<compile_context>
chip_gen: v6e
topology: v6e:2x2x1
jax: 0.10.0
libtpu: 0.0.40
codegen_flags: <defaults>
</compile_context>

<pallas_src>
import numpy as np
import jax
import jax.numpy as jnp
from jax import lax
from jax.experimental import pallas as pl
from jax.experimental.pallas import tpu as pltpu

EPS = 1e-5  # BatchNorm2d default eps
# tap index k = (dy+1)*3 + (dx+1)  (matches OIHW -> (ky*3+kx) weight flattening)
_OFFSETS = tuple((dy, dx) for dy in (-1, 0, 1) for dx in (-1, 0, 1))

# Matmul / staging dtype policy: native bf16 MXU path on real TPUs, f32 fallback on
# CPU / interpret backends (fixes the BF16xBF16=F32 DotThunk failure). State (h, c),
# gate math and accumulation are always f32.
_ON_TPU = jax.default_backend() == "tpu"
MM_DTYPE = jnp.bfloat16 if _ON_TPU else jnp.float32


def _round_up(v, m):
    return -(-v // m) * m


def _tap_masks(H, W, N):
    """(9, N) f32 numpy: 1 where pixel (y+dy, x+dx) is inside the image, else 0."""
    n = np.arange(N)
    x = n % W
    y = (n // W) % H
    rows = []
    for dy, dx in _OFFSETS:
        valid = (y + dy >= 0) & (y + dy < H) & (x + dx >= 0) & (x + dx < W)
        rows.append(valid.astype(np.float32))
    return np.stack(rows, axis=0)


def _prep_weights(w_oihw, C, F_, mm_dtype):
    """Split OIHW conv weight into fused, transposed x- and h- matmul weights."""
    G = w_oihw.shape[0]
    Cin = w_oihw.shape[1]
    # (ky, kx, Cin, G) -> (9, Cin, G), tap index k = ky*3 + kx
    w9 = jnp.transpose(w_oihw, (2, 3, 1, 0)).reshape(9, Cin, G)
    wx9, wh9 = w9[:, :C, :], w9[:, C:, :]
    Cp = _round_up(C, 8)  # pad x-channels to a full sublane tile (zero weights)
    wx9p = jnp.zeros((9, Cp, G), jnp.float32).at[:, :C, :].set(wx9)
    wxT = jnp.transpose(wx9p.reshape(9 * Cp, G)).astype(mm_dtype)   # (G, 9*Cp)
    whT = jnp.transpose(wh9.reshape(9 * F_, G)).astype(mm_dtype)    # (G, 9*F)
    return wxT, whT, Cp


def _make_kernel(S, B, H, W, Cp, F_, mm_dtype):
    N = B * H * W
    G = 4 * F_
    inv_n = 1.0 / N
    STAT_COLS = 128  # lane-width of the ones operand for the MXU row-sum trick

    def tap_patch(v, masks):
        # v: (ch, L); masks: (9, L), same dtype as v. Row block k of the result holds v
        # shifted by tap (dy, dx) on the flattened pixel axis and zeroed outside the
        # image, so a single matmul against the (G, 9*ch) fused weight computes the
        # whole 3x3 "same" convolution. Every wrap position of the roll (row / image /
        # batch / timestep boundary) is masked, so rolling the full flat axis is exact.
        length = v.shape[1]
        taps = []
        for k, (dy, dx) in enumerate(_OFFSETS):
            delta = dy * W + dx
            if delta == 0:
                taps.append(v)  # centre tap: no shift, mask is all ones -> skip the mul
            else:
                shifted = pltpu.roll(v, (-delta) % length, axis=1)
                taps.append(shifted * masks[k:k + 1, :])
        return jnp.concatenate(taps, axis=0)

    def kernel(xT_ref, wxT_ref, whT_ref, gamma_ref, beta_ref, mask_ref,
               out_ref, xg_ref):
        mask_all = mask_ref[...]            # (9, S*N) border masks (constant)
        whT = whT_ref[...]                  # (G, 9*F)
        gamma = gamma_ref[...]              # (G, 1) f32
        beta = beta_ref[...]                # (G, 1) f32

        # ---- phase 1 (hoisted, off the sequential path) ------------------------------
        # x (*) Wx for ALL timesteps with ONE fused MXU matmul: (G, 9*Cp) x (9*Cp, S*N).
        xpatch = tap_patch(xT_ref[...], mask_all)                       # (9*Cp, S*N)
        xg_all = jnp.dot(wxT_ref[...], xpatch,
                         preferred_element_type=jnp.float32)            # (G, S*N) f32
        for s in range(S):                  # static, lane-aligned slab stores to scratch
            xg_ref[s] = xg_all[:, s * N:(s + 1) * N].astype(mm_dtype)

        # ---- phase 2: sequential LSTM recurrence (h-conv + BN + gates) ---------------
        mask_h = mask_all[:, :N]            # first tile period == per-image (9, N) mask
        ones_col = jnp.ones((N, STAT_COLS), jnp.float32)

        def step(t, carry):
            h, c = carry
            hpatch = tap_patch(h.astype(mm_dtype), mask_h)               # (9*F, N)
            gates = xg_ref[t].astype(jnp.float32) + jnp.dot(
                whT, hpatch, preferred_element_type=jnp.float32)         # (G, N) f32

            # BatchNorm2d (training mode) stats over (B, H, W) == the lane axis.
            # Row-sums computed on the MXU (offloads the cross-lane reductions from the
            # XLU, which also carries the 9 rolls per step): one dot of the stacked
            # [gates; gates*gates] against a ones matrix yields sum and sum-of-squares.
            stacked = jnp.concatenate([gates, gates * gates], axis=0)    # (2G, N)
            sums = jnp.dot(stacked, ones_col,
                           preferred_element_type=jnp.float32)[:, :1]    # (2G, 1)
            mean = sums[:G] * inv_n
            # single-pass biased variance (cancellation-safe at these activation scales)
            var = sums[G:] * inv_n - mean * mean
            # BN affine folded into the normalization: scale/shift on (G,1) columns,
            # then one mul + one add over the full (G, N) tile.
            scale = gamma * lax.rsqrt(var + EPS)
            shift = beta - mean * scale
            gates = gates * scale + shift

            i_g = jax.nn.sigmoid(gates[0 * F_:1 * F_, :])
            f_g = jax.nn.sigmoid(gates[1 * F_:2 * F_, :])
            g_g = gates[2 * F_:3 * F_, :]   # NOTE: reference module applies no tanh here
            o_g = jax.nn.sigmoid(gates[3 * F_:4 * F_, :])

            c = f_g * c + i_g * g_g
            h = o_g * jnp.tanh(c)
            out_ref[t] = h
            return (h, c)

        h0 = jnp.zeros((F_, N), jnp.float32)
        c0 = jnp.zeros((F_, N), jnp.float32)
        lax.fori_loop(0, S, step, (h0, c0), unroll=True)

    return kernel


@jax.jit
def conv_lstm_layer(x, w_oihw, gamma, beta):
    """x: (B, S, C, H, W) f32; w_oihw: (4F, C+F, 3, 3); gamma/beta: (4F,).
    Returns (B, S, F, H, W) to match the PyTorch module."""
    B, S, C, H, W = x.shape
    G = w_oihw.shape[0]
    F_ = G // 4
    assert w_oihw.shape[1] == C + F_ and F_ % 8 == 0
    N = B * H * W
    # TODO(synk): if B*H*W is not a lane multiple, pad N and exclude the padding from
    # both the masks and inv_n (BN stats) - not needed at these shapes.
    assert N % 128 == 0

    wxT, whT, Cp = _prep_weights(w_oihw, C, F_, MM_DTYPE)
    # border masks for one timestep, tiled over the flattened S*N lane axis
    masks = jnp.asarray(np.tile(_tap_masks(H, W, N), (1, S)), dtype=MM_DTYPE)

    # channels-first, (timestep, pixel)-flattened input; flat index = s*N + b*H*W + y*W + x
    xT = jnp.transpose(x, (2, 1, 0, 3, 4)).reshape(C, S * N)
    if Cp != C:
        xT = jnp.concatenate([xT, jnp.zeros((Cp - C, S * N), x.dtype)], axis=0)
    xT = xT.astype(MM_DTYPE)

    # VMEM budget sized to the actual resident buffers (pipelined blocks counted twice),
    # with 2x headroom for compiler temporaries; clamped to stay under physical VMEM.
    itm = np.dtype(MM_DTYPE).itemsize
    resident_bytes = (
        2 * (Cp * S * N * itm                        # xT
             + G * 9 * Cp * itm + G * 9 * F_ * itm   # fused weights
             + 2 * G * 4                             # gamma, beta
             + 9 * S * N * itm                       # border masks
             + S * F_ * N * 4)                       # output
        + S * G * N * itm                            # hoisted x-gate scratch
        + 9 * Cp * S * N * itm                       # phase-1 tap-patch temporary
        + G * S * N * 4                              # phase-1 f32 matmul output
    )
    vmem_limit = int(min(100 * 2**20, max(32 * 2**20, 2 * resident_bytes)))

    def full(shape):
        return pl.BlockSpec(shape, lambda i: (0,) * len(shape))

    out = pl.pallas_call(
        _make_kernel(S, B, H, W, Cp, F_, MM_DTYPE),
        out_shape=jax.ShapeDtypeStruct((S, F_, N), jnp.float32),
        grid=(1,),
        in_specs=[full((Cp, S * N)), full((G, 9 * Cp)), full((G, 9 * F_)),
                  full((G, 1)), full((G, 1)), full((9, S * N))],
        out_specs=full((S, F_, N)),
        scratch_shapes=[pltpu.VMEM((S, G, N), MM_DTYPE)],   # hoisted x-gates (bf16 on TPU)
        compiler_params=pltpu.CompilerParams(
            dimension_semantics=("arbitrary",),
            vmem_limit_bytes=vmem_limit),
    )(xT, wxT, whT, gamma.reshape(G, 1), beta.reshape(G, 1), masks)

    # (S, F, N) lane-dense kernel output -> (B, S, F, H, W) PyTorch layout
    return jnp.transpose(out.reshape(S, F_, B, H, W), (2, 0, 1, 3, 4))


def reference(x, w_oihw, gamma, beta):
    """Pure-JAX reference mirroring the PyTorch forward (training-mode BatchNorm)."""
    B, S, C, H, W = x.shape
    G = w_oihw.shape[0]
    F_ = G // 4
    x_nhwc = jnp.transpose(x, (0, 1, 3, 4, 2))
    w_hwio = jnp.transpose(w_oihw, (2, 3, 1, 0))                   # (3, 3, C+F, 4F)
    hx = jnp.zeros((B, H, W, F_), jnp.float32)
    cx = jnp.zeros((B, H, W, F_), jnp.float32)
    outs = []
    for t in range(S):
        comb = jnp.concatenate([x_nhwc[:, t], hx], axis=-1)
        gates = lax.conv_general_dilated(
            comb, w_hwio, (1, 1), "SAME",
            dimension_numbers=("NHWC", "HWIO", "NHWC"),
            precision=lax.Precision.HIGHEST)
        mean = jnp.mean(gates, axis=(0, 1, 2), keepdims=True)
        var = jnp.mean((gates - mean) ** 2, axis=(0, 1, 2), keepdims=True)
        gates = (gates - mean) / jnp.sqrt(var + EPS)
        gates = gates * gamma.reshape(1, 1, 1, -1) + beta.reshape(1, 1, 1, -1)
        i = jax.nn.sigmoid(gates[..., 0 * F_:1 * F_])
        f = jax.nn.sigmoid(gates[..., 1 * F_:2 * F_])
        g = gates[..., 2 * F_:3 * F_]
        o = jax.nn.sigmoid(gates[..., 3 * F_:4 * F_])
        cx = f * cx + i * g
        hx = o * jnp.tanh(cx)
        outs.append(hx)
    out = jnp.stack(outs, axis=1)                                  # (B, S, H, W, F)
    return jnp.transpose(out, (0, 1, 4, 2, 3))


if __name__ == "__main__":
    B, S, C, H, W = 2, 8, 4, 16, 16
    F_ = 8  # num_features

    key = jax.random.PRNGKey(0)
    kx, kw, kg, kb = jax.random.split(key, 4)

    # PyTorch-convention input (B, S, C, H, W)
    x = jax.random.normal(kx, (B, S, C, H, W), jnp.float32)

    Cin = C + F_
    # nn.Conv2d(in=Cin, out=4F, k=3, pad=1, bias=False) weight, OIHW, deterministic init
    w_oihw = 0.1 * jax.random.normal(kw, (4 * F_, Cin, 3, 3), jnp.float32)
    # BatchNorm2d(4F) affine params (deterministic)
    gamma = 1.0 + 0.1 * jax.random.normal(kg, (4 * F_,), jnp.float32)
    beta = 0.1 * jax.random.normal(kb, (4 * F_,), jnp.float32)

    out = jax.block_until_ready(conv_lstm_layer(x, w_oihw, gamma, beta))
    ref = jax.block_until_ready(reference(x, w_oihw, gamma, beta))

    assert out.shape == (B, S, F_, H, W)
    # Dtype policy: on TPU the kernel uses the native bf16 MXU / bf16 staging path, so h
    # is re-quantized each step and error compounds over S -> 1e-2 tolerance. On non-TPU
    # backends the kernel falls back to f32 and is far tighter than this bound.
    np.testing.assert_allclose(np.asarray(out), np.asarray(ref), atol=1e-2, rtol=1e-2)
    print("KERNEL_OK")
</pallas_src>

<mosaic_0001>
module attributes {stable_mosaic.version = 11 : i64} {
  func.func @kernel(%arg0: i32, %arg1: memref<8x4096xf32, #tpu.memory_space<vmem>>, %arg2: memref<32x72xf32, #tpu.memory_space<vmem>>, %arg3: memref<32x72xf32, #tpu.memory_space<vmem>>, %arg4: memref<32x1xf32, #tpu.memory_space<vmem>>, %arg5: memref<32x1xf32, #tpu.memory_space<vmem>>, %arg6: memref<9x4096xf32, #tpu.memory_space<vmem>>, %arg7: memref<8x8x512xf32, #tpu.memory_space<vmem>>, %arg8: memref<8x32x512xf32, #tpu.memory_space<vmem>>) attributes {dimension_semantics = [#tpu.dimension_semantics<arbitrary>], iteration_bounds = array<i64: 1>, scalar_prefetch = 0 : i64, scratch_operands = 1 : i64, tpu.core_type = #tpu.core_type<tc>, window_params = [{pipeline_mode = #tpu.pipeline_mode<synchronous>, transform_indices = @transform_0, window_bounds = array<i64: 8, 4096>}, {pipeline_mode = #tpu.pipeline_mode<synchronous>, transform_indices = @transform_1, window_bounds = array<i64: 32, 72>}, {pipeline_mode = #tpu.pipeline_mode<synchronous>, transform_indices = @transform_2, window_bounds = array<i64: 32, 72>}, {pipeline_mode = #tpu.pipeline_mode<synchronous>, transform_indices = @transform_3, window_bounds = array<i64: 32, 1>}, {pipeline_mode = #tpu.pipeline_mode<synchronous>, transform_indices = @transform_4, window_bounds = array<i64: 32, 1>}, {pipeline_mode = #tpu.pipeline_mode<synchronous>, transform_indices = @transform_5, window_bounds = array<i64: 9, 4096>}, {pipeline_mode = #tpu.pipeline_mode<synchronous>, transform_indices = @transform_6, window_bounds = array<i64: 8, 8, 512>}]} {
    %c0 = arith.constant 0 : index
    %c0_0 = arith.constant 0 : index
    %0 = vector.load %arg6[%c0, %c0_0] : memref<9x4096xf32, #tpu.memory_space<vmem>>, vector<9x4096xf32>
    %c0_1 = arith.constant 0 : index
    %c0_2 = arith.constant 0 : index
    %1 = vector.load %arg3[%c0_1, %c0_2] : memref<32x72xf32, #tpu.memory_space<vmem>>, vector<32x72xf32>
    %c0_3 = arith.constant 0 : index
    %c0_4 = arith.constant 0 : index
    %2 = vector.load %arg4[%c0_3, %c0_4] : memref<32x1xf32, #tpu.memory_space<vmem>>, vector<32x1xf32>
    %c0_5 = arith.constant 0 : index
    %c0_6 = arith.constant 0 : index
    %3 = vector.load %arg5[%c0_5, %c0_6] : memref<32x1xf32, #tpu.memory_space<vmem>>, vector<32x1xf32>
    %c0_7 = arith.constant 0 : index
    %c0_8 = arith.constant 0 : index
    %4 = vector.load %arg1[%c0_7, %c0_8] : memref<8x4096xf32, #tpu.memory_space<vmem>>, vector<8x4096xf32>
    %c17_i32 = arith.constant 17 : i32
    %5 = tpu.dynamic_rotate %4 by %c17_i32 dim 1 : vector<8x4096xf32>, i32 -> vector<8x4096xf32>
    %6 = vector.extract_strided_slice %0 {offsets = [0, 0], sizes = [1, 4096], strides = [1, 1]} : vector<9x4096xf32> to vector<1x4096xf32>
    %7 = vector.broadcast %6 : vector<1x4096xf32> to vector<8x4096xf32>
    %8 = arith.mulf %5, %7 : vector<8x4096xf32>
    %c16_i32 = arith.constant 16 : i32
    %9 = tpu.dynamic_rotate %4 by %c16_i32 dim 1 : vector<8x4096xf32>, i32 -> vector<8x4096xf32>
    %10 = vector.extract_strided_slice %0 {offsets = [1, 0], sizes = [1, 4096], strides = [1, 1]} : vector<9x4096xf32> to vector<1x4096xf32>
    %11 = vector.broadcast %10 : vector<1x4096xf32> to vector<8x4096xf32>
    %12 = arith.mulf %9, %11 : vector<8x4096xf32>
    %c15_i32 = arith.constant 15 : i32
    %13 = tpu.dynamic_rotate %4 by %c15_i32 dim 1 : vector<8x4096xf32>, i32 -> vector<8x4096xf32>
    %14 = vector.extract_strided_slice %0 {offsets = [2, 0], sizes = [1, 4096], strides = [1, 1]} : vector<9x4096xf32> to vector<1x4096xf32>
    %15 = vector.broadcast %14 : vector<1x4096xf32> to vector<8x4096xf32>
    %16 = arith.mulf %13, %15 : vector<8x4096xf32>
    %c1_i32 = arith.constant 1 : i32
    %17 = tpu.dynamic_rotate %4 by %c1_i32 dim 1 : vector<8x4096xf32>, i32 -> vector<8x4096xf32>
    %18 = vector.extract_strided_slice %0 {offsets = [3, 0], sizes = [1, 4096], strides = [1, 1]} : vector<9x4096xf32> to vector<1x4096xf32>
    %19 = vector.broadcast %18 : vector<1x4096xf32> to vector<8x4096xf32>
    %20 = arith.mulf %17, %19 : vector<8x4096xf32>
    %c4095_i32 = arith.constant 4095 : i32
    %21 = tpu.dynamic_rotate %4 by %c4095_i32 dim 1 : vector<8x4096xf32>, i32 -> vector<8x4096xf32>
    %22 = vector.extract_strided_slice %0 {offsets = [5, 0], sizes = [1, 4096], strides = [1, 1]} : vector<9x4096xf32> to vector<1x4096xf32>
    %23 = vector.broadcast %22 : vector<1x4096xf32> to vector<8x4096xf32>
    %24 = arith.mulf %21, %23 : vector<8x4096xf32>
    %c4081_i32 = arith.constant 4081 : i32
    %25 = tpu.dynamic_rotate %4 by %c4081_i32 dim 1 : vector<8x4096xf32>, i32 -> vector<8x4096xf32>
    %26 = vector.extract_strided_slice %0 {offsets = [6, 0], sizes = [1, 4096], strides = [1, 1]} : vector<9x4096xf32> to vector<1x4096xf32>
    %27 = vector.broadcast %26 : vector<1x4096xf32> to vector<8x4096xf32>
    %28 = arith.mulf %25, %27 : vector<8x4096xf32>
    %c4080_i32 = arith.constant 4080 : i32
    %29 = tpu.dynamic_rotate %4 by %c4080_i32 dim 1 : vector<8x4096xf32>, i32 -> vector<8x4096xf32>
    %30 = vector.extract_strided_slice %0 {offsets = [7, 0], sizes = [1, 4096], strides = [1, 1]} : vector<9x4096xf32> to vector<1x4096xf32>
    %31 = vector.broadcast %30 : vector<1x4096xf32> to vector<8x4096xf32>
    %32 = arith.mulf %29, %31 : vector<8x4096xf32>
    %c4079_i32 = arith.constant 4079 : i32
    %33 = tpu.dynamic_rotate %4 by %c4079_i32 dim 1 : vector<8x4096xf32>, i32 -> vector<8x4096xf32>
    %34 = vector.extract_strided_slice %0 {offsets = [8, 0], sizes = [1, 4096], strides = [1, 1]} : vector<9x4096xf32> to vector<1x4096xf32>
    %35 = vector.broadcast %34 : vector<1x4096xf32> to vector<8x4096xf32>
    %36 = arith.mulf %33, %35 : vector<8x4096xf32>
    %37 = tpu.concatenate %8, %12, %16, %20, %4, %24, %28, %32, %36 in 0 : vector<8x4096xf32>, vector<8x4096xf32>, vector<8x4096xf32>, vector<8x4096xf32>, vector<8x4096xf32>, vector<8x4096xf32>, vector<8x4096xf32>, vector<8x4096xf32>, vector<8x4096xf32> -> vector<72x4096xf32>
    %c0_9 = arith.constant 0 : index
    %c0_10 = arith.constant 0 : index
    %38 = vector.load %arg2[%c0_9, %c0_10] : memref<32x72xf32, #tpu.memory_space<vmem>>, vector<32x72xf32>
    %cst = arith.constant dense<0.000000e+00> : vector<32x4096xf32>
    %39 = tpu.matmul %38, %37, %cst {dimension_numbers = #tpu.dot_dimension_numbers<[1], [0], [0], [1], [0, 0, 1, 1], [], []>} : vector<32x72xf32>, vector<72x4096xf32>, vector<32x4096xf32> -> vector<32x4096xf32>
    %40 = vector.extract_strided_slice %39 {offsets = [0, 0], sizes = [32, 512], strides = [1, 1]} : vector<32x4096xf32> to vector<32x512xf32>
    %c0_11 = arith.constant 0 : index
    %c0_12 = arith.constant 0 : index
    %c0_13 = arith.constant 0 : index
    %41 = vector.load %arg8[%c0_11, %c0_12, %c0_13] : memref<8x32x512xf32, #tpu.memory_space<vmem>>, vector<1x32x512xf32>
    %42 = vector.shape_cast %41 : vector<1x32x512xf32> to vector<32x512xf32>
    %43 = vector.shape_cast %40 : vector<32x512xf32> to vector<1x32x512xf32>
    tpu.vector_store %arg8[%c0_11, %c0_12, %c0_13], %43 {strides = array<i32>} : memref<8x32x512xf32, #tpu.memory_space<vmem>>, vector<1x32x512xf32>,
    %44 = vector.extract_strided_slice %39 {offsets = [0, 512], sizes = [32, 512], strides = [1, 1]} : vector<32x4096xf32> to vector<32x512xf32>
    %c1 = arith.constant 1 : index
    %c0_14 = arith.constant 0 : index
    %c0_15 = arith.constant 0 : index
    %45 = vector.load %arg8[%c1, %c0_14, %c0_15] : memref<8x32x512xf32, #tpu.memory_space<vmem>>, vector<1x32x512xf32>
    %46 = vector.shape_cast %45 : vector<1x32x512xf32> to vector<32x512xf32>
    %47 = vector.shape_cast %44 : vector<32x512xf32> to vector<1x32x512xf32>
    tpu.vector_store %arg8[%c1, %c0_14, %c0_15], %47 {strides = array<i32>} : memref<8x32x512xf32, #tpu.memory_space<vmem>>, vector<1x32x512xf32>,
    %48 = vector.extract_strided_slice %39 {offsets = [0, 1024], sizes = [32, 512], strides = [1, 1]} : vector<32x4096xf32> to vector<32x512xf32>
    %c2 = arith.constant 2 : index
    %c0_16 = arith.constant 0 : index
    %c0_17 = arith.constant 0 : index
    %49 = vector.load %arg8[%c2, %c0_16, %c0_17] : memref<8x32x512xf32, #tpu.memory_space<vmem>>, vector<1x32x512xf32>
    %50 = vector.shape_cast %49 : vector<1x32x512xf32> to vector<32x512xf32>
    %51 = vector.shape_cast %48 : vector<32x512xf32> to vector<1x32x512xf32>
    tpu.vector_store %arg8[%c2, %c0_16, %c0_17], %51 {strides = array<i32>} : memref<8x32x512xf32, #tpu.memory_space<vmem>>, vector<1x32x512xf32>,
    %52 = vector.extract_strided_slice %39 {offsets = [0, 1536], sizes = [32, 512], strides = [1, 1]} : vector<32x4096xf32> to vector<32x512xf32>
    %c3 = arith.constant 3 : index
    %c0_18 = arith.constant 0 : index
    %c0_19 = arith.constant 0 : index
    %53 = vector.load %arg8[%c3, %c0_18, %c0_19] : memref<8x32x512xf32, #tpu.memory_space<vmem>>, vector<1x32x512xf32>
    %54 = vector.shape_cast %53 : vector<1x32x512xf32> to vector<32x512xf32>
    %55 = vector.shape_cast %52 : vector<32x512xf32> to vector<1x32x512xf32>
    tpu.vector_store %arg8[%c3, %c0_18, %c0_19], %55 {strides = array<i32>} : memref<8x32x512xf32, #tpu.memory_space<vmem>>, vector<1x32x512xf32>,
    %56 = vector.extract_strided_slice %39 {offsets = [0, 2048], sizes = [32, 512], strides = [1, 1]} : vector<32x4096xf32> to vector<32x512xf32>
    %c4 = arith.constant 4 : index
    %c0_20 = arith.constant 0 : index
    %c0_21 = arith.constant 0 : index
    %57 = vector.load %arg8[%c4, %c0_20, %c0_21] : memref<8x32x512xf32, #tpu.memory_space<vmem>>, vector<1x32x512xf32>
    %58 = vector.shape_cast %57 : vector<1x32x512xf32> to vector<32x512xf32>
    %59 = vector.shape_cast %56 : vector<32x512xf32> to vector<1x32x512xf32>
    tpu.vector_store %arg8[%c4, %c0_20, %c0_21], %59 {strides = array<i32>} : memref<8x32x512xf32, #tpu.memory_space<vmem>>, vector<1x32x512xf32>,
    %60 = vector.extract_strided_slice %39 {offsets = [0, 2560], sizes = [32, 512], strides = [1, 1]} : vector<32x4096xf32> to vector<32x512xf32>
    %c5 = arith.constant 5 : index
    %c0_22 = arith.constant 0 : index
    %c0_23 = arith.constant 0 : index
    %61 = vector.load %arg8[%c5, %c0_22, %c0_23] : memref<8x32x512xf32, #tpu.memory_space<vmem>>, vector<1x32x512xf32>
    %62 = vector.shape_cast %61 : vector<1x32x512xf32> to vector<32x512xf32>
    %63 = vector.shape_cast %60 : vector<32x512xf32> to vector<1x32x512xf32>
    tpu.vector_store %arg8[%c5, %c0_22, %c0_23], %63 {strides = array<i32>} : memref<8x32x512xf32, #tpu.memory_space<vmem>>, vector<1x32x512xf32>,
    %64 = vector.extract_strided_slice %39 {offsets = [0, 3072], sizes = [32, 512], strides = [1, 1]} : vector<32x4096xf32> to vector<32x512xf32>
    %c6 = arith.constant 6 : index
    %c0_24 = arith.constant 0 : index
    %c0_25 = arith.constant 0 : index
    %65 = vector.load %arg8[%c6, %c0_24, %c0_25] : memref<8x32x512xf32, #tpu.memory_space<vmem>>, vector<1x32x512xf32>
    %66 = vector.shape_cast %65 : vector<1x32x512xf32> to vector<32x512xf32>
    %67 = vector.shape_cast %64 : vector<32x512xf32> to vector<1x32x512xf32>
    tpu.vector_store %arg8[%c6, %c0_24, %c0_25], %67 {strides = array<i32>} : memref<8x32x512xf32, #tpu.memory_space<vmem>>, vector<1x32x512xf32>,
    %68 = vector.extract_strided_slice %39 {offsets = [0, 3584], sizes = [32, 512], strides = [1, 1]} : vector<32x4096xf32> to vector<32x512xf32>
    %c7 = arith.constant 7 : index
    %c0_26 = arith.constant 0 : index
    %c0_27 = arith.constant 0 : index
    %69 = vector.load %arg8[%c7, %c0_26, %c0_27] : memref<8x32x512xf32, #tpu.memory_space<vmem>>, vector<1x32x512xf32>
    %70 = vector.shape_cast %69 : vector<1x32x512xf32> to vector<32x512xf32>
    %71 = vector.shape_cast %68 : vector<32x512xf32> to vector<1x32x512xf32>
    tpu.vector_store %arg8[%c7, %c0_26, %c0_27], %71 {strides = array<i32>} : memref<8x32x512xf32, #tpu.memory_space<vmem>>, vector<1x32x512xf32>,
    %72 = vector.extract_strided_slice %0 {offsets = [0, 0], sizes = [9, 512], strides = [1, 1]} : vector<9x4096xf32> to vector<9x512xf32>
    %cst_28 = arith.constant 1.000000e+00 : f32
    %73 = vector.broadcast %cst_28 : f32 to vector<512x128xf32>
    %cst_29 = arith.constant 0.000000e+00 : f32
    %74 = vector.broadcast %cst_29 : f32 to vector<8x512xf32>
    %cst_30 = arith.constant 0.000000e+00 : f32
    %75 = vector.broadcast %cst_30 : f32 to vector<8x512xf32>
    %c0_i32 = arith.constant 0 : i32
    %c17_i32_31 = arith.constant 17 : i32
    %76 = tpu.dynamic_rotate %74 by %c17_i32_31 dim 1 : vector<8x512xf32>, i32 -> vector<8x512xf32>
    %77 = vector.extract_strided_slice %72 {offsets = [0, 0], sizes = [1, 512], strides = [1, 1]} : vector<9x512xf32> to vector<1x512xf32>
    %78 = vector.broadcast %77 : vector<1x512xf32> to vector<8x512xf32>
    %79 = arith.mulf %76, %78 : vector<8x512xf32>
    %c16_i32_32 = arith.constant 16 : i32
    %80 = tpu.dynamic_rotate %74 by %c16_i32_32 dim 1 : vector<8x512xf32>, i32 -> vector<8x512xf32>
    %81 = vector.extract_strided_slice %72 {offsets = [1, 0], sizes = [1, 512], strides = [1, 1]} : vector<9x512xf32> to vector<1x512xf32>
    %82 = vector.broadcast %81 : vector<1x512xf32> to vector<8x512xf32>
    %83 = arith.mulf %80, %82 : vector<8x512xf32>
    %c15_i32_33 = arith.constant 15 : i32
    %84 = tpu.dynamic_rotate %74 by %c15_i32_33 dim 1 : vector<8x512xf32>, i32 -> vector<8x512xf32>
    %85 = vector.extract_strided_slice %72 {offsets = [2, 0], sizes = [1, 512], strides = [1, 1]} : vector<9x512xf32> to vector<1x512xf32>
    %86 = vector.broadcast %85 : vector<1x512xf32> to vector<8x512xf32>
    %87 = arith.mulf %84, %86 : vector<8x512xf32>
    %c1_i32_34 = arith.constant 1 : i32
    %88 = tpu.dynamic_rotate %74 by %c1_i32_34 dim 1 : vector<8x512xf32>, i32 -> vector<8x512xf32>
    %89 = vector.extract_strided_slice %72 {offsets = [3, 0], sizes = [1, 512], strides = [1, 1]} : vector<9x512xf32> to vector<1x512xf32>
    %90 = vector.broadcast %89 : vector<1x512xf32> to vector<8x512xf32>
    %91 = arith.mulf %88, %90 : vector<8x512xf32>
    %c511_i32 = arith.constant 511 : i32
    %92 = tpu.dynamic_rotate %74 by %c511_i32 dim 1 : vector<8x512xf32>, i32 -> vector<8x512xf32>
    %93 = vector.extract_strided_slice %72 {offsets = [5, 0], sizes = [1, 512], strides = [1, 1]} : vector<9x512xf32> to vector<1x512xf32>
    %94 = vector.broadcast %93 : vector<1x512xf32> to vector<8x512xf32>
    %95 = arith.mulf %92, %94 : vector<8x512xf32>
    %c497_i32 = arith.constant 497 : i32
    %96 = tpu.dynamic_rotate %74 by %c497_i32 dim 1 : vector<8x512xf32>, i32 -> vector<8x512xf32>
    %97 = vector.extract_strided_slice %72 {offsets = [6, 0], sizes = [1, 512], strides = [1, 1]} : vector<9x512xf32> to vector<1x512xf32>
    %98 = vector.broadcast %97 : vector<1x512xf32> to vector<8x512xf32>
    %99 = arith.mulf %96, %98 : vector<8x512xf32>
    %c496_i32 = arith.constant 496 : i32
    %100 = tpu.dynamic_rotate %74 by %c496_i32 dim 1 : vector<8x512xf32>, i32 -> vector<8x512xf32>
    %101 = vector.extract_strided_slice %72 {offsets = [7, 0], sizes = [1, 512], strides = [1, 1]} : vector<9x512xf32> to vector<1x512xf32>
    %102 = vector.broadcast %101 : vector<1x512xf32> to vector<8x512xf32>
    %103 = arith.mulf %100, %102 : vector<8x512xf32>
    %c495_i32 = arith.constant 495 : i32
    %104 = tpu.dynamic_rotate %74 by %c495_i32 dim 1 : vector<8x512xf32>, i32 -> vector<8x512xf32>
    %105 = vector.extract_strided_slice %72 {offsets = [8, 0], sizes = [1, 512], strides = [1, 1]} : vector<9x512xf32> to vector<1x512xf32>
    %106 = vector.broadcast %105 : vector<1x512xf32> to vector<8x512xf32>
    %107 = arith.mulf %104, %106 : vector<8x512xf32>
    %108 = tpu.concatenate %79, %83, %87, %91, %74, %95, %99, %103, %107 in 0 : vector<8x512xf32>, vector<8x512xf32>, vector<8x512xf32>, vector<8x512xf32>, vector<8x512xf32>, vector<8x512xf32>, vector<8x512xf32>, vector<8x512xf32>, vector<8x512xf32> -> vector<72x512xf32>
    %109 = arith.index_cast %c0_i32 : i32 to index
    %c0_35 = arith.constant 0 : index
    %c0_36 = arith.constant 0 : index
    %110 = vector.load %arg8[%109, %c0_35, %c0_36] : memref<8x32x512xf32, #tpu.memory_space<vmem>>, vector<1x32x512xf32>
    %111 = vector.shape_cast %110 : vector<1x32x512xf32> to vector<32x512xf32>
    %cst_37 = arith.constant dense<0.000000e+00> : vector<32x512xf32>
    %112 = tpu.matmul %1, %108, %cst_37 {dimension_numbers = #tpu.dot_dimension_numbers<[1], [0], [0], [1], [0, 0, 1, 1], [], []>} : vector<32x72xf32>, vector<72x512xf32>, vector<32x512xf32> -> vector<32x512xf32>
    %113 = arith.addf %111, %112 : vector<32x512xf32>
    %114 = arith.mulf %113, %113 : vector<32x512xf32>
    %115 = tpu.concatenate %113, %114 in 0 : vector<32x512xf32>, vector<32x512xf32> -> vector<64x512xf32>
    %cst_38 = arith.constant dense<0.000000e+00> : vector<64x128xf32>
    %116 = tpu.matmul %115, %73, %cst_38 {dimension_numbers = #tpu.dot_dimension_numbers<[1], [0], [0], [1], [0, 0, 1, 1], [], []>} : vector<64x512xf32>, vector<512x128xf32>, vector<64x128xf32> -> vector<64x128xf32>
    %117 = vector.extract_strided_slice %116 {offsets = [0, 0], sizes = [64, 1], strides = [1, 1]} : vector<64x128xf32> to vector<64x1xf32>
    %118 = vector.extract_strided_slice %117 {offsets = [0, 0], sizes = [32, 1], strides = [1, 1]} : vector<64x1xf32> to vector<32x1xf32>
    %cst_39 = arith.constant 0.001953125 : f32
    %119 = vector.broadcast %cst_39 : f32 to vector<32x1xf32>
    %120 = arith.mulf %118, %119 : vector<32x1xf32>
    %121 = vector.extract_strided_slice %117 {offsets = [32, 0], sizes = [32, 1], strides = [1, 1]} : vector<64x1xf32> to vector<32x1xf32>
    %cst_40 = arith.constant 0.001953125 : f32
    %122 = vector.broadcast %cst_40 : f32 to vector<32x1xf32>
    %123 = arith.mulf %121, %122 : vector<32x1xf32>
    %124 = arith.mulf %120, %120 : vector<32x1xf32>
    %125 = arith.subf %123, %124 : vector<32x1xf32>
    %cst_41 = arith.constant 9.99999974E-6 : f32
    %126 = vector.broadcast %cst_41 : f32 to vector<32x1xf32>
    %127 = arith.addf %125, %126 : vector<32x1xf32>
    %128 = math.rsqrt %127 : vector<32x1xf32>
    %129 = arith.mulf %2, %128 : vector<32x1xf32>
    %130 = arith.mulf %120, %129 : vector<32x1xf32>
    %131 = arith.subf %3, %130 : vector<32x1xf32>
    %132 = vector.broadcast %129 : vector<32x1xf32> to vector<32x512xf32>
    %133 = arith.mulf %113, %132 : vector<32x512xf32>
    %134 = vector.broadcast %131 : vector<32x1xf32> to vector<32x512xf32>
    %135 = arith.addf %133, %134 : vector<32x512xf32>
    %136 = vector.extract_strided_slice %135 {offsets = [0, 0], sizes = [8, 512], strides = [1, 1]} : vector<32x512xf32> to vector<8x512xf32>
    %137 = arith.negf %136 : vector<8x512xf32>
    %138 = math.exp %137 : vector<8x512xf32>
    %cst_42 = arith.constant 1.000000e+00 : f32
    %139 = vector.broadcast %cst_42 : f32 to vector<8x512xf32>
    %140 = arith.addf %139, %138 : vector<8x512xf32>
    %141 = arith.divf %139, %140 : vector<8x512xf32>
    %142 = vector.extract_strided_slice %135 {offsets = [8, 0], sizes = [8, 512], strides = [1, 1]} : vector<32x512xf32> to vector<8x512xf32>
    %143 = arith.negf %142 : vector<8x512xf32>
    %144 = math.exp %143 : vector<8x512xf32>
    %cst_43 = arith.constant 1.000000e+00 : f32
    %145 = vector.broadcast %cst_43 : f32 to vector<8x512xf32>
    %146 = arith.addf %145, %144 : vector<8x512xf32>
    %147 = arith.divf %145, %146 : vector<8x512xf32>
    %148 = vector.extract_strided_slice %135 {offsets = [16, 0], sizes = [8, 512], strides = [1, 1]} : vector<32x512xf32> to vector<8x512xf32>
    %149 = vector.extract_strided_slice %135 {offsets = [24, 0], sizes = [8, 512], strides = [1, 1]} : vector<32x512xf32> to vector<8x512xf32>
    %150 = arith.negf %149 : vector<8x512xf32>
    %151 = math.exp %150 : vector<8x512xf32>
    %cst_44 = arith.constant 1.000000e+00 : f32
    %152 = vector.broadcast %cst_44 : f32 to vector<8x512xf32>
    %153 = arith.addf %152, %151 : vector<8x512xf32>
    %154 = arith.divf %152, %153 : vector<8x512xf32>
    %155 = arith.mulf %147, %75 : vector<8x512xf32>
    %156 = arith.mulf %141, %148 : vector<8x512xf32>
    %157 = arith.addf %155, %156 : vector<8x512xf32>
    %158 = math.tanh %157 : vector<8x512xf32>
    %159 = arith.mulf %154, %158 : vector<8x512xf32>
    %160 = arith.index_cast %c0_i32 : i32 to index
    %c0_45 = arith.constant 0 : index
    %c0_46 = arith.constant 0 : index
    %161 = vector.load %arg7[%160, %c0_45, %c0_46] : memref<8x8x512xf32, #tpu.memory_space<vmem>>, vector<1x8x512xf32>
    %162 = vector.shape_cast %161 : vector<1x8x512xf32> to vector<8x512xf32>
    %163 = vector.shape_cast %159 : vector<8x512xf32> to vector<1x8x512xf32>
    tpu.vector_store %arg7[%160, %c0_45, %c0_46], %163 {strides = array<i32>} : memref<8x8x512xf32, #tpu.memory_space<vmem>>, vector<1x8x512xf32>,
    %c1_i32_47 = arith.constant 1 : i32
    %c17_i32_48 = arith.constant 17 : i32
    %164 = tpu.dynamic_rotate %159 by %c17_i32_48 dim 1 : vector<8x512xf32>, i32 -> vector<8x512xf32>
    %165 = vector.extract_strided_slice %72 {offsets = [0, 0], sizes = [1, 512], strides = [1, 1]} : vector<9x512xf32> to vector<1x512xf32>
    %166 = vector.broadcast %165 : vector<1x512xf32> to vector<8x512xf32>
    %167 = arith.mulf %164, %166 : vector<8x512xf32>
    %c16_i32_49 = arith.constant 16 : i32
    %168 = tpu.dynamic_rotate %159 by %c16_i32_49 dim 1 : vector<8x512xf32>, i32 -> vector<8x512xf32>
    %169 = vector.extract_strided_slice %72 {offsets = [1, 0], sizes = [1, 512], strides = [1, 1]} : vector<9x512xf32> to vector<1x512xf32>
    %170 = vector.broadcast %169 : vector<1x512xf32> to vector<8x512xf32>
    %171 = arith.mulf %168, %170 : vector<8x512xf32>
    %c15_i32_50 = arith.constant 15 : i32
    %172 = tpu.dynamic_rotate %159 by %c15_i32_50 dim 1 : vector<8x512xf32>, i32 -> vector<8x512xf32>
    %173 = vector.extract_strided_slice %72 {offsets = [2, 0], sizes = [1, 512], strides = [1, 1]} : vector<9x512xf32> to vector<1x512xf32>
    %174 = vector.broadcast %173 : vector<1x512xf32> to vector<8x512xf32>
    %175 = arith.mulf %172, %174 : vector<8x512xf32>
    %c1_i32_51 = arith.constant 1 : i32
    %176 = tpu.dynamic_rotate %159 by %c1_i32_51 dim 1 : vector<8x512xf32>, i32 -> vector<8x512xf32>
    %177 = vector.extract_strided_slice %72 {offsets = [3, 0], sizes = [1, 512], strides = [1, 1]} : vector<9x512xf32> to vector<1x512xf32>
    %178 = vector.broadcast %177 : vector<1x512xf32> to vector<8x512xf32>
    %179 = arith.mulf %176, %178 : vector<8x512xf32>
    %c511_i32_52 = arith.constant 511 : i32
    %180 = tpu.dynamic_rotate %159 by %c511_i32_52 dim 1 : vector<8x512xf32>, i32 -> vector<8x512xf32>
    %181 = vector.extract_strided_slice %72 {offsets = [5, 0], sizes = [1, 512], strides = [1, 1]} : vector<9x512xf32> to vector<1x512xf32>
    %182 = vector.broadcast %181 : vector<1x512xf32> to vector<8x512xf32>
    %183 = arith.mulf %180, %182 : vector<8x512xf32>
    %c497_i32_53 = arith.constant 497 : i32
    %184 = tpu.dynamic_rotate %159 by %c497_i32_53 dim 1 : vector<8x512xf32>, i32 -> vector<8x512xf32>
    %185 = vector.extract_strided_slice %72 {offsets = [6, 0], sizes = [1, 512], strides = [1, 1]} : vector<9x512xf32> to vector<1x512xf32>
    %186 = vector.broadcast %185 : vector<1x512xf32> to vector<8x512xf32>
    %187 = arith.mulf %184, %186 : vector<8x512xf32>
    %c496_i32_54 = arith.constant 496 : i32
    %188 = tpu.dynamic_rotate %159 by %c496_i32_54 dim 1 : vector<8x512xf32>, i32 -> vector<8x512xf32>
    %189 = vector.extract_strided_slice %72 {offsets = [7, 0], sizes = [1, 512], strides = [1, 1]} : vector<9x512xf32> to vector<1x512xf32>
    %190 = vector.broadcast %189 : vector<1x512xf32> to vector<8x512xf32>
    %191 = arith.mulf %188, %190 : vector<8x512xf32>
    %c495_i32_55 = arith.constant 495 : i32
    %192 = tpu.dynamic_rotate %159 by %c495_i32_55 dim 1 : vector<8x512xf32>, i32 -> vector<8x512xf32>
    %193 = vector.extract_strided_slice %72 {offsets = [8, 0], sizes = [1, 512], strides = [1, 1]} : vector<9x512xf32> to vector<1x512xf32>
    %194 = vector.broadcast %193 : vector<1x512xf32> to vector<8x512xf32>
    %195 = arith.mulf %192, %194 : vector<8x512xf32>
    %196 = tpu.concatenate %167, %171, %175, %179, %159, %183, %187, %191, %195 in 0 : vector<8x512xf32>, vector<8x512xf32>, vector<8x512xf32>, vector<8x512xf32>, vector<8x512xf32>, vector<8x512xf32>, vector<8x512xf32>, vector<8x512xf32>, vector<8x512xf32> -> vector<72x512xf32>
    %197 = arith.index_cast %c1_i32_47 : i32 to index
    %c0_56 = arith.constant 0 : index
    %c0_57 = arith.constant 0 : index
    %198 = vector.load %arg8[%197, %c0_56, %c0_57] : memref<8x32x512xf32, #tpu.memory_space<vmem>>, vector<1x32x512xf32>
    %199 = vector.shape_cast %198 : vector<1x32x512xf32> to vector<32x512xf32>
    %cst_58 = arith.constant dense<0.000000e+00> : vector<32x512xf32>
    %200 = tpu.matmul %1, %196, %cst_58 {dimension_numbers = #tpu.dot_dimension_numbers<[1], [0], [0], [1], [0, 0, 1, 1], [], []>} : vector<32x72xf32>, vector<72x512xf32>, vector<32x512xf32> -> vector<32x512xf32>
    %201 = arith.addf %199, %200 : vector<32x512xf32>
    %202 = arith.mulf %201, %201 : vector<32x512xf32>
    %203 = tpu.concatenate %201, %202 in 0 : vector<32x512xf32>, vector<32x512xf32> -> vector<64x512xf32>
    %cst_59 = arith.constant dense<0.000000e+00> : vector<64x128xf32>
    %204 = tpu.matmul %203, %73, %cst_59 {dimension_numbers = #tpu.dot_dimension_numbers<[1], [0], [0], [1], [0, 0, 1, 1], [], []>} : vector<64x512xf32>, vector<512x128xf32>, vector<64x128xf32> -> vector<64x128xf32>
    %205 = vector.extract_strided_slice %204 {offsets = [0, 0], sizes = [64, 1], strides = [1, 1]} : vector<64x128xf32> to vector<64x1xf32>
    %206 = vector.extract_strided_slice %205 {offsets = [0, 0], sizes = [32, 1], strides = [1, 1]} : vector<64x1xf32> to vector<32x1xf32>
    %cst_60 = arith.constant 0.001953125 : f32
    %207 = vector.broadcast %cst_60 : f32 to vector<32x1xf32>
    %208 = arith.mulf %206, %207 : vector<32x1xf32>
    %209 = vector.extract_strided_slice %205 {offsets = [32, 0], sizes = [32, 1], strides = [1, 1]} : vector<64x1xf32> to vector<32x1xf32>
    %cst_61 = arith.constant 0.001953125 : f32
    %210 = vector.broadcast %cst_61 : f32 to vector<32x1xf32>
    %211 = arith.mulf %209, %210 : vector<32x1xf32>
    %212 = arith.mulf %208, %208 : vector<32x1xf32>
    %213 = arith.subf %211, %212 : vector<32x1xf32>
    %cst_62 = arith.constant 9.99999974E-6 : f32
    %214 = vector.broadcast %cst_62 : f32 to vector<32x1xf32>
    %215 = arith.addf %213, %214 : vector<32x1xf32>
    %216 = math.rsqrt %215 : vector<32x1xf32>
    %217 = arith.mulf %2, %216 : vector<32x1xf32>
    %218 = arith.mulf %208, %217 : vector<32x1xf32>
    %219 = arith.subf %3, %218 : vector<32x1xf32>
    %220 = vector.broadcast %217 : vector<32x1xf32> to vector<32x512xf32>
    %221 = arith.mulf %201, %220 : vector<32x512xf32>
    %222 = vector.broadcast %219 : vector<32x1xf32> to vector<32x512xf32>
    %223 = arith.addf %221, %222 : vector<32x512xf32>
    %224 = vector.extract_strided_slice %223 {offsets = [0, 0], sizes = [8, 512], strides = [1, 1]} : vector<32x512xf32> to vector<8x512xf32>
    %225 = arith.negf %224 : vector<8x512xf32>
    %226 = math.exp %225 : vector<8x512xf32>
    %cst_63 = arith.constant 1.000000e+00 : f32
    %227 = vector.broadcast %cst_63 : f32 to vector<8x512xf32>
    %228 = arith.addf %227, %226 : vector<8x512xf32>
    %229 = arith.divf %227, %228 : vector<8x512xf32>
    %230 = vector.extract_strided_slice %223 {offsets = [8, 0], sizes = [8, 512], strides = [1, 1]} : vector<32x512xf32> to vector<8x512xf32>
    %231 = arith.negf %230 : vector<8x512xf32>
    %232 = math.exp %231 : vector<8x512xf32>
    %cst_64 = arith.constant 1.000000e+00 : f32
    %233 = vector.broadcast %cst_64 : f32 to vector<8x512xf32>
    %234 = arith.addf %233, %232 : vector<8x512xf32>
    %235 = arith.divf %233, %234 : vector<8x512xf32>
    %236 = vector.extract_strided_slice %223 {offsets = [16, 0], sizes = [8, 512], strides = [1, 1]} : vector<32x512xf32> to vector<8x512xf32>
    %237 = vector.extract_strided_slice %223 {offsets = [24, 0], sizes = [8, 512], strides = [1, 1]} : vector<32x512xf32> to vector<8x512xf32>
    %238 = arith.negf %237 : vector<8x512xf32>
    %239 = math.exp %238 : vector<8x512xf32>
    %cst_65 = arith.constant 1.000000e+00 : f32
    %240 = vector.broadcast %cst_65 : f32 to vector<8x512xf32>
    %241 = arith.addf %240, %239 : vector<8x512xf32>
    %242 = arith.divf %240, %241 : vector<8x512xf32>
    %243 = arith.mulf %235, %157 : vector<8x512xf32>
    %244 = arith.mulf %229, %236 : vector<8x512xf32>
    %245 = arith.addf %243, %244 : vector<8x512xf32>
    %246 = math.tanh %245 : vector<8x512xf32>
    %247 = arith.mulf %242, %246 : vector<8x512xf32>
    %248 = arith.index_cast %c1_i32_47 : i32 to index
    %c0_66 = arith.constant 0 : index
    %c0_67 = arith.constant 0 : index
    %249 = vector.load %arg7[%248, %c0_66, %c0_67] : memref<8x8x512xf32, #tpu.memory_space<vmem>>, vector<1x8x512xf32>
    %250 = vector.shape_cast %249 : vector<1x8x512xf32> to vector<8x512xf32>
    %251 = vector.shape_cast %247 : vector<8x512xf32> to vector<1x8x512xf32>
    tpu.vector_store %arg7[%248, %c0_66, %c0_67], %251 {strides = array<i32>} : memref<8x8x512xf32, #tpu.memory_space<vmem>>, vector<1x8x512xf32>,
    %c2_i32 = arith.constant 2 : i32
    %c17_i32_68 = arith.constant 17 : i32
    %252 = tpu.dynamic_rotate %247 by %c17_i32_68 dim 1 : vector<8x512xf32>, i32 -> vector<8x512xf32>
    %253 = vector.extract_strided_slice %72 {offsets = [0, 0], sizes = [1, 512], strides = [1, 1]} : vector<9x512xf32> to vector<1x512xf32>
    %254 = vector.broadcast %253 : vector<1x512xf32> to vector<8x512xf32>
    %255 = arith.mulf %252, %254 : vector<8x512xf32>
    %c16_i32_69 = arith.constant 16 : i32
    %256 = tpu.dynamic_rotate %247 by %c16_i32_69 dim 1 : vector<8x512xf32>, i32 -> vector<8x512xf32>
    %257 = vector.extract_strided_slice %72 {offsets = [1, 0], sizes = [1, 512], strides = [1, 1]} : vector<9x512xf32> to vector<1x512xf32>
    %258 = vector.broadcast %257 : vector<1x512xf32> to vector<8x512xf32>
    %259 = arith.mulf %256, %258 : vector<8x512xf32>
    %c15_i32_70 = arith.constant 15 : i32
    %260 = tpu.dynamic_rotate %247 by %c15_i32_70 dim 1 : vector<8x512xf32>, i32 -> vector<8x512xf32>
    %261 = vector.extract_strided_slice %72 {offsets = [2, 0], sizes = [1, 512], strides = [1, 1]} : vector<9x512xf32> to vector<1x512xf32>
    %262 = vector.broadcast %261 : vector<1x512xf32> to vector<8x512xf32>
    %263 = arith.mulf %260, %262 : vector<8x512xf32>
    %c1_i32_71 = arith.constant 1 : i32
    %264 = tpu.dynamic_rotate %247 by %c1_i32_71 dim 1 : vector<8x512xf32>, i32 -> vector<8x512xf32>
    %265 = vector.extract_strided_slice %72 {offsets = [3, 0], sizes = [1, 512], strides = [1, 1]} : vector<9x512xf32> to vector<1x512xf32>
    %266 = vector.broadcast %265 : vector<1x512xf32> to vector<8x512xf32>
    %267 = arith.mulf %264, %266 : vector<8x512xf32>
    %c511_i32_72 = arith.constant 511 : i32
    %268 = tpu.dynamic_rotate %247 by %c511_i32_72 dim 1 : vector<8x512xf32>, i32 -> vector<8x512xf32>
    %269 = vector.extract_strided_slice %72 {offsets = [5, 0], sizes = [1, 512], strides = [1, 1]} : vector<9x512xf32> to vector<1x512xf32>
    %270 = vector.broadcast %269 : vector<1x512xf32> to vector<8x512xf32>
    %271 = arith.mulf %268, %270 : vector<8x512xf32>
    %c497_i32_73 = arith.constant 497 : i32
    %272 = tpu.dynamic_rotate %247 by %c497_i32_73 dim 1 : vector<8x512xf32>, i32 -> vector<8x512xf32>
    %273 = vector.extract_strided_slice %72 {offsets = [6, 0], sizes = [1, 512], strides = [1, 1]} : vector<9x512xf32> to vector<1x512xf32>
    %274 = vector.broadcast %273 : vector<1x512xf32> to vector<8x512xf32>
    %275 = arith.mulf %272, %274 : vector<8x512xf32>
    %c496_i32_74 = arith.constant 496 : i32
    %276 = tpu.dynamic_rotate %247 by %c496_i32_74 dim 1 : vector<8x512xf32>, i32 -> vector<8x512xf32>
    %277 = vector.extract_strided_slice %72 {offsets = [7, 0], sizes = [1, 512], strides = [1, 1]} : vector<9x512xf32> to vector<1x512xf32>
    %278 = vector.broadcast %277 : vector<1x512xf32> to vector<8x512xf32>
    %279 = arith.mulf %276, %278 : vector<8x512xf32>
    %c495_i32_75 = arith.constant 495 : i32
    %280 = tpu.dynamic_rotate %247 by %c495_i32_75 dim 1 : vector<8x512xf32>, i32 -> vector<8x512xf32>
    %281 = vector.extract_strided_slice %72 {offsets = [8, 0], sizes = [1, 512], strides = [1, 1]} : vector<9x512xf32> to vector<1x512xf32>
    %282 = vector.broadcast %281 : vector<1x512xf32> to vector<8x512xf32>
    %283 = arith.mulf %280, %282 : vector<8x512xf32>
    %284 = tpu.concatenate %255, %259, %263, %267, %247, %271, %275, %279, %283 in 0 : vector<8x512xf32>, vector<8x512xf32>, vector<8x512xf32>, vector<8x512xf32>, vector<8x512xf32>, vector<8x512xf32>, vector<8x512xf32>, vector<8x512xf32>, vector<8x512xf32> -> vector<72x512xf32>
    %285 = arith.index_cast %c2_i32 : i32 to index
    %c0_76 = arith.constant 0 : index
    %c0_77 = arith.constant 0 : index
    %286 = vector.load %arg8[%285, %c0_76, %c0_77] : memref<8x32x512xf32, #tpu.memory_space<vmem>>, vector<1x32x512xf32>
    %287 = vector.shape_cast %286 : vector<1x32x512xf32> to vector<32x512xf32>
    %cst_78 = arith.constant dense<0.000000e+00> : vector<32x512xf32>
    %288 = tpu.matmul %1, %284, %cst_78 {dimension_numbers = #tpu.dot_dimension_numbers<[1], [0], [0], [1], [0, 0, 1, 1], [], []>} : vector<32x72xf32>, vector<72x512xf32>, vector<32x512xf32> -> vector<32x512xf32>
    %289 = arith.addf %287, %288 : vector<32x512xf32>
    %290 = arith.mulf %289, %289 : vector<32x512xf32>
    %291 = tpu.concatenate %289, %290 in 0 : vector<32x512xf32>, vector<32x512xf32> -> vector<64x512xf32>
    %cst_79 = arith.constant dense<0.000000e+00> : vector<64x128xf32>
    %292 = tpu.matmul %291, %73, %cst_79 {dimension_numbers = #tpu.dot_dimension_numbers<[1], [0], [0], [1], [0, 0, 1, 1], [], []>} : vector<64x512xf32>, vector<512x128xf32>, vector<64x128xf32> -> vector<64x128xf32>
    %293 = vector.extract_strided_slice %292 {offsets = [0, 0], sizes = [64, 1], strides = [1, 1]} : vector<64x128xf32> to vector<64x1xf32>
    %294 = vector.extract_strided_slice %293 {offsets = [0, 0], sizes = [32, 1], strides = [1, 1]} : vector<64x1xf32> to vector<32x1xf32>
    %cst_80 = arith.constant 0.001953125 : f32
    %295 = vector.broadcast %cst_80 : f32 to vector<32x1xf32>
    %296 = arith.mulf %294, %295 : vector<32x1xf32>
    %297 = vector.extract_strided_slice %293 {offsets = [32, 0], sizes = [32, 1], strides = [1, 1]} : vector<64x1xf32> to vector<32x1xf32>
    %cst_81 = arith.constant 0.001953125 : f32
    %298 = vector.broadcast %cst_81 : f32 to vector<32x1xf32>
    %299 = arith.mulf %297, %298 : vector<32x1xf32>
    %300 = arith.mulf %296, %296 : vector<32x1xf32>
    %301 = arith.subf %299, %300 : vector<32x1xf32>
    %cst_82 = arith.constant 9.99999974E-6 : f32
    %302 = vector.broadcast %cst_82 : f32 to vector<32x1xf32>
    %303 = arith.addf %301, %302 : vector<32x1xf32>
    %304 = math.rsqrt %303 : vector<32x1xf32>
    %305 = arith.mulf %2, %304 : vector<32x1xf32>
    %306 = arith.mulf %296, %305 : vector<32x1xf32>
    %307 = arith.subf %3, %306 : vector<32x1xf32>
    %308 = vector.broadcast %305 : vector<32x1xf32> to vector<32x512xf32>
    %309 = arith.mulf %289, %308 : vector<32x512xf32>
    %310 = vector.broadcast %307 : vector<32x1xf32> to vector<32x512xf32>
    %311 = arith.addf %309, %310 : vector<32x512xf32>
    %312 = vector.extract_strided_slice %311 {offsets = [0, 0], sizes = [8, 512], strides = [1, 1]} : vector<32x512xf32> to vector<8x512xf32>
    %313 = arith.negf %312 : vector<8x512xf32>
    %314 = math.exp %313 : vector<8x512xf32>
    %cst_83 = arith.constant 1.000000e+00 : f32
    %315 = vector.broadcast %cst_83 : f32 to vector<8x512xf32>
    %316 = arith.addf %315, %314 : vector<8x512xf32>
    %317 = arith.divf %315, %316 : vector<8x512xf32>
    %318 = vector.extract_strided_slice %311 {offsets = [8, 0], sizes = [8, 512], strides = [1, 1]} : vector<32x512xf32> to vector<8x512xf32>
    %319 = arith.negf %318 : vector<8x512xf32>
    %320 = math.exp %319 : vector<8x512xf32>
    %cst_84 = arith.constant 1.000000e+00 : f32
    %321 = vector.broadcast %cst_84 : f32 to vector<8x512xf32>
    %322 = arith.addf %321, %320 : vector<8x512xf32>
    %323 = arith.divf %321, %322 : vector<8x512xf32>
    %324 = vector.extract_strided_slice %311 {offsets = [16, 0], sizes = [8, 512], strides = [1, 1]} : vector<32x512xf32> to vector<8x512xf32>
    %325 = vector.extract_strided_slice %311 {offsets = [24, 0], sizes = [8, 512], strides = [1, 1]} : vector<32x512xf32> to vector<8x512xf32>
    %326 = arith.negf %325 : vector<8x512xf32>
    %327 = math.exp %326 : vector<8x512xf32>
    %cst_85 = arith.constant 1.000000e+00 : f32
    %328 = vector.broadcast %cst_85 : f32 to vector<8x512xf32>
    %329 = arith.addf %328, %327 : vector<8x512xf32>
    %330 = arith.divf %328, %329 : vector<8x512xf32>
    %331 = arith.mulf %323, %245 : vector<8x512xf32>
    %332 = arith.mulf %317, %324 : vector<8x512xf32>
    %333 = arith.addf %331, %332 : vector<8x512xf32>
    %334 = math.tanh %333 : vector<8x512xf32>
    %335 = arith.mulf %330, %334 : vector<8x512xf32>
    %336 = arith.index_cast %c2_i32 : i32 to index
    %c0_86 = arith.constant 0 : index
    %c0_87 = arith.constant 0 : index
    %337 = vector.load %arg7[%336, %c0_86, %c0_87] : memref<8x8x512xf32, #tpu.memory_space<vmem>>, vector<1x8x512xf32>
    %338 = vector.shape_cast %337 : vector<1x8x512xf32> to vector<8x512xf32>
    %339 = vector.shape_cast %335 : vector<8x512xf32> to vector<1x8x512xf32>
    tpu.vector_store %arg7[%336, %c0_86, %c0_87], %339 {strides = array<i32>} : memref<8x8x512xf32, #tpu.memory_space<vmem>>, vector<1x8x512xf32>,
    %c3_i32 = arith.constant 3 : i32
    %c17_i32_88 = arith.constant 17 : i32
    %340 = tpu.dynamic_rotate %335 by %c17_i32_88 dim 1 : vector<8x512xf32>, i32 -> vector<8x512xf32>
    %341 = vector.extract_strided_slice %72 {offsets = [0, 0], sizes = [1, 512], strides = [1, 1]} : vector<9x512xf32> to vector<1x512xf32>
    %342 = vector.broadcast %341 : vector<1x512xf32> to vector<8x512xf32>
    %343 = arith.mulf %340, %342 : vector<8x512xf32>
    %c16_i32_89 = arith.constant 16 : i32
    %344 = tpu.dynamic_rotate %335 by %c16_i32_89 dim 1 : vector<8x512xf32>, i32 -> vector<8x512xf32>
    %345 = vector.extract_strided_slice %72 {offsets = [1, 0], sizes = [1, 512], strides = [1, 1]} : vector<9x512xf32> to vector<1x512xf32>
    %346 = vector.broadcast %345 : vector<1x512xf32> to vector<8x512xf32>
    %347 = arith.mulf %344, %346 : vector<8x512xf32>
    %c15_i32_90 = arith.constant 15 : i32
    %348 = tpu.dynamic_rotate %335 by %c15_i32_90 dim 1 : vector<8x512xf32>, i32 -> vector<8x512xf32>
    %349 = vector.extract_strided_slice %72 {offsets = [2, 0], sizes = [1, 512], strides = [1, 1]} : vector<9x512xf32> to vector<1x512xf32>
    %350 = vector.broadcast %349 : vector<1x512xf32> to vector<8x512xf32>
    %351 = arith.mulf %348, %350 : vector<8x512xf32>
    %c1_i32_91 = arith.constant 1 : i32
    %352 = tpu.dynamic_rotate %335 by %c1_i32_91 dim 1 : vector<8x512xf32>, i32 -> vector<8x512xf32>
    %353 = vector.extract_strided_slice %72 {offsets = [3, 0], sizes = [1, 512], strides = [1, 1]} : vector<9x512xf32> to vector<1x512xf32>
    %354 = vector.broadcast %353 : vector<1x512xf32> to vector<8x512xf32>
    %355 = arith.mulf %352, %354 : vector<8x512xf32>
    %c511_i32_92 = arith.constant 511 : i32
    %356 = tpu.dynamic_rotate %335 by %c511_i32_92 dim 1 : vector<8x512xf32>, i32 -> vector<8x512xf32>
    %357 = vector.extract_strided_slice %72 {offsets = [5, 0], sizes = [1, 512], strides = [1, 1]} : vector<9x512xf32> to vector<1x512xf32>
    %358 = vector.broadcast %357 : vector<1x512xf32> to vector<8x512xf32>
    %359 = arith.mulf %356, %358 : vector<8x512xf32>
    %c497_i32_93 = arith.constant 497 : i32
    %360 = tpu.dynamic_rotate %335 by %c497_i32_93 dim 1 : vector<8x512xf32>, i32 -> vector<8x512xf32>
    %361 = vector.extract_strided_slice %72 {offsets = [6, 0], sizes = [1, 512], strides = [1, 1]} : vector<9x512xf32> to vector<1x512xf32>
    %362 = vector.broadcast %361 : vector<1x512xf32> to vector<8x512xf32>
    %363 = arith.mulf %360, %362 : vector<8x512xf32>
    %c496_i32_94 = arith.constant 496 : i32
    %364 = tpu.dynamic_rotate %335 by %c496_i32_94 dim 1 : vector<8x512xf32>, i32 -> vector<8x512xf32>
    %365 = vector.extract_strided_slice %72 {offsets = [7, 0], sizes = [1, 512], strides = [1, 1]} : vector<9x512xf32> to vector<1x512xf32>
    %366 = vector.broadcast %365 : vector<1x512xf32> to vector<8x512xf32>
    %367 = arith.mulf %364, %366 : vector<8x512xf32>
    %c495_i32_95 = arith.constant 495 : i32
    %368 = tpu.dynamic_rotate %335 by %c495_i32_95 dim 1 : vector<8x512xf32>, i32 -> vector<8x512xf32>
    %369 = vector.extract_strided_slice %72 {offsets = [8, 0], sizes = [1, 512], strides = [1, 1]} : vector<9x512xf32> to vector<1x512xf32>
    %370 = vector.broadcast %369 : vector<1x512xf32> to vector<8x512xf32>
    %371 = arith.mulf %368, %370 : vector<8x512xf32>
    %372 = tpu.concatenate %343, %347, %351, %355, %335, %359, %363, %367, %371 in 0 : vector<8x512xf32>, vector<8x512xf32>, vector<8x512xf32>, vector<8x512xf32>, vector<8x512xf32>, vector<8x512xf32>, vector<8x512xf32>, vector<8x512xf32>, vector<8x512xf32> -> vector<72x512xf32>
    %373 = arith.index_cast %c3_i32 : i32 to index
    %c0_96 = arith.constant 0 : index
    %c0_97 = arith.constant 0 : index
    %374 = vector.load %arg8[%373, %c0_96, %c0_97] : memref<8x32x512xf32, #tpu.memory_space<vmem>>, vector<1x32x512xf32>
    %375 = vector.shape_cast %374 : vector<1x32x512xf32> to vector<32x512xf32>
    %cst_98 = arith.constant dense<0.000000e+00> : vector<32x512xf32>
    %376 = tpu.matmul %1, %372, %cst_98 {dimension_numbers = #tpu.dot_dimension_numbers<[1], [0], [0], [1], [0, 0, 1, 1], [], []>} : vector<32x72xf32>, vector<72x512xf32>, vector<32x512xf32> -> vector<32x512xf32>
    %377 = arith.addf %375, %376 : vector<32x512xf32>
    %378 = arith.mulf %377, %377 : vector<32x512xf32>
    %379 = tpu.concatenate %377, %378 in 0 : vector<32x512xf32>, vector<32x512xf32> -> vector<64x512xf32>
    %cst_99 = arith.constant dense<0.000000e+00> : vector<64x128xf32>
    %380 = tpu.matmul %379, %73, %cst_99 {dimension_numbers = #tpu.dot_dimension_numbers<[1], [0], [0], [1], [0, 0, 1, 1], [], []>} : vector<64x512xf32>, vector<512x128xf32>, vector<64x128xf32> -> vector<64x128xf32>
    %381 = vector.extract_strided_slice %380 {offsets = [0, 0], sizes = [64, 1], strides = [1, 1]} : vector<64x128xf32> to vector<64x1xf32>
    %382 = vector.extract_strided_slice %381 {offsets = [0, 0], sizes = [32, 1], strides = [1, 1]} : vector<64x1xf32> to vector<32x1xf32>
    %cst_100 = arith.constant 0.001953125 : f32
    %383 = vector.broadcast %cst_100 : f32 to vector<32x1xf32>
    %384 = arith.mulf %382, %383 : vector<32x1xf32>
    %385 = vector.extract_strided_slice %381 {offsets = [32, 0], sizes = [32, 1], strides = [1, 1]} : vector<64x1xf32> to vector<32x1xf32>
    %cst_101 = arith.constant 0.001953125 : f32
    %386 = vector.broadcast %cst_101 : f32 to vector<32x1xf32>
    %387 = arith.mulf %385, %386 : vector<32x1xf32>
    %388 = arith.mulf %384, %384 : vector<32x1xf32>
    %389 = arith.subf %387, %388 : vector<32x1xf32>
    %cst_102 = arith.constant 9.99999974E-6 : f32
    %390 = vector.broadcast %cst_102 : f32 to vector<32x1xf32>
    %391 = arith.addf %389, %390 : vector<32x1xf32>
    %392 = math.rsqrt %391 : vector<32x1xf32>
    %393 = arith.mulf %2, %392 : vector<32x1xf32>
    %394 = arith.mulf %384, %393 : vector<32x1xf32>
    %395 = arith.subf %3, %394 : vector<32x1xf32>
    %396 = vector.broadcast %393 : vector<32x1xf32> to vector<32x512xf32>
    %397 = arith.mulf %377, %396 : vector<32x512xf32>
    %398 = vector.broadcast %395 : vector<32x1xf32> to vector<32x512xf32>
    %399 = arith.addf %397, %398 : vector<32x512xf32>
    %400 = vector.extract_strided_slice %399 {offsets = [0, 0], sizes = [8, 512], strides = [1, 1]} : vector<32x512xf32> to vector<8x512xf32>
    %401 = arith.negf %400 : vector<8x512xf32>
    %402 = math.exp %401 : vector<8x512xf32>
    %cst_103 = arith.constant 1.000000e+00 : f32
    %403 = vector.broadcast %cst_103 : f32 to vector<8x512xf32>
    %404 = arith.addf %403, %402 : vector<8x512xf32>
    %405 = arith.divf %403, %404 : vector<8x512xf32>
    %406 = vector.extract_strided_slice %399 {offsets = [8, 0], sizes = [8, 512], strides = [1, 1]} : vector<32x512xf32> to vector<8x512xf32>
    %407 = arith.negf %406 : vector<8x512xf32>
    %408 = math.exp %407 : vector<8x512xf32>
    %cst_104 = arith.constant 1.000000e+00 : f32
    %409 = vector.broadcast %cst_104 : f32 to vector<8x512xf32>
    %410 = arith.addf %409, %408 : vector<8x512xf32>
    %411 = arith.divf %409, %410 : vector<8x512xf32>
    %412 = vector.extract_strided_slice %399 {offsets = [16, 0], sizes = [8, 512], strides = [1, 1]} : vector<32x512xf32> to vector<8x512xf32>
    %413 = vector.extract_strided_slice %399 {offsets = [24, 0], sizes = [8, 512], strides = [1, 1]} : vector<32x512xf32> to vector<8x512xf32>
    %414 = arith.negf %413 : vector<8x512xf32>
    %415 = math.exp %414 : vector<8x512xf32>
    %cst_105 = arith.constant 1.000000e+00 : f32
    %416 = vector.broadcast %cst_105 : f32 to vector<8x512xf32>
    %417 = arith.addf %416, %415 : vector<8x512xf32>
    %418 = arith.divf %416, %417 : vector<8x512xf32>
    %419 = arith.mulf %411, %333 : vector<8x512xf32>
    %420 = arith.mulf %405, %412 : vector<8x512xf32>
    %421 = arith.addf %419, %420 : vector<8x512xf32>
    %422 = math.tanh %421 : vector<8x512xf32>
    %423 = arith.mulf %418, %422 : vector<8x512xf32>
    %424 = arith.index_cast %c3_i32 : i32 to index
    %c0_106 = arith.constant 0 : index
    %c0_107 = arith.constant 0 : index
    %425 = vector.load %arg7[%424, %c0_106, %c0_107] : memref<8x8x512xf32, #tpu.memory_space<vmem>>, vector<1x8x512xf32>
    %426 = vector.shape_cast %425 : vector<1x8x512xf32> to vector<8x512xf32>
    %427 = vector.shape_cast %423 : vector<8x512xf32> to vector<1x8x512xf32>
    tpu.vector_store %arg7[%424, %c0_106, %c0_107], %427 {strides = array<i32>} : memref<8x8x512xf32, #tpu.memory_space<vmem>>, vector<1x8x512xf32>,
    %c4_i32 = arith.constant 4 : i32
    %c17_i32_108 = arith.constant 17 : i32
    %428 = tpu.dynamic_rotate %423 by %c17_i32_108 dim 1 : vector<8x512xf32>, i32 -> vector<8x512xf32>
    %429 = vector.extract_strided_slice %72 {offsets = [0, 0], sizes = [1, 512], strides = [1, 1]} : vector<9x512xf32> to vector<1x512xf32>
    %430 = vector.broadcast %429 : vector<1x512xf32> to vector<8x512xf32>
    %431 = arith.mulf %428, %430 : vector<8x512xf32>
    %c16_i32_109 = arith.constant 16 : i32
    %432 = tpu.dynamic_rotate %423 by %c16_i32_109 dim 1 : vector<8x512xf32>, i32 -> vector<8x512xf32>
    %433 = vector.extract_strided_slice %72 {offsets = [1, 0], sizes = [1, 512], strides = [1, 1]} : vector<9x512xf32> to vector<1x512xf32>
    %434 = vector.broadcast %433 : vector<1x512xf32> to vector<8x512xf32>
    %435 = arith.mulf %432, %434 : vector<8x512xf32>
    %c15_i32_110 = arith.constant 15 : i32
    %436 = tpu.dynamic_rotate %423 by %c15_i32_110 dim 1 : vector<8x512xf32>, i32 -> vector<8x512xf32>
    %437 = vector.extract_strided_slice %72 {offsets = [2, 0], sizes = [1, 512], strides = [1, 1]} : vector<9x512xf32> to vector<1x512xf32>
    %438 = vector.broadcast %437 : vector<1x512xf32> to vector<8x512xf32>
    %439 = arith.mulf %436, %438 : vector<8x512xf32>
    %c1_i32_111 = arith.constant 1 : i32
    %440 = tpu.dynamic_rotate %423 by %c1_i32_111 dim 1 : vector<8x512xf32>, i32 -> vector<8x512xf32>
    %441 = vector.extract_strided_slice %72 {offsets = [3, 0], sizes = [1, 512], strides = [1, 1]} : vector<9x512xf32> to vector<1x512xf32>
    %442 = vector.broadcast %441 : vector<1x512xf32> to vector<8x512xf32>
    %443 = arith.mulf %440, %442 : vector<8x512xf32>
    %c511_i32_112 = arith.constant 511 : i32
    %444 = tpu.dynamic_rotate %423 by %c511_i32_112 dim 1 : vector<8x512xf32>, i32 -> vector<8x512xf32>
    %445 = vector.extract_strided_slice %72 {offsets = [5, 0], sizes = [1, 512], strides = [1, 1]} : vector<9x512xf32> to vector<1x512xf32>
    %446 = vector.broadcast %445 : vector<1x512xf32> to vector<8x512xf32>
    %447 = arith.mulf %444, %446 : vector<8x512xf32>
    %c497_i32_113 = arith.constant 497 : i32
    %448 = tpu.dynamic_rotate %423 by %c497_i32_113 dim 1 : vector<8x512xf32>, i32 -> vector<8x512xf32>
    %449 = vector.extract_strided_slice %72 {offsets = [6, 0], sizes = [1, 512], strides = [1, 1]} : vector<9x512xf32> to vector<1x512xf32>
    %450 = vector.broadcast %449 : vector<1x512xf32> to vector<8x512xf32>
    %451 = arith.mulf %448, %450 : vector<8x512xf32>
    %c496_i32_114 = arith.constant 496 : i32
    %452 = tpu.dynamic_rotate %423 by %c496_i32_114 dim 1 : vector<8x512xf32>, i32 -> vector<8x512xf32>
    %453 = vector.extract_strided_slice %72 {offsets = [7, 0], sizes = [1, 512], strides = [1, 1]} : vector<9x512xf32> to vector<1x512xf32>
    %454 = vector.broadcast %453 : vector<1x512xf32> to vector<8x512xf32>
    %455 = arith.mulf %452, %454 : vector<8x512xf32>
    %c495_i32_115 = arith.constant 495 : i32
    %456 = tpu.dynamic_rotate %423 by %c495_i32_115 dim 1 : vector<8x512xf32>, i32 -> vector<8x512xf32>
    %457 = vector.extract_strided_slice %72 {offsets = [8, 0], sizes = [1, 512], strides = [1, 1]} : vector<9x512xf32> to vector<1x512xf32>
    %458 = vector.broadcast %457 : vector<1x512xf32> to vector<8x512xf32>
    %459 = arith.mulf %456, %458 : vector<8x512xf32>
    %460 = tpu.concatenate %431, %435, %439, %443, %423, %447, %451, %455, %459 in 0 : vector<8x512xf32>, vector<8x512xf32>, vector<8x512xf32>, vector<8x512xf32>, vector<8x512xf32>, vector<8x512xf32>, vector<8x512xf32>, vector<8x512xf32>, vector<8x512xf32> -> vector<72x512xf32>
    %461 = arith.index_cast %c4_i32 : i32 to index
    %c0_116 = arith.constant 0 : index
    %c0_117 = arith.constant 0 : index
    %462 = vector.load %arg8[%461, %c0_116, %c0_117] : memref<8x32x512xf32, #tpu.memory_space<vmem>>, vector<1x32x512xf32>
    %463 = vector.shape_cast %462 : vector<1x32x512xf32> to vector<32x512xf32>
    %cst_118 = arith.constant dense<0.000000e+00> : vector<32x512xf32>
    %464 = tpu.matmul %1, %460, %cst_118 {dimension_numbers = #tpu.dot_dimension_numbers<[1], [0], [0], [1], [0, 0, 1, 1], [], []>} : vector<32x72xf32>, vector<72x512xf32>, vector<32x512xf32> -> vector<32x512xf32>
    %465 = arith.addf %463, %464 : vector<32x512xf32>
    %466 = arith.mulf %465, %465 : vector<32x512xf32>
    %467 = tpu.concatenate %465, %466 in 0 : vector<32x512xf32>, vector<32x512xf32> -> vector<64x512xf32>
    %cst_119 = arith.constant dense<0.000000e+00> : vector<64x128xf32>
    %468 = tpu.matmul %467, %73, %cst_119 {dimension_numbers = #tpu.dot_dimension_numbers<[1], [0], [0], [1], [0, 0, 1, 1], [], []>} : vector<64x512xf32>, vector<512x128xf32>, vector<64x128xf32> -> vector<64x128xf32>
    %469 = vector.extract_strided_slice %468 {offsets = [0, 0], sizes = [64, 1], strides = [1, 1]} : vector<64x128xf32> to vector<64x1xf32>
    %470 = vector.extract_strided_slice %469 {offsets = [0, 0], sizes = [32, 1], strides = [1, 1]} : vector<64x1xf32> to vector<32x1xf32>
    %cst_120 = arith.constant 0.001953125 : f32
    %471 = vector.broadcast %cst_120 : f32 to vector<32x1xf32>
    %472 = arith.mulf %470, %471 : vector<32x1xf32>
    %473 = vector.extract_strided_slice %469 {offsets = [32, 0], sizes = [32, 1], strides = [1, 1]} : vector<64x1xf32> to vector<32x1xf32>
    %cst_121 = arith.constant 0.001953125 : f32
    %474 = vector.broadcast %cst_121 : f32 to vector<32x1xf32>
    %475 = arith.mulf %473, %474 : vector<32x1xf32>
    %476 = arith.mulf %472, %472 : vector<32x1xf32>
    %477 = arith.subf %475, %476 : vector<32x1xf32>
    %cst_122 = arith.constant 9.99999974E-6 : f32
    %478 = vector.broadcast %cst_122 : f32 to vector<32x1xf32>
    %479 = arith.addf %477, %478 : vector<32x1xf32>
    %480 = math.rsqrt %479 : vector<32x1xf32>
    %481 = arith.mulf %2, %480 : vector<32x1xf32>
    %482 = arith.mulf %472, %481 : vector<32x1xf32>
    %483 = arith.subf %3, %482 : vector<32x1xf32>
    %484 = vector.broadcast %481 : vector<32x1xf32> to vector<32x512xf32>
    %485 = arith.mulf %465, %484 : vector<32x512xf32>
    %486 = vector.broadcast %483 : vector<32x1xf32> to vector<32x512xf32>
    %487 = arith.addf %485, %486 : vector<32x512xf32>
    %488 = vector.extract_strided_slice %487 {offsets = [0, 0], sizes = [8, 512], strides = [1, 1]} : vector<32x512xf32> to vector<8x512xf32>
    %489 = arith.negf %488 : vector<8x512xf32>
    %490 = math.exp %489 : vector<8x512xf32>
    %cst_123 = arith.constant 1.000000e+00 : f32
    %491 = vector.broadcast %cst_123 : f32 to vector<8x512xf32>
    %492 = arith.addf %491, %490 : vector<8x512xf32>
    %493 = arith.divf %491, %492 : vector<8x512xf32>
    %494 = vector.extract_strided_slice %487 {offsets = [8, 0], sizes = [8, 512], strides = [1, 1]} : vector<32x512xf32> to vector<8x512xf32>
    %495 = arith.negf %494 : vector<8x512xf32>
    %496 = math.exp %495 : vector<8x512xf32>
    %cst_124 = arith.constant 1.000000e+00 : f32
    %497 = vector.broadcast %cst_124 : f32 to vector<8x512xf32>
    %498 = arith.addf %497, %496 : vector<8x512xf32>
    %499 = arith.divf %497, %498 : vector<8x512xf32>
    %500 = vector.extract_strided_slice %487 {offsets = [16, 0], sizes = [8, 512], strides = [1, 1]} : vector<32x512xf32> to vector<8x512xf32>
    %501 = vector.extract_strided_slice %487 {offsets = [24, 0], sizes = [8, 512], strides = [1, 1]} : vector<32x512xf32> to vector<8x512xf32>
    %502 = arith.negf %501 : vector<8x512xf32>
    %503 = math.exp %502 : vector<8x512xf32>
    %cst_125 = arith.constant 1.000000e+00 : f32
    %504 = vector.broadcast %cst_125 : f32 to vector<8x512xf32>
    %505 = arith.addf %504, %503 : vector<8x512xf32>
    %506 = arith.divf %504, %505 : vector<8x512xf32>
    %507 = arith.mulf %499, %421 : vector<8x512xf32>
    %508 = arith.mulf %493, %500 : vector<8x512xf32>
    %509 = arith.addf %507, %508 : vector<8x512xf32>
    %510 = math.tanh %509 : vector<8x512xf32>
    %511 = arith.mulf %506, %510 : vector<8x512xf32>
    %512 = arith.index_cast %c4_i32 : i32 to index
    %c0_126 = arith.constant 0 : index
    %c0_127 = arith.constant 0 : index
    %513 = vector.load %arg7[%512, %c0_126, %c0_127] : memref<8x8x512xf32, #tpu.memory_space<vmem>>, vector<1x8x512xf32>
    %514 = vector.shape_cast %513 : vector<1x8x512xf32> to vector<8x512xf32>
    %515 = vector.shape_cast %511 : vector<8x512xf32> to vector<1x8x512xf32>
    tpu.vector_store %arg7[%512, %c0_126, %c0_127], %515 {strides = array<i32>} : memref<8x8x512xf32, #tpu.memory_space<vmem>>, vector<1x8x512xf32>,
    %c5_i32 = arith.constant 5 : i32
    %c17_i32_128 = arith.constant 17 : i32
    %516 = tpu.dynamic_rotate %511 by %c17_i32_128 dim 1 : vector<8x512xf32>, i32 -> vector<8x512xf32>
    %517 = vector.extract_strided_slice %72 {offsets = [0, 0], sizes = [1, 512], strides = [1, 1]} : vector<9x512xf32> to vector<1x512xf32>
    %518 = vector.broadcast %517 : vector<1x512xf32> to vector<8x512xf32>
    %519 = arith.mulf %516, %518 : vector<8x512xf32>
    %c16_i32_129 = arith.constant 16 : i32
    %520 = tpu.dynamic_rotate %511 by %c16_i32_129 dim 1 : vector<8x512xf32>, i32 -> vector<8x512xf32>
    %521 = vector.extract_strided_slice %72 {offsets = [1, 0], sizes = [1, 512], strides = [1, 1]} : vector<9x512xf32> to vector<1x512xf32>
    %522 = vector.broadcast %521 : vector<1x512xf32> to vector<8x512xf32>
    %523 = arith.mulf %520, %522 : vector<8x512xf32>
    %c15_i32_130 = arith.constant 15 : i32
    %524 = tpu.dynamic_rotate %511 by %c15_i32_130 dim 1 : vector<8x512xf32>, i32 -> vector<8x512xf32>
    %525 = vector.extract_strided_slice %72 {offsets = [2, 0], sizes = [1, 512], strides = [1, 1]} : vector<9x512xf32> to vector<1x512xf32>
    %526 = vector.broadcast %525 : vector<1x512xf32> to vector<8x512xf32>
    %527 = arith.mulf %524, %526 : vector<8x512xf32>
    %c1_i32_131 = arith.constant 1 : i32
    %528 = tpu.dynamic_rotate %511 by %c1_i32_131 dim 1 : vector<8x512xf32>, i32 -> vector<8x512xf32>
    %529 = vector.extract_strided_slice %72 {offsets = [3, 0], sizes = [1, 512], strides = [1, 1]} : vector<9x512xf32> to vector<1x512xf32>
    %530 = vector.broadcast %529 : vector<1x512xf32> to vector<8x512xf32>
    %531 = arith.mulf %528, %530 : vector<8x512xf32>
    %c511_i32_132 = arith.constant 511 : i32
    %532 = tpu.dynamic_rotate %511 by %c511_i32_132 dim 1 : vector<8x512xf32>, i32 -> vector<8x512xf32>
    %533 = vector.extract_strided_slice %72 {offsets = [5, 0], sizes = [1, 512], strides = [1, 1]} : vector<9x512xf32> to vector<1x512xf32>
    %534 = vector.broadcast %533 : vector<1x512xf32> to vector<8x512xf32>
    %535 = arith.mulf %532, %534 : vector<8x512xf32>
    %c497_i32_133 = arith.constant 497 : i32
    %536 = tpu.dynamic_rotate %511 by %c497_i32_133 dim 1 : vector<8x512xf32>, i32 -> vector<8x512xf32>
    %537 = vector.extract_strided_slice %72 {offsets = [6, 0], sizes = [1, 512], strides = [1, 1]} : vector<9x512xf32> to vector<1x512xf32>
    %538 = vector.broadcast %537 : vector<1x512xf32> to vector<8x512xf32>
    %539 = arith.mulf %536, %538 : vector<8x512xf32>
    %c496_i32_134 = arith.constant 496 : i32
    %540 = tpu.dynamic_rotate %511 by %c496_i32_134 dim 1 : vector<8x512xf32>, i32 -> vector<8x512xf32>
    %541 = vector.extract_strided_slice %72 {offsets = [7, 0], sizes = [1, 512], strides = [1, 1]} : vector<9x512xf32> to vector<1x512xf32>
    %542 = vector.broadcast %541 : vector<1x512xf32> to vector<8x512xf32>
    %543 = arith.mulf %540, %542 : vector<8x512xf32>
    %c495_i32_135 = arith.constant 495 : i32
    %544 = tpu.dynamic_rotate %511 by %c495_i32_135 dim 1 : vector<8x512xf32>, i32 -> vector<8x512xf32>
    %545 = vector.extract_strided_slice %72 {offsets = [8, 0], sizes = [1, 512], strides = [1, 1]} : vector<9x512xf32> to vector<1x512xf32>
    %546 = vector.broadcast %545 : vector<1x512xf32> to vector<8x512xf32>
    %547 = arith.mulf %544, %546 : vector<8x512xf32>
    %548 = tpu.concatenate %519, %523, %527, %531, %511, %535, %539, %543, %547 in 0 : vector<8x512xf32>, vector<8x512xf32>, vector<8x512xf32>, vector<8x512xf32>, vector<8x512xf32>, vector<8x512xf32>, vector<8x512xf32>, vector<8x512xf32>, vector<8x512xf32> -> vector<72x512xf32>
    %549 = arith.index_cast %c5_i32 : i32 to index
    %c0_136 = arith.constant 0 : index
    %c0_137 = arith.constant 0 : index
    %550 = vector.load %arg8[%549, %c0_136, %c0_137] : memref<8x32x512xf32, #tpu.memory_space<vmem>>, vector<1x32x512xf32>
    %551 = vector.shape_cast %550 : vector<1x32x512xf32> to vector<32x512xf32>
    %cst_138 = arith.constant dense<0.000000e+00> : vector<32x512xf32>
    %552 = tpu.matmul %1, %548, %cst_138 {dimension_numbers = #tpu.dot_dimension_numbers<[1], [0], [0], [1], [0, 0, 1, 1], [], []>} : vector<32x72xf32>, vector<72x512xf32>, vector<32x512xf32> -> vector<32x512xf32>
    %553 = arith.addf %551, %552 : vector<32x512xf32>
    %554 = arith.mulf %553, %553 : vector<32x512xf32>
    %555 = tpu.concatenate %553, %554 in 0 : vector<32x512xf32>, vector<32x512xf32> -> vector<64x512xf32>
    %cst_139 = arith.constant dense<0.000000e+00> : vector<64x128xf32>
    %556 = tpu.matmul %555, %73, %cst_139 {dimension_numbers = #tpu.dot_dimension_numbers<[1], [0], [0], [1], [0, 0, 1, 1], [], []>} : vector<64x512xf32>, vector<512x128xf32>, vector<64x128xf32> -> vector<64x128xf32>
    %557 = vector.extract_strided_slice %556 {offsets = [0, 0], sizes = [64, 1], strides = [1, 1]} : vector<64x128xf32> to vector<64x1xf32>
    %558 = vector.extract_strided_slice %557 {offsets = [0, 0], sizes = [32, 1], strides = [1, 1]} : vector<64x1xf32> to vector<32x1xf32>
    %cst_140 = arith.constant 0.001953125 : f32
    %559 = vector.broadcast %cst_140 : f32 to vector<32x1xf32>
    %560 = arith.mulf %558, %559 : vector<32x1xf32>
    %561 = vector.extract_strided_slice %557 {offsets = [32, 0], sizes = [32, 1], strides = [1, 1]} : vector<64x1xf32> to vector<32x1xf32>
    %cst_141 = arith.constant 0.001953125 : f32
    %562 = vector.broadcast %cst_141 : f32 to vector<32x1xf32>
    %563 = arith.mulf %561, %562 : vector<32x1xf32>
    %564 = arith.mulf %560, %560 : vector<32x1xf32>
    %565 = arith.subf %563, %564 : vector<32x1xf32>
    %cst_142 = arith.constant 9.99999974E-6 : f32
    %566 = vector.broadcast %cst_142 : f32 to vector<32x1xf32>
    %567 = arith.addf %565, %566 : vector<32x1xf32>
    %568 = math.rsqrt %567 : vector<32x1xf32>
    %569 = arith.mulf %2, %568 : vector<32x1xf32>
    %570 = arith.mulf %560, %569 : vector<32x1xf32>
    %571 = arith.subf %3, %570 : vector<32x1xf32>
    %572 = vector.broadcast %569 : vector<32x1xf32> to vector<32x512xf32>
    %573 = arith.mulf %553, %572 : vector<32x512xf32>
    %574 = vector.broadcast %571 : vector<32x1xf32> to vector<32x512xf32>
    %575 = arith.addf %573, %574 : vector<32x512xf32>
    %576 = vector.extract_strided_slice %575 {offsets = [0, 0], sizes = [8, 512], strides = [1, 1]} : vector<32x512xf32> to vector<8x512xf32>
    %577 = arith.negf %576 : vector<8x512xf32>
    %578 = math.exp %577 : vector<8x512xf32>
    %cst_143 = arith.constant 1.000000e+00 : f32
    %579 = vector.broadcast %cst_143 : f32 to vector<8x512xf32>
    %580 = arith.addf %579, %578 : vector<8x512xf32>
    %581 = arith.divf %579, %580 : vector<8x512xf32>
    %582 = vector.extract_strided_slice %575 {offsets = [8, 0], sizes = [8, 512], strides = [1, 1]} : vector<32x512xf32> to vector<8x512xf32>
    %583 = arith.negf %582 : vector<8x512xf32>
    %584 = math.exp %583 : vector<8x512xf32>
    %cst_144 = arith.constant 1.000000e+00 : f32
    %585 = vector.broadcast %cst_144 : f32 to vector<8x512xf32>
    %586 = arith.addf %585, %584 : vector<8x512xf32>
    %587 = arith.divf %585, %586 : vector<8x512xf32>
    %588 = vector.extract_strided_slice %575 {offsets = [16, 0], sizes = [8, 512], strides = [1, 1]} : vector<32x512xf32> to vector<8x512xf32>
    %589 = vector.extract_strided_slice %575 {offsets = [24, 0], sizes = [8, 512], strides = [1, 1]} : vector<32x512xf32> to vector<8x512xf32>
    %590 = arith.negf %589 : vector<8x512xf32>
    %591 = math.exp %590 : vector<8x512xf32>
    %cst_145 = arith.constant 1.000000e+00 : f32
    %592 = vector.broadcast %cst_145 : f32 to vector<8x512xf32>
    %593 = arith.addf %592, %591 : vector<8x512xf32>
    %594 = arith.divf %592, %593 : vector<8x512xf32>
    %595 = arith.mulf %587, %509 : vector<8x512xf32>
    %596 = arith.mulf %581, %588 : vector<8x512xf32>
    %597 = arith.addf %595, %596 : vector<8x512xf32>
    %598 = math.tanh %597 : vector<8x512xf32>
    %599 = arith.mulf %594, %598 : vector<8x512xf32>
    %600 = arith.index_cast %c5_i32 : i32 to index
    %c0_146 = arith.constant 0 : index
    %c0_147 = arith.constant 0 : index
    %601 = vector.load %arg7[%600, %c0_146, %c0_147] : memref<8x8x512xf32, #tpu.memory_space<vmem>>, vector<1x8x512xf32>
    %602 = vector.shape_cast %601 : vector<1x8x512xf32> to vector<8x512xf32>
    %603 = vector.shape_cast %599 : vector<8x512xf32> to vector<1x8x512xf32>
    tpu.vector_store %arg7[%600, %c0_146, %c0_147], %603 {strides = array<i32>} : memref<8x8x512xf32, #tpu.memory_space<vmem>>, vector<1x8x512xf32>,
    %c6_i32 = arith.constant 6 : i32
    %c17_i32_148 = arith.constant 17 : i32
    %604 = tpu.dynamic_rotate %599 by %c17_i32_148 dim 1 : vector<8x512xf32>, i32 -> vector<8x512xf32>
    %605 = vector.extract_strided_slice %72 {offsets = [0, 0], sizes = [1, 512], strides = [1, 1]} : vector<9x512xf32> to vector<1x512xf32>
    %606 = vector.broadcast %605 : vector<1x512xf32> to vector<8x512xf32>
    %607 = arith.mulf %604, %606 : vector<8x512xf32>
    %c16_i32_149 = arith.constant 16 : i32
    %608 = tpu.dynamic_rotate %599 by %c16_i32_149 dim 1 : vector<8x512xf32>, i32 -> vector<8x512xf32>
    %609 = vector.extract_strided_slice %72 {offsets = [1, 0], sizes = [1, 512], strides = [1, 1]} : vector<9x512xf32> to vector<1x512xf32>
    %610 = vector.broadcast %609 : vector<1x512xf32> to vector<8x512xf32>
    %611 = arith.mulf %608, %610 : vector<8x512xf32>
    %c15_i32_150 = arith.constant 15 : i32
    %612 = tpu.dynamic_rotate %599 by %c15_i32_150 dim 1 : vector<8x512xf32>, i32 -> vector<8x512xf32>
    %613 = vector.extract_strided_slice %72 {offsets = [2, 0], sizes = [1, 512], strides = [1, 1]} : vector<9x512xf32> to vector<1x512xf32>
    %614 = vector.broadcast %613 : vector<1x512xf32> to vector<8x512xf32>
    %615 = arith.mulf %612, %614 : vector<8x512xf32>
    %c1_i32_151 = arith.constant 1 : i32
    %616 = tpu.dynamic_rotate %599 by %c1_i32_151 dim 1 : vector<8x512xf32>, i32 -> vector<8x512xf32>
    %617 = vector.extract_strided_slice %72 {offsets = [3, 0], sizes = [1, 512], strides = [1, 1]} : vector<9x512xf32> to vector<1x512xf32>
    %618 = vector.broadcast %617 : vector<1x512xf32> to vector<8x512xf32>
    %619 = arith.mulf %616, %618 : vector<8x512xf32>
    %c511_i32_152 = arith.constant 511 : i32
    %620 = tpu.dynamic_rotate %599 by %c511_i32_152 dim 1 : vector<8x512xf32>, i32 -> vector<8x512xf32>
    %621 = vector.extract_strided_slice %72 {offsets = [5, 0], sizes = [1, 512], strides = [1, 1]} : vector<9x512xf32> to vector<1x512xf32>
    %622 = vector.broadcast %621 : vector<1x512xf32> to vector<8x512xf32>
    %623 = arith.mulf %620, %622 : vector<8x512xf32>
    %c497_i32_153 = arith.constant 497 : i32
    %624 = tpu.dynamic_rotate %599 by %c497_i32_153 dim 1 : vector<8x512xf32>, i32 -> vector<8x512xf32>
    %625 = vector.extract_strided_slice %72 {offsets = [6, 0], sizes = [1, 512], strides = [1, 1]} : vector<9x512xf32> to vector<1x512xf32>
    %626 = vector.broadcast %625 : vector<1x512xf32> to vector<8x512xf32>
    %627 = arith.mulf %624, %626 : vector<8x512xf32>
    %c496_i32_154 = arith.constant 496 : i32
    %628 = tpu.dynamic_rotate %599 by %c496_i32_154 dim 1 : vector<8x512xf32>, i32 -> vector<8x512xf32>
    %629 = vector.extract_strided_slice %72 {offsets = [7, 0], sizes = [1, 512], strides = [1, 1]} : vector<9x512xf32> to vector<1x512xf32>
    %630 = vector.broadcast %629 : vector<1x512xf32> to vector<8x512xf32>
    %631 = arith.mulf %628, %630 : vector<8x512xf32>
    %c495_i32_155 = arith.constant 495 : i32
    %632 = tpu.dynamic_rotate %599 by %c495_i32_155 dim 1 : vector<8x512xf32>, i32 -> vector<8x512xf32>
    %633 = vector.extract_strided_slice %72 {offsets = [8, 0], sizes = [1, 512], strides = [1, 1]} : vector<9x512xf32> to vector<1x512xf32>
    %634 = vector.broadcast %633 : vector<1x512xf32> to vector<8x512xf32>
    %635 = arith.mulf %632, %634 : vector<8x512xf32>
    %636 = tpu.concatenate %607, %611, %615, %619, %599, %623, %627, %631, %635 in 0 : vector<8x512xf32>, vector<8x512xf32>, vector<8x512xf32>, vector<8x512xf32>, vector<8x512xf32>, vector<8x512xf32>, vector<8x512xf32>, vector<8x512xf32>, vector<8x512xf32> -> vector<72x512xf32>
    %637 = arith.index_cast %c6_i32 : i32 to index
    %c0_156 = arith.constant 0 : index
    %c0_157 = arith.constant 0 : index
    %638 = vector.load %arg8[%637, %c0_156, %c0_157] : memref<8x32x512xf32, #tpu.memory_space<vmem>>, vector<1x32x512xf32>
    %639 = vector.shape_cast %638 : vector<1x32x512xf32> to vector<32x512xf32>
    %cst_158 = arith.constant dense<0.000000e+00> : vector<32x512xf32>
    %640 = tpu.matmul %1, %636, %cst_158 {dimension_numbers = #tpu.dot_dimension_numbers<[1], [0], [0], [1], [0, 0, 1, 1], [], []>} : vector<32x72xf32>, vector<72x512xf32>, vector<32x512xf32> -> vector<32x512xf32>
    %641 = arith.addf %639, %640 : vector<32x512xf32>
    %642 = arith.mulf %641, %641 : vector<32x512xf32>
    %643 = tpu.concatenate %641, %642 in 0 : vector<32x512xf32>, vector<32x512xf32> -> vector<64x512xf32>
    %cst_159 = arith.constant dense<0.000000e+00> : vector<64x128xf32>
    %644 = tpu.matmul %643, %73, %cst_159 {dimension_numbers = #tpu.dot_dimension_numbers<[1], [0], [0], [1], [0, 0, 1, 1], [], []>} : vector<64x512xf32>, vector<512x128xf32>, vector<64x128xf32> -> vector<64x128xf32>
    %645 = vector.extract_strided_slice %644 {offsets = [0, 0], sizes = [64, 1], strides = [1, 1]} : vector<64x128xf32> to vector<64x1xf32>
    %646 = vector.extract_strided_slice %645 {offsets = [0, 0], sizes = [32, 1], strides = [1, 1]} : vector<64x1xf32> to vector<32x1xf32>
    %cst_160 = arith.constant 0.001953125 : f32
    %647 = vector.broadcast %cst_160 : f32 to vector<32x1xf32>
    %648 = arith.mulf %646, %647 : vector<32x1xf32>
    %649 = vector.extract_strided_slice %645 {offsets = [32, 0], sizes = [32, 1], strides = [1, 1]} : vector<64x1xf32> to vector<32x1xf32>
    %cst_161 = arith.constant 0.001953125 : f32
    %650 = vector.broadcast %cst_161 : f32 to vector<32x1xf32>
    %651 = arith.mulf %649, %650 : vector<32x1xf32>
    %652 = arith.mulf %648, %648 : vector<32x1xf32>
    %653 = arith.subf %651, %652 : vector<32x1xf32>
    %cst_162 = arith.constant 9.99999974E-6 : f32
    %654 = vector.broadcast %cst_162 : f32 to vector<32x1xf32>
    %655 = arith.addf %653, %654 : vector<32x1xf32>
    %656 = math.rsqrt %655 : vector<32x1xf32>
    %657 = arith.mulf %2, %656 : vector<32x1xf32>
    %658 = arith.mulf %648, %657 : vector<32x1xf32>
    %659 = arith.subf %3, %658 : vector<32x1xf32>
    %660 = vector.broadcast %657 : vector<32x1xf32> to vector<32x512xf32>
    %661 = arith.mulf %641, %660 : vector<32x512xf32>
    %662 = vector.broadcast %659 : vector<32x1xf32> to vector<32x512xf32>
    %663 = arith.addf %661, %662 : vector<32x512xf32>
    %664 = vector.extract_strided_slice %663 {offsets = [0, 0], sizes = [8, 512], strides = [1, 1]} : vector<32x512xf32> to vector<8x512xf32>
    %665 = arith.negf %664 : vector<8x512xf32>
    %666 = math.exp %665 : vector<8x512xf32>
    %cst_163 = arith.constant 1.000000e+00 : f32
    %667 = vector.broadcast %cst_163 : f32 to vector<8x512xf32>
    %668 = arith.addf %667, %666 : vector<8x512xf32>
    %669 = arith.divf %667, %668 : vector<8x512xf32>
    %670 = vector.extract_strided_slice %663 {offsets = [8, 0], sizes = [8, 512], strides = [1, 1]} : vector<32x512xf32> to vector<8x512xf32>
    %671 = arith.negf %670 : vector<8x512xf32>
    %672 = math.exp %671 : vector<8x512xf32>
    %cst_164 = arith.constant 1.000000e+00 : f32
    %673 = vector.broadcast %cst_164 : f32 to vector<8x512xf32>
    %674 = arith.addf %673, %672 : vector<8x512xf32>
    %675 = arith.divf %673, %674 : vector<8x512xf32>
    %676 = vector.extract_strided_slice %663 {offsets = [16, 0], sizes = [8, 512], strides = [1, 1]} : vector<32x512xf32> to vector<8x512xf32>
    %677 = vector.extract_strided_slice %663 {offsets = [24, 0], sizes = [8, 512], strides = [1, 1]} : vector<32x512xf32> to vector<8x512xf32>
    %678 = arith.negf %677 : vector<8x512xf32>
    %679 = math.exp %678 : vector<8x512xf32>
    %cst_165 = arith.constant 1.000000e+00 : f32
    %680 = vector.broadcast %cst_165 : f32 to vector<8x512xf32>
    %681 = arith.addf %680, %679 : vector<8x512xf32>
    %682 = arith.divf %680, %681 : vector<8x512xf32>
    %683 = arith.mulf %675, %597 : vector<8x512xf32>
    %684 = arith.mulf %669, %676 : vector<8x512xf32>
    %685 = arith.addf %683, %684 : vector<8x512xf32>
    %686 = math.tanh %685 : vector<8x512xf32>
    %687 = arith.mulf %682, %686 : vector<8x512xf32>
    %688 = arith.index_cast %c6_i32 : i32 to index
    %c0_166 = arith.constant 0 : index
    %c0_167 = arith.constant 0 : index
    %689 = vector.load %arg7[%688, %c0_166, %c0_167] : memref<8x8x512xf32, #tpu.memory_space<vmem>>, vector<1x8x512xf32>
    %690 = vector.shape_cast %689 : vector<1x8x512xf32> to vector<8x512xf32>
    %691 = vector.shape_cast %687 : vector<8x512xf32> to vector<1x8x512xf32>
    tpu.vector_store %arg7[%688, %c0_166, %c0_167], %691 {strides = array<i32>} : memref<8x8x512xf32, #tpu.memory_space<vmem>>, vector<1x8x512xf32>,
    %c7_i32 = arith.constant 7 : i32
    %c17_i32_168 = arith.constant 17 : i32
    %692 = tpu.dynamic_rotate %687 by %c17_i32_168 dim 1 : vector<8x512xf32>, i32 -> vector<8x512xf32>
    %693 = vector.extract_strided_slice %72 {offsets = [0, 0], sizes = [1, 512], strides = [1, 1]} : vector<9x512xf32> to vector<1x512xf32>
    %694 = vector.broadcast %693 : vector<1x512xf32> to vector<8x512xf32>
    %695 = arith.mulf %692, %694 : vector<8x512xf32>
    %c16_i32_169 = arith.constant 16 : i32
    %696 = tpu.dynamic_rotate %687 by %c16_i32_169 dim 1 : vector<8x512xf32>, i32 -> vector<8x512xf32>
    %697 = vector.extract_strided_slice %72 {offsets = [1, 0], sizes = [1, 512], strides = [1, 1]} : vector<9x512xf32> to vector<1x512xf32>
    %698 = vector.broadcast %697 : vector<1x512xf32> to vector<8x512xf32>
    %699 = arith.mulf %696, %698 : vector<8x512xf32>
    %c15_i32_170 = arith.constant 15 : i32
    %700 = tpu.dynamic_rotate %687 by %c15_i32_170 dim 1 : vector<8x512xf32>, i32 -> vector<8x512xf32>
    %701 = vector.extract_strided_slice %72 {offsets = [2, 0], sizes = [1, 512], strides = [1, 1]} : vector<9x512xf32> to vector<1x512xf32>
    %702 = vector.broadcast %701 : vector<1x512xf32> to vector<8x512xf32>
    %703 = arith.mulf %700, %702 : vector<8x512xf32>
    %c1_i32_171 = arith.constant 1 : i32
    %704 = tpu.dynamic_rotate %687 by %c1_i32_171 dim 1 : vector<8x512xf32>, i32 -> vector<8x512xf32>
    %705 = vector.extract_strided_slice %72 {offsets = [3, 0], sizes = [1, 512], strides = [1, 1]} : vector<9x512xf32> to vector<1x512xf32>
    %706 = vector.broadcast %705 : vector<1x512xf32> to vector<8x512xf32>
    %707 = arith.mulf %704, %706 : vector<8x512xf32>
    %c511_i32_172 = arith.constant 511 : i32
    %708 = tpu.dynamic_rotate %687 by %c511_i32_172 dim 1 : vector<8x512xf32>, i32 -> vector<8x512xf32>
    %709 = vector.extract_strided_slice %72 {offsets = [5, 0], sizes = [1, 512], strides = [1, 1]} : vector<9x512xf32> to vector<1x512xf32>
    %710 = vector.broadcast %709 : vector<1x512xf32> to vector<8x512xf32>
    %711 = arith.mulf %708, %710 : vector<8x512xf32>
    %c497_i32_173 = arith.constant 497 : i32
    %712 = tpu.dynamic_rotate %687 by %c497_i32_173 dim 1 : vector<8x512xf32>, i32 -> vector<8x512xf32>
    %713 = vector.extract_strided_slice %72 {offsets = [6, 0], sizes = [1, 512], strides = [1, 1]} : vector<9x512xf32> to vector<1x512xf32>
    %714 = vector.broadcast %713 : vector<1x512xf32> to vector<8x512xf32>
    %715 = arith.mulf %712, %714 : vector<8x512xf32>
    %c496_i32_174 = arith.constant 496 : i32
    %716 = tpu.dynamic_rotate %687 by %c496_i32_174 dim 1 : vector<8x512xf32>, i32 -> vector<8x512xf32>
    %717 = vector.extract_strided_slice %72 {offsets = [7, 0], sizes = [1, 512], strides = [1, 1]} : vector<9x512xf32> to vector<1x512xf32>
    %718 = vector.broadcast %717 : vector<1x512xf32> to vector<8x512xf32>
    %719 = arith.mulf %716, %718 : vector<8x512xf32>
    %c495_i32_175 = arith.constant 495 : i32
    %720 = tpu.dynamic_rotate %687 by %c495_i32_175 dim 1 : vector<8x512xf32>, i32 -> vector<8x512xf32>
    %721 = vector.extract_strided_slice %72 {offsets = [8, 0], sizes = [1, 512], strides = [1, 1]} : vector<9x512xf32> to vector<1x512xf32>
    %722 = vector.broadcast %721 : vector<1x512xf32> to vector<8x512xf32>
    %723 = arith.mulf %720, %722 : vector<8x512xf32>
    %724 = tpu.concatenate %695, %699, %703, %707, %687, %711, %715, %719, %723 in 0 : vector<8x512xf32>, vector<8x512xf32>, vector<8x512xf32>, vector<8x512xf32>, vector<8x512xf32>, vector<8x512xf32>, vector<8x512xf32>, vector<8x512xf32>, vector<8x512xf32> -> vector<72x512xf32>
    %725 = arith.index_cast %c7_i32 : i32 to index
    %c0_176 = arith.constant 0 : index
    %c0_177 = arith.constant 0 : index
    %726 = vector.load %arg8[%725, %c0_176, %c0_177] : memref<8x32x512xf32, #tpu.memory_space<vmem>>, vector<1x32x512xf32>
    %727 = vector.shape_cast %726 : vector<1x32x512xf32> to vector<32x512xf32>
    %cst_178 = arith.constant dense<0.000000e+00> : vector<32x512xf32>
    %728 = tpu.matmul %1, %724, %cst_178 {dimension_numbers = #tpu.dot_dimension_numbers<[1], [0], [0], [1], [0, 0, 1, 1], [], []>} : vector<32x72xf32>, vector<72x512xf32>, vector<32x512xf32> -> vector<32x512xf32>
    %729 = arith.addf %727, %728 : vector<32x512xf32>
    %730 = arith.mulf %729, %729 : vector<32x512xf32>
    %731 = tpu.concatenate %729, %730 in 0 : vector<32x512xf32>, vector<32x512xf32> -> vector<64x512xf32>
    %cst_179 = arith.constant dense<0.000000e+00> : vector<64x128xf32>
    %732 = tpu.matmul %731, %73, %cst_179 {dimension_numbers = #tpu.dot_dimension_numbers<[1], [0], [0], [1], [0, 0, 1, 1], [], []>} : vector<64x512xf32>, vector<512x128xf32>, vector<64x128xf32> -> vector<64x128xf32>
    %733 = vector.extract_strided_slice %732 {offsets = [0, 0], sizes = [64, 1], strides = [1, 1]} : vector<64x128xf32> to vector<64x1xf32>
    %734 = vector.extract_strided_slice %733 {offsets = [0, 0], sizes = [32, 1], strides = [1, 1]} : vector<64x1xf32> to vector<32x1xf32>
    %cst_180 = arith.constant 0.001953125 : f32
    %735 = vector.broadcast %cst_180 : f32 to vector<32x1xf32>
    %736 = arith.mulf %734, %735 : vector<32x1xf32>
    %737 = vector.extract_strided_slice %733 {offsets = [32, 0], sizes = [32, 1], strides = [1, 1]} : vector<64x1xf32> to vector<32x1xf32>
    %cst_181 = arith.constant 0.001953125 : f32
    %738 = vector.broadcast %cst_181 : f32 to vector<32x1xf32>
    %739 = arith.mulf %737, %738 : vector<32x1xf32>
    %740 = arith.mulf %736, %736 : vector<32x1xf32>
    %741 = arith.subf %739, %740 : vector<32x1xf32>
    %cst_182 = arith.constant 9.99999974E-6 : f32
    %742 = vector.broadcast %cst_182 : f32 to vector<32x1xf32>
    %743 = arith.addf %741, %742 : vector<32x1xf32>
    %744 = math.rsqrt %743 : vector<32x1xf32>
    %745 = arith.mulf %2, %744 : vector<32x1xf32>
    %746 = arith.mulf %736, %745 : vector<32x1xf32>
    %747 = arith.subf %3, %746 : vector<32x1xf32>
    %748 = vector.broadcast %745 : vector<32x1xf32> to vector<32x512xf32>
    %749 = arith.mulf %729, %748 : vector<32x512xf32>
    %750 = vector.broadcast %747 : vector<32x1xf32> to vector<32x512xf32>
    %751 = arith.addf %749, %750 : vector<32x512xf32>
    %752 = vector.extract_strided_slice %751 {offsets = [0, 0], sizes = [8, 512], strides = [1, 1]} : vector<32x512xf32> to vector<8x512xf32>
    %753 = arith.negf %752 : vector<8x512xf32>
    %754 = math.exp %753 : vector<8x512xf32>
    %cst_183 = arith.constant 1.000000e+00 : f32
    %755 = vector.broadcast %cst_183 : f32 to vector<8x512xf32>
    %756 = arith.addf %755, %754 : vector<8x512xf32>
    %757 = arith.divf %755, %756 : vector<8x512xf32>
    %758 = vector.extract_strided_slice %751 {offsets = [8, 0], sizes = [8, 512], strides = [1, 1]} : vector<32x512xf32> to vector<8x512xf32>
    %759 = arith.negf %758 : vector<8x512xf32>
    %760 = math.exp %759 : vector<8x512xf32>
    %cst_184 = arith.constant 1.000000e+00 : f32
    %761 = vector.broadcast %cst_184 : f32 to vector<8x512xf32>
    %762 = arith.addf %761, %760 : vector<8x512xf32>
    %763 = arith.divf %761, %762 : vector<8x512xf32>
    %764 = vector.extract_strided_slice %751 {offsets = [16, 0], sizes = [8, 512], strides = [1, 1]} : vector<32x512xf32> to vector<8x512xf32>
    %765 = vector.extract_strided_slice %751 {offsets = [24, 0], sizes = [8, 512], strides = [1, 1]} : vector<32x512xf32> to vector<8x512xf32>
    %766 = arith.negf %765 : vector<8x512xf32>
    %767 = math.exp %766 : vector<8x512xf32>
    %cst_185 = arith.constant 1.000000e+00 : f32
    %768 = vector.broadcast %cst_185 : f32 to vector<8x512xf32>
    %769 = arith.addf %768, %767 : vector<8x512xf32>
    %770 = arith.divf %768, %769 : vector<8x512xf32>
    %771 = arith.mulf %763, %685 : vector<8x512xf32>
    %772 = arith.mulf %757, %764 : vector<8x512xf32>
    %773 = arith.addf %771, %772 : vector<8x512xf32>
    %774 = math.tanh %773 : vector<8x512xf32>
    %775 = arith.mulf %770, %774 : vector<8x512xf32>
    %776 = arith.index_cast %c7_i32 : i32 to index
    %c0_186 = arith.constant 0 : index
    %c0_187 = arith.constant 0 : index
    %777 = vector.load %arg7[%776, %c0_186, %c0_187] : memref<8x8x512xf32, #tpu.memory_space<vmem>>, vector<1x8x512xf32>
    %778 = vector.shape_cast %777 : vector<1x8x512xf32> to vector<8x512xf32>
    %779 = vector.shape_cast %775 : vector<8x512xf32> to vector<1x8x512xf32>
    tpu.vector_store %arg7[%776, %c0_186, %c0_187], %779 {strides = array<i32>} : memref<8x8x512xf32, #tpu.memory_space<vmem>>, vector<1x8x512xf32>,
    %c8_i32 = arith.constant 8 : i32
    return
  }
  func.func @transform_0(%arg0: i32) -> (i32, i32) {
    %c0_i32 = arith.constant 0 : i32
    %c0_i32_0 = arith.constant 0 : i32
    %c0_i32_1 = arith.constant 0 : i32
    return %c0_i32, %c0_i32_0 : i32, i32
  }
  func.func @transform_1(%arg0: i32) -> (i32, i32) {
    %c0_i32 = arith.constant 0 : i32
    %c0_i32_0 = arith.constant 0 : i32
    %c0_i32_1 = arith.constant 0 : i32
    return %c0_i32, %c0_i32_0 : i32, i32
  }
  func.func @transform_2(%arg0: i32) -> (i32, i32) {
    %c0_i32 = arith.constant 0 : i32
    %c0_i32_0 = arith.constant 0 : i32
    %c0_i32_1 = arith.constant 0 : i32
    return %c0_i32, %c0_i32_0 : i32, i32
  }
  func.func @transform_3(%arg0: i32) -> (i32, i32) {
    %c0_i32 = arith.constant 0 : i32
    %c0_i32_0 = arith.constant 0 : i32
    %c0_i32_1 = arith.constant 0 : i32
    return %c0_i32, %c0_i32_0 : i32, i32
  }
  func.func @transform_4(%arg0: i32) -> (i32, i32) {
    %c0_i32 = arith.constant 0 : i32
    %c0_i32_0 = arith.constant 0 : i32
    %c0_i32_1 = arith.constant 0 : i32
    return %c0_i32, %c0_i32_0 : i32, i32
  }
  func.func @transform_5(%arg0: i32) -> (i32, i32) {
    %c0_i32 = arith.constant 0 : i32
    %c0_i32_0 = arith.constant 0 : i32
    %c0_i32_1 = arith.constant 0 : i32
    return %c0_i32, %c0_i32_0 : i32, i32
  }
  func.func @transform_6(%arg0: i32) -> (i32, i32, i32) {
    %c0_i32 = arith.constant 0 : i32
    %c0_i32_0 = arith.constant 0 : i32
    %c0_i32_1 = arith.constant 0 : i32
    %c0_i32_2 = arith.constant 0 : i32
    return %c0_i32, %c0_i32_0, %c0_i32_1 : i32, i32, i32
  }
}

</mosaic_0001>

<llo_original>
// kernel: conv_lstm_layer.1
$region0: #{conv_lstm_layer.1}
  #allocation0 [shape = 'u32[]', space=smem, size = 0x4, offset = 0x4, fixed_abs, tag = 'smem constant byte address 0x4 - core index']
  #allocation1 [shape = 'u32[144,128]{1,0:T(1,128)}', space=vmem, size = 0x12000, scoped, tag = 'internal scratch']
  #allocation2 [shape = 'f32[8,32,512]{2,1,0:T(8,128)}', space=vmem, size = 0x80000, scoped, tag = 'scratch operand']
  %s0 = inlined_call_operand.vmem [shape: f32[8,4096], index: 0, kind: input, shape index: {}]
  %s1 = inlined_call_operand.vmem [shape: f32[32,72], index: 1, kind: input, shape index: {}]
  %s2 = inlined_call_operand.vmem [shape: f32[32,72], index: 2, kind: input, shape index: {}]
  %s3 = inlined_call_operand.vmem [shape: f32[32,1], index: 3, kind: input, shape index: {}]
  %s4 = inlined_call_operand.vmem [shape: f32[32,1], index: 4, kind: input, shape index: {}]
  %s5 = inlined_call_operand.vmem [shape: f32[9,4096], index: 5, kind: input, shape index: {}]
  %s6 = inlined_call_operand.vmem [shape: f32[8,8,512], index: 6, kind: output, shape index: {}]
  %s7 = sld [smem:[#allocation0]]
  $region34: #{conv_lstm_layer.1} parent=0
    _
  %s9 = ssub.s32 1, %s7
  %s10 = scalar_select 0, %s9, %s7
  // Predicated region
  $region2: #{conv_lstm_layer.1} parent=0 // pred_check
    _
  $region3: #{conv_lstm_layer.1} parent=0 // pred_check_branch
    %12 = sbr.rel (0) target = $region5
  $region4: #{conv_lstm_layer.1} parent=0 // pred_region
    _
  $region5: #{conv_lstm_layer.1} parent=0 // pred_fallthru
    _
  // Predicated region
  $region6: #{conv_lstm_layer.1} parent=0 // pred_check
    _
  $region7: #{conv_lstm_layer.1} parent=0 // pred_check_branch
    %14 = sbr.rel (0) target = $region9
  $region8: #{conv_lstm_layer.1} parent=0 // pred_region
    _
  $region9: #{conv_lstm_layer.1} parent=0 // pred_fallthru
    _
  // Predicated region
  $region10: #{conv_lstm_layer.1} parent=0 // pred_check
    _
  $region11: #{conv_lstm_layer.1} parent=0 // pred_check_branch
    %16 = sbr.rel (0) target = $region13
  $region12: #{conv_lstm_layer.1} parent=0 // pred_region
    _
  $region13: #{conv_lstm_layer.1} parent=0 // pred_fallthru
    _
  // Predicated region
  $region14: #{conv_lstm_layer.1} parent=0 // pred_check
    _
  $region15: #{conv_lstm_layer.1} parent=0 // pred_check_branch
    %18 = sbr.rel (0) target = $region17
  $region16: #{conv_lstm_layer.1} parent=0 // pred_region
    _
  $region17: #{conv_lstm_layer.1} parent=0 // pred_fallthru
    _
  // Predicated region
  $region18: #{conv_lstm_layer.1} parent=0 // pred_check
    _
  $region19: #{conv_lstm_layer.1} parent=0 // pred_check_branch
    %20 = sbr.rel (0) target = $region21
  $region20: #{conv_lstm_layer.1} parent=0 // pred_region
    _
  $region21: #{conv_lstm_layer.1} parent=0 // pred_fallthru
    _
  // Predicated region
  $region22: #{conv_lstm_layer.1} parent=0 // pred_check
    _
  $region23: #{conv_lstm_layer.1} parent=0 // pred_check_branch
    %22 = sbr.rel (0) target = $region25
  $region24: #{conv_lstm_layer.1} parent=0 // pred_region
    _
  $region25: #{conv_lstm_layer.1} parent=0 // pred_fallthru
    _
  %v23 = vld [vmem:[%s5] sm:$0xff]
  %v24 = vld [vmem:[%s5 + $0x8] sm:$0xff]
  %v25 = vld [vmem:[%s5 + $0x10] sm:$0xff]
  %v26 = vld [vmem:[%s5 + $0x18] sm:$0xff]
  %v27 = vld [vmem:[%s5 + $0x20] sm:$0xff]
  %v28 = vld [vmem:[%s5 + $0x28] sm:$0xff]
  %v29 = vld [vmem:[%s5 + $0x30] sm:$0xff]
  %v30 = vld [vmem:[%s5 + $0x38] sm:$0xff]
  %v31 = vld [vmem:[%s5 + $0x40] sm:$0xff]
  %v32 = vld [vmem:[%s5 + $0x48] sm:$0xff]
  %v33 = vld [vmem:[%s5 + $0x50] sm:$0xff]
  %v34 = vld [vmem:[%s5 + $0x58] sm:$0xff]
  %v35 = vld [vmem:[%s5 + $0x60] sm:$0xff]
  %v36 = vld [vmem:[%s5 + $0x68] sm:$0xff]
  %v37 = vld [vmem:[%s5 + $0x70] sm:$0xff]
  %v38 = vld [vmem:[%s5 + $0x78] sm:$0xff]
  %v39 = vld [vmem:[%s5 + $0x80] sm:$0xff]
  %v40 = vld [vmem:[%s5 + $0x88] sm:$0xff]
  %v41 = vld [vmem:[%s5 + $0x90] sm:$0xff]
  %v42 = vld [vmem:[%s5 + $0x98] sm:$0xff]
  %v43 = vld [vmem:[%s5 + $0xa0] sm:$0xff]
  %v44 = vld [vmem:[%s5 + $0xa8] sm:$0xff]
  %v45 = vld [vmem:[%s5 + $0xb0] sm:$0xff]
  %v46 = vld [vmem:[%s5 + $0xb8] sm:$0xff]
  %v47 = vld [vmem:[%s5 + $0xc0] sm:$0xff]
  %v48 = vld [vmem:[%s5 + $0xc8] sm:$0xff]
  %v49 = vld [vmem:[%s5 + $0xd0] sm:$0xff]
  %v50 = vld [vmem:[%s5 + $0xd8] sm:$0xff]
  %v51 = vld [vmem:[%s5 + $0xe0] sm:$0xff]
  %v52 = vld [vmem:[%s5 + $0xe8] sm:$0xff]
  %v53 = vld [vmem:[%s5 + $0xf0] sm:$0xff]
  %v54 = vld [vmem:[%s5 + $0xf8] sm:$0xff]
  %v55 = vld [vmem:[%s5 + $0x100] sm:$0x1]
  %v56 = vld [vmem:[%s5 + $0x108] sm:$0x1]
  %v57 = vld [vmem:[%s5 + $0x110] sm:$0x1]
  %v58 = vld [vmem:[%s5 + $0x118] sm:$0x1]
  %v59 = vld [vmem:[%s5 + $0x120] sm:$0x1]
  %v60 = vld [vmem:[%s5 + $0x128] sm:$0x1]
  %v61 = vld [vmem:[%s5 + $0x130] sm:$0x1]
  %v62 = vld [vmem:[%s5 + $0x138] sm:$0x1]
  %v63 = vld [vmem:[%s5 + $0x140] sm:$0x1]
  %v64 = vld [vmem:[%s5 + $0x148] sm:$0x1]
  %v65 = vld [vmem:[%s5 + $0x150] sm:$0x1]
  %v66 = vld [vmem:[%s5 + $0x158] sm:$0x1]
  %v67 = vld [vmem:[%s5 + $0x160] sm:$0x1]
  %v68 = vld [vmem:[%s5 + $0x168] sm:$0x1]
  %v69 = vld [vmem:[%s5 + $0x170] sm:$0x1]
  %v70 = vld [vmem:[%s5 + $0x178] sm:$0x1]
  %v71 = vld [vmem:[%s5 + $0x180] sm:$0x1]
  %v72 = vld [vmem:[%s5 + $0x188] sm:$0x1]
  %v73 = vld [vmem:[%s5 + $0x190] sm:$0x1]
  %v74 = vld [vmem:[%s5 + $0x198] sm:$0x1]
  %v75 = vld [vmem:[%s5 + $0x1a0] sm:$0x1]
  %v76 = vld [vmem:[%s5 + $0x1a8] sm:$0x1]
  %v77 = vld [vmem:[%s5 + $0x1b0] sm:$0x1]
  %v78 = vld [vmem:[%s5 + $0x1b8] sm:$0x1]
  %v79 = vld [vmem:[%s5 + $0x1c0] sm:$0x1]
  %v80 = vld [vmem:[%s5 + $0x1c8] sm:$0x1]
  %v81 = vld [vmem:[%s5 + $0x1d0] sm:$0x1]
  %v82 = vld [vmem:[%s5 + $0x1d8] sm:$0x1]
  %v83 = vld [vmem:[%s5 + $0x1e0] sm:$0x1]
  %v84 = vld [vmem:[%s5 + $0x1e8] sm:$0x1]
  %v85 = vld [vmem:[%s5 + $0x1f0] sm:$0x1]
  %v86 = vld [vmem:[%s5 + $0x1f8] sm:$0x1]
  %v87 = vld [vmem:[%s2] sm:$0xff]
  %v88 = vld [vmem:[%s2 + $0x8] sm:$0xff]
  %v89 = vld [vmem:[%s2 + $0x10] sm:$0xff]
  %v90 = vld [vmem:[%s2 + $0x18] sm:$0xff]
  %v91 = vld [vmem:[%s3] sm:$0xff]
  %v92 = vld [vmem:[%s3 + $0x8] sm:$0xff]
  %v93 = vld [vmem:[%s3 + $0x10] sm:$0xff]
  %v94 = vld [vmem:[%s3 + $0x18] sm:$0xff]
  %v95 = vld [vmem:[%s4] sm:$0xff]
  %v96 = vld [vmem:[%s4 + $0x8] sm:$0xff]
  %v97 = vld [vmem:[%s4 + $0x10] sm:$0xff]
  %v98 = vld [vmem:[%s4 + $0x18] sm:$0xff]
  %v99 = vld [vmem:[%s0] sm:$0xff]
  %v100 = vld [vmem:[%s0 + $0x8] sm:$0xff]
  %v101 = vld [vmem:[%s0 + $0x10] sm:$0xff]
  %v102 = vld [vmem:[%s0 + $0x18] sm:$0xff]
  %v103 = vld [vmem:[%s0 + $0x20] sm:$0xff]
  %v104 = vld [vmem:[%s0 + $0x28] sm:$0xff]
  %v105 = vld [vmem:[%s0 + $0x30] sm:$0xff]
  %v106 = vld [vmem:[%s0 + $0x38] sm:$0xff]
  %v107 = vld [vmem:[%s0 + $0x40] sm:$0xff]
  %v108 = vld [vmem:[%s0 + $0x48] sm:$0xff]
  %v109 = vld [vmem:[%s0 + $0x50] sm:$0xff]
  %v110 = vld [vmem:[%s0 + $0x58] sm:$0xff]
  %v111 = vld [vmem:[%s0 + $0x60] sm:$0xff]
  %v112 = vld [vmem:[%s0 + $0x68] sm:$0xff]
  %v113 = vld [vmem:[%s0 + $0x70] sm:$0xff]
  %v114 = vld [vmem:[%s0 + $0x78] sm:$0xff]
  %v115 = vld [vmem:[%s0 + $0x80] sm:$0xff]
  %v116 = vld [vmem:[%s0 + $0x88] sm:$0xff]
  %v117 = vld [vmem:[%s0 + $0x90] sm:$0xff]
  %v118 = vld [vmem:[%s0 + $0x98] sm:$0xff]
  %v119 = vld [vmem:[%s0 + $0xa0] sm:$0xff]
  %v120 = vld [vmem:[%s0 + $0xa8] sm:$0xff]
  %v121 = vld [vmem:[%s0 + $0xb0] sm:$0xff]
  %v122 = vld [vmem:[%s0 + $0xb8] sm:$0xff]
  %v123 = vld [vmem:[%s0 + $0xc0] sm:$0xff]
  %v124 = vld [vmem:[%s0 + $0xc8] sm:$0xff]
  %v125 = vld [vmem:[%s0 + $0xd0] sm:$0xff]
  %v126 = vld [vmem:[%s0 + $0xd8] sm:$0xff]
  %v127 = vld [vmem:[%s0 + $0xe0] sm:$0xff]
  %v128 = vld [vmem:[%s0 + $0xe8] sm:$0xff]
  %v129 = vld [vmem:[%s0 + $0xf0] sm:$0xff]
  %v130 = vld [vmem:[%s0 + $0xf8] sm:$0xff]
  %131 = vrot.lane.b32.xlu0 %v99, 17
  %v132 = vpop.permute.xlu0 %131
  %133 = vrot.lane.b32.xlu0 %v100, 17
  %v134 = vpop.permute.xlu0 %133
  %135 = vrot.lane.b32.xlu0 %v101, 17
  %v136 = vpop.permute.xlu0 %135
  %137 = vrot.lane.b32.xlu0 %v102, 17
  %v138 = vpop.permute.xlu0 %137
  %139 = vrot.lane.b32.xlu0 %v103, 17
  %v140 = vpop.permute.xlu0 %139
  %141 = vrot.lane.b32.xlu0 %v104, 17
  %v142 = vpop.permute.xlu0 %141
  %143 = vrot.lane.b32.xlu0 %v105, 17
  %v144 = vpop.permute.xlu0 %143
  %145 = vrot.lane.b32.xlu0 %v106, 17
  %v146 = vpop.permute.xlu0 %145
  %147 = vrot.lane.b32.xlu0 %v107, 17
  %v148 = vpop.permute.xlu0 %147
  %149 = vrot.lane.b32.xlu0 %v108, 17
  %v150 = vpop.permute.xlu0 %149
  %151 = vrot.lane.b32.xlu0 %v109, 17
  %v152 = vpop.permute.xlu0 %151
  %153 = vrot.lane.b32.xlu0 %v110, 17
  %v154 = vpop.permute.xlu0 %153
  %155 = vrot.lane.b32.xlu0 %v111, 17
  %v156 = vpop.permute.xlu0 %155
  %157 = vrot.lane.b32.xlu0 %v112, 17
  %v158 = vpop.permute.xlu0 %157
  %159 = vrot.lane.b32.xlu0 %v113, 17
  %v160 = vpop.permute.xlu0 %159
  %161 = vrot.lane.b32.xlu0 %v114, 17
  %v162 = vpop.permute.xlu0 %161
  %163 = vrot.lane.b32.xlu0 %v115, 17
  %v164 = vpop.permute.xlu0 %163
  %165 = vrot.lane.b32.xlu0 %v116, 17
  %v166 = vpop.permute.xlu0 %165
  %167 = vrot.lane.b32.xlu0 %v117, 17
  %v168 = vpop.permute.xlu0 %167
  %169 = vrot.lane.b32.xlu0 %v118, 17
  %v170 = vpop.permute.xlu0 %169
  %171 = vrot.lane.b32.xlu0 %v119, 17
  %v172 = vpop.permute.xlu0 %171
  %173 = vrot.lane.b32.xlu0 %v120, 17
  %v174 = vpop.permute.xlu0 %173
  %175 = vrot.lane.b32.xlu0 %v121, 17
  %v176 = vpop.permute.xlu0 %175
  %177 = vrot.lane.b32.xlu0 %v122, 17
  %v178 = vpop.permute.xlu0 %177
  %179 = vrot.lane.b32.xlu0 %v123, 17
  %v180 = vpop.permute.xlu0 %179
  %181 = vrot.lane.b32.xlu0 %v124, 17
  %v182 = vpop.permute.xlu0 %181
  %183 = vrot.lane.b32.xlu0 %v125, 17
  %v184 = vpop.permute.xlu0 %183
  %185 = vrot.lane.b32.xlu0 %v126, 17
  %v186 = vpop.permute.xlu0 %185
  %187 = vrot.lane.b32.xlu0 %v127, 17
  %v188 = vpop.permute.xlu0 %187
  %189 = vrot.lane.b32.xlu0 %v128, 17
  %v190 = vpop.permute.xlu0 %189
  %191 = vrot.lane.b32.xlu0 %v129, 17
  %v192 = vpop.permute.xlu0 %191
  %193 = vrot.lane.b32.xlu0 %v130, 17
  %v194 = vpop.permute.xlu0 %193
  %v195 = vlaneseq
  %v196 = vand.u32 %v195, 127
  %vm197 = vcmp.lt.s32.totalorder %v196, 17
  %v198 = vsel %vm197, %v192, %v194
  %v199 = vsel %vm197, %v190, %v192
  %v200 = vsel %vm197, %v188, %v190
  %v201 = vsel %vm197, %v186, %v188
  %v202 = vsel %vm197, %v184, %v186
  %v203 = vsel %vm197, %v182, %v184
  %v204 = vsel %vm197, %v180, %v182
  %v205 = vsel %vm197, %v178, %v180
  %v206 = vsel %vm197, %v176, %v178
  %v207 = vsel %vm197, %v174, %v176
  %v208 = vsel %vm197, %v172, %v174
  %v209 = vsel %vm197, %v170, %v172
  %v210 = vsel %vm197, %v168, %v170
  %v211 = vsel %vm197, %v166, %v168
  %v212 = vsel %vm197, %v164, %v166
  %v213 = vsel %vm197, %v162, %v164
  %v214 = vsel %vm197, %v160, %v162
  %v215 = vsel %vm197, %v158, %v160
  %v216 = vsel %vm197, %v156, %v158
  %v217 = vsel %vm197, %v154, %v156
  %v218 = vsel %vm197, %v152, %v154
  %v219 = vsel %vm197, %v150, %v152
  %v220 = vsel %vm197, %v148, %v150
  %v221 = vsel %vm197, %v146, %v148
  %v222 = vsel %vm197, %v144, %v146
  %v223 = vsel %vm197, %v142, %v144
  %v224 = vsel %vm197, %v140, %v142
  %v225 = vsel %vm197, %v138, %v140
  %v226 = vsel %vm197, %v136, %v138
  %v227 = vsel %vm197, %v134, %v136
  %v228 = vsel %vm197, %v132, %v134
  %v229 = vsel %vm197, %v194, %v132
  %v230 = vlaneseq
  %v231 = vshrl.u32 %v230, 7
  %v232 = vsub.s32 0, %v231
  %v233 = vrot.slane %v23, %v232
  %v234 = vlaneseq
  %v235 = vshrl.u32 %v234, 7
  %v236 = vsub.s32 0, %v235
  %v237 = vrot.slane %v24, %v236
  %v238 = vlaneseq
  %v239 = vshrl.u32 %v238, 7
  %v240 = vsub.s32 0, %v239
  %v241 = vrot.slane %v25, %v240
  %v242 = vlaneseq
  %v243 = vshrl.u32 %v242, 7
  %v244 = vsub.s32 0, %v243
  %v245 = vrot.slane %v26, %v244
  %v246 = vlaneseq
  %v247 = vshrl.u32 %v246, 7
  %v248 = vsub.s32 0, %v247
  %v249 = vrot.slane %v27, %v248
  %v250 = vlaneseq
  %v251 = vshrl.u32 %v250, 7
  %v252 = vsub.s32 0, %v251
  %v253 = vrot.slane %v28, %v252
  %v254 = vlaneseq
  %v255 = vshrl.u32 %v254, 7
  %v256 = vsub.s32 0, %v255
  %v257 = vrot.slane %v29, %v256
  %v258 = vlaneseq
  %v259 = vshrl.u32 %v258, 7
  %v260 = vsub.s32 0, %v259
  %v261 = vrot.slane %v30, %v260
  %v262 = vlaneseq
  %v263 = vshrl.u32 %v262, 7
  %v264 = vsub.s32 0, %v263
  %v265 = vrot.slane %v31, %v264
  %v266 = vlaneseq
  %v267 = vshrl.u32 %v266, 7
  %v268 = vsub.s32 0, %v267
  %v269 = vrot.slane %v32, %v268
  %v270 = vlaneseq
  %v271 = vshrl.u32 %v270, 7
  %v272 = vsub.s32 0, %v271
  %v273 = vrot.slane %v33, %v272
  %v274 = vlaneseq
  %v275 = vshrl.u32 %v274, 7
  %v276 = vsub.s32 0, %v275
  %v277 = vrot.slane %v34, %v276
  %v278 = vlaneseq
  %v279 = vshrl.u32 %v278, 7
  %v280 = vsub.s32 0, %v279
  %v281 = vrot.slane %v35, %v280
  %v282 = vlaneseq
  %v283 = vshrl.u32 %v282, 7
  %v284 = vsub.s32 0, %v283
  %v285 = vrot.slane %v36, %v284
  %v286 = vlaneseq
  %v287 = vshrl.u32 %v286, 7
  %v288 = vsub.s32 0, %v287
  %v289 = vrot.slane %v37, %v288
  %v290 = vlaneseq
  %v291 = vshrl.u32 %v290, 7
  %v292 = vsub.s32 0, %v291
  %v293 = vrot.slane %v38, %v292
  %v294 = vlaneseq
  %v295 = vshrl.u32 %v294, 7
  %v296 = vsub.s32 0, %v295
  %v297 = vrot.slane %v39, %v296
  %v298 = vlaneseq
  %v299 = vshrl.u32 %v298, 7
  %v300 = vsub.s32 0, %v299
  %v301 = vrot.slane %v40, %v300
  %v302 = vlaneseq
  %v303 = vshrl.u32 %v302, 7
  %v304 = vsub.s32 0, %v303
  %v305 = vrot.slane %v41, %v304
  %v306 = vlaneseq
  %v307 = vshrl.u32 %v306, 7
  %v308 = vsub.s32 0, %v307
  %v309 = vrot.slane %v42, %v308
  %v310 = vlaneseq
  %v311 = vshrl.u32 %v310, 7
  %v312 = vsub.s32 0, %v311
  %v313 = vrot.slane %v43, %v312
  %v314 = vlaneseq
  %v315 = vshrl.u32 %v314, 7
  %v316 = vsub.s32 0, %v315
  %v317 = vrot.slane %v44, %v316
  %v318 = vlaneseq
  %v319 = vshrl.u32 %v318, 7
  %v320 = vsub.s32 0, %v319
  %v321 = vrot.slane %v45, %v320
  %v322 = vlaneseq
  %v323 = vshrl.u32 %v322, 7
  %v324 = vsub.s32 0, %v323
  %v325 = vrot.slane %v46, %v324
  %v326 = vlaneseq
  %v327 = vshrl.u32 %v326, 7
  %v328 = vsub.s32 0, %v327
  %v329 = vrot.slane %v47, %v328
  %v330 = vlaneseq
  %v331 = vshrl.u32 %v330, 7
  %v332 = vsub.s32 0, %v331
  %v333 = vrot.slane %v48, %v332
  %v334 = vlaneseq
  %v335 = vshrl.u32 %v334, 7
  %v336 = vsub.s32 0, %v335
  %v337 = vrot.slane %v49, %v336
  %v338 = vlaneseq
  %v339 = vshrl.u32 %v338, 7
  %v340 = vsub.s32 0, %v339
  %v341 = vrot.slane %v50, %v340
  %v342 = vlaneseq
  %v343 = vshrl.u32 %v342, 7
  %v344 = vsub.s32 0, %v343
  %v345 = vrot.slane %v51, %v344
  %v346 = vlaneseq
  %v347 = vshrl.u32 %v346, 7
  %v348 = vsub.s32 0, %v347
  %v349 = vrot.slane %v52, %v348
  %v350 = vlaneseq
  %v351 = vshrl.u32 %v350, 7
  %v352 = vsub.s32 0, %v351
  %v353 = vrot.slane %v53, %v352
  %v354 = vlaneseq
  %v355 = vshrl.u32 %v354, 7
  %v356 = vsub.s32 0, %v355
  %v357 = vrot.slane %v54, %v356
  %v358 = vmul.f32 %v229, %v233
  %v359 = vmul.f32 %v228, %v237
  %v360 = vmul.f32 %v227, %v241
  %v361 = vmul.f32 %v226, %v245
  %v362 = vmul.f32 %v225, %v249
  %v363 = vmul.f32 %v224, %v253
  %v364 = vmul.f32 %v223, %v257
  %v365 = vmul.f32 %v222, %v261
  %v366 = vmul.f32 %v221, %v265
  %v367 = vmul.f32 %v220, %v269
  %v368 = vmul.f32 %v219, %v273
  %v369 = vmul.f32 %v218, %v277
  %v370 = vmul.f32 %v217, %v281
  %v371 = vmul.f32 %v216, %v285
  %v372 = vmul.f32 %v215, %v289
  %v373 = vmul.f32 %v214, %v293
  %v374 = vmul.f32 %v213, %v297
  %v375 = vmul.f32 %v212, %v301
  %v376 = vmul.f32 %v211, %v305
  %v377 = vmul.f32 %v210, %v309
  %v378 = vmul.f32 %v209, %v313
  %v379 = vmul.f32 %v208, %v317
  %v380 = vmul.f32 %v207, %v321
  %v381 = vmul.f32 %v206, %v325
  %v382 = vmul.f32 %v205, %v329
  %v383 = vmul.f32 %v204, %v333
  %v384 = vmul.f32 %v203, %v337
  %v385 = vmul.f32 %v202, %v341
  %v386 = vmul.f32 %v201, %v345
  %v387 = vmul.f32 %v200, %v349
  %v388 = vmul.f32 %v199, %v353
  %v389 = vmul.f32 %v198, %v357
  %390 = vrot.lane.b32.xlu0 %v99, 16
  %v391 = vpop.permute.xlu0 %390
  %392 = vrot.lane.b32.xlu0 %v100, 16
  %v393 = vpop.permute.xlu0 %392
  %394 = vrot.lane.b32.xlu0 %v101, 16
  %v395 = vpop.permute.xlu0 %394
  %396 = vrot.lane.b32.xlu0 %v102, 16
  %v397 = vpop.permute.xlu0 %396
  %398 = vrot.lane.b32.xlu0 %v103, 16
  %v399 = vpop.permute.xlu0 %398
  %400 = vrot.lane.b32.xlu0 %v104, 16
  %v401 = vpop.permute.xlu0 %400
  %402 = vrot.lane.b32.xlu0 %v105, 16
  %v403 = vpop.permute.xlu0 %402
  %404 = vrot.lane.b32.xlu0 %v106, 16
  %v405 = vpop.permute.xlu0 %404
  %406 = vrot.lane.b32.xlu0 %v107, 16
  %v407 = vpop.permute.xlu0 %406
  %408 = vrot.lane.b32.xlu0 %v108, 16
  %v409 = vpop.permute.xlu0 %408
  %410 = vrot.lane.b32.xlu0 %v109, 16
  %v411 = vpop.permute.xlu0 %410
  %412 = vrot.lane.b32.xlu0 %v110, 16
  %v413 = vpop.permute.xlu0 %412
  %414 = vrot.lane.b32.xlu0 %v111, 16
  %v415 = vpop.permute.xlu0 %414
  %416 = vrot.lane.b32.xlu0 %v112, 16
  %v417 = vpop.permute.xlu0 %416
  %418 = vrot.lane.b32.xlu0 %v113, 16
  %v419 = vpop.permute.xlu0 %418
  %420 = vrot.lane.b32.xlu0 %v114, 16
  %v421 = vpop.permute.xlu0 %420
  %422 = vrot.lane.b32.xlu0 %v115, 16
  %v423 = vpop.permute.xlu0 %422
  %424 = vrot.lane.b32.xlu0 %v116, 16
  %v425 = vpop.permute.xlu0 %424
  %426 = vrot.lane.b32.xlu0 %v117, 16
  %v427 = vpop.permute.xlu0 %426
  %428 = vrot.lane.b32.xlu0 %v118, 16
  %v429 = vpop.permute.xlu0 %428
  %430 = vrot.lane.b32.xlu0 %v119, 16
  %v431 = vpop.permute.xlu0 %430
  %432 = vrot.lane.b32.xlu0 %v120, 16
  %v433 = vpop.permute.xlu0 %432
  %434 = vrot.lane.b32.xlu0 %v121, 16
  %v435 = vpop.permute.xlu0 %434
  %436 = vrot.lane.b32.xlu0 %v122, 16
  %v437 = vpop.permute.xlu0 %436
  %438 = vrot.lane.b32.xlu0 %v123, 16
  %v439 = vpop.permute.xlu0 %438
  %440 = vrot.lane.b32.xlu0 %v124, 16
  %v441 = vpop.permute.xlu0 %440
  %442 = vrot.lane.b32.xlu0 %v125, 16
  %v443 = vpop.permute.xlu0 %442
  %444 = vrot.lane.b32.xlu0 %v126, 16
  %v445 = vpop.permute.xlu0 %444
  %446 = vrot.lane.b32.xlu0 %v127, 16
  %v447 = vpop.permute.xlu0 %446
  %448 = vrot.lane.b32.xlu0 %v128, 16
  %v449 = vpop.permute.xlu0 %448
  %450 = vrot.lane.b32.xlu0 %v129, 16
  %v451 = vpop.permute.xlu0 %450
  %452 = vrot.lane.b32.xlu0 %v130, 16
  %v453 = vpop.permute.xlu0 %452
  %vm454 = vcmp.lt.s32.totalorder %v196, 16
  %v455 = vsel %vm454, %v451, %v453
  %v456 = vsel %vm454, %v449, %v451
  %v457 = vsel %vm454, %v447, %v449
  %v458 = vsel %vm454, %v445, %v447
  %v459 = vsel %vm454, %v443, %v445
  %v460 = vsel %vm454, %v441, %v443
  %v461 = vsel %vm454, %v439, %v441
  %v462 = vsel %vm454, %v437, %v439
  %v463 = vsel %vm454, %v435, %v437
  %v464 = vsel %vm454, %v433, %v435
  %v465 = vsel %vm454, %v431, %v433
  %v466 = vsel %vm454, %v429, %v431
  %v467 = vsel %vm454, %v427, %v429
  %v468 = vsel %vm454, %v425, %v427
  %v469 = vsel %vm454, %v423, %v425
  %v470 = vsel %vm454, %v421, %v423
  %v471 = vsel %vm454, %v419, %v421
  %v472 = vsel %vm454, %v417, %v419
  %v473 = vsel %vm454, %v415, %v417
  %v474 = vsel %vm454, %v413, %v415
  %v475 = vsel %vm454, %v411, %v413
  %v476 = vsel %vm454, %v409, %v411
  %v477 = vsel %vm454, %v407, %v409
  %v478 = vsel %vm454, %v405, %v407
  %v479 = vsel %vm454, %v403, %v405
  %v480 = vsel %vm454, %v401, %v403
  %v481 = vsel %vm454, %v399, %v401
  %v482 = vsel %vm454, %v397, %v399
  %v483 = vsel %vm454, %v395, %v397
  %v484 = vsel %vm454, %v393, %v395
  %v485 = vsel %vm454, %v391, %v393
  %v486 = vsel %vm454, %v453, %v391
  %v487 = vlaneseq
  %v488 = vshrl.u32 %v487, 7
  %v489 = vsub.s32 1, %v488
  %v490 = vrot.slane %v23, %v489
  %v491 = vlaneseq
  %v492 = vshrl.u32 %v491, 7
  %v493 = vsub.s32 1, %v492
  %v494 = vrot.slane %v24, %v493
  %v495 = vlaneseq
  %v496 = vshrl.u32 %v495, 7
  %v497 = vsub.s32 1, %v496
  %v498 = vrot.slane %v25, %v497
  %v499 = vlaneseq
  %v500 = vshrl.u32 %v499, 7
  %v501 = vsub.s32 1, %v500
  %v502 = vrot.slane %v26, %v501
  %v503 = vlaneseq
  %v504 = vshrl.u32 %v503, 7
  %v505 = vsub.s32 1, %v504
  %v506 = vrot.slane %v27, %v505
  %v507 = vlaneseq
  %v508 = vshrl.u32 %v507, 7
  %v509 = vsub.s32 1, %v508
  %v510 = vrot.slane %v28, %v509
  %v511 = vlaneseq
  %v512 = vshrl.u32 %v511, 7
  %v513 = vsub.s32 1, %v512
  %v514 = vrot.slane %v29, %v513
  %v515 = vlaneseq
  %v516 = vshrl.u32 %v515, 7
  %v517 = vsub.s32 1, %v516
  %v518 = vrot.slane %v30, %v517
  %v519 = vlaneseq
  %v520 = vshrl.u32 %v519, 7
  %v521 = vsub.s32 1, %v520
  %v522 = vrot.slane %v31, %v521
  %v523 = vlaneseq
  %v524 = vshrl.u32 %v523, 7
  %v525 = vsub.s32 1, %v524
  %v526 = vrot.slane %v32, %v525
  %v527 = vlaneseq
  %v528 = vshrl.u32 %v527, 7
  %v529 = vsub.s32 1, %v528
  %v530 = vrot.slane %v33, %v529
  %v531 = vlaneseq
  %v532 = vshrl.u32 %v531, 7
  %v533 = vsub.s32 1, %v532
  %v534 = vrot.slane %v34, %v533
  %v535 = vlaneseq
  %v536 = vshrl.u32 %v535, 7
  %v537 = vsub.s32 1, %v536
  %v538 = vrot.slane %v35, %v537
  %v539 = vlaneseq
  %v540 = vshrl.u32 %v539, 7
  %v541 = vsub.s32 1, %v540
  %v542 = vrot.slane %v36, %v541
  %v543 = vlaneseq
  %v544 = vshrl.u32 %v543, 7
  %v545 = vsub.s32 1, %v544
  %v546 = vrot.slane %v37, %v545
  %v547 = vlaneseq
  %v548 = vshrl.u32 %v547, 7
  %v549 = vsub.s32 1, %v548
  %v550 = vrot.slane %v38, %v549
  %v551 = vlaneseq
  %v552 = vshrl.u32 %v551, 7
  %v553 = vsub.s32 1, %v552
  %v554 = vrot.slane %v39, %v553
  %v555 = vlaneseq
  %v556 = vshrl.u32 %v555, 7
  %v557 = vsub.s32 1, %v556
  %v558 = vrot.slane %v40, %v557
  %v559 = vlaneseq
  %v560 = vshrl.u32 %v559, 7
  %v561 = vsub.s32 1, %v560
  %v562 = vrot.slane %v41, %v561
  %v563 = vlaneseq
  %v564 = vshrl.u32 %v563, 7
  %v565 = vsub.s32 1, %v564
  %v566 = vrot.slane %v42, %v565
  %v567 = vlaneseq
  %v568 = vshrl.u32 %v567, 7
  %v569 = vsub.s32 1, %v568
  %v570 = vrot.slane %v43, %v569
  %v571 = vlaneseq
  %v572 = vshrl.u32 %v571, 7
  %v573 = vsub.s32 1, %v572
  %v574 = vrot.slane %v44, %v573
  %v575 = vlaneseq
  %v576 = vshrl.u32 %v575, 7
  %v577 = vsub.s32 1, %v576
  %v578 = vrot.slane %v45, %v577
  %v579 = vlaneseq
  %v580 = vshrl.u32 %v579, 7
  %v581 = vsub.s32 1, %v580
  %v582 = vrot.slane %v46, %v581
  %v583 = vlaneseq
  %v584 = vshrl.u32 %v583, 7
  %v585 = vsub.s32 1, %v584
  %v586 = vrot.slane %v47, %v585
  %v587 = vlaneseq
  %v588 = vshrl.u32 %v587, 7
  %v589 = vsub.s32 1, %v588
  %v590 = vrot.slane %v48, %v589
  %v591 = vlaneseq
  %v592 = vshrl.u32 %v591, 7
  %v593 = vsub.s32 1, %v592
  %v594 = vrot.slane %v49, %v593
  %v595 = vlaneseq
  %v596 = vshrl.u32 %v595, 7
  %v597 = vsub.s32 1, %v596
  %v598 = vrot.slane %v50, %v597
  %v599 = vlaneseq
  %v600 = vshrl.u32 %v599, 7
  %v601 = vsub.s32 1, %v600
  %v602 = vrot.slane %v51, %v601
  %v603 = vlaneseq
  %v604 = vshrl.u32 %v603, 7
  %v605 = vsub.s32 1, %v604
  %v606 = vrot.slane %v52, %v605
  %v607 = vlaneseq
  %v608 = vshrl.u32 %v607, 7
  %v609 = vsub.s32 1, %v608
  %v610 = vrot.slane %v53, %v609
  %v611 = vlaneseq
  %v612 = vshrl.u32 %v611, 7
  %v613 = vsub.s32 1, %v612
  %v614 = vrot.slane %v54, %v613
  %v615 = vmul.f32 %v486, %v490
  %v616 = vmul.f32 %v485, %v494
  %v617 = vmul.f32 %v484, %v498
  %v618 = vmul.f32 %v483, %v502
  %v619 = vmul.f32 %v482, %v506
  %v620 = vmul.f32 %v481, %v510
  %v621 = vmul.f32 %v480, %v514
  %v622 = vmul.f32 %v479, %v518
  %v623 = vmul.f32 %v478, %v522
  %v624 = vmul.f32 %v477, %v526
  %v625 = vmul.f32 %v476, %v530
  %v626 = vmul.f32 %v475, %v534
  %v627 = vmul.f32 %v474, %v538
  %v628 = vmul.f32 %v473, %v542
  %v629 = vmul.f32 %v472, %v546
  %v630 = vmul.f32 %v471, %v550
  %v631 = vmul.f32 %v470, %v554
  %v632 = vmul.f32 %v469, %v558
  %v633 = vmul.f32 %v468, %v562
  %v634 = vmul.f32 %v467, %v566
  %v635 = vmul.f32 %v466, %v570
  %v636 = vmul.f32 %v465, %v574
  %v637 = vmul.f32 %v464, %v578
  %v638 = vmul.f32 %v463, %v582
  %v639 = vmul.f32 %v462, %v586
  %v640 = vmul.f32 %v461, %v590
  %v641 = vmul.f32 %v460, %v594
  %v642 = vmul.f32 %v459, %v598
  %v643 = vmul.f32 %v458, %v602
  %v644 = vmul.f32 %v457, %v606
  %v645 = vmul.f32 %v456, %v610
  %v646 = vmul.f32 %v455, %v614
  %647 = vrot.lane.b32.xlu0 %v99, 15
  %v648 = vpop.permute.xlu0 %647
  %649 = vrot.lane.b32.xlu0 %v100, 15
  %v650 = vpop.permute.xlu0 %649
  %651 = vrot.lane.b32.xlu0 %v101, 15
  %v652 = vpop.permute.xlu0 %651
  %653 = vrot.lane.b32.xlu0 %v102, 15
  %v654 = vpop.permute.xlu0 %653
  %655 = vrot.lane.b32.xlu0 %v103, 15
  %v656 = vpop.permute.xlu0 %655
  %657 = vrot.lane.b32.xlu0 %v104, 15
  %v658 = vpop.permute.xlu0 %657
  %659 = vrot.lane.b32.xlu0 %v105, 15
  %v660 = vpop.permute.xlu0 %659
  %661 = vrot.lane.b32.xlu0 %v106, 15
  %v662 = vpop.permute.xlu0 %661
  %663 = vrot.lane.b32.xlu0 %v107, 15
  %v664 = vpop.permute.xlu0 %663
  %665 = vrot.lane.b32.xlu0 %v108, 15
  %v666 = vpop.permute.xlu0 %665
  %667 = vrot.lane.b32.xlu0 %v109, 15
  %v668 = vpop.permute.xlu0 %667
  %669 = vrot.lane.b32.xlu0 %v110, 15
  %v670 = vpop.permute.xlu0 %669
  %671 = vrot.lane.b32.xlu0 %v111, 15
  %v672 = vpop.permute.xlu0 %671
  %673 = vrot.lane.b32.xlu0 %v112, 15
  %v674 = vpop.permute.xlu0 %673
  %675 = vrot.lane.b32.xlu0 %v113, 15
  %v676 = vpop.permute.xlu0 %675
  %677 = vrot.lane.b32.xlu0 %v114, 15
  %v678 = vpop.permute.xlu0 %677
  %679 = vrot.lane.b32.xlu0 %v115, 15
  %v680 = vpop.permute.xlu0 %679
  %681 = vrot.lane.b32.xlu0 %v116, 15
  %v682 = vpop.permute.xlu0 %681
  %683 = vrot.lane.b32.xlu0 %v117, 15
  %v684 = vpop.permute.xlu0 %683
  %685 = vrot.lane.b32.xlu0 %v118, 15
  %v686 = vpop.permute.xlu0 %685
  %687 = vrot.lane.b32.xlu0 %v119, 15
  %v688 = vpop.permute.xlu0 %687
  %689 = vrot.lane.b32.xlu0 %v120, 15
  %v690 = vpop.permute.xlu0 %689
  %691 = vrot.lane.b32.xlu0 %v121, 15
  %v692 = vpop.permute.xlu0 %691
  %693 = vrot.lane.b32.xlu0 %v122, 15
  %v694 = vpop.permute.xlu0 %693
  %695 = vrot.lane.b32.xlu0 %v123, 15
  %v696 = vpop.permute.xlu0 %695
  %697 = vrot.lane.b32.xlu0 %v124, 15
  %v698 = vpop.permute.xlu0 %697
  %699 = vrot.lane.b32.xlu0 %v125, 15
  %v700 = vpop.permute.xlu0 %699
  %701 = vrot.lane.b32.xlu0 %v126, 15
  %v702 = vpop.permute.xlu0 %701
  %703 = vrot.lane.b32.xlu0 %v127, 15
  %v704 = vpop.permute.xlu0 %703
  %705 = vrot.lane.b32.xlu0 %v128, 15
  %v706 = vpop.permute.xlu0 %705
  %707 = vrot.lane.b32.xlu0 %v129, 15
  %v708 = vpop.permute.xlu0 %707
  %709 = vrot.lane.b32.xlu0 %v130, 15
  %v710 = vpop.permute.xlu0 %709
  %vm711 = vcmp.lt.s32.totalorder %v196, 15
  %v712 = vsel %vm711, %v708, %v710
  %v713 = vsel %vm711, %v706, %v708
  %v714 = vsel %vm711, %v704, %v706
  %v715 = vsel %vm711, %v702, %v704
  %v716 = vsel %vm711, %v700, %v702
  %v717 = vsel %vm711, %v698, %v700
  %v718 = vsel %vm711, %v696, %v698
  %v719 = vsel %vm711, %v694, %v696
  %v720 = vsel %vm711, %v692, %v694
  %v721 = vsel %vm711, %v690, %v692
  %v722 = vsel %vm711, %v688, %v690
  %v723 = vsel %vm711, %v686, %v688
  %v724 = vsel %vm711, %v684, %v686
  %v725 = vsel %vm711, %v682, %v684
  %v726 = vsel %vm711, %v680, %v682
  %v727 = vsel %vm711, %v678, %v680
  %v728 = vsel %vm711, %v676, %v678
  %v729 = vsel %vm711, %v674, %v676
  %v730 = vsel %vm711, %v672, %v674
  %v731 = vsel %vm711, %v670, %v672
  %v732 = vsel %vm711, %v668, %v670
  %v733 = vsel %vm711, %v666, %v668
  %v734 = vsel %vm711, %v664, %v666
  %v735 = vsel %vm711, %v662, %v664
  %v736 = vsel %vm711, %v660, %v662
  %v737 = vsel %vm711, %v658, %v660
  %v738 = vsel %vm711, %v656, %v658
  %v739 = vsel %vm711, %v654, %v656
  %v740 = vsel %vm711, %v652, %v654
  %v741 = vsel %vm711, %v650, %v652
  %v742 = vsel %vm711, %v648, %v650
  %v743 = vsel %vm711, %v710, %v648
  %v744 = vlaneseq
  %v745 = vshrl.u32 %v744, 7
  %v746 = vsub.s32 2, %v745
  %v747 = vrot.slane %v23, %v746
  %v748 = vlaneseq
  %v749 = vshrl.u32 %v748, 7
  %v750 = vsub.s32 2, %v749
  %v751 = vrot.slane %v24, %v750
  %v752 = vlaneseq
  %v753 = vshrl.u32 %v752, 7
  %v754 = vsub.s32 2, %v753
  %v755 = vrot.slane %v25, %v754
  %v756 = vlaneseq
  %v757 = vshrl.u32 %v756, 7
  %v758 = vsub.s32 2, %v757
  %v759 = vrot.slane %v26, %v758
  %v760 = vlaneseq
  %v761 = vshrl.u32 %v760, 7
  %v762 = vsub.s32 2, %v761
  %v763 = vrot.slane %v27, %v762
  %v764 = vlaneseq
  %v765 = vshrl.u32 %v764, 7
  %v766 = vsub.s32 2, %v765
  %v767 = vrot.slane %v28, %v766
  %v768 = vlaneseq
  %v769 = vshrl.u32 %v768, 7
  %v770 = vsub.s32 2, %v769
  %v771 = vrot.slane %v29, %v770
  %v772 = vlaneseq
  %v773 = vshrl.u32 %v772, 7
  %v774 = vsub.s32 2, %v773
  %v775 = vrot.slane %v30, %v774
  %v776 = vlaneseq
  %v777 = vshrl.u32 %v776, 7
  %v778 = vsub.s32 2, %v777
  %v779 = vrot.slane %v31, %v778
  %v780 = vlaneseq
  %v781 = vshrl.u32 %v780, 7
  %v782 = vsub.s32 2, %v781
  %v783 = vrot.slane %v32, %v782
  %v784 = vlaneseq
  %v785 = vshrl.u32 %v784, 7
  %v786 = vsub.s32 2, %v785
  %v787 = vrot.slane %v33, %v786
  %v788 = vlaneseq
  %v789 = vshrl.u32 %v788, 7
  %v790 = vsub.s32 2, %v789
  %v791 = vrot.slane %v34, %v790
  %v792 = vlaneseq
  %v793 = vshrl.u32 %v792, 7
  %v794 = vsub.s32 2, %v793
  %v795 = vrot.slane %v35, %v794
  %v796 = vlaneseq
  %v797 = vshrl.u32 %v796, 7
  %v798 = vsub.s32 2, %v797
  %v799 = vrot.slane %v36, %v798
  %v800 = vlaneseq
  %v801 = vshrl.u32 %v800, 7
  %v802 = vsub.s32 2, %v801
  %v803 = vrot.slane %v37, %v802
  %v804 = vlaneseq
  %v805 = vshrl.u32 %v804, 7
  %v806 = vsub.s32 2, %v805
  %v807 = vrot.slane %v38, %v806
  %v808 = vlaneseq
  %v809 = vshrl.u32 %v808, 7
  %v810 = vsub.s32 2, %v809
  %v811 = vrot.slane %v39, %v810
  %v812 = vlaneseq
  %v813 = vshrl.u32 %v812, 7
  %v814 = vsub.s32 2, %v813
  %v815 = vrot.slane %v40, %v814
  %v816 = vlaneseq
  %v817 = vshrl.u32 %v816, 7
  %v818 = vsub.s32 2, %v817
  %v819 = vrot.slane %v41, %v818
  %v820 = vlaneseq
  %v821 = vshrl.u32 %v820, 7
  %v822 = vsub.s32 2, %v821
  %v823 = vrot.slane %v42, %v822
  %v824 = vlaneseq
  %v825 = vshrl.u32 %v824, 7
  %v826 = vsub.s32 2, %v825
  %v827 = vrot.slane %v43, %v826
  %v828 = vlaneseq
  %v829 = vshrl.u32 %v828, 7
  %v830 = vsub.s32 2, %v829
  %v831 = vrot.slane %v44, %v830
  %v832 = vlaneseq
  %v833 = vshrl.u32 %v832, 7
  %v834 = vsub.s32 2, %v833
  %v835 = vrot.slane %v45, %v834
  %v836 = vlaneseq
  %v837 = vshrl.u32 %v836, 7
  %v838 = vsub.s32 2, %v837
  %v839 = vrot.slane %v46, %v838
  %v840 = vlaneseq
  %v841 = vshrl.u32 %v840, 7
  %v842 = vsub.s32 2, %v841
  %v843 = vrot.slane %v47, %v842
  %v844 = vlaneseq
  %v845 = vshrl.u32 %v844, 7
  %v846 = vsub.s32 2, %v845
  %v847 = vrot.slane %v48, %v846
  %v848 = vlaneseq
  %v849 = vshrl.u32 %v848, 7
  %v850 = vsub.s32 2, %v849
  %v851 = vrot.slane %v49, %v850
  %v852 = vlaneseq
  %v853 = vshrl.u32 %v852, 7
  %v854 = vsub.s32 2, %v853
  %v855 = vrot.slane %v50, %v854
  %v856 = vlaneseq
  %v857 = vshrl.u32 %v856, 7
  %v858 = vsub.s32 2, %v857
  %v859 = vrot.slane %v51, %v858
  %v860 = vlaneseq
  %v861 = vshrl.u32 %v860, 7
  %v862 = vsub.s32 2, %v861
  %v863 = vrot.slane %v52, %v862
  %v864 = vlaneseq
  %v865 = vshrl.u32 %v864, 7
  %v866 = vsub.s32 2, %v865
  %v867 = vrot.slane %v53, %v866
  %v868 = vlaneseq
  %v869 = vshrl.u32 %v868, 7
  %v870 = vsub.s32 2, %v869
  %v871 = vrot.slane %v54, %v870
  %v872 = vmul.f32 %v743, %v747
  %v873 = vmul.f32 %v742, %v751
  %v874 = vmul.f32 %v741, %v755
  %v875 = vmul.f32 %v740, %v759
  %v876 = vmul.f32 %v739, %v763
  %v877 = vmul.f32 %v738, %v767
  %v878 = vmul.f32 %v737, %v771
  %v879 = vmul.f32 %v736, %v775
  %v880 = vmul.f32 %v735, %v779
  %v881 = vmul.f32 %v734, %v783
  %v882 = vmul.f32 %v733, %v787
  %v883 = vmul.f32 %v732, %v791
  %v884 = vmul.f32 %v731, %v795
  %v885 = vmul.f32 %v730, %v799
  %v886 = vmul.f32 %v729, %v803
  %v887 = vmul.f32 %v728, %v807
  %v888 = vmul.f32 %v727, %v811
  %v889 = vmul.f32 %v726, %v815
  %v890 = vmul.f32 %v725, %v819
  %v891 = vmul.f32 %v724, %v823
  %v892 = vmul.f32 %v723, %v827
  %v893 = vmul.f32 %v722, %v831
  %v894 = vmul.f32 %v721, %v835
  %v895 = vmul.f32 %v720, %v839
  %v896 = vmul.f32 %v719, %v843
  %v897 = vmul.f32 %v718, %v847
  %v898 = vmul.f32 %v717, %v851
  %v899 = vmul.f32 %v716, %v855
  %v900 = vmul.f32 %v715, %v859
  %v901 = vmul.f32 %v714, %v863
  %v902 = vmul.f32 %v713, %v867
  %v903 = vmul.f32 %v712, %v871
  %904 = vrot.lane.b32.xlu0 %v99, 1
  %v905 = vpop.permute.xlu0 %904
  %906 = vrot.lane.b32.xlu0 %v100, 1
  %v907 = vpop.permute.xlu0 %906
  %908 = vrot.lane.b32.xlu0 %v101, 1
  %v909 = vpop.permute.xlu0 %908
  %910 = vrot.lane.b32.xlu0 %v102, 1
  %v911 = vpop.permute.xlu0 %910
  %912 = vrot.lane.b32.xlu0 %v103, 1
  %v913 = vpop.permute.xlu0 %912
  %914 = vrot.lane.b32.xlu0 %v104, 1
  %v915 = vpop.permute.xlu0 %914
  %916 = vrot.lane.b32.xlu0 %v105, 1
  %v917 = vpop.permute.xlu0 %916
  %918 = vrot.lane.b32.xlu0 %v106, 1
  %v919 = vpop.permute.xlu0 %918
  %920 = vrot.lane.b32.xlu0 %v107, 1
  %v921 = vpop.permute.xlu0 %920
  %922 = vrot.lane.b32.xlu0 %v108, 1
  %v923 = vpop.permute.xlu0 %922
  %924 = vrot.lane.b32.xlu0 %v109, 1
  %v925 = vpop.permute.xlu0 %924
  %926 = vrot.lane.b32.xlu0 %v110, 1
  %v927 = vpop.permute.xlu0 %926
  %928 = vrot.lane.b32.xlu0 %v111, 1
  %v929 = vpop.permute.xlu0 %928
  %930 = vrot.lane.b32.xlu0 %v112, 1
  %v931 = vpop.permute.xlu0 %930
  %932 = vrot.lane.b32.xlu0 %v113, 1
  %v933 = vpop.permute.xlu0 %932
  %934 = vrot.lane.b32.xlu0 %v114, 1
  %v935 = vpop.permute.xlu0 %934
  %936 = vrot.lane.b32.xlu0 %v115, 1
  %v937 = vpop.permute.xlu0 %936
  %938 = vrot.lane.b32.xlu0 %v116, 1
  %v939 = vpop.permute.xlu0 %938
  %940 = vrot.lane.b32.xlu0 %v117, 1
  %v941 = vpop.permute.xlu0 %940
  %942 = vrot.lane.b32.xlu0 %v118, 1
  %v943 = vpop.permute.xlu0 %942
  %944 = vrot.lane.b32.xlu0 %v119, 1
  %v945 = vpop.permute.xlu0 %944
  %946 = vrot.lane.b32.xlu0 %v120, 1
  %v947 = vpop.permute.xlu0 %946
  %948 = vrot.lane.b32.xlu0 %v121, 1
  %v949 = vpop.permute.xlu0 %948
  %950 = vrot.lane.b32.xlu0 %v122, 1
  %v951 = vpop.permute.xlu0 %950
  %952 = vrot.lane.b32.xlu0 %v123, 1
  %v953 = vpop.permute.xlu0 %952
  %954 = vrot.lane.b32.xlu0 %v124, 1
  %v955 = vpop.permute.xlu0 %954
  %956 = vrot.lane.b32.xlu0 %v125, 1
  %v957 = vpop.permute.xlu0 %956
  %958 = vrot.lane.b32.xlu0 %v126, 1
  %v959 = vpop.permute.xlu0 %958
  %960 = vrot.lane.b32.xlu0 %v127, 1
  %v961 = vpop.permute.xlu0 %960
  %962 = vrot.lane.b32.xlu0 %v128, 1
  %v963 = vpop.permute.xlu0 %962
  %964 = vrot.lane.b32.xlu0 %v129, 1
  %v965 = vpop.permute.xlu0 %964
  %966 = vrot.lane.b32.xlu0 %v130, 1
  %v967 = vpop.permute.xlu0 %966
  %vm968 = vcmp.lt.s32.totalorder %v196, 1
  %v969 = vsel %vm968, %v965, %v967
  %v970 = vsel %vm968, %v963, %v965
  %v971 = vsel %vm968, %v961, %v963
  %v972 = vsel %vm968, %v959, %v961
  %v973 = vsel %vm968, %v957, %v959
  %v974 = vsel %vm968, %v955, %v957
  %v975 = vsel %vm968, %v953, %v955
  %v976 = vsel %vm968, %v951, %v953
  %v977 = vsel %vm968, %v949, %v951
  %v978 = vsel %vm968, %v947, %v949
  %v979 = vsel %vm968, %v945, %v947
  %v980 = vsel %vm968, %v943, %v945
  %v981 = vsel %vm968, %v941, %v943
  %v982 = vsel %vm968, %v939, %v941
  %v983 = vsel %vm968, %v937, %v939
  %v984 = vsel %vm968, %v935, %v937
  %v985 = vsel %vm968, %v933, %v935
  %v986 = vsel %vm968, %v931, %v933
  %v987 = vsel %vm968, %v929, %v931
  %v988 = vsel %vm968, %v927, %v929
  %v989 = vsel %vm968, %v925, %v927
  %v990 = vsel %vm968, %v923, %v925
  %v991 = vsel %vm968, %v921, %v923
  %v992 = vsel %vm968, %v919, %v921
  %v993 = vsel %vm968, %v917, %v919
  %v994 = vsel %vm968, %v915, %v917
  %v995 = vsel %vm968, %v913, %v915
  %v996 = vsel %vm968, %v911, %v913
  %v997 = vsel %vm968, %v909, %v911
  %v998 = vsel %vm968, %v907, %v909
  %v999 = vsel %vm968, %v905, %v907
  %v1000 = vsel %vm968, %v967, %v905
  %v1001 = vlaneseq
  %v1002 = vshrl.u32 %v1001, 7
  %v1003 = vsub.s32 3, %v1002
  %v1004 = vrot.slane %v23, %v1003
  %v1005 = vlaneseq
  %v1006 = vshrl.u32 %v1005, 7
  %v1007 = vsub.s32 3, %v1006
  %v1008 = vrot.slane %v24, %v1007
  %v1009 = vlaneseq
  %v1010 = vshrl.u32 %v1009, 7
  %v1011 = vsub.s32 3, %v1010
  %v1012 = vrot.slane %v25, %v1011
  %v1013 = vlaneseq
  %v1014 = vshrl.u32 %v1013, 7
  %v1015 = vsub.s32 3, %v1014
  %v1016 = vrot.slane %v26, %v1015
  %v1017 = vlaneseq
  %v1018 = vshrl.u32 %v1017, 7
  %v1019 = vsub.s32 3, %v1018
  %v1020 = vrot.slane %v27, %v1019
  %v1021 = vlaneseq
  %v1022 = vshrl.u32 %v1021, 7
  %v1023 = vsub.s32 3, %v1022
  %v1024 = vrot.slane %v28, %v1023
  %v1025 = vlaneseq
  %v1026 = vshrl.u32 %v1025, 7
  %v1027 = vsub.s32 3, %v1026
  %v1028 = vrot.slane %v29, %v1027
  %v1029 = vlaneseq
  %v1030 = vshrl.u32 %v1029, 7
  %v1031 = vsub.s32 3, %v1030
  %v1032 = vrot.slane %v30, %v1031
  %v1033 = vlaneseq
  %v1034 = vshrl.u32 %v1033, 7
  %v1035 = vsub.s32 3, %v1034
  %v1036 = vrot.slane %v31, %v1035
  %v1037 = vlaneseq
  %v1038 = vshrl.u32 %v1037, 7
  %v1039 = vsub.s32 3, %v1038
  %v1040 = vrot.slane %v32, %v1039
  %v1041 = vlaneseq
  %v1042 = vshrl.u32 %v1041, 7
  %v1043 = vsub.s32 3, %v1042
  %v1044 = vrot.slane %v33, %v1043
  %v1045 = vlaneseq
  %v1046 = vshrl.u32 %v1045, 7
  %v1047 = vsub.s32 3, %v1046
  %v1048 = vrot.slane %v34, %v1047
  %v1049 = vlaneseq
  %v1050 = vshrl.u32 %v1049, 7
  %v1051 = vsub.s32 3, %v1050
  %v1052 = vrot.slane %v35, %v1051
  %v1053 = vlaneseq
  %v1054 = vshrl.u32 %v1053, 7
  %v1055 = vsub.s32 3, %v1054
  %v1056 = vrot.slane %v36, %v1055
  %v1057 = vlaneseq
  %v1058 = vshrl.u32 %v1057, 7
  %v1059 = vsub.s32 3, %v1058
  %v1060 = vrot.slane %v37, %v1059
  %v1061 = vlaneseq
  %v1062 = vshrl.u32 %v1061, 7
  %v1063 = vsub.s32 3, %v1062
  %v1064 = vrot.slane %v38, %v1063
  %v1065 = vlaneseq
  %v1066 = vshrl.u32 %v1065, 7
  %v1067 = vsub.s32 3, %v1066
  %v1068 = vrot.slane %v39, %v1067
  %v1069 = vlaneseq
  %v1070 = vshrl.u32 %v1069, 7
  %v1071 = vsub.s32 3, %v1070
  %v1072 = vrot.slane %v40, %v1071
  %v1073 = vlaneseq
  %v1074 = vshrl.u32 %v1073, 7
  %v1075 = vsub.s32 3, %v1074
  %v1076 = vrot.slane %v41, %v1075
  %v1077 = vlaneseq
  %v1078 = vshrl.u32 %v1077, 7
  %v1079 = vsub.s32 3, %v1078
  %v1080 = vrot.slane %v42, %v1079
  %v1081 = vlaneseq
  %v1082 = vshrl.u32 %v1081, 7
  %v1083 = vsub.s32 3, %v1082
  %v1084 = vrot.slane %v43, %v1083
  %v1085 = vlaneseq
  %v1086 = vshrl.u32 %v1085, 7
  %v1087 = vsub.s32 3, %v1086
  %v1088 = vrot.slane %v44, %v1087
  %v1089 = vlaneseq
  %v1090 = vshrl.u32 %v1089, 7
  %v1091 = vsub.s32 3, %v1090
  %v1092 = vrot.slane %v45, %v1091
  %v1093 = vlaneseq
  %v1094 = vshrl.u32 %v1093, 7
  %v1095 = vsub.s32 3, %v1094
  %v1096 = vrot.slane %v46, %v1095
  %v1097 = vlaneseq
  %v1098 = vshrl.u32 %v1097, 7
  %v1099 = vsub.s32 3, %v1098
  %v1100 = vrot.slane %v47, %v1099
  %v1101 = vlaneseq
  %v1102 = vshrl.u32 %v1101, 7
  %v1103 = vsub.s32 3, %v1102
  %v1104 = vrot.slane %v48, %v1103
  %v1105 = vlaneseq
  %v1106 = vshrl.u32 %v1105, 7
  %v1107 = vsub.s32 3, %v1106
  %v1108 = vrot.slane %v49, %v1107
  %v1109 = vlaneseq
  %v1110 = vshrl.u32 %v1109, 7
  %v1111 = vsub.s32 3, %v1110
  %v1112 = vrot.slane %v50, %v1111
  %v1113 = vlaneseq
  %v1114 = vshrl.u32 %v1113, 7
  %v1115 = vsub.s32 3, %v1114
  %v1116 = vrot.slane %v51, %v1115
  %v1117 = vlaneseq
  %v1118 = vshrl.u32 %v1117, 7
  %v1119 = vsub.s32 3, %v1118
  %v1120 = vrot.slane %v52, %v1119
  %v1121 = vlaneseq
  %v1122 = vshrl.u32 %v1121, 7
  %v1123 = vsub.s32 3, %v1122
  %v1124 = vrot.slane %v53, %v1123
  %v1125 = vlaneseq
  %v1126 = vshrl.u32 %v1125, 7
  %v1127 = vsub.s32 3, %v1126
  %v1128 = vrot.slane %v54, %v1127
  %v1129 = vmul.f32 %v1000, %v1004
  %v1130 = vmul.f32 %v999, %v1008
  %v1131 = vmul.f32 %v998, %v1012
  %v1132 = vmul.f32 %v997, %v1016
  %v1133 = vmul.f32 %v996, %v1020
  %v1134 = vmul.f32 %v995, %v1024
  %v1135 = vmul.f32 %v994, %v1028
  %v1136 = vmul.f32 %v993, %v1032
  %v1137 = vmul.f32 %v992, %v1036
  %v1138 = vmul.f32 %v991, %v1040
  %v1139 = vmul.f32 %v990, %v1044
  %v1140 = vmul.f32 %v989, %v1048
  %v1141 = vmul.f32 %v988, %v1052
  %v1142 = vmul.f32 %v987, %v1056
  %v1143 = vmul.f32 %v986, %v1060
  %v1144 = vmul.f32 %v985, %v1064
  %v1145 = vmul.f32 %v984, %v1068
  %v1146 = vmul.f32 %v983, %v1072
  %v1147 = vmul.f32 %v982, %v1076
  %v1148 = vmul.f32 %v981, %v1080
  %v1149 = vmul.f32 %v980, %v1084
  %v1150 = vmul.f32 %v979, %v1088
  %v1151 = vmul.f32 %v978, %v1092
  %v1152 = vmul.f32 %v977, %v1096
  %v1153 = vmul.f32 %v976, %v1100
  %v1154 = vmul.f32 %v975, %v1104
  %v1155 = vmul.f32 %v974, %v1108
  %v1156 = vmul.f32 %v973, %v1112
  %v1157 = vmul.f32 %v972, %v1116
  %v1158 = vmul.f32 %v971, %v1120
  %v1159 = vmul.f32 %v970, %v1124
  %v1160 = vmul.f32 %v969, %v1128
  %1161 = vrot.lane.b32.xlu0 %v99, 127
  %v1162 = vpop.permute.xlu0 %1161
  %1163 = vrot.lane.b32.xlu0 %v100, 127
  %v1164 = vpop.permute.xlu0 %1163
  %1165 = vrot.lane.b32.xlu0 %v101, 127
  %v1166 = vpop.permute.xlu0 %1165
  %1167 = vrot.lane.b32.xlu0 %v102, 127
  %v1168 = vpop.permute.xlu0 %1167
  %1169 = vrot.lane.b32.xlu0 %v103, 127
  %v1170 = vpop.permute.xlu0 %1169
  %1171 = vrot.lane.b32.xlu0 %v104, 127
  %v1172 = vpop.permute.xlu0 %1171
  %1173 = vrot.lane.b32.xlu0 %v105, 127
  %v1174 = vpop.permute.xlu0 %1173
  %1175 = vrot.lane.b32.xlu0 %v106, 127
  %v1176 = vpop.permute.xlu0 %1175
  %1177 = vrot.lane.b32.xlu0 %v107, 127
  %v1178 = vpop.permute.xlu0 %1177
  %1179 = vrot.lane.b32.xlu0 %v108, 127
  %v1180 = vpop.permute.xlu0 %1179
  %1181 = vrot.lane.b32.xlu0 %v109, 127
  %v1182 = vpop.permute.xlu0 %1181
  %1183 = vrot.lane.b32.xlu0 %v110, 127
  %v1184 = vpop.permute.xlu0 %1183
  %1185 = vrot.lane.b32.xlu0 %v111, 127
  %v1186 = vpop.permute.xlu0 %1185
  %1187 = vrot.lane.b32.xlu0 %v112, 127
  %v1188 = vpop.permute.xlu0 %1187
  %1189 = vrot.lane.b32.xlu0 %v113, 127
  %v1190 = vpop.permute.xlu0 %1189
  %1191 = vrot.lane.b32.xlu0 %v114, 127
  %v1192 = vpop.permute.xlu0 %1191
  %1193 = vrot.lane.b32.xlu0 %v115, 127
  %v1194 = vpop.permute.xlu0 %1193
  %1195 = vrot.lane.b32.xlu0 %v116, 127
  %v1196 = vpop.permute.xlu0 %1195
  %1197 = vrot.lane.b32.xlu0 %v117, 127
  %v1198 = vpop.permute.xlu0 %1197
  %1199 = vrot.lane.b32.xlu0 %v118, 127
  %v1200 = vpop.permute.xlu0 %1199
  %1201 = vrot.lane.b32.xlu0 %v119, 127
  %v1202 = vpop.permute.xlu0 %1201
  %1203 = vrot.lane.b32.xlu0 %v120, 127
  %v1204 = vpop.permute.xlu0 %1203
  %1205 = vrot.lane.b32.xlu0 %v121, 127
  %v1206 = vpop.permute.xlu0 %1205
  %1207 = vrot.lane.b32.xlu0 %v122, 127
  %v1208 = vpop.permute.xlu0 %1207
  %1209 = vrot.lane.b32.xlu0 %v123, 127
  %v1210 = vpop.permute.xlu0 %1209
  %1211 = vrot.lane.b32.xlu0 %v124, 127
  %v1212 = vpop.permute.xlu0 %1211
  %1213 = vrot.lane.b32.xlu0 %v125, 127
  %v1214 = vpop.permute.xlu0 %1213
  %1215 = vrot.lane.b32.xlu0 %v126, 127
  %v1216 = vpop.permute.xlu0 %1215
  %1217 = vrot.lane.b32.xlu0 %v127, 127
  %v1218 = vpop.permute.xlu0 %1217
  %1219 = vrot.lane.b32.xlu0 %v128, 127
  %v1220 = vpop.permute.xlu0 %1219
  %1221 = vrot.lane.b32.xlu0 %v129, 127
  %v1222 = vpop.permute.xlu0 %1221
  %1223 = vrot.lane.b32.xlu0 %v130, 127
  %v1224 = vpop.permute.xlu0 %1223
  %vm1225 = vcmp.lt.s32.totalorder %v196, 127
  %v1226 = vsel %vm1225, %v1222, %v1224
  %v1227 = vsel %vm1225, %v1220, %v1222
  %v1228 = vsel %vm1225, %v1218, %v1220
  %v1229 = vsel %vm1225, %v1216, %v1218
  %v1230 = vsel %vm1225, %v1214, %v1216
  %v1231 = vsel %vm1225, %v1212, %v1214
  %v1232 = vsel %vm1225, %v1210, %v1212
  %v1233 = vsel %vm1225, %v1208, %v1210
  %v1234 = vsel %vm1225, %v1206, %v1208
  %v1235 = vsel %vm1225, %v1204, %v1206
  %v1236 = vsel %vm1225, %v1202, %v1204
  %v1237 = vsel %vm1225, %v1200, %v1202
  %v1238 = vsel %vm1225, %v1198, %v1200
  %v1239 = vsel %vm1225, %v1196, %v1198
  %v1240 = vsel %vm1225, %v1194, %v1196
  %v1241 = vsel %vm1225, %v1192, %v1194
  %v1242 = vsel %vm1225, %v1190, %v1192
  %v1243 = vsel %vm1225, %v1188, %v1190
  %v1244 = vsel %vm1225, %v1186, %v1188
  %v1245 = vsel %vm1225, %v1184, %v1186
  %v1246 = vsel %vm1225, %v1182, %v1184
  %v1247 = vsel %vm1225, %v1180, %v1182
  %v1248 = vsel %vm1225, %v1178, %v1180
  %v1249 = vsel %vm1225, %v1176, %v1178
  %v1250 = vsel %vm1225, %v1174, %v1176
  %v1251 = vsel %vm1225, %v1172, %v1174
  %v1252 = vsel %vm1225, %v1170, %v1172
  %v1253 = vsel %vm1225, %v1168, %v1170
  %v1254 = vsel %vm1225, %v1166, %v1168
  %v1255 = vsel %vm1225, %v1164, %v1166
  %v1256 = vsel %vm1225, %v1162, %v1164
  %v1257 = vsel %vm1225, %v1224, %v1162
  %v1258 = vlaneseq
  %v1259 = vshrl.u32 %v1258, 7
  %v1260 = vsub.s32 5, %v1259
  %v1261 = vrot.slane %v23, %v1260
  %v1262 = vlaneseq
  %v1263 = vshrl.u32 %v1262, 7
  %v1264 = vsub.s32 5, %v1263
  %v1265 = vrot.slane %v24, %v1264
  %v1266 = vlaneseq
  %v1267 = vshrl.u32 %v1266, 7
  %v1268 = vsub.s32 5, %v1267
  %v1269 = vrot.slane %v25, %v1268
  %v1270 = vlaneseq
  %v1271 = vshrl.u32 %v1270, 7
  %v1272 = vsub.s32 5, %v1271
  %v1273 = vrot.slane %v26, %v1272
  %v1274 = vlaneseq
  %v1275 = vshrl.u32 %v1274, 7
  %v1276 = vsub.s32 5, %v1275
  %v1277 = vrot.slane %v27, %v1276
  %v1278 = vlaneseq
  %v1279 = vshrl.u32 %v1278, 7
  %v1280 = vsub.s32 5, %v1279
  %v1281 = vrot.slane %v28, %v1280
  %v1282 = vlaneseq
  %v1283 = vshrl.u32 %v1282, 7
  %v1284 = vsub.s32 5, %v1283
  %v1285 = vrot.slane %v29, %v1284
  %v1286 = vlaneseq
  %v1287 = vshrl.u32 %v1286, 7
  %v1288 = vsub.s32 5, %v1287
  %v1289 = vrot.slane %v30, %v1288
  %v1290 = vlaneseq
  %v1291 = vshrl.u32 %v1290, 7
  %v1292 = vsub.s32 5, %v1291
  %v1293 = vrot.slane %v31, %v1292
  %v1294 = vlaneseq
  %v1295 = vshrl.u32 %v1294, 7
  %v1296 = vsub.s32 5, %v1295
  %v1297 = vrot.slane %v32, %v1296
  %v1298 = vlaneseq
  %v1299 = vshrl.u32 %v1298, 7
  %v1300 = vsub.s32 5, %v1299
  %v1301 = vrot.slane %v33, %v1300
  %v1302 = vlaneseq
  %v1303 = vshrl.u32 %v1302, 7
  %v1304 = vsub.s32 5, %v1303
  %v1305 = vrot.slane %v34, %v1304
  %v1306 = vlaneseq
  %v1307 = vshrl.u32 %v1306, 7
  %v1308 = vsub.s32 5, %v1307
  %v1309 = vrot.slane %v35, %v1308
  %v1310 = vlaneseq
  %v1311 = vshrl.u32 %v1310, 7
  %v1312 = vsub.s32 5, %v1311
  %v1313 = vrot.slane %v36, %v1312
  %v1314 = vlaneseq
  %v1315 = vshrl.u32 %v1314, 7
  %v1316 = vsub.s32 5, %v1315
  %v1317 = vrot.slane %v37, %v1316
  %v1318 = vlaneseq
  %v1319 = vshrl.u32 %v1318, 7
  %v1320 = vsub.s32 5, %v1319
  %v1321 = vrot.slane %v38, %v1320
  %v1322 = vlaneseq
  %v1323 = vshrl.u32 %v1322, 7
  %v1324 = vsub.s32 5, %v1323
  %v1325 = vrot.slane %v39, %v1324
  %v1326 = vlaneseq
  %v1327 = vshrl.u32 %v1326, 7
  %v1328 = vsub.s32 5, %v1327
  %v1329 = vrot.slane %v40, %v1328
  %v1330 = vlaneseq
  %v1331 = vshrl.u32 %v1330, 7
  %v1332 = vsub.s32 5, %v1331
  %v1333 = vrot.slane %v41, %v1332
  %v1334 = vlaneseq
  %v1335 = vshrl.u32 %v1334, 7
  %v1336 = vsub.s32 5, %v1335
  %v1337 = vrot.slane %v42, %v1336
  %v1338 = vlaneseq
  %v1339 = vshrl.u32 %v1338, 7
  %v1340 = vsub.s32 5, %v1339
  %v1341 = vrot.slane %v43, %v1340
  %v1342 = vlaneseq
  %v1343 = vshrl.u32 %v1342, 7
  %v1344 = vsub.s32 5, %v1343
  %v1345 = vrot.slane %v44, %v1344
  %v1346 = vlaneseq
  %v1347 = vshrl.u32 %v1346, 7
  %v1348 = vsub.s32 5, %v1347
  %v1349 = vrot.slane %v45, %v1348
  %v1350 = vlaneseq
  %v1351 = vshrl.u32 %v1350, 7
  %v1352 = vsub.s32 5, %v1351
  %v1353 = vrot.slane %v46, %v1352
  %v1354 = vlaneseq
  %v1355 = vshrl.u32 %v1354, 7
  %v1356 = vsub.s32 5, %v1355
  %v1357 = vrot.slane %v47, %v1356
  %v1358 = vlaneseq
  %v1359 = vshrl.u32 %v1358, 7
  %v1360 = vsub.s32 5, %v1359
  %v1361 = vrot.slane %v48, %v1360
  %v1362 = vlaneseq
  %v1363 = vshrl.u32 %v1362, 7
  %v1364 = vsub.s32 5, %v1363
  %v1365 = vrot.slane %v49, %v1364
  %v1366 = vlaneseq
  %v1367 = vshrl.u32 %v1366, 7
  %v1368 = vsub.s32 5, %v1367
  %v1369 = vrot.slane %v50, %v1368
  %v1370 = vlaneseq
  %v1371 = vshrl.u32 %v1370, 7
  %v1372 = vsub.s32 5, %v1371
  %v1373 = vrot.slane %v51, %v1372
  %v1374 = vlaneseq
  %v1375 = vshrl.u32 %v1374, 7
  %v1376 = vsub.s32 5, %v1375
  %v1377 = vrot.slane %v52, %v1376
  %v1378 = vlaneseq
  %v1379 = vshrl.u32 %v1378, 7
  %v1380 = vsub.s32 5, %v1379
  %v1381 = vrot.slane %v53, %v1380
  %v1382 = vlaneseq
  %v1383 = vshrl.u32 %v1382, 7
  %v1384 = vsub.s32 5, %v1383
  %v1385 = vrot.slane %v54, %v1384
  %v1386 = vmul.f32 %v1256, %v1261
  %v1387 = vmul.f32 %v1255, %v1265
  %v1388 = vmul.f32 %v1254, %v1269
  %v1389 = vmul.f32 %v1253, %v1273
  %v1390 = vmul.f32 %v1252, %v1277
  %v1391 = vmul.f32 %v1251, %v1281
  %v1392 = vmul.f32 %v1250, %v1285
  %v1393 = vmul.f32 %v1249, %v1289
  %v1394 = vmul.f32 %v1248, %v1293
  %v1395 = vmul.f32 %v1247, %v1297
  %v1396 = vmul.f32 %v1246, %v1301
  %v1397 = vmul.f32 %v1245, %v1305
  %v1398 = vmul.f32 %v1244, %v1309
  %v1399 = vmul.f32 %v1243, %v1313
  %v1400 = vmul.f32 %v1242, %v1317
  %v1401 = vmul.f32 %v1241, %v1321
  %v1402 = vmul.f32 %v1240, %v1325
  %v1403 = vmul.f32 %v1239, %v1329
  %v1404 = vmul.f32 %v1238, %v1333
  %v1405 = vmul.f32 %v1237, %v1337
  %v1406 = vmul.f32 %v1236, %v1341
  %v1407 = vmul.f32 %v1235, %v1345
  %v1408 = vmul.f32 %v1234, %v1349
  %v1409 = vmul.f32 %v1233, %v1353
  %v1410 = vmul.f32 %v1232, %v1357
  %v1411 = vmul.f32 %v1231, %v1361
  %v1412 = vmul.f32 %v1230, %v1365
  %v1413 = vmul.f32 %v1229, %v1369
  %v1414 = vmul.f32 %v1228, %v1373
  %v1415 = vmul.f32 %v1227, %v1377
  %v1416 = vmul.f32 %v1226, %v1381
  %v1417 = vmul.f32 %v1257, %v1385
  %1418 = vrot.lane.b32.xlu0 %v99, 113
  %v1419 = vpop.permute.xlu0 %1418
  %1420 = vrot.lane.b32.xlu0 %v100, 113
  %v1421 = vpop.permute.xlu0 %1420
  %1422 = vrot.lane.b32.xlu0 %v101, 113
  %v1423 = vpop.permute.xlu0 %1422
  %1424 = vrot.lane.b32.xlu0 %v102, 113
  %v1425 = vpop.permute.xlu0 %1424
  %1426 = vrot.lane.b32.xlu0 %v103, 113
  %v1427 = vpop.permute.xlu0 %1426
  %1428 = vrot.lane.b32.xlu0 %v104, 113
  %v1429 = vpop.permute.xlu0 %1428
  %1430 = vrot.lane.b32.xlu0 %v105, 113
  %v1431 = vpop.permute.xlu0 %1430
  %1432 = vrot.lane.b32.xlu0 %v106, 113
  %v1433 = vpop.permute.xlu0 %1432
  %1434 = vrot.lane.b32.xlu0 %v107, 113
  %v1435 = vpop.permute.xlu0 %1434
  %1436 = vrot.lane.b32.xlu0 %v108, 113
  %v1437 = vpop.permute.xlu0 %1436
  %1438 = vrot.lane.b32.xlu0 %v109, 113
  %v1439 = vpop.permute.xlu0 %1438
  %1440 = vrot.lane.b32.xlu0 %v110, 113
  %v1441 = vpop.permute.xlu0 %1440
  %1442 = vrot.lane.b32.xlu0 %v111, 113
  %v1443 = vpop.permute.xlu0 %1442
  %1444 = vrot.lane.b32.xlu0 %v112, 113
  %v1445 = vpop.permute.xlu0 %1444
  %1446 = vrot.lane.b32.xlu0 %v113, 113
  %v1447 = vpop.permute.xlu0 %1446
  %1448 = vrot.lane.b32.xlu0 %v114, 113
  %v1449 = vpop.permute.xlu0 %1448
  %1450 = vrot.lane.b32.xlu0 %v115, 113
  %v1451 = vpop.permute.xlu0 %1450
  %1452 = vrot.lane.b32.xlu0 %v116, 113
  %v1453 = vpop.permute.xlu0 %1452
  %1454 = vrot.lane.b32.xlu0 %v117, 113
  %v1455 = vpop.permute.xlu0 %1454
  %1456 = vrot.lane.b32.xlu0 %v118, 113
  %v1457 = vpop.permute.xlu0 %1456
  %1458 = vrot.lane.b32.xlu0 %v119, 113
  %v1459 = vpop.permute.xlu0 %1458
  %1460 = vrot.lane.b32.xlu0 %v120, 113
  %v1461 = vpop.permute.xlu0 %1460
  %1462 = vrot.lane.b32.xlu0 %v121, 113
  %v1463 = vpop.permute.xlu0 %1462
  %1464 = vrot.lane.b32.xlu0 %v122, 113
  %v1465 = vpop.permute.xlu0 %1464
  %1466 = vrot.lane.b32.xlu0 %v123, 113
  %v1467 = vpop.permute.xlu0 %1466
  %1468 = vrot.lane.b32.xlu0 %v124, 113
  %v1469 = vpop.permute.xlu0 %1468
  %1470 = vrot.lane.b32.xlu0 %v125, 113
  %v1471 = vpop.permute.xlu0 %1470
  %1472 = vrot.lane.b32.xlu0 %v126, 113
  %v1473 = vpop.permute.xlu0 %1472
  %1474 = vrot.lane.b32.xlu0 %v127, 113
  %v1475 = vpop.permute.xlu0 %1474
  %1476 = vrot.lane.b32.xlu0 %v128, 113
  %v1477 = vpop.permute.xlu0 %1476
  %1478 = vrot.lane.b32.xlu0 %v129, 113
  %v1479 = vpop.permute.xlu0 %1478
  %1480 = vrot.lane.b32.xlu0 %v130, 113
  %v1481 = vpop.permute.xlu0 %1480
  %vm1482 = vcmp.lt.s32.totalorder %v196, 113
  %v1483 = vsel %vm1482, %v1479, %v1481
  %v1484 = vsel %vm1482, %v1477, %v1479
  %v1485 = vsel %vm1482, %v1475, %v1477
  %v1486 = vsel %vm1482, %v1473, %v1475
  %v1487 = vsel %vm1482, %v1471, %v1473
  %v1488 = vsel %vm1482, %v1469, %v1471
  %v1489 = vsel %vm1482, %v1467, %v1469
  %v1490 = vsel %vm1482, %v1465, %v1467
  %v1491 = vsel %vm1482, %v1463, %v1465
  %v1492 = vsel %vm1482, %v1461, %v1463
  %v1493 = vsel %vm1482, %v1459, %v1461
  %v1494 = vsel %vm1482, %v1457, %v1459
  %v1495 = vsel %vm1482, %v1455, %v1457
  %v1496 = vsel %vm1482, %v1453, %v1455
  %v1497 = vsel %vm1482, %v1451, %v1453
  %v1498 = vsel %vm1482, %v1449, %v1451
  %v1499 = vsel %vm1482, %v1447, %v1449
  %v1500 = vsel %vm1482, %v1445, %v1447
  %v1501 = vsel %vm1482, %v1443, %v1445
  %v1502 = vsel %vm1482, %v1441, %v1443
  %v1503 = vsel %vm1482, %v1439, %v1441
  %v1504 = vsel %vm1482, %v1437, %v1439
  %v1505 = vsel %vm1482, %v1435, %v1437
  %v1506 = vsel %vm1482, %v1433, %v1435
  %v1507 = vsel %vm1482, %v1431, %v1433
  %v1508 = vsel %vm1482, %v1429, %v1431
  %v1509 = vsel %vm1482, %v1427, %v1429
  %v1510 = vsel %vm1482, %v1425, %v1427
  %v1511 = vsel %vm1482, %v1423, %v1425
  %v1512 = vsel %vm1482, %v1421, %v1423
  %v1513 = vsel %vm1482, %v1419, %v1421
  %v1514 = vsel %vm1482, %v1481, %v1419
  %v1515 = vlaneseq
  %v1516 = vshrl.u32 %v1515, 7
  %v1517 = vsub.s32 6, %v1516
  %v1518 = vrot.slane %v23, %v1517
  %v1519 = vlaneseq
  %v1520 = vshrl.u32 %v1519, 7
  %v1521 = vsub.s32 6, %v1520
  %v1522 = vrot.slane %v24, %v1521
  %v1523 = vlaneseq
  %v1524 = vshrl.u32 %v1523, 7
  %v1525 = vsub.s32 6, %v1524
  %v1526 = vrot.slane %v25, %v1525
  %v1527 = vlaneseq
  %v1528 = vshrl.u32 %v1527, 7
  %v1529 = vsub.s32 6, %v1528
  %v1530 = vrot.slane %v26, %v1529
  %v1531 = vlaneseq
  %v1532 = vshrl.u32 %v1531, 7
  %v1533 = vsub.s32 6, %v1532
  %v1534 = vrot.slane %v27, %v1533
  %v1535 = vlaneseq
  %v1536 = vshrl.u32 %v1535, 7
  %v1537 = vsub.s32 6, %v1536
  %v1538 = vrot.slane %v28, %v1537
  %v1539 = vlaneseq
  %v1540 = vshrl.u32 %v1539, 7
  %v1541 = vsub.s32 6, %v1540
  %v1542 = vrot.slane %v29, %v1541
  %v1543 = vlaneseq
  %v1544 = vshrl.u32 %v1543, 7
  %v1545 = vsub.s32 6, %v1544
  %v1546 = vrot.slane %v30, %v1545
  %v1547 = vlaneseq
  %v1548 = vshrl.u32 %v1547, 7
  %v1549 = vsub.s32 6, %v1548
  %v1550 = vrot.slane %v31, %v1549
  %v1551 = vlaneseq
  %v1552 = vshrl.u32 %v1551, 7
  %v1553 = vsub.s32 6, %v1552
  %v1554 = vrot.slane %v32, %v1553
  %v1555 = vlaneseq
  %v1556 = vshrl.u32 %v1555, 7
  %v1557 = vsub.s32 6, %v1556
  %v1558 = vrot.slane %v33, %v1557
  %v1559 = vlaneseq
  %v1560 = vshrl.u32 %v1559, 7
  %v1561 = vsub.s32 6, %v1560
  %v1562 = vrot.slane %v34, %v1561
  %v1563 = vlaneseq
  %v1564 = vshrl.u32 %v1563, 7
  %v1565 = vsub.s32 6, %v1564
  %v1566 = vrot.slane %v35, %v1565
  %v1567 = vlaneseq
  %v1568 = vshrl.u32 %v1567, 7
  %v1569 = vsub.s32 6, %v1568
  %v1570 = vrot.slane %v36, %v1569
  %v1571 = vlaneseq
  %v1572 = vshrl.u32 %v1571, 7
  %v1573 = vsub.s32 6, %v1572
  %v1574 = vrot.slane %v37, %v1573
  %v1575 = vlaneseq
  %v1576 = vshrl.u32 %v1575, 7
  %v1577 = vsub.s32 6, %v1576
  %v1578 = vrot.slane %v38, %v1577
  %v1579 = vlaneseq
  %v1580 = vshrl.u32 %v1579, 7
  %v1581 = vsub.s32 6, %v1580
  %v1582 = vrot.slane %v39, %v1581
  %v1583 = vlaneseq
  %v1584 = vshrl.u32 %v1583, 7
  %v1585 = vsub.s32 6, %v1584
  %v1586 = vrot.slane %v40, %v1585
  %v1587 = vlaneseq
  %v1588 = vshrl.u32 %v1587, 7
  %v1589 = vsub.s32 6, %v1588
  %v1590 = vrot.slane %v41, %v1589
  %v1591 = vlaneseq
  %v1592 = vshrl.u32 %v1591, 7
  %v1593 = vsub.s32 6, %v1592
  %v1594 = vrot.slane %v42, %v1593
  %v1595 = vlaneseq
  %v1596 = vshrl.u32 %v1595, 7
  %v1597 = vsub.s32 6, %v1596
  %v1598 = vrot.slane %v43, %v1597
  %v1599 = vlaneseq
  %v1600 = vshrl.u32 %v1599, 7
  %v1601 = vsub.s32 6, %v1600
  %v1602 = vrot.slane %v44, %v1601
  %v1603 = vlaneseq
  %v1604 = vshrl.u32 %v1603, 7
  %v1605 = vsub.s32 6, %v1604
  %v1606 = vrot.slane %v45, %v1605
  %v1607 = vlaneseq
  %v1608 = vshrl.u32 %v1607, 7
  %v1609 = vsub.s32 6, %v1608
  %v1610 = vrot.slane %v46, %v1609
  %v1611 = vlaneseq
  %v1612 = vshrl.u32 %v1611, 7
  %v1613 = vsub.s32 6, %v1612
  %v1614 = vrot.slane %v47, %v1613
  %v1615 = vlaneseq
  %v1616 = vshrl.u32 %v1615, 7
  %v1617 = vsub.s32 6, %v1616
  %v1618 = vrot.slane %v48, %v1617
  %v1619 = vlaneseq
  %v1620 = vshrl.u32 %v1619, 7
  %v1621 = vsub.s32 6, %v1620
  %v1622 = vrot.slane %v49, %v1621
  %v1623 = vlaneseq
  %v1624 = vshrl.u32 %v1623, 7
  %v1625 = vsub.s32 6, %v1624
  %v1626 = vrot.slane %v50, %v1625
  %v1627 = vlaneseq
  %v1628 = vshrl.u32 %v1627, 7
  %v1629 = vsub.s32 6, %v1628
  %v1630 = vrot.slane %v51, %v1629
  %v1631 = vlaneseq
  %v1632 = vshrl.u32 %v1631, 7
  %v1633 = vsub.s32 6, %v1632
  %v1634 = vrot.slane %v52, %v1633
  %v1635 = vlaneseq
  %v1636 = vshrl.u32 %v1635, 7
  %v1637 = vsub.s32 6, %v1636
  %v1638 = vrot.slane %v53, %v1637
  %v1639 = vlaneseq
  %v1640 = vshrl.u32 %v1639, 7
  %v1641 = vsub.s32 6, %v1640
  %v1642 = vrot.slane %v54, %v1641
  %v1643 = vmul.f32 %v1513, %v1518
  %v1644 = vmul.f32 %v1512, %v1522
  %v1645 = vmul.f32 %v1511, %v1526
  %v1646 = vmul.f32 %v1510, %v1530
  %v1647 = vmul.f32 %v1509, %v1534
  %v1648 = vmul.f32 %v1508, %v1538
  %v1649 = vmul.f32 %v1507, %v1542
  %v1650 = vmul.f32 %v1506, %v1546
  %v1651 = vmul.f32 %v1505, %v1550
  %v1652 = vmul.f32 %v1504, %v1554
  %v1653 = vmul.f32 %v1503, %v1558
  %v1654 = vmul.f32 %v1502, %v1562
  %v1655 = vmul.f32 %v1501, %v1566
  %v1656 = vmul.f32 %v1500, %v1570
  %v1657 = vmul.f32 %v1499, %v1574
  %v1658 = vmul.f32 %v1498, %v1578
  %v1659 = vmul.f32 %v1497, %v1582
  %v1660 = vmul.f32 %v1496, %v1586
  %v1661 = vmul.f32 %v1495, %v1590
  %v1662 = vmul.f32 %v1494, %v1594
  %v1663 = vmul.f32 %v1493, %v1598
  %v1664 = vmul.f32 %v1492, %v1602
  %v1665 = vmul.f32 %v1491, %v1606
  %v1666 = vmul.f32 %v1490, %v1610
  %v1667 = vmul.f32 %v1489, %v1614
  %v1668 = vmul.f32 %v1488, %v1618
  %v1669 = vmul.f32 %v1487, %v1622
  %v1670 = vmul.f32 %v1486, %v1626
  %v1671 = vmul.f32 %v1485, %v1630
  %v1672 = vmul.f32 %v1484, %v1634
  %v1673 = vmul.f32 %v1483, %v1638
  %v1674 = vmul.f32 %v1514, %v1642
  %1675 = vrot.lane.b32.xlu0 %v99, 112
  %v1676 = vpop.permute.xlu0 %1675
  %1677 = vrot.lane.b32.xlu0 %v100, 112
  %v1678 = vpop.permute.xlu0 %1677
  %1679 = vrot.lane.b32.xlu0 %v101, 112
  %v1680 = vpop.permute.xlu0 %1679
  %1681 = vrot.lane.b32.xlu0 %v102, 112
  %v1682 = vpop.permute.xlu0 %1681
  %1683 = vrot.lane.b32.xlu0 %v103, 112
  %v1684 = vpop.permute.xlu0 %1683
  %1685 = vrot.lane.b32.xlu0 %v104, 112
  %v1686 = vpop.permute.xlu0 %1685
  %1687 = vrot.lane.b32.xlu0 %v105, 112
  %v1688 = vpop.permute.xlu0 %1687
  %1689 = vrot.lane.b32.xlu0 %v106, 112
  %v1690 = vpop.permute.xlu0 %1689
  %1691 = vrot.lane.b32.xlu0 %v107, 112
  %v1692 = vpop.permute.xlu0 %1691
  %1693 = vrot.lane.b32.xlu0 %v108, 112
  %v1694 = vpop.permute.xlu0 %1693
  %1695 = vrot.lane.b32.xlu0 %v109, 112
  %v1696 = vpop.permute.xlu0 %1695
  %1697 = vrot.lane.b32.xlu0 %v110, 112
  %v1698 = vpop.permute.xlu0 %1697
  %1699 = vrot.lane.b32.xlu0 %v111, 112
  %v1700 = vpop.permute.xlu0 %1699
  %1701 = vrot.lane.b32.xlu0 %v112, 112
  %v1702 = vpop.permute.xlu0 %1701
  %1703 = vrot.lane.b32.xlu0 %v113, 112
  %v1704 = vpop.permute.xlu0 %1703
  %1705 = vrot.lane.b32.xlu0 %v114, 112
  %v1706 = vpop.permute.xlu0 %1705
  %1707 = vrot.lane.b32.xlu0 %v115, 112
  %v1708 = vpop.permute.xlu0 %1707
  %1709 = vrot.lane.b32.xlu0 %v116, 112
  %v1710 = vpop.permute.xlu0 %1709
  %1711 = vrot.lane.b32.xlu0 %v117, 112
  %v1712 = vpop.permute.xlu0 %1711
  %1713 = vrot.lane.b32.xlu0 %v118, 112
  %v1714 = vpop.permute.xlu0 %1713
  %1715 = vrot.lane.b32.xlu0 %v119, 112
  %v1716 = vpop.permute.xlu0 %1715
  %1717 = vrot.lane.b32.xlu0 %v120, 112
  %v1718 = vpop.permute.xlu0 %1717
  %1719 = vrot.lane.b32.xlu0 %v121, 112
  %v1720 = vpop.permute.xlu0 %1719
  %1721 = vrot.lane.b32.xlu0 %v122, 112
  %v1722 = vpop.permute.xlu0 %1721
  %1723 = vrot.lane.b32.xlu0 %v123, 112
  %v1724 = vpop.permute.xlu0 %1723
  %1725 = vrot.lane.b32.xlu0 %v124, 112
  %v1726 = vpop.permute.xlu0 %1725
  %1727 = vrot.lane.b32.xlu0 %v125, 112
  %v1728 = vpop.permute.xlu0 %1727
  %1729 = vrot.lane.b32.xlu0 %v126, 112
  %v1730 = vpop.permute.xlu0 %1729
  %1731 = vrot.lane.b32.xlu0 %v127, 112
  %v1732 = vpop.permute.xlu0 %1731
  %1733 = vrot.lane.b32.xlu0 %v128, 112
  %v1734 = vpop.permute.xlu0 %1733
  %1735 = vrot.lane.b32.xlu0 %v129, 112
  %v1736 = vpop.permute.xlu0 %1735
  %1737 = vrot.lane.b32.xlu0 %v130, 112
  %v1738 = vpop.permute.xlu0 %1737
  %vm1739 = vcmp.lt.s32.totalorder %v196, 112
  %v1740 = vsel %vm1739, %v1736, %v1738
  %v1741 = vsel %vm1739, %v1734, %v1736
  %v1742 = vsel %vm1739, %v1732, %v1734
  %v1743 = vsel %vm1739, %v1730, %v1732
  %v1744 = vsel %vm1739, %v1728, %v1730
  %v1745 = vsel %vm1739, %v1726, %v1728
  %v1746 = vsel %vm1739, %v1724, %v1726
  %v1747 = vsel %vm1739, %v1722, %v1724
  %v1748 = vsel %vm1739, %v1720, %v1722
  %v1749 = vsel %vm1739, %v1718, %v1720
  %v1750 = vsel %vm1739, %v1716, %v1718
  %v1751 = vsel %vm1739, %v1714, %v1716
  %v1752 = vsel %vm1739, %v1712, %v1714
  %v1753 = vsel %vm1739, %v1710, %v1712
  %v1754 = vsel %vm1739, %v1708, %v1710
  %v1755 = vsel %vm1739, %v1706, %v1708
  %v1756 = vsel %vm1739, %v1704, %v1706
  %v1757 = vsel %vm1739, %v1702, %v1704
  %v1758 = vsel %vm1739, %v1700, %v1702
  %v1759 = vsel %vm1739, %v1698, %v1700
  %v1760 = vsel %vm1739, %v1696, %v1698
  %v1761 = vsel %vm1739, %v1694, %v1696
  %v1762 = vsel %vm1739, %v1692, %v1694
  %v1763 = vsel %vm1739, %v1690, %v1692
  %v1764 = vsel %vm1739, %v1688, %v1690
  %v1765 = vsel %vm1739, %v1686, %v1688
  %v1766 = vsel %vm1739, %v1684, %v1686
  %v1767 = vsel %vm1739, %v1682, %v1684
  %v1768 = vsel %vm1739, %v1680, %v1682
  %v1769 = vsel %vm1739, %v1678, %v1680
  %v1770 = vsel %vm1739, %v1676, %v1678
  %v1771 = vsel %vm1739, %v1738, %v1676
  %v1772 = vlaneseq
  %v1773 = vshrl.u32 %v1772, 7
  %v1774 = vsub.s32 7, %v1773
  %v1775 = vrot.slane %v23, %v1774
  %v1776 = vlaneseq
  %v1777 = vshrl.u32 %v1776, 7
  %v1778 = vsub.s32 7, %v1777
  %v1779 = vrot.slane %v24, %v1778
  %v1780 = vlaneseq
  %v1781 = vshrl.u32 %v1780, 7
  %v1782 = vsub.s32 7, %v1781
  %v1783 = vrot.slane %v25, %v1782
  %v1784 = vlaneseq
  %v1785 = vshrl.u32 %v1784, 7
  %v1786 = vsub.s32 7, %v1785
  %v1787 = vrot.slane %v26, %v1786
  %v1788 = vlaneseq
  %v1789 = vshrl.u32 %v1788, 7
  %v1790 = vsub.s32 7, %v1789
  %v1791 = vrot.slane %v27, %v1790
  %v1792 = vlaneseq
  %v1793 = vshrl.u32 %v1792, 7
  %v1794 = vsub.s32 7, %v1793
  %v1795 = vrot.slane %v28, %v1794
  %v1796 = vlaneseq
  %v1797 = vshrl.u32 %v1796, 7
  %v1798 = vsub.s32 7, %v1797
  %v1799 = vrot.slane %v29, %v1798
  %v1800 = vlaneseq
  %v1801 = vshrl.u32 %v1800, 7
  %v1802 = vsub.s32 7, %v1801
  %v1803 = vrot.slane %v30, %v1802
  %v1804 = vlaneseq
  %v1805 = vshrl.u32 %v1804, 7
  %v1806 = vsub.s32 7, %v1805
  %v1807 = vrot.slane %v31, %v1806
  %v1808 = vlaneseq
  %v1809 = vshrl.u32 %v1808, 7
  %v1810 = vsub.s32 7, %v1809
  %v1811 = vrot.slane %v32, %v1810
  %v1812 = vlaneseq
  %v1813 = vshrl.u32 %v1812, 7
  %v1814 = vsub.s32 7, %v1813
  %v1815 = vrot.slane %v33, %v1814
  %v1816 = vlaneseq
  %v1817 = vshrl.u32 %v1816, 7
  %v1818 = vsub.s32 7, %v1817
  %v1819 = vrot.slane %v34, %v1818
  %v1820 = vlaneseq
  %v1821 = vshrl.u32 %v1820, 7
  %v1822 = vsub.s32 7, %v1821
  %v1823 = vrot.slane %v35, %v1822
  %v1824 = vlaneseq
  %v1825 = vshrl.u32 %v1824, 7
  %v1826 = vsub.s32 7, %v1825
  %v1827 = vrot.slane %v36, %v1826
  %v1828 = vlaneseq
  %v1829 = vshrl.u32 %v1828, 7
  %v1830 = vsub.s32 7, %v1829
  %v1831 = vrot.slane %v37, %v1830
  %v1832 = vlaneseq
  %v1833 = vshrl.u32 %v1832, 7
  %v1834 = vsub.s32 7, %v1833
  %v1835 = vrot.slane %v38, %v1834
  %v1836 = vlaneseq
  %v1837 = vshrl.u32 %v1836, 7
  %v1838 = vsub.s32 7, %v1837
  %v1839 = vrot.slane %v39, %v1838
  %v1840 = vlaneseq
  %v1841 = vshrl.u32 %v1840, 7
  %v1842 = vsub.s32 7, %v1841
  %v1843 = vrot.slane %v40, %v1842
  %v1844 = vlaneseq
  %v1845 = vshrl.u32 %v1844, 7
  %v1846 = vsub.s32 7, %v1845
  %v1847 = vrot.slane %v41, %v1846
  %v1848 = vlaneseq
  %v1849 = vshrl.u32 %v1848, 7
  %v1850 = vsub.s32 7, %v1849
  %v1851 = vrot.slane %v42, %v1850
  %v1852 = vlaneseq
  %v1853 = vshrl.u32 %v1852, 7
  %v1854 = vsub.s32 7, %v1853
  %v1855 = vrot.slane %v43, %v1854
  %v1856 = vlaneseq
  %v1857 = vshrl.u32 %v1856, 7
  %v1858 = vsub.s32 7, %v1857
  %v1859 = vrot.slane %v44, %v1858
  %v1860 = vlaneseq
  %v1861 = vshrl.u32 %v1860, 7
  %v1862 = vsub.s32 7, %v1861
  %v1863 = vrot.slane %v45, %v1862
  %v1864 = vlaneseq
  %v1865 = vshrl.u32 %v1864, 7
  %v1866 = vsub.s32 7, %v1865
  %v1867 = vrot.slane %v46, %v1866
  %v1868 = vlaneseq
  %v1869 = vshrl.u32 %v1868, 7
  %v1870 = vsub.s32 7, %v1869
  %v1871 = vrot.slane %v47, %v1870
  %v1872 = vlaneseq
  %v1873 = vshrl.u32 %v1872, 7
  %v1874 = vsub.s32 7, %v1873
  %v1875 = vrot.slane %v48, %v1874
  %v1876 = vlaneseq
  %v1877 = vshrl.u32 %v1876, 7
  %v1878 = vsub.s32 7, %v1877
  %v1879 = vrot.slane %v49, %v1878
  %v1880 = vlaneseq
  %v1881 = vshrl.u32 %v1880, 7
  %v1882 = vsub.s32 7, %v1881
  %v1883 = vrot.slane %v50, %v1882
  %v1884 = vlaneseq
  %v1885 = vshrl.u32 %v1884, 7
  %v1886 = vsub.s32 7, %v1885
  %v1887 = vrot.slane %v51, %v1886
  %v1888 = vlaneseq
  %v1889 = vshrl.u32 %v1888, 7
  %v1890 = vsub.s32 7, %v1889
  %v1891 = vrot.slane %v52, %v1890
  %v1892 = vlaneseq
  %v1893 = vshrl.u32 %v1892, 7
  %v1894 = vsub.s32 7, %v1893
  %v1895 = vrot.slane %v53, %v1894
  %v1896 = vlaneseq
  %v1897 = vshrl.u32 %v1896, 7
  %v1898 = vsub.s32 7, %v1897
  %v1899 = vrot.slane %v54, %v1898
  %v1900 = vmul.f32 %v1770, %v1775
  %v1901 = vmul.f32 %v1769, %v1779
  %v1902 = vmul.f32 %v1768, %v1783
  %v1903 = vmul.f32 %v1767, %v1787
  %v1904 = vmul.f32 %v1766, %v1791
  %v1905 = vmul.f32 %v1765, %v1795
  %v1906 = vmul.f32 %v1764, %v1799
  %v1907 = vmul.f32 %v1763, %v1803
  %v1908 = vmul.f32 %v1762, %v1807
  %v1909 = vmul.f32 %v1761, %v1811
  %v1910 = vmul.f32 %v1760, %v1815
  %v1911 = vmul.f32 %v1759, %v1819
  %v1912 = vmul.f32 %v1758, %v1823
  %v1913 = vmul.f32 %v1757, %v1827
  %v1914 = vmul.f32 %v1756, %v1831
  %v1915 = vmul.f32 %v1755, %v1835
  %v1916 = vmul.f32 %v1754, %v1839
  %v1917 = vmul.f32 %v1753, %v1843
  %v1918 = vmul.f32 %v1752, %v1847
  %v1919 = vmul.f32 %v1751, %v1851
  %v1920 = vmul.f32 %v1750, %v1855
  %v1921 = vmul.f32 %v1749, %v1859
  %v1922 = vmul.f32 %v1748, %v1863
  %v1923 = vmul.f32 %v1747, %v1867
  %v1924 = vmul.f32 %v1746, %v1871
  %v1925 = vmul.f32 %v1745, %v1875
  %v1926 = vmul.f32 %v1744, %v1879
  %v1927 = vmul.f32 %v1743, %v1883
  %v1928 = vmul.f32 %v1742, %v1887
  %v1929 = vmul.f32 %v1741, %v1891
  %v1930 = vmul.f32 %v1740, %v1895
  %v1931 = vmul.f32 %v1771, %v1899
  %1932 = vrot.lane.b32.xlu0 %v99, 111
  %v1933 = vpop.permute.xlu0 %1932
  %1934 = vrot.lane.b32.xlu0 %v100, 111
  %v1935 = vpop.permute.xlu0 %1934
  %1936 = vrot.lane.b32.xlu0 %v101, 111
  %v1937 = vpop.permute.xlu0 %1936
  %1938 = vrot.lane.b32.xlu0 %v102, 111
  %v1939 = vpop.permute.xlu0 %1938
  %1940 = vrot.lane.b32.xlu0 %v103, 111
  %v1941 = vpop.permute.xlu0 %1940
  %1942 = vrot.lane.b32.xlu0 %v104, 111
  %v1943 = vpop.permute.xlu0 %1942
  %1944 = vrot.lane.b32.xlu0 %v105, 111
  %v1945 = vpop.permute.xlu0 %1944
  %1946 = vrot.lane.b32.xlu0 %v106, 111
  %v1947 = vpop.permute.xlu0 %1946
  %1948 = vrot.lane.b32.xlu0 %v107, 111
  %v1949 = vpop.permute.xlu0 %1948
  %1950 = vrot.lane.b32.xlu0 %v108, 111
  %v1951 = vpop.permute.xlu0 %1950
  %1952 = vrot.lane.b32.xlu0 %v109, 111
  %v1953 = vpop.permute.xlu0 %1952
  %1954 = vrot.lane.b32.xlu0 %v110, 111
  %v1955 = vpop.permute.xlu0 %1954
  %1956 = vrot.lane.b32.xlu0 %v111, 111
  %v1957 = vpop.permute.xlu0 %1956
  %1958 = vrot.lane.b32.xlu0 %v112, 111
  %v1959 = vpop.permute.xlu0 %1958
  %1960 = vrot.lane.b32.xlu0 %v113, 111
  %v1961 = vpop.permute.xlu0 %1960
  %1962 = vrot.lane.b32.xlu0 %v114, 111
  %v1963 = vpop.permute.xlu0 %1962
  %1964 = vrot.lane.b32.xlu0 %v115, 111
  %v1965 = vpop.permute.xlu0 %1964
  %1966 = vrot.lane.b32.xlu0 %v116, 111
  %v1967 = vpop.permute.xlu0 %1966
  %1968 = vrot.lane.b32.xlu0 %v117, 111
  %v1969 = vpop.permute.xlu0 %1968
  %1970 = vrot.lane.b32.xlu0 %v118, 111
  %v1971 = vpop.permute.xlu0 %1970
  %1972 = vrot.lane.b32.xlu0 %v119, 111
  %v1973 = vpop.permute.xlu0 %1972
  %1974 = vrot.lane.b32.xlu0 %v120, 111
  %v1975 = vpop.permute.xlu0 %1974
  %1976 = vrot.lane.b32.xlu0 %v121, 111
  %v1977 = vpop.permute.xlu0 %1976
  %1978 = vrot.lane.b32.xlu0 %v122, 111
  %v1979 = vpop.permute.xlu0 %1978
  %1980 = vrot.lane.b32.xlu0 %v123, 111
  %v1981 = vpop.permute.xlu0 %1980
  %1982 = vrot.lane.b32.xlu0 %v124, 111
  %v1983 = vpop.permute.xlu0 %1982
  %1984 = vrot.lane.b32.xlu0 %v125, 111
  %v1985 = vpop.permute.xlu0 %1984
  %1986 = vrot.lane.b32.xlu0 %v126, 111
  %v1987 = vpop.permute.xlu0 %1986
  %1988 = vrot.lane.b32.xlu0 %v127, 111
  %v1989 = vpop.permute.xlu0 %1988
  %1990 = vrot.lane.b32.xlu0 %v128, 111
  %v1991 = vpop.permute.xlu0 %1990
  %1992 = vrot.lane.b32.xlu0 %v129, 111
  %v1993 = vpop.permute.xlu0 %1992
  %1994 = vrot.lane.b32.xlu0 %v130, 111
  %v1995 = vpop.permute.xlu0 %1994
  %vm1996 = vcmp.lt.s32.totalorder %v196, 111
  %v1997 = vsel %vm1996, %v1993, %v1995
  %v1998 = vsel %vm1996, %v1991, %v1993
  %v1999 = vsel %vm1996, %v1989, %v1991
  %v2000 = vsel %vm1996, %v1987, %v1989
  %v2001 = vsel %vm1996, %v1985, %v1987
  %v2002 = vsel %vm1996, %v1983, %v1985
  %v2003 = vsel %vm1996, %v1981, %v1983
  %v2004 = vsel %vm1996, %v1979, %v1981
  %v2005 = vsel %vm1996, %v1977, %v1979
  %v2006 = vsel %vm1996, %v1975, %v1977
  %v2007 = vsel %vm1996, %v1973, %v1975
  %v2008 = vsel %vm1996, %v1971, %v1973
  %v2009 = vsel %vm1996, %v1969, %v1971
  %v2010 = vsel %vm1996, %v1967, %v1969
  %v2011 = vsel %vm1996, %v1965, %v1967
  %v2012 = vsel %vm1996, %v1963, %v1965
  %v2013 = vsel %vm1996, %v1961, %v1963
  %v2014 = vsel %vm1996, %v1959, %v1961
  %v2015 = vsel %vm1996, %v1957, %v1959
  %v2016 = vsel %vm1996, %v1955, %v1957
  %v2017 = vsel %vm1996, %v1953, %v1955
  %v2018 = vsel %vm1996, %v1951, %v1953
  %v2019 = vsel %vm1996, %v1949, %v1951
  %v2020 = vsel %vm1996, %v1947, %v1949
  %v2021 = vsel %vm1996, %v1945, %v1947
  %v2022 = vsel %vm1996, %v1943, %v1945
  %v2023 = vsel %vm1996, %v1941, %v1943
  %v2024 = vsel %vm1996, %v1939, %v1941
  %v2025 = vsel %vm1996, %v1937, %v1939
  %v2026 = vsel %vm1996, %v1935, %v1937
  %v2027 = vsel %vm1996, %v1933, %v1935
  %v2028 = vsel %vm1996, %v1995, %v1933
  %v2029 = vlaneseq
  %v2030 = vshrl.u32 %v2029, 7
  %v2031 = vsub.s32 0, %v2030
  %v2032 = vrot.slane %v55, %v2031
  %v2033 = vlaneseq
  %v2034 = vshrl.u32 %v2033, 7
  %v2035 = vsub.s32 0, %v2034
  %v2036 = vrot.slane %v56, %v2035
  %v2037 = vlaneseq
  %v2038 = vshrl.u32 %v2037, 7
  %v2039 = vsub.s32 0, %v2038
  %v2040 = vrot.slane %v57, %v2039
  %v2041 = vlaneseq
  %v2042 = vshrl.u32 %v2041, 7
  %v2043 = vsub.s32 0, %v2042
  %v2044 = vrot.slane %v58, %v2043
  %v2045 = vlaneseq
  %v2046 = vshrl.u32 %v2045, 7
  %v2047 = vsub.s32 0, %v2046
  %v2048 = vrot.slane %v59, %v2047
  %v2049 = vlaneseq
  %v2050 = vshrl.u32 %v2049, 7
  %v2051 = vsub.s32 0, %v2050
  %v2052 = vrot.slane %v60, %v2051
  %v2053 = vlaneseq
  %v2054 = vshrl.u32 %v2053, 7
  %v2055 = vsub.s32 0, %v2054
  %v2056 = vrot.slane %v61, %v2055
  %v2057 = vlaneseq
  %v2058 = vshrl.u32 %v2057, 7
  %v2059 = vsub.s32 0, %v2058
  %v2060 = vrot.slane %v62, %v2059
  %v2061 = vlaneseq
  %v2062 = vshrl.u32 %v2061, 7
  %v2063 = vsub.s32 0, %v2062
  %v2064 = vrot.slane %v63, %v2063
  %v2065 = vlaneseq
  %v2066 = vshrl.u32 %v2065, 7
  %v2067 = vsub.s32 0, %v2066
  %v2068 = vrot.slane %v64, %v2067
  %v2069 = vlaneseq
  %v2070 = vshrl.u32 %v2069, 7
  %v2071 = vsub.s32 0, %v2070
  %v2072 = vrot.slane %v65, %v2071
  %v2073 = vlaneseq
  %v2074 = vshrl.u32 %v2073, 7
  %v2075 = vsub.s32 0, %v2074
  %v2076 = vrot.slane %v66, %v2075
  %v2077 = vlaneseq
  %v2078 = vshrl.u32 %v2077, 7
  %v2079 = vsub.s32 0, %v2078
  %v2080 = vrot.slane %v67, %v2079
  %v2081 = vlaneseq
  %v2082 = vshrl.u32 %v2081, 7
  %v2083 = vsub.s32 0, %v2082
  %v2084 = vrot.slane %v68, %v2083
  %v2085 = vlaneseq
  %v2086 = vshrl.u32 %v2085, 7
  %v2087 = vsub.s32 0, %v2086
  %v2088 = vrot.slane %v69, %v2087
  %v2089 = vlaneseq
  %v2090 = vshrl.u32 %v2089, 7
  %v2091 = vsub.s32 0, %v2090
  %v2092 = vrot.slane %v70, %v2091
  %v2093 = vlaneseq
  %v2094 = vshrl.u32 %v2093, 7
  %v2095 = vsub.s32 0, %v2094
  %v2096 = vrot.slane %v71, %v2095
  %v2097 = vlaneseq
  %v2098 = vshrl.u32 %v2097, 7
  %v2099 = vsub.s32 0, %v2098
  %v2100 = vrot.slane %v72, %v2099
  %v2101 = vlaneseq
  %v2102 = vshrl.u32 %v2101, 7
  %v2103 = vsub.s32 0, %v2102
  %v2104 = vrot.slane %v73, %v2103
  %v2105 = vlaneseq
  %v2106 = vshrl.u32 %v2105, 7
  %v2107 = vsub.s32 0, %v2106
  %v2108 = vrot.slane %v74, %v2107
  %v2109 = vlaneseq
  %v2110 = vshrl.u32 %v2109, 7
  %v2111 = vsub.s32 0, %v2110
  %v2112 = vrot.slane %v75, %v2111
  %v2113 = vlaneseq
  %v2114 = vshrl.u32 %v2113, 7
  %v2115 = vsub.s32 0, %v2114
  %v2116 = vrot.slane %v76, %v2115
  %v2117 = vlaneseq
  %v2118 = vshrl.u32 %v2117, 7
  %v2119 = vsub.s32 0, %v2118
  %v2120 = vrot.slane %v77, %v2119
  %v2121 = vlaneseq
  %v2122 = vshrl.u32 %v2121, 7
  %v2123 = vsub.s32 0, %v2122
  %v2124 = vrot.slane %v78, %v2123
  %v2125 = vlaneseq
  %v2126 = vshrl.u32 %v2125, 7
  %v2127 = vsub.s32 0, %v2126
  %v2128 = vrot.slane %v79, %v2127
  %v2129 = vlaneseq
  %v2130 = vshrl.u32 %v2129, 7
  %v2131 = vsub.s32 0, %v2130
  %v2132 = vrot.slane %v80, %v2131
  %v2133 = vlaneseq
  %v2134 = vshrl.u32 %v2133, 7
  %v2135 = vsub.s32 0, %v2134
  %v2136 = vrot.slane %v81, %v2135
  %v2137 = vlaneseq
  %v2138 = vshrl.u32 %v2137, 7
  %v2139 = vsub.s32 0, %v2138
  %v2140 = vrot.slane %v82, %v2139
  %v2141 = vlaneseq
  %v2142 = vshrl.u32 %v2141, 7
  %v2143 = vsub.s32 0, %v2142
  %v2144 = vrot.slane %v83, %v2143
  %v2145 = vlaneseq
  %v2146 = vshrl.u32 %v2145, 7
  %v2147 = vsub.s32 0, %v2146
  %v2148 = vrot.slane %v84, %v2147
  %v2149 = vlaneseq
  %v2150 = vshrl.u32 %v2149, 7
  %v2151 = vsub.s32 0, %v2150
  %v2152 = vrot.slane %v85, %v2151
  %v2153 = vlaneseq
  %v2154 = vshrl.u32 %v2153, 7
  %v2155 = vsub.s32 0, %v2154
  %v2156 = vrot.slane %v86, %v2155
  %v2157 = vmul.f32 %v2027, %v2032
  %v2158 = vmul.f32 %v2026, %v2036
  %v2159 = vmul.f32 %v2025, %v2040
  %v2160 = vmul.f32 %v2024, %v2044
  %v2161 = vmul.f32 %v2023, %v2048
  %v2162 = vmul.f32 %v2022, %v2052
  %v2163 = vmul.f32 %v2021, %v2056
  %v2164 = vmul.f32 %v2020, %v2060
  %v2165 = vmul.f32 %v2019, %v2064
  %v2166 = vmul.f32 %v2018, %v2068
  %v2167 = vmul.f32 %v2017, %v2072
  %v2168 = vmul.f32 %v2016, %v2076
  %v2169 = vmul.f32 %v2015, %v2080
  %v2170 = vmul.f32 %v2014, %v2084
  %v2171 = vmul.f32 %v2013, %v2088
  %v2172 = vmul.f32 %v2012, %v2092
  %v2173 = vmul.f32 %v2011, %v2096
  %v2174 = vmul.f32 %v2010, %v2100
  %v2175 = vmul.f32 %v2009, %v2104
  %v2176 = vmul.f32 %v2008, %v2108
  %v2177 = vmul.f32 %v2007, %v2112
  %v2178 = vmul.f32 %v2006, %v2116
  %v2179 = vmul.f32 %v2005, %v2120
  %v2180 = vmul.f32 %v2004, %v2124
  %v2181 = vmul.f32 %v2003, %v2128
  %v2182 = vmul.f32 %v2002, %v2132
  %v2183 = vmul.f32 %v2001, %v2136
  %v2184 = vmul.f32 %v2000, %v2140
  %v2185 = vmul.f32 %v1999, %v2144
  %v2186 = vmul.f32 %v1998, %v2148
  %v2187 = vmul.f32 %v1997, %v2152
  %v2188 = vmul.f32 %v2028, %v2156
  %v2189 = vld [vmem:[%s1] sm:$0xff]
  %v2190 = vld [vmem:[%s1 + $0x8] sm:$0xff]
  %v2191 = vld [vmem:[%s1 + $0x10] sm:$0xff]
  %v2192 = vld [vmem:[%s1 + $0x18] sm:$0xff]
  %vm2193 = vcmask 588800
  %v2195 = vsel %vm2193, %v2189, 0
  %v2198 = vsel %vm2193, %v2190, 0
  %v2201 = vsel %vm2193, %v2191, 0
  %v2204 = vsel %vm2193, %v2192, 0
  %2206 = vmatprep.subr.mxu0 0.0
  %2207 = vmatpush1.msra.mxu0 0.0
  %2208 = vmatprep.subr.mxu0 0.0
  %2209 = vmatpush1.msra.mxu0 0.0
  %2210 = vmatprep.subr.mxu0 0.0
  %2211 = vmatpush1.msra.mxu0 0.0
  %2212 = vmatprep.subr.mxu0 0.0
  %2213 = vmatpush1.msra.mxu0 0.0
  %2214 = vmatprep.subr.mxu0 0.0
  %2215 = vmatpush1.msra.mxu0 0.0
  %2216 = vmatprep.subr.mxu0 0.0
  %2217 = vmatpush1.msra.mxu0 0.0
  %2218 = vmatprep.subr.mxu0 0.0
  %2219 = vmatpush1.msra.mxu0 0.0
  %2220 = vmatprep.subr.mxu0 %v2158
  %2221 = vmatpush1.msra.mxu0 %v2157
  %2222 = vmatprep.subr.mxu0 %v1901
  %2223 = vmatpush1.msra.mxu0 %v1900
  %2224 = vmatprep.subr.mxu0 %v1644
  %2225 = vmatpush1.msra.mxu0 %v1643
  %2226 = vmatprep.subr.mxu0 %v1387
  %2227 = vmatpush1.msra.mxu0 %v1386
  %2228 = vmatprep.subr.mxu0 %v100
  %2229 = vmatpush1.msra.mxu0 %v99
  %2230 = vmatprep.subr.mxu0 %v1130
  %2231 = vmatpush1.msra.mxu0 %v1129
  %2232 = vmatprep.subr.mxu0 %v873
  %2233 = vmatpush1.msra.mxu0 %v872
  %2234 = vmatprep.subr.mxu0 %v616
  %2235 = vmatpush1.msra.mxu0 %v615
  %2236 = vmatprep.subr.mxu0 %v359
  %2237 = vmatpush1.msra.mxu0 %v358
  %2238 = vmatprep.subr.mxu0 0.0
  %2239 = vmatpush2.msra.mxu0 0.0
  %2240 = vmatprep.subr.mxu0 0.0
  %2241 = vmatpush2.msra.mxu0 0.0
  %2242 = vmatprep.subr.mxu0 0.0
  %2243 = vmatpush2.msra.mxu0 0.0
  %2244 = vmatprep.subr.mxu0 0.0
  %2245 = vmatpush2.msra.mxu0 0.0
  %2246 = vmatprep.subr.mxu0 0.0
  %2247 = vmatpush2.msra.mxu0 0.0
  %2248 = vmatprep.subr.mxu0 0.0
  %2249 = vmatpush2.msra.mxu0 0.0
  %2250 = vmatprep.subr.mxu0 0.0
  %2251 = vmatpush2.msra.mxu0 0.0
  %2252 = vmatprep.subr.mxu0 0.0
  %2253 = vmatpush2.msra.mxu0 0.0
  %2254 = vmatprep.subr.mxu0 0.0
  %2255 = vmatpush2.msra.mxu0 0.0
  %2256 = vmatprep.subr.mxu0 0.0
  %2257 = vmatpush2.msra.mxu0 0.0
  %2258 = vmatprep.subr.mxu0 0.0
  %2259 = vmatpush2.msra.mxu0 0.0
  %2260 = vmatprep.subr.mxu0 0.0
  %2261 = vmatpush2.msra.mxu0 0.0
  %2262 = vmatprep.subr.mxu0 0.0
  %2263 = vmatpush2.msra.mxu0 0.0
  %2264 = vmatprep.subr.mxu0 0.0
  %2265 = vmatpush2.msra.mxu0 0.0
  %2266 = vmatprep.subr.mxu0 0.0
  %2267 = vmatpush2.msra.mxu0 0.0
  %2268 = vmatprep.subr.mxu0 0.0
  %2269 = vmatpush2.msra.mxu0 0.0
  %2270 = vmatprep.mubr.f32.mxu0 0.0
  %2271 = vmatmul.mubr.f32.gmra.mxu0 %v2195
  %v2272 = vpop.f32.mrf.mxu0
  %v2273 = vadd.f32 0.0, %v2272
  %v2274 = vpop.f32.mrf.mxu0
  %v2275 = vadd.f32 0.0, %v2274
  %2276 = vmatprep.mubr.f32.mxu0 0.0
  %2277 = vmatmul.mubr.f32.gmra.mxu0 %v2198
  %v2278 = vpop.f32.mrf.mxu0
  %v2279 = vadd.f32 0.0, %v2278
  %v2280 = vpop.f32.mrf.mxu0
  %v2281 = vadd.f32 0.0, %v2280
  %2282 = vmatprep.mubr.f32.mxu0 0.0
  %2283 = vmatmul.mubr.f32.gmra.mxu0 %v2201
  %v2284 = vpop.f32.mrf.mxu0
  %v2285 = vadd.f32 0.0, %v2284
  %v2286 = vpop.f32.mrf.mxu0
  %v2287 = vadd.f32 0.0, %v2286
  %2288 = vmatprep.mubr.f32.mxu0 0.0
  %2289 = vmatmul.mubr.f32.gmra.mxu0 %v2204
  %v2290 = vpop.f32.mrf.mxu0
  %v2291 = vadd.f32 0.0, %v2290
  %v2292 = vpop.f32.mrf.mxu0
  %v2293 = vadd.f32 0.0, %v2292
  %2294 = vdwg.mxu0
  %2295 = vmatprep.subr.mxu0 0.0
  %2296 = vmatpush1.msra.mxu0 0.0
  %2297 = vmatprep.subr.mxu0 0.0
  %2298 = vmatpush1.msra.mxu0 0.0
  %2299 = vmatprep.subr.mxu0 0.0
  %2300 = vmatpush1.msra.mxu0 0.0
  %2301 = vmatprep.subr.mxu0 0.0
  %2302 = vmatpush1.msra.mxu0 0.0
  %2303 = vmatprep.subr.mxu0 0.0
  %2304 = vmatpush1.msra.mxu0 0.0
  %2305 = vmatprep.subr.mxu0 0.0
  %2306 = vmatpush1.msra.mxu0 0.0
  %2307 = vmatprep.subr.mxu0 0.0
  %2308 = vmatpush1.msra.mxu0 0.0
  %2309 = vmatprep.subr.mxu0 %v2160
  %2310 = vmatpush1.msra.mxu0 %v2159
  %2311 = vmatprep.subr.mxu0 %v1903
  %2312 = vmatpush1.msra.mxu0 %v1902
  %2313 = vmatprep.subr.mxu0 %v1646
  %2314 = vmatpush1.msra.mxu0 %v1645
  %2315 = vmatprep.subr.mxu0 %v1389
  %2316 = vmatpush1.msra.mxu0 %v1388
  %2317 = vmatprep.subr.mxu0 %v102
  %2318 = vmatpush1.msra.mxu0 %v101
  %2319 = vmatprep.subr.mxu0 %v1132
  %2320 = vmatpush1.msra.mxu0 %v1131
  %2321 = vmatprep.subr.mxu0 %v875
  %2322 = vmatpush1.msra.mxu0 %v874
  %2323 = vmatprep.subr.mxu0 %v618
  %2324 = vmatpush1.msra.mxu0 %v617
  %2325 = vmatprep.subr.mxu0 %v361
  %2326 = vmatpush1.msra.mxu0 %v360
  %2327 = vmatprep.subr.mxu0 0.0
  %2328 = vmatpush2.msra.mxu0 0.0
  %2329 = vmatprep.subr.mxu0 0.0
  %2330 = vmatpush2.msra.mxu0 0.0
  %2331 = vmatprep.subr.mxu0 0.0
  %2332 = vmatpush2.msra.mxu0 0.0
  %2333 = vmatprep.subr.mxu0 0.0
  %2334 = vmatpush2.msra.mxu0 0.0
  %2335 = vmatprep.subr.mxu0 0.0
  %2336 = vmatpush2.msra.mxu0 0.0
  %2337 = vmatprep.subr.mxu0 0.0
  %2338 = vmatpush2.msra.mxu0 0.0
  %2339 = vmatprep.subr.mxu0 0.0
  %2340 = vmatpush2.msra.mxu0 0.0
  %2341 = vmatprep.subr.mxu0 0.0
  %2342 = vmatpush2.msra.mxu0 0.0
  %2343 = vmatprep.subr.mxu0 0.0
  %2344 = vmatpush2.msra.mxu0 0.0
  %2345 = vmatprep.subr.mxu0 0.0
  %2346 = vmatpush2.msra.mxu0 0.0
  %2347 = vmatprep.subr.mxu0 0.0
  %2348 = vmatpush2.msra.mxu0 0.0
  %2349 = vmatprep.subr.mxu0 0.0
  %2350 = vmatpush2.msra.mxu0 0.0
  %2351 = vmatprep.subr.mxu0 0.0
  %2352 = vmatpush2.msra.mxu0 0.0
  %2353 = vmatprep.subr.mxu0 0.0
  %2354 = vmatpush2.msra.mxu0 0.0
  %2355 = vmatprep.subr.mxu0 0.0
  %2356 = vmatpush2.msra.mxu0 0.0
  %2357 = vmatprep.subr.mxu0 0.0
  %2358 = vmatpush2.msra.mxu0 0.0
  %2359 = vmatprep.mubr.f32.mxu0 0.0
  %2360 = vmatmul.mubr.f32.gmra.mxu0 %v2195
  %v2361 = vpop.f32.mrf.mxu0
  %v2362 = vadd.f32 0.0, %v2361
  %v2363 = vpop.f32.mrf.mxu0
  %v2364 = vadd.f32 0.0, %v2363
  %2365 = vmatprep.mubr.f32.mxu0 0.0
  %2366 = vmatmul.mubr.f32.gmra.mxu0 %v2198
  %v2367 = vpop.f32.mrf.mxu0
  %v2368 = vadd.f32 0.0, %v2367
  %v2369 = vpop.f32.mrf.mxu0
  %v2370 = vadd.f32 0.0, %v2369
  %2371 = vmatprep.mubr.f32.mxu0 0.0
  %2372 = vmatmul.mubr.f32.gmra.mxu0 %v2201
  %v2373 = vpop.f32.mrf.mxu0
  %v2374 = vadd.f32 0.0, %v2373
  %v2375 = vpop.f32.mrf.mxu0
  %v2376 = vadd.f32 0.0, %v2375
  %2377 = vmatprep.mubr.f32.mxu0 0.0
  %2378 = vmatmul.mubr.f32.gmra.mxu0 %v2204
  %v2379 = vpop.f32.mrf.mxu0
  %v2380 = vadd.f32 0.0, %v2379
  %v2381 = vpop.f32.mrf.mxu0
  %v2382 = vadd.f32 0.0, %v2381
  %2383 = vdwg.mxu0
  %2384 = vmatprep.subr.mxu0 0.0
  %2385 = vmatpush1.msra.mxu0 0.0
  %2386 = vmatprep.subr.mxu0 0.0
  %2387 = vmatpush1.msra.mxu0 0.0
  %2388 = vmatprep.subr.mxu0 0.0
  %2389 = vmatpush1.msra.mxu0 0.0
  %2390 = vmatprep.subr.mxu0 0.0
  %2391 = vmatpush1.msra.mxu0 0.0
  %2392 = vmatprep.subr.mxu0 0.0
  %2393 = vmatpush1.msra.mxu0 0.0
  %2394 = vmatprep.subr.mxu0 0.0
  %2395 = vmatpush1.msra.mxu0 0.0
  %2396 = vmatprep.subr.mxu0 0.0
  %2397 = vmatpush1.msra.mxu0 0.0
  %2398 = vmatprep.subr.mxu0 %v2162
  %2399 = vmatpush1.msra.mxu0 %v2161
  %2400 = vmatprep.subr.mxu0 %v1905
  %2401 = vmatpush1.msra.mxu0 %v1904
  %2402 = vmatprep.subr.mxu0 %v1648
  %2403 = vmatpush1.msra.mxu0 %v1647
  %2404 = vmatprep.subr.mxu0 %v1391
  %2405 = vmatpush1.msra.mxu0 %v1390
  %2406 = vmatprep.subr.mxu0 %v104
  %2407 = vmatpush1.msra.mxu0 %v103
  %2408 = vmatprep.subr.mxu0 %v1134
  %2409 = vmatpush1.msra.mxu0 %v1133
  %2410 = vmatprep.subr.mxu0 %v877
  %2411 = vmatpush1.msra.mxu0 %v876
  %2412 = vmatprep.subr.mxu0 %v620
  %2413 = vmatpush1.msra.mxu0 %v619
  %2414 = vmatprep.subr.mxu0 %v363
  %2415 = vmatpush1.msra.mxu0 %v362
  %2416 = vmatprep.subr.mxu0 0.0
  %2417 = vmatpush2.msra.mxu0 0.0
  %2418 = vmatprep.subr.mxu0 0.0
  %2419 = vmatpush2.msra.mxu0 0.0
  %2420 = vmatprep.subr.mxu0 0.0
  %2421 = vmatpush2.msra.mxu0 0.0
  %2422 = vmatprep.subr.mxu0 0.0
  %2423 = vmatpush2.msra.mxu0 0.0
  %2424 = vmatprep.subr.mxu0 0.0
  %2425 = vmatpush2.msra.mxu0 0.0
  %2426 = vmatprep.subr.mxu0 0.0
  %2427 = vmatpush2.msra.mxu0 0.0
  %2428 = vmatprep.subr.mxu0 0.0
  %2429 = vmatpush2.msra.mxu0 0.0
  %2430 = vmatprep.subr.mxu0 0.0
  %2431 = vmatpush2.msra.mxu0 0.0
  %2432 = vmatprep.subr.mxu0 0.0
  %2433 = vmatpush2.msra.mxu0 0.0
  %2434 = vmatprep.subr.mxu0 0.0
  %2435 = vmatpush2.msra.mxu0 0.0
  %2436 = vmatprep.subr.mxu0 0.0
  %2437 = vmatpush2.msra.mxu0 0.0
  %2438 = vmatprep.subr.mxu0 0.0
  %2439 = vmatpush2.msra.mxu0 0.0
  %2440 = vmatprep.subr.mxu0 0.0
  %2441 = vmatpush2.msra.mxu0 0.0
  %2442 = vmatprep.subr.mxu0 0.0
  %2443 = vmatpush2.msra.mxu0 0.0
  %2444 = vmatprep.subr.mxu0 0.0
  %2445 = vmatpush2.msra.mxu0 0.0
  %2446 = vmatprep.subr.mxu0 0.0
  %2447 = vmatpush2.msra.mxu0 0.0
  %2448 = vmatprep.mubr.f32.mxu0 0.0
  %2449 = vmatmul.mubr.f32.gmra.mxu0 %v2195
  %v2450 = vpop.f32.mrf.mxu0
  %v2451 = vadd.f32 0.0, %v2450
  %v2452 = vpop.f32.mrf.mxu0
  %v2453 = vadd.f32 0.0, %v2452
  %2454 = vmatprep.mubr.f32.mxu0 0.0
  %2455 = vmatmul.mubr.f32.gmra.mxu0 %v2198
  %v2456 = vpop.f32.mrf.mxu0
  %v2457 = vadd.f32 0.0, %v2456
  %v2458 = vpop.f32.mrf.mxu0
  %v2459 = vadd.f32 0.0, %v2458
  %2460 = vmatprep.mubr.f32.mxu0 0.0
  %2461 = vmatmul.mubr.f32.gmra.mxu0 %v2201
  %v2462 = vpop.f32.mrf.mxu0
  %v2463 = vadd.f32 0.0, %v2462
  %v2464 = vpop.f32.mrf.mxu0
  %v2465 = vadd.f32 0.0, %v2464
  %2466 = vmatprep.mubr.f32.mxu0 0.0
  %2467 = vmatmul.mubr.f32.gmra.mxu0 %v2204
  %v2468 = vpop.f32.mrf.mxu0
  %v2469 = vadd.f32 0.0, %v2468
  %v2470 = vpop.f32.mrf.mxu0
  %v2471 = vadd.f32 0.0, %v2470
  %2472 = vdwg.mxu0
  %2473 = vmatprep.subr.mxu0 0.0
  %2474 = vmatpush1.msra.mxu0 0.0
  %2475 = vmatprep.subr.mxu0 0.0
  %2476 = vmatpush1.msra.mxu0 0.0
  %2477 = vmatprep.subr.mxu0 0.0
  %2478 = vmatpush1.msra.mxu0 0.0
  %2479 = vmatprep.subr.mxu0 0.0
  %2480 = vmatpush1.msra.mxu0 0.0
  %2481 = vmatprep.subr.mxu0 0.0
  %2482 = vmatpush1.msra.mxu0 0.0
  %2483 = vmatprep.subr.mxu0 0.0
  %2484 = vmatpush1.msra.mxu0 0.0
  %2485 = vmatprep.subr.mxu0 0.0
  %2486 = vmatpush1.msra.mxu0 0.0
  %2487 = vmatprep.subr.mxu0 %v2164
  %2488 = vmatpush1.msra.mxu0 %v2163
  %2489 = vmatprep.subr.mxu0 %v1907
  %2490 = vmatpush1.msra.mxu0 %v1906
  %2491 = vmatprep.subr.mxu0 %v1650
  %2492 = vmatpush1.msra.mxu0 %v1649
  %2493 = vmatprep.subr.mxu0 %v1393
  %2494 = vmatpush1.msra.mxu0 %v1392
  %2495 = vmatprep.subr.mxu0 %v106
  %2496 = vmatpush1.msra.mxu0 %v105
  %2497 = vmatprep.subr.mxu0 %v1136
  %2498 = vmatpush1.msra.mxu0 %v1135
  %2499 = vmatprep.subr.mxu0 %v879
  %2500 = vmatpush1.msra.mxu0 %v878
  %2501 = vmatprep.subr.mxu0 %v622
  %2502 = vmatpush1.msra.mxu0 %v621
  %2503 = vmatprep.subr.mxu0 %v365
  %2504 = vmatpush1.msra.mxu0 %v364
  %2505 = vmatprep.subr.mxu0 0.0
  %2506 = vmatpush2.msra.mxu0 0.0
  %2507 = vmatprep.subr.mxu0 0.0
  %2508 = vmatpush2.msra.mxu0 0.0
  %2509 = vmatprep.subr.mxu0 0.0
  %2510 = vmatpush2.msra.mxu0 0.0
  %2511 = vmatprep.subr.mxu0 0.0
  %2512 = vmatpush2.msra.mxu0 0.0
  %2513 = vmatprep.subr.mxu0 0.0
  %2514 = vmatpush2.msra.mxu0 0.0
  %2515 = vmatprep.subr.mxu0 0.0
  %2516 = vmatpush2.msra.mxu0 0.0
  %2517 = vmatprep.subr.mxu0 0.0
  %2518 = vmatpush2.msra.mxu0 0.0
  %2519 = vmatprep.subr.mxu0 0.0
  %2520 = vmatpush2.msra.mxu0 0.0
  %2521 = vmatprep.subr.mxu0 0.0
  %2522 = vmatpush2.msra.mxu0 0.0
  %2523 = vmatprep.subr.mxu0 0.0
  %2524 = vmatpush2.msra.mxu0 0.0
  %2525 = vmatprep.subr.mxu0 0.0
  %2526 = vmatpush2.msra.mxu0 0.0
  %2527 = vmatprep.subr.mxu0 0.0
  %2528 = vmatpush2.msra.mxu0 0.0
  %2529 = vmatprep.subr.mxu0 0.0
  %2530 = vmatpush2.msra.mxu0 0.0
  %2531 = vmatprep.subr.mxu0 0.0
  %2532 = vmatpush2.msra.mxu0 0.0
  %2533 = vmatprep.subr.mxu0 0.0
  %2534 = vmatpush2.msra.mxu0 0.0
  %2535 = vmatprep.subr.mxu0 0.0
  %2536 = vmatpush2.msra.mxu0 0.0
  %2537 = vmatprep.mubr.f32.mxu0 0.0
  %2538 = vmatmul.mubr.f32.gmra.mxu0 %v2195
  %v2539 = vpop.f32.mrf.mxu0
  %v2540 = vadd.f32 0.0, %v2539
  %v2541 = vpop.f32.mrf.mxu0
  %v2542 = vadd.f32 0.0, %v2541
  %2543 = vmatprep.mubr.f32.mxu0 0.0
  %2544 = vmatmul.mubr.f32.gmra.mxu0 %v2198
  %v2545 = vpop.f32.mrf.mxu0
  %v2546 = vadd.f32 0.0, %v2545
  %v2547 = vpop.f32.mrf.mxu0
  %v2548 = vadd.f32 0.0, %v2547
  %2549 = vmatprep.mubr.f32.mxu0 0.0
  %2550 = vmatmul.mubr.f32.gmra.mxu0 %v2201
  %v2551 = vpop.f32.mrf.mxu0
  %v2552 = vadd.f32 0.0, %v2551
  %v2553 = vpop.f32.mrf.mxu0
  %v2554 = vadd.f32 0.0, %v2553
  %2555 = vmatprep.mubr.f32.mxu0 0.0
  %2556 = vmatmul.mubr.f32.gmra.mxu0 %v2204
  %v2557 = vpop.f32.mrf.mxu0
  %v2558 = vadd.f32 0.0, %v2557
  %v2559 = vpop.f32.mrf.mxu0
  %v2560 = vadd.f32 0.0, %v2559
  %2561 = vdwg.mxu0
  %2562 = vmatprep.subr.mxu0 0.0
  %2563 = vmatpush1.msra.mxu0 0.0
  %2564 = vmatprep.subr.mxu0 0.0
  %2565 = vmatpush1.msra.mxu0 0.0
  %2566 = vmatprep.subr.mxu0 0.0
  %2567 = vmatpush1.msra.mxu0 0.0
  %2568 = vmatprep.subr.mxu0 0.0
  %2569 = vmatpush1.msra.mxu0 0.0
  %2570 = vmatprep.subr.mxu0 0.0
  %2571 = vmatpush1.msra.mxu0 0.0
  %2572 = vmatprep.subr.mxu0 0.0
  %2573 = vmatpush1.msra.mxu0 0.0
  %2574 = vmatprep.subr.mxu0 0.0
  %2575 = vmatpush1.msra.mxu0 0.0
  %2576 = vmatprep.subr.mxu0 %v2166
  %2577 = vmatpush1.msra.mxu0 %v2165
  %2578 = vmatprep.subr.mxu0 %v1909
  %2579 = vmatpush1.msra.mxu0 %v1908
  %2580 = vmatprep.subr.mxu0 %v1652
  %2581 = vmatpush1.msra.mxu0 %v1651
  %2582 = vmatprep.subr.mxu0 %v1395
  %2583 = vmatpush1.msra.mxu0 %v1394
  %2584 = vmatprep.subr.mxu0 %v108
  %2585 = vmatpush1.msra.mxu0 %v107
  %2586 = vmatprep.subr.mxu0 %v1138
  %2587 = vmatpush1.msra.mxu0 %v1137
  %2588 = vmatprep.subr.mxu0 %v881
  %2589 = vmatpush1.msra.mxu0 %v880
  %2590 = vmatprep.subr.mxu0 %v624
  %2591 = vmatpush1.msra.mxu0 %v623
  %2592 = vmatprep.subr.mxu0 %v367
  %2593 = vmatpush1.msra.mxu0 %v366
  %2594 = vmatprep.subr.mxu0 0.0
  %2595 = vmatpush2.msra.mxu0 0.0
  %2596 = vmatprep.subr.mxu0 0.0
  %2597 = vmatpush2.msra.mxu0 0.0
  %2598 = vmatprep.subr.mxu0 0.0
  %2599 = vmatpush2.msra.mxu0 0.0
  %2600 = vmatprep.subr.mxu0 0.0
  %2601 = vmatpush2.msra.mxu0 0.0
  %2602 = vmatprep.subr.mxu0 0.0
  %2603 = vmatpush2.msra.mxu0 0.0
  %2604 = vmatprep.subr.mxu0 0.0
  %2605 = vmatpush2.msra.mxu0 0.0
  %2606 = vmatprep.subr.mxu0 0.0
  %2607 = vmatpush2.msra.mxu0 0.0
  %2608 = vmatprep.subr.mxu0 0.0
  %2609 = vmatpush2.msra.mxu0 0.0
  %2610 = vmatprep.subr.mxu0 0.0
  %2611 = vmatpush2.msra.mxu0 0.0
  %2612 = vmatprep.subr.mxu0 0.0
  %2613 = vmatpush2.msra.mxu0 0.0
  %2614 = vmatprep.subr.mxu0 0.0
  %2615 = vmatpush2.msra.mxu0 0.0
  %2616 = vmatprep.subr.mxu0 0.0
  %2617 = vmatpush2.msra.mxu0 0.0
  %2618 = vmatprep.subr.mxu0 0.0
  %2619 = vmatpush2.msra.mxu0 0.0
  %2620 = vmatprep.subr.mxu0 0.0
  %2621 = vmatpush2.msra.mxu0 0.0
  %2622 = vmatprep.subr.mxu0 0.0
  %2623 = vmatpush2.msra.mxu0 0.0
  %2624 = vmatprep.subr.mxu0 0.0
  %2625 = vmatpush2.msra.mxu0 0.0
  %2626 = vmatprep.mubr.f32.mxu0 0.0
  %2627 = vmatmul.mubr.f32.gmra.mxu0 %v2195
  %v2628 = vpop.f32.mrf.mxu0
  %v2629 = vadd.f32 0.0, %v2628
  %v2630 = vpop.f32.mrf.mxu0
  %v2631 = vadd.f32 0.0, %v2630
  %2632 = vmatprep.mubr.f32.mxu0 0.0
  %2633 = vmatmul.mubr.f32.gmra.mxu0 %v2198
  %v2634 = vpop.f32.mrf.mxu0
  %v2635 = vadd.f32 0.0, %v2634
  %v2636 = vpop.f32.mrf.mxu0
  %v2637 = vadd.f32 0.0, %v2636
  %2638 = vmatprep.mubr.f32.mxu0 0.0
  %2639 = vmatmul.mubr.f32.gmra.mxu0 %v2201
  %v2640 = vpop.f32.mrf.mxu0
  %v2641 = vadd.f32 0.0, %v2640
  %v2642 = vpop.f32.mrf.mxu0
  %v2643 = vadd.f32 0.0, %v2642
  %2644 = vmatprep.mubr.f32.mxu0 0.0
  %2645 = vmatmul.mubr.f32.gmra.mxu0 %v2204
  %v2646 = vpop.f32.mrf.mxu0
  %v2647 = vadd.f32 0.0, %v2646
  %v2648 = vpop.f32.mrf.mxu0
  %v2649 = vadd.f32 0.0, %v2648
  %2650 = vdwg.mxu0
  %2651 = vmatprep.subr.mxu0 0.0
  %2652 = vmatpush1.msra.mxu0 0.0
  %2653 = vmatprep.subr.mxu0 0.0
  %2654 = vmatpush1.msra.mxu0 0.0
  %2655 = vmatprep.subr.mxu0 0.0
  %2656 = vmatpush1.msra.mxu0 0.0
  %2657 = vmatprep.subr.mxu0 0.0
  %2658 = vmatpush1.msra.mxu0 0.0
  %2659 = vmatprep.subr.mxu0 0.0
  %2660 = vmatpush1.msra.mxu0 0.0
  %2661 = vmatprep.subr.mxu0 0.0
  %2662 = vmatpush1.msra.mxu0 0.0
  %2663 = vmatprep.subr.mxu0 0.0
  %2664 = vmatpush1.msra.mxu0 0.0
  %2665 = vmatprep.subr.mxu0 %v2168
  %2666 = vmatpush1.msra.mxu0 %v2167
  %2667 = vmatprep.subr.mxu0 %v1911
  %2668 = vmatpush1.msra.mxu0 %v1910
  %2669 = vmatprep.subr.mxu0 %v1654
  %2670 = vmatpush1.msra.mxu0 %v1653
  %2671 = vmatprep.subr.mxu0 %v1397
  %2672 = vmatpush1.msra.mxu0 %v1396
  %2673 = vmatprep.subr.mxu0 %v110
  %2674 = vmatpush1.msra.mxu0 %v109
  %2675 = vmatprep.subr.mxu0 %v1140
  %2676 = vmatpush1.msra.mxu0 %v1139
  %2677 = vmatprep.subr.mxu0 %v883
  %2678 = vmatpush1.msra.mxu0 %v882
  %2679 = vmatprep.subr.mxu0 %v626
  %2680 = vmatpush1.msra.mxu0 %v625
  %2681 = vmatprep.subr.mxu0 %v369
  %2682 = vmatpush1.msra.mxu0 %v368
  %2683 = vmatprep.subr.mxu0 0.0
  %2684 = vmatpush2.msra.mxu0 0.0
  %2685 = vmatprep.subr.mxu0 0.0
  %2686 = vmatpush2.msra.mxu0 0.0
  %2687 = vmatprep.subr.mxu0 0.0
  %2688 = vmatpush2.msra.mxu0 0.0
  %2689 = vmatprep.subr.mxu0 0.0
  %2690 = vmatpush2.msra.mxu0 0.0
  %2691 = vmatprep.subr.mxu0 0.0
  %2692 = vmatpush2.msra.mxu0 0.0
  %2693 = vmatprep.subr.mxu0 0.0
  %2694 = vmatpush2.msra.mxu0 0.0
  %2695 = vmatprep.subr.mxu0 0.0
  %2696 = vmatpush2.msra.mxu0 0.0
  %2697 = vmatprep.subr.mxu0 0.0
  %2698 = vmatpush2.msra.mxu0 0.0
  %2699 = vmatprep.subr.mxu0 0.0
  %2700 = vmatpush2.msra.mxu0 0.0
  %2701 = vmatprep.subr.mxu0 0.0
  %2702 = vmatpush2.msra.mxu0 0.0
  %2703 = vmatprep.subr.mxu0 0.0
  %2704 = vmatpush2.msra.mxu0 0.0
  %2705 = vmatprep.subr.mxu0 0.0
  %2706 = vmatpush2.msra.mxu0 0.0
  %2707 = vmatprep.subr.mxu0 0.0
  %2708 = vmatpush2.msra.mxu0 0.0
  %2709 = vmatprep.subr.mxu0 0.0
  %2710 = vmatpush2.msra.mxu0 0.0
  %2711 = vmatprep.subr.mxu0 0.0
  %2712 = vmatpush2.msra.mxu0 0.0
  %2713 = vmatprep.subr.mxu0 0.0
  %2714 = vmatpush2.msra.mxu0 0.0
  %2715 = vmatprep.mubr.f32.mxu0 0.0
  %2716 = vmatmul.mubr.f32.gmra.mxu0 %v2195
  %v2717 = vpop.f32.mrf.mxu0
  %v2718 = vadd.f32 0.0, %v2717
  %v2719 = vpop.f32.mrf.mxu0
  %v2720 = vadd.f32 0.0, %v2719
  %2721 = vmatprep.mubr.f32.mxu0 0.0
  %2722 = vmatmul.mubr.f32.gmra.mxu0 %v2198
  %v2723 = vpop.f32.mrf.mxu0
  %v2724 = vadd.f32 0.0, %v2723
  %v2725 = vpop.f32.mrf.mxu0
  %v2726 = vadd.f32 0.0, %v2725
  %2727 = vmatprep.mubr.f32.mxu0 0.0
  %2728 = vmatmul.mubr.f32.gmra.mxu0 %v2201
  %v2729 = vpop.f32.mrf.mxu0
  %v2730 = vadd.f32 0.0, %v2729
  %v2731 = vpop.f32.mrf.mxu0
  %v2732 = vadd.f32 0.0, %v2731
  %2733 = vmatprep.mubr.f32.mxu0 0.0
  %2734 = vmatmul.mubr.f32.gmra.mxu0 %v2204
  %v2735 = vpop.f32.mrf.mxu0
  %v2736 = vadd.f32 0.0, %v2735
  %v2737 = vpop.f32.mrf.mxu0
  %v2738 = vadd.f32 0.0, %v2737
  %2739 = vdwg.mxu0
  %2740 = vmatprep.subr.mxu0 0.0
  %2741 = vmatpush1.msra.mxu0 0.0
  %2742 = vmatprep.subr.mxu0 0.0
  %2743 = vmatpush1.msra.mxu0 0.0
  %2744 = vmatprep.subr.mxu0 0.0
  %2745 = vmatpush1.msra.mxu0 0.0
  %2746 = vmatprep.subr.mxu0 0.0
  %2747 = vmatpush1.msra.mxu0 0.0
  %2748 = vmatprep.subr.mxu0 0.0
  %2749 = vmatpush1.msra.mxu0 0.0
  %2750 = vmatprep.subr.mxu0 0.0
  %2751 = vmatpush1.msra.mxu0 0.0
  %2752 = vmatprep.subr.mxu0 0.0
  %2753 = vmatpush1.msra.mxu0 0.0
  %2754 = vmatprep.subr.mxu0 %v2170
  %2755 = vmatpush1.msra.mxu0 %v2169
  %2756 = vmatprep.subr.mxu0 %v1913
  %2757 = vmatpush1.msra.mxu0 %v1912
  %2758 = vmatprep.subr.mxu0 %v1656
  %2759 = vmatpush1.msra.mxu0 %v1655
  %2760 = vmatprep.subr.mxu0 %v1399
  %2761 = vmatpush1.msra.mxu0 %v1398
  %2762 = vmatprep.subr.mxu0 %v112
  %2763 = vmatpush1.msra.mxu0 %v111
  %2764 = vmatprep.subr.mxu0 %v1142
  %2765 = vmatpush1.msra.mxu0 %v1141
  %2766 = vmatprep.subr.mxu0 %v885
  %2767 = vmatpush1.msra.mxu0 %v884
  %2768 = vmatprep.subr.mxu0 %v628
  %2769 = vmatpush1.msra.mxu0 %v627
  %2770 = vmatprep.subr.mxu0 %v371
  %2771 = vmatpush1.msra.mxu0 %v370
  %2772 = vmatprep.subr.mxu0 0.0
  %2773 = vmatpush2.msra.mxu0 0.0
  %2774 = vmatprep.subr.mxu0 0.0
  %2775 = vmatpush2.msra.mxu0 0.0
  %2776 = vmatprep.subr.mxu0 0.0
  %2777 = vmatpush2.msra.mxu0 0.0
  %2778 = vmatprep.subr.mxu0 0.0
  %2779 = vmatpush2.msra.mxu0 0.0
  %2780 = vmatprep.subr.mxu0 0.0
  %2781 = vmatpush2.msra.mxu0 0.0
  %2782 = vmatprep.subr.mxu0 0.0
  %2783 = vmatpush2.msra.mxu0 0.0
  %2784 = vmatprep.subr.mxu0 0.0
  %2785 = vmatpush2.msra.mxu0 0.0
  %2786 = vmatprep.subr.mxu0 0.0
  %2787 = vmatpush2.msra.mxu0 0.0
  %2788 = vmatprep.subr.mxu0 0.0
  %2789 = vmatpush2.msra.mxu0 0.0
  %2790 = vmatprep.subr.mxu0 0.0
  %2791 = vmatpush2.msra.mxu0 0.0
  %2792 = vmatprep.subr.mxu0 0.0
  %2793 = vmatpush2.msra.mxu0 0.0
  %2794 = vmatprep.subr.mxu0 0.0
  %2795 = vmatpush2.msra.mxu0 0.0
  %2796 = vmatprep.subr.mxu0 0.0
  %2797 = vmatpush2.msra.mxu0 0.0
  %2798 = vmatprep.subr.mxu0 0.0
  %2799 = vmatpush2.msra.mxu0 0.0
  %2800 = vmatprep.subr.mxu0 0.0
  %2801 = vmatpush2.msra.mxu0 0.0
  %2802 = vmatprep.subr.mxu0 0.0
  %2803 = vmatpush2.msra.mxu0 0.0
  %2804 = vmatprep.mubr.f32.mxu0 0.0
  %2805 = vmatmul.mubr.f32.gmra.mxu0 %v2195
  %v2806 = vpop.f32.mrf.mxu0
  %v2807 = vadd.f32 0.0, %v2806
  %v2808 = vpop.f32.mrf.mxu0
  %v2809 = vadd.f32 0.0, %v2808
  %2810 = vmatprep.mubr.f32.mxu0 0.0
  %2811 = vmatmul.mubr.f32.gmra.mxu0 %v2198
  %v2812 = vpop.f32.mrf.mxu0
  %v2813 = vadd.f32 0.0, %v2812
  %v2814 = vpop.f32.mrf.mxu0
  %v2815 = vadd.f32 0.0, %v2814
  %2816 = vmatprep.mubr.f32.mxu0 0.0
  %2817 = vmatmul.mubr.f32.gmra.mxu0 %v2201
  %v2818 = vpop.f32.mrf.mxu0
  %v2819 = vadd.f32 0.0, %v2818
  %v2820 = vpop.f32.mrf.mxu0
  %v2821 = vadd.f32 0.0, %v2820
  %2822 = vmatprep.mubr.f32.mxu0 0.0
  %2823 = vmatmul.mubr.f32.gmra.mxu0 %v2204
  %v2824 = vpop.f32.mrf.mxu0
  %v2825 = vadd.f32 0.0, %v2824
  %v2826 = vpop.f32.mrf.mxu0
  %v2827 = vadd.f32 0.0, %v2826
  %2828 = vdwg.mxu0
  %2829 = vmatprep.subr.mxu0 0.0
  %2830 = vmatpush1.msra.mxu0 0.0
  %2831 = vmatprep.subr.mxu0 0.0
  %2832 = vmatpush1.msra.mxu0 0.0
  %2833 = vmatprep.subr.mxu0 0.0
  %2834 = vmatpush1.msra.mxu0 0.0
  %2835 = vmatprep.subr.mxu0 0.0
  %2836 = vmatpush1.msra.mxu0 0.0
  %2837 = vmatprep.subr.mxu0 0.0
  %2838 = vmatpush1.msra.mxu0 0.0
  %2839 = vmatprep.subr.mxu0 0.0
  %2840 = vmatpush1.msra.mxu0 0.0
  %2841 = vmatprep.subr.mxu0 0.0
  %2842 = vmatpush1.msra.mxu0 0.0
  %2843 = vmatprep.subr.mxu0 %v2172
  %2844 = vmatpush1.msra.mxu0 %v2171
  %2845 = vmatprep.subr.mxu0 %v1915
  %2846 = vmatpush1.msra.mxu0 %v1914
  %2847 = vmatprep.subr.mxu0 %v1658
  %2848 = vmatpush1.msra.mxu0 %v1657
  %2849 = vmatprep.subr.mxu0 %v1401
  %2850 = vmatpush1.msra.mxu0 %v1400
  %2851 = vmatprep.subr.mxu0 %v114
  %2852 = vmatpush1.msra.mxu0 %v113
  %2853 = vmatprep.subr.mxu0 %v1144
  %2854 = vmatpush1.msra.mxu0 %v1143
  %2855 = vmatprep.subr.mxu0 %v887
  %2856 = vmatpush1.msra.mxu0 %v886
  %2857 = vmatprep.subr.mxu0 %v630
  %2858 = vmatpush1.msra.mxu0 %v629
  %2859 = vmatprep.subr.mxu0 %v373
  %2860 = vmatpush1.msra.mxu0 %v372
  %2861 = vmatprep.subr.mxu0 0.0
  %2862 = vmatpush2.msra.mxu0 0.0
  %2863 = vmatprep.subr.mxu0 0.0
  %2864 = vmatpush2.msra.mxu0 0.0
  %2865 = vmatprep.subr.mxu0 0.0
  %2866 = vmatpush2.msra.mxu0 0.0
  %2867 = vmatprep.subr.mxu0 0.0
  %2868 = vmatpush2.msra.mxu0 0.0
  %2869 = vmatprep.subr.mxu0 0.0
  %2870 = vmatpush2.msra.mxu0 0.0
  %2871 = vmatprep.subr.mxu0 0.0
  %2872 = vmatpush2.msra.mxu0 0.0
  %2873 = vmatprep.subr.mxu0 0.0
  %2874 = vmatpush2.msra.mxu0 0.0
  %2875 = vmatprep.subr.mxu0 0.0
  %2876 = vmatpush2.msra.mxu0 0.0
  %2877 = vmatprep.subr.mxu0 0.0
  %2878 = vmatpush2.msra.mxu0 0.0
  %2879 = vmatprep.subr.mxu0 0.0
  %2880 = vmatpush2.msra.mxu0 0.0
  %2881 = vmatprep.subr.mxu0 0.0
  %2882 = vmatpush2.msra.mxu0 0.0
  %2883 = vmatprep.subr.mxu0 0.0
  %2884 = vmatpush2.msra.mxu0 0.0
  %2885 = vmatprep.subr.mxu0 0.0
  %2886 = vmatpush2.msra.mxu0 0.0
  %2887 = vmatprep.subr.mxu0 0.0
  %2888 = vmatpush2.msra.mxu0 0.0
  %2889 = vmatprep.subr.mxu0 0.0
  %2890 = vmatpush2.msra.mxu0 0.0
  %2891 = vmatprep.subr.mxu0 0.0
  %2892 = vmatpush2.msra.mxu0 0.0
  %2893 = vmatprep.mubr.f32.mxu0 0.0
  %2894 = vmatmul.mubr.f32.gmra.mxu0 %v2195
  %v2895 = vpop.f32.mrf.mxu0
  %v2896 = vadd.f32 0.0, %v2895
  %v2897 = vpop.f32.mrf.mxu0
  %v2898 = vadd.f32 0.0, %v2897
  %2899 = vmatprep.mubr.f32.mxu0 0.0
  %2900 = vmatmul.mubr.f32.gmra.mxu0 %v2198
  %v2901 = vpop.f32.mrf.mxu0
  %v2902 = vadd.f32 0.0, %v2901
  %v2903 = vpop.f32.mrf.mxu0
  %v2904 = vadd.f32 0.0, %v2903
  %2905 = vmatprep.mubr.f32.mxu0 0.0
  %2906 = vmatmul.mubr.f32.gmra.mxu0 %v2201
  %v2907 = vpop.f32.mrf.mxu0
  %v2908 = vadd.f32 0.0, %v2907
  %v2909 = vpop.f32.mrf.mxu0
  %v2910 = vadd.f32 0.0, %v2909
  %2911 = vmatprep.mubr.f32.mxu0 0.0
  %2912 = vmatmul.mubr.f32.gmra.mxu0 %v2204
  %v2913 = vpop.f32.mrf.mxu0
  %v2914 = vadd.f32 0.0, %v2913
  %v2915 = vpop.f32.mrf.mxu0
  %v2916 = vadd.f32 0.0, %v2915
  %2917 = vdwg.mxu0
  %2918 = vmatprep.subr.mxu0 0.0
  %2919 = vmatpush1.msra.mxu0 0.0
  %2920 = vmatprep.subr.mxu0 0.0
  %2921 = vmatpush1.msra.mxu0 0.0
  %2922 = vmatprep.subr.mxu0 0.0
  %2923 = vmatpush1.msra.mxu0 0.0
  %2924 = vmatprep.subr.mxu0 0.0
  %2925 = vmatpush1.msra.mxu0 0.0
  %2926 = vmatprep.subr.mxu0 0.0
  %2927 = vmatpush1.msra.mxu0 0.0
  %2928 = vmatprep.subr.mxu0 0.0
  %2929 = vmatpush1.msra.mxu0 0.0
  %2930 = vmatprep.subr.mxu0 0.0
  %2931 = vmatpush1.msra.mxu0 0.0
  %2932 = vmatprep.subr.mxu0 %v2174
  %2933 = vmatpush1.msra.mxu0 %v2173
  %2934 = vmatprep.subr.mxu0 %v1917
  %2935 = vmatpush1.msra.mxu0 %v1916
  %2936 = vmatprep.subr.mxu0 %v1660
  %2937 = vmatpush1.msra.mxu0 %v1659
  %2938 = vmatprep.subr.mxu0 %v1403
  %2939 = vmatpush1.msra.mxu0 %v1402
  %2940 = vmatprep.subr.mxu0 %v116
  %2941 = vmatpush1.msra.mxu0 %v115
  %2942 = vmatprep.subr.mxu0 %v1146
  %2943 = vmatpush1.msra.mxu0 %v1145
  %2944 = vmatprep.subr.mxu0 %v889
  %2945 = vmatpush1.msra.mxu0 %v888
  %2946 = vmatprep.subr.mxu0 %v632
  %2947 = vmatpush1.msra.mxu0 %v631
  %2948 = vmatprep.subr.mxu0 %v375
  %2949 = vmatpush1.msra.mxu0 %v374
  %2950 = vmatprep.subr.mxu0 0.0
  %2951 = vmatpush2.msra.mxu0 0.0
  %2952 = vmatprep.subr.mxu0 0.0
  %2953 = vmatpush2.msra.mxu0 0.0
  %2954 = vmatprep.subr.mxu0 0.0
  %2955 = vmatpush2.msra.mxu0 0.0
  %2956 = vmatprep.subr.mxu0 0.0
  %2957 = vmatpush2.msra.mxu0 0.0
  %2958 = vmatprep.subr.mxu0 0.0
  %2959 = vmatpush2.msra.mxu0 0.0
  %2960 = vmatprep.subr.mxu0 0.0
  %2961 = vmatpush2.msra.mxu0 0.0
  %2962 = vmatprep.subr.mxu0 0.0
  %2963 = vmatpush2.msra.mxu0 0.0
  %2964 = vmatprep.subr.mxu0 0.0
  %2965 = vmatpush2.msra.mxu0 0.0
  %2966 = vmatprep.subr.mxu0 0.0
  %2967 = vmatpush2.msra.mxu0 0.0
  %2968 = vmatprep.subr.mxu0 0.0
  %2969 = vmatpush2.msra.mxu0 0.0
  %2970 = vmatprep.subr.mxu0 0.0
  %2971 = vmatpush2.msra.mxu0 0.0
  %2972 = vmatprep.subr.mxu0 0.0
  %2973 = vmatpush2.msra.mxu0 0.0
  %2974 = vmatprep.subr.mxu0 0.0
  %2975 = vmatpush2.msra.mxu0 0.0
  %2976 = vmatprep.subr.mxu0 0.0
  %2977 = vmatpush2.msra.mxu0 0.0
  %2978 = vmatprep.subr.mxu0 0.0
  %2979 = vmatpush2.msra.mxu0 0.0
  %2980 = vmatprep.subr.mxu0 0.0
  %2981 = vmatpush2.msra.mxu0 0.0
  %2982 = vmatprep.mubr.f32.mxu0 0.0
  %2983 = vmatmul.mubr.f32.gmra.mxu0 %v2195
  %v2984 = vpop.f32.mrf.mxu0
  %v2985 = vadd.f32 0.0, %v2984
  %v2986 = vpop.f32.mrf.mxu0
  %v2987 = vadd.f32 0.0, %v2986
  %2988 = vmatprep.mubr.f32.mxu0 0.0
  %2989 = vmatmul.mubr.f32.gmra.mxu0 %v2198
  %v2990 = vpop.f32.mrf.mxu0
  %v2991 = vadd.f32 0.0, %v2990
  %v2992 = vpop.f32.mrf.mxu0
  %v2993 = vadd.f32 0.0, %v2992
  %2994 = vmatprep.mubr.f32.mxu0 0.0
  %2995 = vmatmul.mubr.f32.gmra.mxu0 %v2201
  %v2996 = vpop.f32.mrf.mxu0
  %v2997 = vadd.f32 0.0, %v2996
  %v2998 = vpop.f32.mrf.mxu0
  %v2999 = vadd.f32 0.0, %v2998
  %3000 = vmatprep.mubr.f32.mxu0 0.0
  %3001 = vmatmul.mubr.f32.gmra.mxu0 %v2204
  %v3002 = vpop.f32.mrf.mxu0
  %v3003 = vadd.f32 0.0, %v3002
  %v3004 = vpop.f32.mrf.mxu0
  %v3005 = vadd.f32 0.0, %v3004
  %3006 = vdwg.mxu0
  %3007 = vmatprep.subr.mxu0 0.0
  %3008 = vmatpush1.msra.mxu0 0.0
  %3009 = vmatprep.subr.mxu0 0.0
  %3010 = vmatpush1.msra.mxu0 0.0
  %3011 = vmatprep.subr.mxu0 0.0
  %3012 = vmatpush1.msra.mxu0 0.0
  %3013 = vmatprep.subr.mxu0 0.0
  %3014 = vmatpush1.msra.mxu0 0.0
  %3015 = vmatprep.subr.mxu0 0.0
  %3016 = vmatpush1.msra.mxu0 0.0
  %3017 = vmatprep.subr.mxu0 0.0
  %3018 = vmatpush1.msra.mxu0 0.0
  %3019 = vmatprep.subr.mxu0 0.0
  %3020 = vmatpush1.msra.mxu0 0.0
  %3021 = vmatprep.subr.mxu0 %v2176
  %3022 = vmatpush1.msra.mxu0 %v2175
  %3023 = vmatprep.subr.mxu0 %v1919
  %3024 = vmatpush1.msra.mxu0 %v1918
  %3025 = vmatprep.subr.mxu0 %v1662
  %3026 = vmatpush1.msra.mxu0 %v1661
  %3027 = vmatprep.subr.mxu0 %v1405
  %3028 = vmatpush1.msra.mxu0 %v1404
  %3029 = vmatprep.subr.mxu0 %v118
  %3030 = vmatpush1.msra.mxu0 %v117
  %3031 = vmatprep.subr.mxu0 %v1148
  %3032 = vmatpush1.msra.mxu0 %v1147
  %3033 = vmatprep.subr.mxu0 %v891
  %3034 = vmatpush1.msra.mxu0 %v890
  %3035 = vmatprep.subr.mxu0 %v634
  %3036 = vmatpush1.msra.mxu0 %v633
  %3037 = vmatprep.subr.mxu0 %v377
  %3038 = vmatpush1.msra.mxu0 %v376
  %3039 = vmatprep.subr.mxu0 0.0
  %3040 = vmatpush2.msra.mxu0 0.0
  %3041 = vmatprep.subr.mxu0 0.0
  %3042 = vmatpush2.msra.mxu0 0.0
  %3043 = vmatprep.subr.mxu0 0.0
  %3044 = vmatpush2.msra.mxu0 0.0
  %3045 = vmatprep.subr.mxu0 0.0
  %3046 = vmatpush2.msra.mxu0 0.0
  %3047 = vmatprep.subr.mxu0 0.0
  %3048 = vmatpush2.msra.mxu0 0.0
  %3049 = vmatprep.subr.mxu0 0.0
  %3050 = vmatpush2.msra.mxu0 0.0
  %3051 = vmatprep.subr.mxu0 0.0
  %3052 = vmatpush2.msra.mxu0 0.0
  %3053 = vmatprep.subr.mxu0 0.0
  %3054 = vmatpush2.msra.mxu0 0.0
  %3055 = vmatprep.subr.mxu0 0.0
  %3056 = vmatpush2.msra.mxu0 0.0
  %3057 = vmatprep.subr.mxu0 0.0
  %3058 = vmatpush2.msra.mxu0 0.0
  %3059 = vmatprep.subr.mxu0 0.0
  %3060 = vmatpush2.msra.mxu0 0.0
  %3061 = vmatprep.subr.mxu0 0.0
  %3062 = vmatpush2.msra.mxu0 0.0
  %3063 = vmatprep.subr.mxu0 0.0
  %3064 = vmatpush2.msra.mxu0 0.0
  %3065 = vmatprep.subr.mxu0 0.0
  %3066 = vmatpush2.msra.mxu0 0.0
  %3067 = vmatprep.subr.mxu0 0.0
  %3068 = vmatpush2.msra.mxu0 0.0
  %3069 = vmatprep.subr.mxu0 0.0
  %3070 = vmatpush2.msra.mxu0 0.0
  %3071 = vmatprep.mubr.f32.mxu0 0.0
  %3072 = vmatmul.mubr.f32.gmra.mxu0 %v2195
  %v3073 = vpop.f32.mrf.mxu0
  %v3074 = vadd.f32 0.0, %v3073
  %v3075 = vpop.f32.mrf.mxu0
  %v3076 = vadd.f32 0.0, %v3075
  %3077 = vmatprep.mubr.f32.mxu0 0.0
  %3078 = vmatmul.mubr.f32.gmra.mxu0 %v2198
  %v3079 = vpop.f32.mrf.mxu0
  %v3080 = vadd.f32 0.0, %v3079
  %v3081 = vpop.f32.mrf.mxu0
  %v3082 = vadd.f32 0.0, %v3081
  %3083 = vmatprep.mubr.f32.mxu0 0.0
  %3084 = vmatmul.mubr.f32.gmra.mxu0 %v2201
  %v3085 = vpop.f32.mrf.mxu0
  %v3086 = vadd.f32 0.0, %v3085
  %v3087 = vpop.f32.mrf.mxu0
  %v3088 = vadd.f32 0.0, %v3087
  %3089 = vmatprep.mubr.f32.mxu0 0.0
  %3090 = vmatmul.mubr.f32.gmra.mxu0 %v2204
  %v3091 = vpop.f32.mrf.mxu0
  %v3092 = vadd.f32 0.0, %v3091
  %v3093 = vpop.f32.mrf.mxu0
  %v3094 = vadd.f32 0.0, %v3093
  %3095 = vdwg.mxu0
  %3096 = vmatprep.subr.mxu0 0.0
  %3097 = vmatpush1.msra.mxu0 0.0
  %3098 = vmatprep.subr.mxu0 0.0
  %3099 = vmatpush1.msra.mxu0 0.0
  %3100 = vmatprep.subr.mxu0 0.0
  %3101 = vmatpush1.msra.mxu0 0.0
  %3102 = vmatprep.subr.mxu0 0.0
  %3103 = vmatpush1.msra.mxu0 0.0
  %3104 = vmatprep.subr.mxu0 0.0
  %3105 = vmatpush1.msra.mxu0 0.0
  %3106 = vmatprep.subr.mxu0 0.0
  %3107 = vmatpush1.msra.mxu0 0.0
  %3108 = vmatprep.subr.mxu0 0.0
  %3109 = vmatpush1.msra.mxu0 0.0
  %3110 = vmatprep.subr.mxu0 %v2178
  %3111 = vmatpush1.msra.mxu0 %v2177
  %3112 = vmatprep.subr.mxu0 %v1921
  %3113 = vmatpush1.msra.mxu0 %v1920
  %3114 = vmatprep.subr.mxu0 %v1664
  %3115 = vmatpush1.msra.mxu0 %v1663
  %3116 = vmatprep.subr.mxu0 %v1407
  %3117 = vmatpush1.msra.mxu0 %v1406
  %3118 = vmatprep.subr.mxu0 %v120
  %3119 = vmatpush1.msra.mxu0 %v119
  %3120 = vmatprep.subr.mxu0 %v1150
  %3121 = vmatpush1.msra.mxu0 %v1149
  %3122 = vmatprep.subr.mxu0 %v893
  %3123 = vmatpush1.msra.mxu0 %v892
  %3124 = vmatprep.subr.mxu0 %v636
  %3125 = vmatpush1.msra.mxu0 %v635
  %3126 = vmatprep.subr.mxu0 %v379
  %3127 = vmatpush1.msra.mxu0 %v378
  %3128 = vmatprep.subr.mxu0 0.0
  %3129 = vmatpush2.msra.mxu0 0.0
  %3130 = vmatprep.subr.mxu0 0.0
  %3131 = vmatpush2.msra.mxu0 0.0
  %3132 = vmatprep.subr.mxu0 0.0
  %3133 = vmatpush2.msra.mxu0 0.0
  %3134 = vmatprep.subr.mxu0 0.0
  %3135 = vmatpush2.msra.mxu0 0.0
  %3136 = vmatprep.subr.mxu0 0.0
  %3137 = vmatpush2.msra.mxu0 0.0
  %3138 = vmatprep.subr.mxu0 0.0
  %3139 = vmatpush2.msra.mxu0 0.0
  %3140 = vmatprep.subr.mxu0 0.0
  %3141 = vmatpush2.msra.mxu0 0.0
  %3142 = vmatprep.subr.mxu0 0.0
  %3143 = vmatpush2.msra.mxu0 0.0
  %3144 = vmatprep.subr.mxu0 0.0
  %3145 = vmatpush2.msra.mxu0 0.0
  %3146 = vmatprep.subr.mxu0 0.0
  %3147 = vmatpush2.msra.mxu0 0.0
  %3148 = vmatprep.subr.mxu0 0.0
  %3149 = vmatpush2.msra.mxu0 0.0
  %3150 = vmatprep.subr.mxu0 0.0
  %3151 = vmatpush2.msra.mxu0 0.0
  %3152 = vmatprep.subr.mxu0 0.0
  %3153 = vmatpush2.msra.mxu0 0.0
  %3154 = vmatprep.subr.mxu0 0.0
  %3155 = vmatpush2.msra.mxu0 0.0
  %3156 = vmatprep.subr.mxu0 0.0
  %3157 = vmatpush2.msra.mxu0 0.0
  %3158 = vmatprep.subr.mxu0 0.0
  %3159 = vmatpush2.msra.mxu0 0.0
  %3160 = vmatprep.mubr.f32.mxu0 0.0
  %3161 = vmatmul.mubr.f32.gmra.mxu0 %v2195
  %v3162 = vpop.f32.mrf.mxu0
  %v3163 = vadd.f32 0.0, %v3162
  %v3164 = vpop.f32.mrf.mxu0
  %v3165 = vadd.f32 0.0, %v3164
  %3166 = vmatprep.mubr.f32.mxu0 0.0
  %3167 = vmatmul.mubr.f32.gmra.mxu0 %v2198
  %v3168 = vpop.f32.mrf.mxu0
  %v3169 = vadd.f32 0.0, %v3168
  %v3170 = vpop.f32.mrf.mxu0
  %v3171 = vadd.f32 0.0, %v3170
  %3172 = vmatprep.mubr.f32.mxu0 0.0
  %3173 = vmatmul.mubr.f32.gmra.mxu0 %v2201
  %v3174 = vpop.f32.mrf.mxu0
  %v3175 = vadd.f32 0.0, %v3174
  %v3176 = vpop.f32.mrf.mxu0
  %v3177 = vadd.f32 0.0, %v3176
  %3178 = vmatprep.mubr.f32.mxu0 0.0
  %3179 = vmatmul.mubr.f32.gmra.mxu0 %v2204
  %v3180 = vpop.f32.mrf.mxu0
  %v3181 = vadd.f32 0.0, %v3180
  %v3182 = vpop.f32.mrf.mxu0
  %v3183 = vadd.f32 0.0, %v3182
  %3184 = vdwg.mxu0
  %3185 = vmatprep.subr.mxu0 0.0
  %3186 = vmatpush1.msra.mxu0 0.0
  %3187 = vmatprep.subr.mxu0 0.0
  %3188 = vmatpush1.msra.mxu0 0.0
  %3189 = vmatprep.subr.mxu0 0.0
  %3190 = vmatpush1.msra.mxu0 0.0
  %3191 = vmatprep.subr.mxu0 0.0
  %3192 = vmatpush1.msra.mxu0 0.0
  %3193 = vmatprep.subr.mxu0 0.0
  %3194 = vmatpush1.msra.mxu0 0.0
  %3195 = vmatprep.subr.mxu0 0.0
  %3196 = vmatpush1.msra.mxu0 0.0
  %3197 = vmatprep.subr.mxu0 0.0
  %3198 = vmatpush1.msra.mxu0 0.0
  %3199 = vmatprep.subr.mxu0 %v2180
  %3200 = vmatpush1.msra.mxu0 %v2179
  %3201 = vmatprep.subr.mxu0 %v1923
  %3202 = vmatpush1.msra.mxu0 %v1922
  %3203 = vmatprep.subr.mxu0 %v1666
  %3204 = vmatpush1.msra.mxu0 %v1665
  %3205 = vmatprep.subr.mxu0 %v1409
  %3206 = vmatpush1.msra.mxu0 %v1408
  %3207 = vmatprep.subr.mxu0 %v122
  %3208 = vmatpush1.msra.mxu0 %v121
  %3209 = vmatprep.subr.mxu0 %v1152
  %3210 = vmatpush1.msra.mxu0 %v1151
  %3211 = vmatprep.subr.mxu0 %v895
  %3212 = vmatpush1.msra.mxu0 %v894
  %3213 = vmatprep.subr.mxu0 %v638
  %3214 = vmatpush1.msra.mxu0 %v637
  %3215 = vmatprep.subr.mxu0 %v381
  %3216 = vmatpush1.msra.mxu0 %v380
  %3217 = vmatprep.subr.mxu0 0.0
  %3218 = vmatpush2.msra.mxu0 0.0
  %3219 = vmatprep.subr.mxu0 0.0
  %3220 = vmatpush2.msra.mxu0 0.0
  %3221 = vmatprep.subr.mxu0 0.0
  %3222 = vmatpush2.msra.mxu0 0.0
  %3223 = vmatprep.subr.mxu0 0.0
  %3224 = vmatpush2.msra.mxu0 0.0
  %3225 = vmatprep.subr.mxu0 0.0
  %3226 = vmatpush2.msra.mxu0 0.0
  %3227 = vmatprep.subr.mxu0 0.0
  %3228 = vmatpush2.msra.mxu0 0.0
  %3229 = vmatprep.subr.mxu0 0.0
  %3230 = vmatpush2.msra.mxu0 0.0
  %3231 = vmatprep.subr.mxu0 0.0
  %3232 = vmatpush2.msra.mxu0 0.0
  %3233 = vmatprep.subr.mxu0 0.0
  %3234 = vmatpush2.msra.mxu0 0.0
  %3235 = vmatprep.subr.mxu0 0.0
  %3236 = vmatpush2.msra.mxu0 0.0
  %3237 = vmatprep.subr.mxu0 0.0
  %3238 = vmatpush2.msra.mxu0 0.0
  %3239 = vmatprep.subr.mxu0 0.0
  %3240 = vmatpush2.msra.mxu0 0.0
  %3241 = vmatprep.subr.mxu0 0.0
  %3242 = vmatpush2.msra.mxu0 0.0
  %3243 = vmatprep.subr.mxu0 0.0
  %3244 = vmatpush2.msra.mxu0 0.0
  %3245 = vmatprep.subr.mxu0 0.0
  %3246 = vmatpush2.msra.mxu0 0.0
  %3247 = vmatprep.subr.mxu0 0.0
  %3248 = vmatpush2.msra.mxu0 0.0
  %3249 = vmatprep.mubr.f32.mxu0 0.0
  %3250 = vmatmul.mubr.f32.gmra.mxu0 %v2195
  %v3251 = vpop.f32.mrf.mxu0
  %v3252 = vadd.f32 0.0, %v3251
  %v3253 = vpop.f32.mrf.mxu0
  %v3254 = vadd.f32 0.0, %v3253
  %3255 = vmatprep.mubr.f32.mxu0 0.0
  %3256 = vmatmul.mubr.f32.gmra.mxu0 %v2198
  %v3257 = vpop.f32.mrf.mxu0
  %v3258 = vadd.f32 0.0, %v3257
  %v3259 = vpop.f32.mrf.mxu0
  %v3260 = vadd.f32 0.0, %v3259
  %3261 = vmatprep.mubr.f32.mxu0 0.0
  %3262 = vmatmul.mubr.f32.gmra.mxu0 %v2201
  %v3263 = vpop.f32.mrf.mxu0
  %v3264 = vadd.f32 0.0, %v3263
  %v3265 = vpop.f32.mrf.mxu0
  %v3266 = vadd.f32 0.0, %v3265
  %3267 = vmatprep.mubr.f32.mxu0 0.0
  %3268 = vmatmul.mubr.f32.gmra.mxu0 %v2204
  %v3269 = vpop.f32.mrf.mxu0
  %v3270 = vadd.f32 0.0, %v3269
  %v3271 = vpop.f32.mrf.mxu0
  %v3272 = vadd.f32 0.0, %v3271
  %3273 = vdwg.mxu0
  %3274 = vmatprep.subr.mxu0 0.0
  %3275 = vmatpush1.msra.mxu0 0.0
  %3276 = vmatprep.subr.mxu0 0.0
  %3277 = vmatpush1.msra.mxu0 0.0
  %3278 = vmatprep.subr.mxu0 0.0
  %3279 = vmatpush1.msra.mxu0 0.0
  %3280 = vmatprep.subr.mxu0 0.0
  %3281 = vmatpush1.msra.mxu0 0.0
  %3282 = vmatprep.subr.mxu0 0.0
  %3283 = vmatpush1.msra.mxu0 0.0
  %3284 = vmatprep.subr.mxu0 0.0
  %3285 = vmatpush1.msra.mxu0 0.0
  %3286 = vmatprep.subr.mxu0 0.0
  %3287 = vmatpush1.msra.mxu0 0.0
  %3288 = vmatprep.subr.mxu0 %v2182
  %3289 = vmatpush1.msra.mxu0 %v2181
  %3290 = vmatprep.subr.mxu0 %v1925
  %3291 = vmatpush1.msra.mxu0 %v1924
  %3292 = vmatprep.subr.mxu0 %v1668
  %3293 = vmatpush1.msra.mxu0 %v1667
  %3294 = vmatprep.subr.mxu0 %v1411
  %3295 = vmatpush1.msra.mxu0 %v1410
  %3296 = vmatprep.subr.mxu0 %v124
  %3297 = vmatpush1.msra.mxu0 %v123
  %3298 = vmatprep.subr.mxu0 %v1154
  %3299 = vmatpush1.msra.mxu0 %v1153
  %3300 = vmatprep.subr.mxu0 %v897
  %3301 = vmatpush1.msra.mxu0 %v896
  %3302 = vmatprep.subr.mxu0 %v640
  %3303 = vmatpush1.msra.mxu0 %v639
  %3304 = vmatprep.subr.mxu0 %v383
  %3305 = vmatpush1.msra.mxu0 %v382
  %3306 = vmatprep.subr.mxu0 0.0
  %3307 = vmatpush2.msra.mxu0 0.0
  %3308 = vmatprep.subr.mxu0 0.0
  %3309 = vmatpush2.msra.mxu0 0.0
  %3310 = vmatprep.subr.mxu0 0.0
  %3311 = vmatpush2.msra.mxu0 0.0
  %3312 = vmatprep.subr.mxu0 0.0
  %3313 = vmatpush2.msra.mxu0 0.0
  %3314 = vmatprep.subr.mxu0 0.0
  %3315 = vmatpush2.msra.mxu0 0.0
  %3316 = vmatprep.subr.mxu0 0.0
  %3317 = vmatpush2.msra.mxu0 0.0
  %3318 = vmatprep.subr.mxu0 0.0
  %3319 = vmatpush2.msra.mxu0 0.0
  %3320 = vmatprep.subr.mxu0 0.0
  %3321 = vmatpush2.msra.mxu0 0.0
  %3322 = vmatprep.subr.mxu0 0.0
  %3323 = vmatpush2.msra.mxu0 0.0
  %3324 = vmatprep.subr.mxu0 0.0
  %3325 = vmatpush2.msra.mxu0 0.0
  %3326 = vmatprep.subr.mxu0 0.0
  %3327 = vmatpush2.msra.mxu0 0.0
  %3328 = vmatprep.subr.mxu0 0.0
  %3329 = vmatpush2.msra.mxu0 0.0
  %3330 = vmatprep.subr.mxu0 0.0
  %3331 = vmatpush2.msra.mxu0 0.0
  %3332 = vmatprep.subr.mxu0 0.0
  %3333 = vmatpush2.msra.mxu0 0.0
  %3334 = vmatprep.subr.mxu0 0.0
  %3335 = vmatpush2.msra.mxu0 0.0
  %3336 = vmatprep.subr.mxu0 0.0
  %3337 = vmatpush2.msra.mxu0 0.0
  %3338 = vmatprep.mubr.f32.mxu0 0.0
  %3339 = vmatmul.mubr.f32.gmra.mxu0 %v2195
  %v3340 = vpop.f32.mrf.mxu0
  %v3341 = vadd.f32 0.0, %v3340
  %v3342 = vpop.f32.mrf.mxu0
  %v3343 = vadd.f32 0.0, %v3342
  %3344 = vmatprep.mubr.f32.mxu0 0.0
  %3345 = vmatmul.mubr.f32.gmra.mxu0 %v2198
  %v3346 = vpop.f32.mrf.mxu0
  %v3347 = vadd.f32 0.0, %v3346
  %v3348 = vpop.f32.mrf.mxu0
  %v3349 = vadd.f32 0.0, %v3348
  %3350 = vmatprep.mubr.f32.mxu0 0.0
  %3351 = vmatmul.mubr.f32.gmra.mxu0 %v2201
  %v3352 = vpop.f32.mrf.mxu0
  %v3353 = vadd.f32 0.0, %v3352
  %v3354 = vpop.f32.mrf.mxu0
  %v3355 = vadd.f32 0.0, %v3354
  %3356 = vmatprep.mubr.f32.mxu0 0.0
  %3357 = vmatmul.mubr.f32.gmra.mxu0 %v2204
  %v3358 = vpop.f32.mrf.mxu0
  %v3359 = vadd.f32 0.0, %v3358
  %v3360 = vpop.f32.mrf.mxu0
  %v3361 = vadd.f32 0.0, %v3360
  %3362 = vdwg.mxu0
  %3363 = vmatprep.subr.mxu0 0.0
  %3364 = vmatpush1.msra.mxu0 0.0
  %3365 = vmatprep.subr.mxu0 0.0
  %3366 = vmatpush1.msra.mxu0 0.0
  %3367 = vmatprep.subr.mxu0 0.0
  %3368 = vmatpush1.msra.mxu0 0.0
  %3369 = vmatprep.subr.mxu0 0.0
  %3370 = vmatpush1.msra.mxu0 0.0
  %3371 = vmatprep.subr.mxu0 0.0
  %3372 = vmatpush1.msra.mxu0 0.0
  %3373 = vmatprep.subr.mxu0 0.0
  %3374 = vmatpush1.msra.mxu0 0.0
  %3375 = vmatprep.subr.mxu0 0.0
  %3376 = vmatpush1.msra.mxu0 0.0
  %3377 = vmatprep.subr.mxu0 %v2184
  %3378 = vmatpush1.msra.mxu0 %v2183
  %3379 = vmatprep.subr.mxu0 %v1927
  %3380 = vmatpush1.msra.mxu0 %v1926
  %3381 = vmatprep.subr.mxu0 %v1670
  %3382 = vmatpush1.msra.mxu0 %v1669
  %3383 = vmatprep.subr.mxu0 %v1413
  %3384 = vmatpush1.msra.mxu0 %v1412
  %3385 = vmatprep.subr.mxu0 %v126
  %3386 = vmatpush1.msra.mxu0 %v125
  %3387 = vmatprep.subr.mxu0 %v1156
  %3388 = vmatpush1.msra.mxu0 %v1155
  %3389 = vmatprep.subr.mxu0 %v899
  %3390 = vmatpush1.msra.mxu0 %v898
  %3391 = vmatprep.subr.mxu0 %v642
  %3392 = vmatpush1.msra.mxu0 %v641
  %3393 = vmatprep.subr.mxu0 %v385
  %3394 = vmatpush1.msra.mxu0 %v384
  %3395 = vmatprep.subr.mxu0 0.0
  %3396 = vmatpush2.msra.mxu0 0.0
  %3397 = vmatprep.subr.mxu0 0.0
  %3398 = vmatpush2.msra.mxu0 0.0
  %3399 = vmatprep.subr.mxu0 0.0
  %3400 = vmatpush2.msra.mxu0 0.0
  %3401 = vmatprep.subr.mxu0 0.0
  %3402 = vmatpush2.msra.mxu0 0.0
  %3403 = vmatprep.subr.mxu0 0.0
  %3404 = vmatpush2.msra.mxu0 0.0
  %3405 = vmatprep.subr.mxu0 0.0
  %3406 = vmatpush2.msra.mxu0 0.0
  %3407 = vmatprep.subr.mxu0 0.0
  %3408 = vmatpush2.msra.mxu0 0.0
  %3409 = vmatprep.subr.mxu0 0.0
  %3410 = vmatpush2.msra.mxu0 0.0
  %3411 = vmatprep.subr.mxu0 0.0
  %3412 = vmatpush2.msra.mxu0 0.0
  %3413 = vmatprep.subr.mxu0 0.0
  %3414 = vmatpush2.msra.mxu0 0.0
  %3415 = vmatprep.subr.mxu0 0.0
  %3416 = vmatpush2.msra.mxu0 0.0
  %3417 = vmatprep.subr.mxu0 0.0
  %3418 = vmatpush2.msra.mxu0 0.0
  %3419 = vmatprep.subr.mxu0 0.0
  %3420 = vmatpush2.msra.mxu0 0.0
  %3421 = vmatprep.subr.mxu0 0.0
  %3422 = vmatpush2.msra.mxu0 0.0
  %3423 = vmatprep.subr.mxu0 0.0
  %3424 = vmatpush2.msra.mxu0 0.0
  %3425 = vmatprep.subr.mxu0 0.0
  %3426 = vmatpush2.msra.mxu0 0.0
  %3427 = vmatprep.mubr.f32.mxu0 0.0
  %3428 = vmatmul.mubr.f32.gmra.mxu0 %v2195
  %v3429 = vpop.f32.mrf.mxu0
  %v3430 = vadd.f32 0.0, %v3429
  %v3431 = vpop.f32.mrf.mxu0
  %v3432 = vadd.f32 0.0, %v3431
  %3433 = vmatprep.mubr.f32.mxu0 0.0
  %3434 = vmatmul.mubr.f32.gmra.mxu0 %v2198
  %v3435 = vpop.f32.mrf.mxu0
  %v3436 = vadd.f32 0.0, %v3435
  %v3437 = vpop.f32.mrf.mxu0
  %v3438 = vadd.f32 0.0, %v3437
  %3439 = vmatprep.mubr.f32.mxu0 0.0
  %3440 = vmatmul.mubr.f32.gmra.mxu0 %v2201
  %v3441 = vpop.f32.mrf.mxu0
  %v3442 = vadd.f32 0.0, %v3441
  %v3443 = vpop.f32.mrf.mxu0
  %v3444 = vadd.f32 0.0, %v3443
  %3445 = vmatprep.mubr.f32.mxu0 0.0
  %3446 = vmatmul.mubr.f32.gmra.mxu0 %v2204
  %v3447 = vpop.f32.mrf.mxu0
  %v3448 = vadd.f32 0.0, %v3447
  %v3449 = vpop.f32.mrf.mxu0
  %v3450 = vadd.f32 0.0, %v3449
  %3451 = vdwg.mxu0
  %3452 = vmatprep.subr.mxu0 0.0
  %3453 = vmatpush1.msra.mxu0 0.0
  %3454 = vmatprep.subr.mxu0 0.0
  %3455 = vmatpush1.msra.mxu0 0.0
  %3456 = vmatprep.subr.mxu0 0.0
  %3457 = vmatpush1.msra.mxu0 0.0
  %3458 = vmatprep.subr.mxu0 0.0
  %3459 = vmatpush1.msra.mxu0 0.0
  %3460 = vmatprep.subr.mxu0 0.0
  %3461 = vmatpush1.msra.mxu0 0.0
  %3462 = vmatprep.subr.mxu0 0.0
  %3463 = vmatpush1.msra.mxu0 0.0
  %3464 = vmatprep.subr.mxu0 0.0
  %3465 = vmatpush1.msra.mxu0 0.0
  %3466 = vmatprep.subr.mxu0 %v2186
  %3467 = vmatpush1.msra.mxu0 %v2185
  %3468 = vmatprep.subr.mxu0 %v1929
  %3469 = vmatpush1.msra.mxu0 %v1928
  %3470 = vmatprep.subr.mxu0 %v1672
  %3471 = vmatpush1.msra.mxu0 %v1671
  %3472 = vmatprep.subr.mxu0 %v1415
  %3473 = vmatpush1.msra.mxu0 %v1414
  %3474 = vmatprep.subr.mxu0 %v128
  %3475 = vmatpush1.msra.mxu0 %v127
  %3476 = vmatprep.subr.mxu0 %v1158
  %3477 = vmatpush1.msra.mxu0 %v1157
  %3478 = vmatprep.subr.mxu0 %v901
  %3479 = vmatpush1.msra.mxu0 %v900
  %3480 = vmatprep.subr.mxu0 %v644
  %3481 = vmatpush1.msra.mxu0 %v643
  %3482 = vmatprep.subr.mxu0 %v387
  %3483 = vmatpush1.msra.mxu0 %v386
  %3484 = vmatprep.subr.mxu0 0.0
  %3485 = vmatpush2.msra.mxu0 0.0
  %3486 = vmatprep.subr.mxu0 0.0
  %3487 = vmatpush2.msra.mxu0 0.0
  %3488 = vmatprep.subr.mxu0 0.0
  %3489 = vmatpush2.msra.mxu0 0.0
  %3490 = vmatprep.subr.mxu0 0.0
  %3491 = vmatpush2.msra.mxu0 0.0
  %3492 = vmatprep.subr.mxu0 0.0
  %3493 = vmatpush2.msra.mxu0 0.0
  %3494 = vmatprep.subr.mxu0 0.0
  %3495 = vmatpush2.msra.mxu0 0.0
  %3496 = vmatprep.subr.mxu0 0.0
  %3497 = vmatpush2.msra.mxu0 0.0
  %3498 = vmatprep.subr.mxu0 0.0
  %3499 = vmatpush2.msra.mxu0 0.0
  %3500 = vmatprep.subr.mxu0 0.0
  %3501 = vmatpush2.msra.mxu0 0.0
  %3502 = vmatprep.subr.mxu0 0.0
  %3503 = vmatpush2.msra.mxu0 0.0
  %3504 = vmatprep.subr.mxu0 0.0
  %3505 = vmatpush2.msra.mxu0 0.0
  %3506 = vmatprep.subr.mxu0 0.0
  %3507 = vmatpush2.msra.mxu0 0.0
  %3508 = vmatprep.subr.mxu0 0.0
  %3509 = vmatpush2.msra.mxu0 0.0
  %3510 = vmatprep.subr.mxu0 0.0
  %3511 = vmatpush2.msra.mxu0 0.0
  %3512 = vmatprep.subr.mxu0 0.0
  %3513 = vmatpush2.msra.mxu0 0.0
  %3514 = vmatprep.subr.mxu0 0.0
  %3515 = vmatpush2.msra.mxu0 0.0
  %3516 = vmatprep.mubr.f32.mxu0 0.0
  %3517 = vmatmul.mubr.f32.gmra.mxu0 %v2195
  %v3518 = vpop.f32.mrf.mxu0
  %v3519 = vadd.f32 0.0, %v3518
  %v3520 = vpop.f32.mrf.mxu0
  %v3521 = vadd.f32 0.0, %v3520
  %3522 = vmatprep.mubr.f32.mxu0 0.0
  %3523 = vmatmul.mubr.f32.gmra.mxu0 %v2198
  %v3524 = vpop.f32.mrf.mxu0
  %v3525 = vadd.f32 0.0, %v3524
  %v3526 = vpop.f32.mrf.mxu0
  %v3527 = vadd.f32 0.0, %v3526
  %3528 = vmatprep.mubr.f32.mxu0 0.0
  %3529 = vmatmul.mubr.f32.gmra.mxu0 %v2201
  %v3530 = vpop.f32.mrf.mxu0
  %v3531 = vadd.f32 0.0, %v3530
  %v3532 = vpop.f32.mrf.mxu0
  %v3533 = vadd.f32 0.0, %v3532
  %3534 = vmatprep.mubr.f32.mxu0 0.0
  %3535 = vmatmul.mubr.f32.gmra.mxu0 %v2204
  %v3536 = vpop.f32.mrf.mxu0
  %v3537 = vadd.f32 0.0, %v3536
  %v3538 = vpop.f32.mrf.mxu0
  %v3539 = vadd.f32 0.0, %v3538
  %3540 = vdwg.mxu0
  %3541 = vmatprep.subr.mxu0 0.0
  %3542 = vmatpush1.msra.mxu0 0.0
  %3543 = vmatprep.subr.mxu0 0.0
  %3544 = vmatpush1.msra.mxu0 0.0
  %3545 = vmatprep.subr.mxu0 0.0
  %3546 = vmatpush1.msra.mxu0 0.0
  %3547 = vmatprep.subr.mxu0 0.0
  %3548 = vmatpush1.msra.mxu0 0.0
  %3549 = vmatprep.subr.mxu0 0.0
  %3550 = vmatpush1.msra.mxu0 0.0
  %3551 = vmatprep.subr.mxu0 0.0
  %3552 = vmatpush1.msra.mxu0 0.0
  %3553 = vmatprep.subr.mxu0 0.0
  %3554 = vmatpush1.msra.mxu0 0.0
  %3555 = vmatprep.subr.mxu0 %v2188
  %3556 = vmatpush1.msra.mxu0 %v2187
  %3557 = vmatprep.subr.mxu0 %v1931
  %3558 = vmatpush1.msra.mxu0 %v1930
  %3559 = vmatprep.subr.mxu0 %v1674
  %3560 = vmatpush1.msra.mxu0 %v1673
  %3561 = vmatprep.subr.mxu0 %v1417
  %3562 = vmatpush1.msra.mxu0 %v1416
  %3563 = vmatprep.subr.mxu0 %v130
  %3564 = vmatpush1.msra.mxu0 %v129
  %3565 = vmatprep.subr.mxu0 %v1160
  %3566 = vmatpush1.msra.mxu0 %v1159
  %3567 = vmatprep.subr.mxu0 %v903
  %3568 = vmatpush1.msra.mxu0 %v902
  %3569 = vmatprep.subr.mxu0 %v646
  %3570 = vmatpush1.msra.mxu0 %v645
  %3571 = vmatprep.subr.mxu0 %v389
  %3572 = vmatpush1.msra.mxu0 %v388
  %3573 = vmatprep.subr.mxu0 0.0
  %3574 = vmatpush2.msra.mxu0 0.0
  %3575 = vmatprep.subr.mxu0 0.0
  %3576 = vmatpush2.msra.mxu0 0.0
  %3577 = vmatprep.subr.mxu0 0.0
  %3578 = vmatpush2.msra.mxu0 0.0
  %3579 = vmatprep.subr.mxu0 0.0
  %3580 = vmatpush2.msra.mxu0 0.0
  %3581 = vmatprep.subr.mxu0 0.0
  %3582 = vmatpush2.msra.mxu0 0.0
  %3583 = vmatprep.subr.mxu0 0.0
  %3584 = vmatpush2.msra.mxu0 0.0
  %3585 = vmatprep.subr.mxu0 0.0
  %3586 = vmatpush2.msra.mxu0 0.0
  %3587 = vmatprep.subr.mxu0 0.0
  %3588 = vmatpush2.msra.mxu0 0.0
  %3589 = vmatprep.subr.mxu0 0.0
  %3590 = vmatpush2.msra.mxu0 0.0
  %3591 = vmatprep.subr.mxu0 0.0
  %3592 = vmatpush2.msra.mxu0 0.0
  %3593 = vmatprep.subr.mxu0 0.0
  %3594 = vmatpush2.msra.mxu0 0.0
  %3595 = vmatprep.subr.mxu0 0.0
  %3596 = vmatpush2.msra.mxu0 0.0
  %3597 = vmatprep.subr.mxu0 0.0
  %3598 = vmatpush2.msra.mxu0 0.0
  %3599 = vmatprep.subr.mxu0 0.0
  %3600 = vmatpush2.msra.mxu0 0.0
  %3601 = vmatprep.subr.mxu0 0.0
  %3602 = vmatpush2.msra.mxu0 0.0
  %3603 = vmatprep.subr.mxu0 0.0
  %3604 = vmatpush2.msra.mxu0 0.0
  %3605 = vmatprep.mubr.f32.mxu0 0.0
  %3606 = vmatmul.mubr.f32.gmra.mxu0 %v2195
  %v3607 = vpop.f32.mrf.mxu0
  %v3608 = vadd.f32 0.0, %v3607
  %v3609 = vpop.f32.mrf.mxu0
  %v3610 = vadd.f32 0.0, %v3609
  %3611 = vmatprep.mubr.f32.mxu0 0.0
  %3612 = vmatmul.mubr.f32.gmra.mxu0 %v2198
  %v3613 = vpop.f32.mrf.mxu0
  %v3614 = vadd.f32 0.0, %v3613
  %v3615 = vpop.f32.mrf.mxu0
  %v3616 = vadd.f32 0.0, %v3615
  %3617 = vmatprep.mubr.f32.mxu0 0.0
  %3618 = vmatmul.mubr.f32.gmra.mxu0 %v2201
  %v3619 = vpop.f32.mrf.mxu0
  %v3620 = vadd.f32 0.0, %v3619
  %v3621 = vpop.f32.mrf.mxu0
  %v3622 = vadd.f32 0.0, %v3621
  %3623 = vmatprep.mubr.f32.mxu0 0.0
  %3624 = vmatmul.mubr.f32.gmra.mxu0 %v2204
  %v3625 = vpop.f32.mrf.mxu0
  %v3626 = vadd.f32 0.0, %v3625
  %v3627 = vpop.f32.mrf.mxu0
  %v3628 = vadd.f32 0.0, %v3627
  %3629 = vdwg.mxu0
  %3630 = vst [vmem:[#allocation2] sm:$0xff] %v2273
  %3631 = vst [vmem:[#allocation2 + $0x8] sm:$0xff] %v2275
  %3632 = vst [vmem:[#allocation2 + $0x10] sm:$0xff] %v2362
  %3633 = vst [vmem:[#allocation2 + $0x18] sm:$0xff] %v2364
  %3634 = vst [vmem:[#allocation2 + $0x20] sm:$0xff] %v2279
  %3635 = vst [vmem:[#allocation2 + $0x28] sm:$0xff] %v2281
  %3636 = vst [vmem:[#allocation2 + $0x30] sm:$0xff] %v2368
  %3637 = vst [vmem:[#allocation2 + $0x38] sm:$0xff] %v2370
  %3638 = vst [vmem:[#allocation2 + $0x40] sm:$0xff] %v2285
  %3639 = vst [vmem:[#allocation2 + $0x48] sm:$0xff] %v2287
  %3640 = vst [vmem:[#allocation2 + $0x50] sm:$0xff] %v2374
  %3641 = vst [vmem:[#allocation2 + $0x58] sm:$0xff] %v2376
  %3642 = vst [vmem:[#allocation2 + $0x60] sm:$0xff] %v2291
  %3643 = vst [vmem:[#allocation2 + $0x68] sm:$0xff] %v2293
  %3644 = vst [vmem:[#allocation2 + $0x70] sm:$0xff] %v2380
  %3645 = vst [vmem:[#allocation2 + $0x78] sm:$0xff] %v2382
  %s3646 = scalar_lea.vmem [#allocation2], 128
  %3647 = vst [vmem:[%s3646] sm:$0xff] %v2451
  %3648 = vst [vmem:[%s3646 + $0x8] sm:$0xff] %v2453
  %3649 = vst [vmem:[%s3646 + $0x10] sm:$0xff] %v2540
  %3650 = vst [vmem:[%s3646 + $0x18] sm:$0xff] %v2542
  %3651 = vst [vmem:[%s3646 + $0x20] sm:$0xff] %v2457
  %3652 = vst [vmem:[%s3646 + $0x28] sm:$0xff] %v2459
  %3653 = vst [vmem:[%s3646 + $0x30] sm:$0xff] %v2546
  %3654 = vst [vmem:[%s3646 + $0x38] sm:$0xff] %v2548
  %3655 = vst [vmem:[%s3646 + $0x40] sm:$0xff] %v2463
  %3656 = vst [vmem:[%s3646 + $0x48] sm:$0xff] %v2465
  %3657 = vst [vmem:[%s3646 + $0x50] sm:$0xff] %v2552
  %3658 = vst [vmem:[%s3646 + $0x58] sm:$0xff] %v2554
  %3659 = vst [vmem:[%s3646 + $0x60] sm:$0xff] %v2469
  %3660 = vst [vmem:[%s3646 + $0x68] sm:$0xff] %v2471
  %3661 = vst [vmem:[%s3646 + $0x70] sm:$0xff] %v2558
  %3662 = vst [vmem:[%s3646 + $0x78] sm:$0xff] %v2560
  %s3663 = scalar_lea.vmem [#allocation2], 256
  %3664 = vst [vmem:[%s3663] sm:$0xff] %v2629
  %3665 = vst [vmem:[%s3663 + $0x8] sm:$0xff] %v2631
  %3666 = vst [vmem:[%s3663 + $0x10] sm:$0xff] %v2718
  %3667 = vst [vmem:[%s3663 + $0x18] sm:$0xff] %v2720
  %3668 = vst [vmem:[%s3663 + $0x20] sm:$0xff] %v2635
  %3669 = vst [vmem:[%s3663 + $0x28] sm:$0xff] %v2637
  %3670 = vst [vmem:[%s3663 + $0x30] sm:$0xff] %v2724
  %3671 = vst [vmem:[%s3663 + $0x38] sm:$0xff] %v2726
  %3672 = vst [vmem:[%s3663 + $0x40] sm:$0xff] %v2641
  %3673 = vst [vmem:[%s3663 + $0x48] sm:$0xff] %v2643
  %3674 = vst [vmem:[%s3663 + $0x50] sm:$0xff] %v2730
  %3675 = vst [vmem:[%s3663 + $0x58] sm:$0xff] %v2732
  %3676 = vst [vmem:[%s3663 + $0x60] sm:$0xff] %v2647
  %3677 = vst [vmem:[%s3663 + $0x68] sm:$0xff] %v2649
  %3678 = vst [vmem:[%s3663 + $0x70] sm:$0xff] %v2736
  %3679 = vst [vmem:[%s3663 + $0x78] sm:$0xff] %v2738
  %s3680 = scalar_lea.vmem [#allocation2], 384
  %3681 = vst [vmem:[%s3680] sm:$0xff] %v2807
  %3682 = vst [vmem:[%s3680 + $0x8] sm:$0xff] %v2809
  %3683 = vst [vmem:[%s3680 + $0x10] sm:$0xff] %v2896
  %3684 = vst [vmem:[%s3680 + $0x18] sm:$0xff] %v2898
  %3685 = vst [vmem:[%s3680 + $0x20] sm:$0xff] %v2813
  %3686 = vst [vmem:[%s3680 + $0x28] sm:$0xff] %v2815
  %3687 = vst [vmem:[%s3680 + $0x30] sm:$0xff] %v2902
  %3688 = vst [vmem:[%s3680 + $0x38] sm:$0xff] %v2904
  %3689 = vst [vmem:[%s3680 + $0x40] sm:$0xff] %v2819
  %3690 = vst [vmem:[%s3680 + $0x48] sm:$0xff] %v2821
  %3691 = vst [vmem:[%s3680 + $0x50] sm:$0xff] %v2908
  %3692 = vst [vmem:[%s3680 + $0x58] sm:$0xff] %v2910
  %3693 = vst [vmem:[%s3680 + $0x60] sm:$0xff] %v2825
  %3694 = vst [vmem:[%s3680 + $0x68] sm:$0xff] %v2827
  %3695 = vst [vmem:[%s3680 + $0x70] sm:$0xff] %v2914
  %3696 = vst [vmem:[%s3680 + $0x78] sm:$0xff] %v2916
  %s3697 = scalar_lea.vmem [#allocation2], 512
  %3698 = vst [vmem:[%s3697] sm:$0xff] %v2985
  %3699 = vst [vmem:[%s3697 + $0x8] sm:$0xff] %v2987
  %3700 = vst [vmem:[%s3697 + $0x10] sm:$0xff] %v3074
  %3701 = vst [vmem:[%s3697 + $0x18] sm:$0xff] %v3076
  %3702 = vst [vmem:[%s3697 + $0x20] sm:$0xff] %v2991
  %3703 = vst [vmem:[%s3697 + $0x28] sm:$0xff] %v2993
  %3704 = vst [vmem:[%s3697 + $0x30] sm:$0xff] %v3080
  %3705 = vst [vmem:[%s3697 + $0x38] sm:$0xff] %v3082
  %3706 = vst [vmem:[%s3697 + $0x40] sm:$0xff] %v2997
  %3707 = vst [vmem:[%s3697 + $0x48] sm:$0xff] %v2999
  %3708 = vst [vmem:[%s3697 + $0x50] sm:$0xff] %v3086
  %3709 = vst [vmem:[%s3697 + $0x58] sm:$0xff] %v3088
  %3710 = vst [vmem:[%s3697 + $0x60] sm:$0xff] %v3003
  %3711 = vst [vmem:[%s3697 + $0x68] sm:$0xff] %v3005
  %3712 = vst [vmem:[%s3697 + $0x70] sm:$0xff] %v3092
  %3713 = vst [vmem:[%s3697 + $0x78] sm:$0xff] %v3094
  %s3714 = scalar_lea.vmem [#allocation2], 640
  %3715 = vst [vmem:[%s3714] sm:$0xff] %v3163
  %3716 = vst [vmem:[%s3714 + $0x8] sm:$0xff] %v3165
  %3717 = vst [vmem:[%s3714 + $0x10] sm:$0xff] %v3252
  %3718 = vst [vmem:[%s3714 + $0x18] sm:$0xff] %v3254
  %3719 = vst [vmem:[%s3714 + $0x20] sm:$0xff] %v3169
  %3720 = vst [vmem:[%s3714 + $0x28] sm:$0xff] %v3171
  %3721 = vst [vmem:[%s3714 + $0x30] sm:$0xff] %v3258
  %3722 = vst [vmem:[%s3714 + $0x38] sm:$0xff] %v3260
  %3723 = vst [vmem:[%s3714 + $0x40] sm:$0xff] %v3175
  %3724 = vst [vmem:[%s3714 + $0x48] sm:$0xff] %v3177
  %3725 = vst [vmem:[%s3714 + $0x50] sm:$0xff] %v3264
  %3726 = vst [vmem:[%s3714 + $0x58] sm:$0xff] %v3266
  %3727 = vst [vmem:[%s3714 + $0x60] sm:$0xff] %v3181
  %3728 = vst [vmem:[%s3714 + $0x68] sm:$0xff] %v3183
  %3729 = vst [vmem:[%s3714 + $0x70] sm:$0xff] %v3270
  %3730 = vst [vmem:[%s3714 + $0x78] sm:$0xff] %v3272
  %s3731 = scalar_lea.vmem [#allocation2], 768
  %3732 = vst [vmem:[%s3731] sm:$0xff] %v3341
  %3733 = vst [vmem:[%s3731 + $0x8] sm:$0xff] %v3343
  %3734 = vst [vmem:[%s3731 + $0x10] sm:$0xff] %v3430
  %3735 = vst [vmem:[%s3731 + $0x18] sm:$0xff] %v3432
  %3736 = vst [vmem:[%s3731 + $0x20] sm:$0xff] %v3347
  %3737 = vst [vmem:[%s3731 + $0x28] sm:$0xff] %v3349
  %3738 = vst [vmem:[%s3731 + $0x30] sm:$0xff] %v3436
  %3739 = vst [vmem:[%s3731 + $0x38] sm:$0xff] %v3438
  %3740 = vst [vmem:[%s3731 + $0x40] sm:$0xff] %v3353
  %3741 = vst [vmem:[%s3731 + $0x48] sm:$0xff] %v3355
  %3742 = vst [vmem:[%s3731 + $0x50] sm:$0xff] %v3442
  %3743 = vst [vmem:[%s3731 + $0x58] sm:$0xff] %v3444
  %3744 = vst [vmem:[%s3731 + $0x60] sm:$0xff] %v3359
  %3745 = vst [vmem:[%s3731 + $0x68] sm:$0xff] %v3361
  %3746 = vst [vmem:[%s3731 + $0x70] sm:$0xff] %v3448
  %3747 = vst [vmem:[%s3731 + $0x78] sm:$0xff] %v3450
  %s3748 = scalar_lea.vmem [#allocation2], 896
  %3749 = vst [vmem:[%s3748] sm:$0xff] %v3519
  %3750 = vst [vmem:[%s3748 + $0x8] sm:$0xff] %v3521
  %3751 = vst [vmem:[%s3748 + $0x10] sm:$0xff] %v3608
  %3752 = vst [vmem:[%s3748 + $0x18] sm:$0xff] %v3610
  %3753 = vst [vmem:[%s3748 + $0x20] sm:$0xff] %v3525
  %3754 = vst [vmem:[%s3748 + $0x28] sm:$0xff] %v3527
  %3755 = vst [vmem:[%s3748 + $0x30] sm:$0xff] %v3614
  %3756 = vst [vmem:[%s3748 + $0x38] sm:$0xff] %v3616
  %3757 = vst [vmem:[%s3748 + $0x40] sm:$0xff] %v3531
  %3758 = vst [vmem:[%s3748 + $0x48] sm:$0xff] %v3533
  %3759 = vst [vmem:[%s3748 + $0x50] sm:$0xff] %v3620
  %3760 = vst [vmem:[%s3748 + $0x58] sm:$0xff] %v3622
  %3761 = vst [vmem:[%s3748 + $0x60] sm:$0xff] %v3537
  %3762 = vst [vmem:[%s3748 + $0x68] sm:$0xff] %v3539
  %3763 = vst [vmem:[%s3748 + $0x70] sm:$0xff] %v3626
  %3764 = vst [vmem:[%s3748 + $0x78] sm:$0xff] %v3628
  %3765 = vrot.lane.b32.xlu0 0.0, 17
  %v3766 = vpop.permute.xlu0 %3765
  %v3767 = vmul.f32 %v3766, %v233
  %v3768 = vmul.f32 %v3766, %v237
  %v3769 = vmul.f32 %v3766, %v241
  %v3770 = vmul.f32 %v3766, %v245
  %3771 = vrot.lane.b32.xlu0 0.0, 16
  %v3772 = vpop.permute.xlu0 %3771
  %v3773 = vmul.f32 %v3772, %v490
  %v3774 = vmul.f32 %v3772, %v494
  %v3775 = vmul.f32 %v3772, %v498
  %v3776 = vmul.f32 %v3772, %v502
  %3777 = vrot.lane.b32.xlu0 0.0, 15
  %v3778 = vpop.permute.xlu0 %3777
  %v3779 = vmul.f32 %v3778, %v747
  %v3780 = vmul.f32 %v3778, %v751
  %v3781 = vmul.f32 %v3778, %v755
  %v3782 = vmul.f32 %v3778, %v759
  %3783 = vrot.lane.b32.xlu0 0.0, 1
  %v3784 = vpop.permute.xlu0 %3783
  %v3785 = vmul.f32 %v3784, %v1004
  %v3786 = vmul.f32 %v3784, %v1008
  %v3787 = vmul.f32 %v3784, %v1012
  %v3788 = vmul.f32 %v3784, %v1016
  %3789 = vrot.lane.b32.xlu0 0.0, 127
  %v3790 = vpop.permute.xlu0 %3789
  %v3791 = vmul.f32 %v3790, %v1261
  %v3792 = vmul.f32 %v3790, %v1265
  %v3793 = vmul.f32 %v3790, %v1269
  %v3794 = vmul.f32 %v3790, %v1273
  %3795 = vrot.lane.b32.xlu0 0.0, 113
  %v3796 = vpop.permute.xlu0 %3795
  %v3797 = vmul.f32 %v3796, %v1518
  %v3798 = vmul.f32 %v3796, %v1522
  %v3799 = vmul.f32 %v3796, %v1526
  %v3800 = vmul.f32 %v3796, %v1530
  %3801 = vrot.lane.b32.xlu0 0.0, 112
  %v3802 = vpop.permute.xlu0 %3801
  %v3803 = vmul.f32 %v3802, %v1775
  %v3804 = vmul.f32 %v3802, %v1779
  %v3805 = vmul.f32 %v3802, %v1783
  %v3806 = vmul.f32 %v3802, %v1787
  %3807 = vrot.lane.b32.xlu0 0.0, 111
  %v3808 = vpop.permute.xlu0 %3807
  %v3809 = vmul.f32 %v3808, %v2032
  %v3810 = vmul.f32 %v3808, %v2036
  %v3811 = vmul.f32 %v3808, %v2040
  %v3812 = vmul.f32 %v3808, %v2044
  %v3813 = vld [vmem:[#allocation2] sm:$0xff]
  %v3814 = vld [vmem:[#allocation2 + $0x8] sm:$0xff]
  %v3815 = vld [vmem:[#allocation2 + $0x10] sm:$0xff]
  %v3816 = vld [vmem:[#allocation2 + $0x18] sm:$0xff]
  %v3817 = vld [vmem:[#allocation2 + $0x20] sm:$0xff]
  %v3818 = vld [vmem:[#allocation2 + $0x28] sm:$0xff]
  %v3819 = vld [vmem:[#allocation2 + $0x30] sm:$0xff]
  %v3820 = vld [vmem:[#allocation2 + $0x38] sm:$0xff]
  %v3821 = vld [vmem:[#allocation2 + $0x40] sm:$0xff]
  %v3822 = vld [vmem:[#allocation2 + $0x48] sm:$0xff]
  %v3823 = vld [vmem:[#allocation2 + $0x50] sm:$0xff]
  %v3824 = vld [vmem:[#allocation2 + $0x58] sm:$0xff]
  %v3825 = vld [vmem:[#allocation2 + $0x60] sm:$0xff]
  %v3826 = vld [vmem:[#allocation2 + $0x68] sm:$0xff]
  %v3827 = vld [vmem:[#allocation2 + $0x70] sm:$0xff]
  %v3828 = vld [vmem:[#allocation2 + $0x78] sm:$0xff]
  %v3830 = vsel %vm2193, %v87, 0
  %v3833 = vsel %vm2193, %v88, 0
  %v3836 = vsel %vm2193, %v89, 0
  %v3839 = vsel %vm2193, %v90, 0
  %3841 = vmatprep.subr.mxu0 0.0
  %3842 = vmatpush1.msra.mxu0 0.0
  %3843 = vmatprep.subr.mxu0 0.0
  %3844 = vmatpush1.msra.mxu0 0.0
  %3845 = vmatprep.subr.mxu0 0.0
  %3846 = vmatpush1.msra.mxu0 0.0
  %3847 = vmatprep.subr.mxu0 0.0
  %3848 = vmatpush1.msra.mxu0 0.0
  %3849 = vmatprep.subr.mxu0 0.0
  %3850 = vmatpush1.msra.mxu0 0.0
  %3851 = vmatprep.subr.mxu0 0.0
  %3852 = vmatpush1.msra.mxu0 0.0
  %3853 = vmatprep.subr.mxu0 0.0
  %3854 = vmatpush1.msra.mxu0 0.0
  %3855 = vmatprep.subr.mxu0 %v3810
  %3856 = vmatpush1.msra.mxu0 %v3809
  %3857 = vmatprep.subr.mxu0 %v3804
  %3858 = vmatpush1.msra.mxu0 %v3803
  %3859 = vmatprep.subr.mxu0 %v3798
  %3860 = vmatpush1.msra.mxu0 %v3797
  %3861 = vmatprep.subr.mxu0 %v3792
  %3862 = vmatpush1.msra.mxu0 %v3791
  %3863 = vmatprep.subr.mxu0 0.0
  %3864 = vmatpush1.msra.mxu0 0.0
  %3865 = vmatprep.subr.mxu0 %v3786
  %3866 = vmatpush1.msra.mxu0 %v3785
  %3867 = vmatprep.subr.mxu0 %v3780
  %3868 = vmatpush1.msra.mxu0 %v3779
  %3869 = vmatprep.subr.mxu0 %v3774
  %3870 = vmatpush1.msra.mxu0 %v3773
  %3871 = vmatprep.subr.mxu0 %v3768
  %3872 = vmatpush1.msra.mxu0 %v3767
  %3873 = vmatprep.subr.mxu0 0.0
  %3874 = vmatpush2.msra.mxu0 0.0
  %3875 = vmatprep.subr.mxu0 0.0
  %3876 = vmatpush2.msra.mxu0 0.0
  %3877 = vmatprep.subr.mxu0 0.0
  %3878 = vmatpush2.msra.mxu0 0.0
  %3879 = vmatprep.subr.mxu0 0.0
  %3880 = vmatpush2.msra.mxu0 0.0
  %3881 = vmatprep.subr.mxu0 0.0
  %3882 = vmatpush2.msra.mxu0 0.0
  %3883 = vmatprep.subr.mxu0 0.0
  %3884 = vmatpush2.msra.mxu0 0.0
  %3885 = vmatprep.subr.mxu0 0.0
  %3886 = vmatpush2.msra.mxu0 0.0
  %3887 = vmatprep.subr.mxu0 0.0
  %3888 = vmatpush2.msra.mxu0 0.0
  %3889 = vmatprep.subr.mxu0 0.0
  %3890 = vmatpush2.msra.mxu0 0.0
  %3891 = vmatprep.subr.mxu0 0.0
  %3892 = vmatpush2.msra.mxu0 0.0
  %3893 = vmatprep.subr.mxu0 0.0
  %3894 = vmatpush2.msra.mxu0 0.0
  %3895 = vmatprep.subr.mxu0 0.0
  %3896 = vmatpush2.msra.mxu0 0.0
  %3897 = vmatprep.subr.mxu0 0.0
  %3898 = vmatpush2.msra.mxu0 0.0
  %3899 = vmatprep.subr.mxu0 0.0
  %3900 = vmatpush2.msra.mxu0 0.0
  %3901 = vmatprep.subr.mxu0 0.0
  %3902 = vmatpush2.msra.mxu0 0.0
  %3903 = vmatprep.subr.mxu0 0.0
  %3904 = vmatpush2.msra.mxu0 0.0
  %3905 = vmatprep.mubr.f32.mxu0 0.0
  %3906 = vmatmul.mubr.f32.gmra.mxu0 %v3830
  %v3907 = vpop.f32.mrf.mxu0
  %v3908 = vadd.f32 0.0, %v3907
  %v3909 = vpop.f32.mrf.mxu0
  %v3910 = vadd.f32 0.0, %v3909
  %3911 = vmatprep.mubr.f32.mxu0 0.0
  %3912 = vmatmul.mubr.f32.gmra.mxu0 %v3833
  %v3913 = vpop.f32.mrf.mxu0
  %v3914 = vadd.f32 0.0, %v3913
  %v3915 = vpop.f32.mrf.mxu0
  %v3916 = vadd.f32 0.0, %v3915
  %3917 = vmatprep.mubr.f32.mxu0 0.0
  %3918 = vmatmul.mubr.f32.gmra.mxu0 %v3836
  %v3919 = vpop.f32.mrf.mxu0
  %v3920 = vadd.f32 0.0, %v3919
  %v3921 = vpop.f32.mrf.mxu0
  %v3922 = vadd.f32 0.0, %v3921
  %3923 = vmatprep.mubr.f32.mxu0 0.0
  %3924 = vmatmul.mubr.f32.gmra.mxu0 %v3839
  %v3925 = vpop.f32.mrf.mxu0
  %v3926 = vadd.f32 0.0, %v3925
  %v3927 = vpop.f32.mrf.mxu0
  %v3928 = vadd.f32 0.0, %v3927
  %3929 = vdwg.mxu0
  %3930 = vmatprep.subr.mxu0 0.0
  %3931 = vmatpush1.msra.mxu0 0.0
  %3932 = vmatprep.subr.mxu0 0.0
  %3933 = vmatpush1.msra.mxu0 0.0
  %3934 = vmatprep.subr.mxu0 0.0
  %3935 = vmatpush1.msra.mxu0 0.0
  %3936 = vmatprep.subr.mxu0 0.0
  %3937 = vmatpush1.msra.mxu0 0.0
  %3938 = vmatprep.subr.mxu0 0.0
  %3939 = vmatpush1.msra.mxu0 0.0
  %3940 = vmatprep.subr.mxu0 0.0
  %3941 = vmatpush1.msra.mxu0 0.0
  %3942 = vmatprep.subr.mxu0 0.0
  %3943 = vmatpush1.msra.mxu0 0.0
  %3944 = vmatprep.subr.mxu0 %v3812
  %3945 = vmatpush1.msra.mxu0 %v3811
  %3946 = vmatprep.subr.mxu0 %v3806
  %3947 = vmatpush1.msra.mxu0 %v3805
  %3948 = vmatprep.subr.mxu0 %v3800
  %3949 = vmatpush1.msra.mxu0 %v3799
  %3950 = vmatprep.subr.mxu0 %v3794
  %3951 = vmatpush1.msra.mxu0 %v3793
  %3952 = vmatprep.subr.mxu0 0.0
  %3953 = vmatpush1.msra.mxu0 0.0
  %3954 = vmatprep.subr.mxu0 %v3788
  %3955 = vmatpush1.msra.mxu0 %v3787
  %3956 = vmatprep.subr.mxu0 %v3782
  %3957 = vmatpush1.msra.mxu0 %v3781
  %3958 = vmatprep.subr.mxu0 %v3776
  %3959 = vmatpush1.msra.mxu0 %v3775
  %3960 = vmatprep.subr.mxu0 %v3770
  %3961 = vmatpush1.msra.mxu0 %v3769
  %3962 = vmatprep.subr.mxu0 0.0
  %3963 = vmatpush2.msra.mxu0 0.0
  %3964 = vmatprep.subr.mxu0 0.0
  %3965 = vmatpush2.msra.mxu0 0.0
  %3966 = vmatprep.subr.mxu0 0.0
  %3967 = vmatpush2.msra.mxu0 0.0
  %3968 = vmatprep.subr.mxu0 0.0
  %3969 = vmatpush2.msra.mxu0 0.0
  %3970 = vmatprep.subr.mxu0 0.0
  %3971 = vmatpush2.msra.mxu0 0.0
  %3972 = vmatprep.subr.mxu0 0.0
  %3973 = vmatpush2.msra.mxu0 0.0
  %3974 = vmatprep.subr.mxu0 0.0
  %3975 = vmatpush2.msra.mxu0 0.0
  %3976 = vmatprep.subr.mxu0 0.0
  %3977 = vmatpush2.msra.mxu0 0.0
  %3978 = vmatprep.subr.mxu0 0.0
  %3979 = vmatpush2.msra.mxu0 0.0
  %3980 = vmatprep.subr.mxu0 0.0
  %3981 = vmatpush2.msra.mxu0 0.0
  %3982 = vmatprep.subr.mxu0 0.0
  %3983 = vmatpush2.msra.mxu0 0.0
  %3984 = vmatprep.subr.mxu0 0.0
  %3985 = vmatpush2.msra.mxu0 0.0
  %3986 = vmatprep.subr.mxu0 0.0
  %3987 = vmatpush2.msra.mxu0 0.0
  %3988 = vmatprep.subr.mxu0 0.0
  %3989 = vmatpush2.msra.mxu0 0.0
  %3990 = vmatprep.subr.mxu0 0.0
  %3991 = vmatpush2.msra.mxu0 0.0
  %3992 = vmatprep.subr.mxu0 0.0
  %3993 = vmatpush2.msra.mxu0 0.0
  %3994 = vmatprep.mubr.f32.mxu0 0.0
  %3995 = vmatmul.mubr.f32.gmra.mxu0 %v3830
  %v3996 = vpop.f32.mrf.mxu0
  %v3997 = vadd.f32 0.0, %v3996
  %v3998 = vpop.f32.mrf.mxu0
  %v3999 = vadd.f32 0.0, %v3998
  %4000 = vmatprep.mubr.f32.mxu0 0.0
  %4001 = vmatmul.mubr.f32.gmra.mxu0 %v3833
  %v4002 = vpop.f32.mrf.mxu0
  %v4003 = vadd.f32 0.0, %v4002
  %v4004 = vpop.f32.mrf.mxu0
  %v4005 = vadd.f32 0.0, %v4004
  %4006 = vmatprep.mubr.f32.mxu0 0.0
  %4007 = vmatmul.mubr.f32.gmra.mxu0 %v3836
  %v4008 = vpop.f32.mrf.mxu0
  %v4009 = vadd.f32 0.0, %v4008
  %v4010 = vpop.f32.mrf.mxu0
  %v4011 = vadd.f32 0.0, %v4010
  %4012 = vmatprep.mubr.f32.mxu0 0.0
  %4013 = vmatmul.mubr.f32.gmra.mxu0 %v3839
  %v4014 = vpop.f32.mrf.mxu0
  %v4015 = vadd.f32 0.0, %v4014
  %v4016 = vpop.f32.mrf.mxu0
  %v4017 = vadd.f32 0.0, %v4016
  %4018 = vdwg.mxu0
  %v4019 = vadd.f32 %v3813, %v3908
  %v4020 = vadd.f32 %v3814, %v3910
  %v4021 = vadd.f32 %v3815, %v3997
  %v4022 = vadd.f32 %v3816, %v3999
  %v4023 = vadd.f32 %v3817, %v3914
  %v4024 = vadd.f32 %v3818, %v3916
  %v4025 = vadd.f32 %v3819, %v4003
  %v4026 = vadd.f32 %v3820, %v4005
  %v4027 = vadd.f32 %v3821, %v3920
  %v4028 = vadd.f32 %v3822, %v3922
  %v4029 = vadd.f32 %v3823, %v4009
  %v4030 = vadd.f32 %v3824, %v4011
  %v4031 = vadd.f32 %v3825, %v3926
  %v4032 = vadd.f32 %v3826, %v3928
  %v4033 = vadd.f32 %v3827, %v4015
  %v4034 = vadd.f32 %v3828, %v4017
  %v4035 = vmul.f32 %v4019, %v4019
  %v4036 = vmul.f32 %v4020, %v4020
  %v4037 = vmul.f32 %v4021, %v4021
  %v4038 = vmul.f32 %v4022, %v4022
  %v4039 = vmul.f32 %v4023, %v4023
  %v4040 = vmul.f32 %v4024, %v4024
  %v4041 = vmul.f32 %v4025, %v4025
  %v4042 = vmul.f32 %v4026, %v4026
  %v4043 = vmul.f32 %v4027, %v4027
  %v4044 = vmul.f32 %v4028, %v4028
  %v4045 = vmul.f32 %v4029, %v4029
  %v4046 = vmul.f32 %v4030, %v4030
  %v4047 = vmul.f32 %v4031, %v4031
  %v4048 = vmul.f32 %v4032, %v4032
  %v4049 = vmul.f32 %v4033, %v4033
  %v4050 = vmul.f32 %v4034, %v4034
  %4051 = vmatprep.subr.mxu0 0.0
  %4052 = vmatpush1.msra.mxu0 1.0
  %4053 = vmatprep.subr.mxu0 0.0
  %4054 = vmatpush1.msra.mxu0 1.0
  %4055 = vmatprep.subr.mxu0 0.0
  %4056 = vmatpush1.msra.mxu0 1.0
  %4057 = vmatprep.subr.mxu0 0.0
  %4058 = vmatpush1.msra.mxu0 1.0
  %4059 = vmatprep.subr.mxu0 0.0
  %4060 = vmatpush1.msra.mxu0 1.0
  %4061 = vmatprep.subr.mxu0 0.0
  %4062 = vmatpush1.msra.mxu0 1.0
  %4063 = vmatprep.subr.mxu0 0.0
  %4064 = vmatpush1.msra.mxu0 1.0
  %4065 = vmatprep.subr.mxu0 0.0
  %4066 = vmatpush1.msra.mxu0 1.0
  %4067 = vmatprep.subr.mxu0 0.0
  %4068 = vmatpush1.msra.mxu0 1.0
  %4069 = vmatprep.subr.mxu0 0.0
  %4070 = vmatpush1.msra.mxu0 1.0
  %4071 = vmatprep.subr.mxu0 0.0
  %4072 = vmatpush1.msra.mxu0 1.0
  %4073 = vmatprep.subr.mxu0 0.0
  %4074 = vmatpush1.msra.mxu0 1.0
  %4075 = vmatprep.subr.mxu0 0.0
  %4076 = vmatpush1.msra.mxu0 1.0
  %4077 = vmatprep.subr.mxu0 0.0
  %4078 = vmatpush1.msra.mxu0 1.0
  %4079 = vmatprep.subr.mxu0 0.0
  %4080 = vmatpush1.msra.mxu0 1.0
  %4081 = vmatprep.subr.mxu0 0.0
  %4082 = vmatpush1.msra.mxu0 1.0
  %4083 = vmatprep.subr.mxu0 0.0
  %4084 = vmatpush2.msra.mxu0 1.0
  %4085 = vmatprep.subr.mxu0 0.0
  %4086 = vmatpush2.msra.mxu0 1.0
  %4087 = vmatprep.subr.mxu0 0.0
  %4088 = vmatpush2.msra.mxu0 1.0
  %4089 = vmatprep.subr.mxu0 0.0
  %4090 = vmatpush2.msra.mxu0 1.0
  %4091 = vmatprep.subr.mxu0 0.0
  %4092 = vmatpush2.msra.mxu0 1.0
  %4093 = vmatprep.subr.mxu0 0.0
  %4094 = vmatpush2.msra.mxu0 1.0
  %4095 = vmatprep.subr.mxu0 0.0
  %4096 = vmatpush2.msra.mxu0 1.0
  %4097 = vmatprep.subr.mxu0 0.0
  %4098 = vmatpush2.msra.mxu0 1.0
  %4099 = vmatprep.subr.mxu0 0.0
  %4100 = vmatpush2.msra.mxu0 1.0
  %4101 = vmatprep.subr.mxu0 0.0
  %4102 = vmatpush2.msra.mxu0 1.0
  %4103 = vmatprep.subr.mxu0 0.0
  %4104 = vmatpush2.msra.mxu0 1.0
  %4105 = vmatprep.subr.mxu0 0.0
  %4106 = vmatpush2.msra.mxu0 1.0
  %4107 = vmatprep.subr.mxu0 0.0
  %4108 = vmatpush2.msra.mxu0 1.0
  %4109 = vmatprep.subr.mxu0 0.0
  %4110 = vmatpush2.msra.mxu0 1.0
  %4111 = vmatprep.subr.mxu0 0.0
  %4112 = vmatpush2.msra.mxu0 1.0
  %4113 = vmatprep.subr.mxu0 0.0
  %4114 = vmatpush2.msra.mxu0 1.0
  %4115 = vmatprep.mubr.f32.mxu0 %v4020
  %4116 = vmatmul.mubr.f32.gmra.mxu0 %v4019
  %v4117 = vpop.f32.mrf.mxu0
  %v4118 = vadd.f32 0.0, %v4117
  %v4119 = vpop.f32.mrf.mxu0
  %4120 = vmatprep.mubr.f32.mxu0 %v4024
  %4121 = vmatmul.mubr.f32.gmra.mxu0 %v4023
  %v4122 = vpop.f32.mrf.mxu0
  %v4123 = vadd.f32 0.0, %v4122
  %v4124 = vpop.f32.mrf.mxu0
  %4125 = vmatprep.mubr.f32.mxu0 %v4028
  %4126 = vmatmul.mubr.f32.gmra.mxu0 %v4027
  %v4127 = vpop.f32.mrf.mxu0
  %v4128 = vadd.f32 0.0, %v4127
  %v4129 = vpop.f32.mrf.mxu0
  %4130 = vmatprep.mubr.f32.mxu0 %v4032
  %4131 = vmatmul.mubr.f32.gmra.mxu0 %v4031
  %v4132 = vpop.f32.mrf.mxu0
  %v4133 = vadd.f32 0.0, %v4132
  %v4134 = vpop.f32.mrf.mxu0
  %4135 = vmatprep.mubr.f32.mxu0 %v4036
  %4136 = vmatmul.mubr.f32.gmra.mxu0 %v4035
  %v4137 = vpop.f32.mrf.mxu0
  %v4138 = vadd.f32 0.0, %v4137
  %v4139 = vpop.f32.mrf.mxu0
  %4140 = vmatprep.mubr.f32.mxu0 %v4040
  %4141 = vmatmul.mubr.f32.gmra.mxu0 %v4039
  %v4142 = vpop.f32.mrf.mxu0
  %v4143 = vadd.f32 0.0, %v4142
  %v4144 = vpop.f32.mrf.mxu0
  %4145 = vmatprep.mubr.f32.mxu0 %v4044
  %4146 = vmatmul.mubr.f32.gmra.mxu0 %v4043
  %v4147 = vpop.f32.mrf.mxu0
  %v4148 = vadd.f32 0.0, %v4147
  %v4149 = vpop.f32.mrf.mxu0
  %4150 = vmatprep.mubr.f32.mxu0 %v4048
  %4151 = vmatmul.mubr.f32.gmra.mxu0 %v4047
  %v4152 = vpop.f32.mrf.mxu0
  %v4153 = vadd.f32 0.0, %v4152
  %v4154 = vpop.f32.mrf.mxu0
  %4155 = vdwg.mxu0
  %4156 = vmatprep.subr.mxu0 0.0
  %4157 = vmatpush1.msra.mxu0 1.0
  %4158 = vmatprep.subr.mxu0 0.0
  %4159 = vmatpush1.msra.mxu0 1.0
  %4160 = vmatprep.subr.mxu0 0.0
  %4161 = vmatpush1.msra.mxu0 1.0
  %4162 = vmatprep.subr.mxu0 0.0
  %4163 = vmatpush1.msra.mxu0 1.0
  %4164 = vmatprep.subr.mxu0 0.0
  %4165 = vmatpush1.msra.mxu0 1.0
  %4166 = vmatprep.subr.mxu0 0.0
  %4167 = vmatpush1.msra.mxu0 1.0
  %4168 = vmatprep.subr.mxu0 0.0
  %4169 = vmatpush1.msra.mxu0 1.0
  %4170 = vmatprep.subr.mxu0 0.0
  %4171 = vmatpush1.msra.mxu0 1.0
  %4172 = vmatprep.subr.mxu0 0.0
  %4173 = vmatpush1.msra.mxu0 1.0
  %4174 = vmatprep.subr.mxu0 0.0
  %4175 = vmatpush1.msra.mxu0 1.0
  %4176 = vmatprep.subr.mxu0 0.0
  %4177 = vmatpush1.msra.mxu0 1.0
  %4178 = vmatprep.subr.mxu0 0.0
  %4179 = vmatpush1.msra.mxu0 1.0
  %4180 = vmatprep.subr.mxu0 0.0
  %4181 = vmatpush1.msra.mxu0 1.0
  %4182 = vmatprep.subr.mxu0 0.0
  %4183 = vmatpush1.msra.mxu0 1.0
  %4184 = vmatprep.subr.mxu0 0.0
  %4185 = vmatpush1.msra.mxu0 1.0
  %4186 = vmatprep.subr.mxu0 0.0
  %4187 = vmatpush1.msra.mxu0 1.0
  %4188 = vmatprep.subr.mxu0 0.0
  %4189 = vmatpush2.msra.mxu0 1.0
  %4190 = vmatprep.subr.mxu0 0.0
  %4191 = vmatpush2.msra.mxu0 1.0
  %4192 = vmatprep.subr.mxu0 0.0
  %4193 = vmatpush2.msra.mxu0 1.0
  %4194 = vmatprep.subr.mxu0 0.0
  %4195 = vmatpush2.msra.mxu0 1.0
  %4196 = vmatprep.subr.mxu0 0.0
  %4197 = vmatpush2.msra.mxu0 1.0
  %4198 = vmatprep.subr.mxu0 0.0
  %4199 = vmatpush2.msra.mxu0 1.0
  %4200 = vmatprep.subr.mxu0 0.0
  %4201 = vmatpush2.msra.mxu0 1.0
  %4202 = vmatprep.subr.mxu0 0.0
  %4203 = vmatpush2.msra.mxu0 1.0
  %4204 = vmatprep.subr.mxu0 0.0
  %4205 = vmatpush2.msra.mxu0 1.0
  %4206 = vmatprep.subr.mxu0 0.0
  %4207 = vmatpush2.msra.mxu0 1.0
  %4208 = vmatprep.subr.mxu0 0.0
  %4209 = vmatpush2.msra.mxu0 1.0
  %4210 = vmatprep.subr.mxu0 0.0
  %4211 = vmatpush2.msra.mxu0 1.0
  %4212 = vmatprep.subr.mxu0 0.0
  %4213 = vmatpush2.msra.mxu0 1.0
  %4214 = vmatprep.subr.mxu0 0.0
  %4215 = vmatpush2.msra.mxu0 1.0
  %4216 = vmatprep.subr.mxu0 0.0
  %4217 = vmatpush2.msra.mxu0 1.0
  %4218 = vmatprep.subr.mxu0 0.0
  %4219 = vmatpush2.msra.mxu0 1.0
  %4220 = vmatprep.mubr.f32.mxu0 %v4022
  %4221 = vmatmul.mubr.f32.gmra.mxu0 %v4021
  %v4222 = vpop.f32.mrf.mxu0
  %v4223 = vadd.f32 %v4118, %v4222
  %v4224 = vpop.f32.mrf.mxu0
  %4225 = vmatprep.mubr.f32.mxu0 %v4026
  %4226 = vmatmul.mubr.f32.gmra.mxu0 %v4025
  %v4227 = vpop.f32.mrf.mxu0
  %v4228 = vadd.f32 %v4123, %v4227
  %v4229 = vpop.f32.mrf.mxu0
  %4230 = vmatprep.mubr.f32.mxu0 %v4030
  %4231 = vmatmul.mubr.f32.gmra.mxu0 %v4029
  %v4232 = vpop.f32.mrf.mxu0
  %v4233 = vadd.f32 %v4128, %v4232
  %v4234 = vpop.f32.mrf.mxu0
  %4235 = vmatprep.mubr.f32.mxu0 %v4034
  %4236 = vmatmul.mubr.f32.gmra.mxu0 %v4033
  %v4237 = vpop.f32.mrf.mxu0
  %v4238 = vadd.f32 %v4133, %v4237
  %v4239 = vpop.f32.mrf.mxu0
  %4240 = vmatprep.mubr.f32.mxu0 %v4038
  %4241 = vmatmul.mubr.f32.gmra.mxu0 %v4037
  %v4242 = vpop.f32.mrf.mxu0
  %v4243 = vadd.f32 %v4138, %v4242
  %v4244 = vpop.f32.mrf.mxu0
  %4245 = vmatprep.mubr.f32.mxu0 %v4042
  %4246 = vmatmul.mubr.f32.gmra.mxu0 %v4041
  %v4247 = vpop.f32.mrf.mxu0
  %v4248 = vadd.f32 %v4143, %v4247
  %v4249 = vpop.f32.mrf.mxu0
  %4250 = vmatprep.mubr.f32.mxu0 %v4046
  %4251 = vmatmul.mubr.f32.gmra.mxu0 %v4045
  %v4252 = vpop.f32.mrf.mxu0
  %v4253 = vadd.f32 %v4148, %v4252
  %v4254 = vpop.f32.mrf.mxu0
  %4255 = vmatprep.mubr.f32.mxu0 %v4050
  %4256 = vmatmul.mubr.f32.gmra.mxu0 %v4049
  %v4257 = vpop.f32.mrf.mxu0
  %v4258 = vadd.f32 %v4153, %v4257
  %v4259 = vpop.f32.mrf.mxu0
  %4260 = vdwg.mxu0
  %v4261 = vmul.f32 %v4223, 0.001953125
  %v4262 = vmul.f32 %v4228, 0.001953125
  %v4263 = vmul.f32 %v4233, 0.001953125
  %v4264 = vmul.f32 %v4238, 0.001953125
  %v4265 = vmul.f32 %v4243, 0.001953125
  %v4266 = vmul.f32 %v4248, 0.001953125
  %v4267 = vmul.f32 %v4253, 0.001953125
  %v4268 = vmul.f32 %v4258, 0.001953125
  %v4269 = vmul.f32 %v4261, %v4261
  %v4270 = vmul.f32 %v4262, %v4262
  %v4271 = vmul.f32 %v4263, %v4263
  %v4272 = vmul.f32 %v4264, %v4264
  %v4273 = vsub.f32 %v4265, %v4269
  %v4274 = vsub.f32 %v4266, %v4270
  %v4275 = vsub.f32 %v4267, %v4271
  %v4276 = vsub.f32 %v4268, %v4272
  %v4277 = vadd.f32 %v4273, 1e-05
  %v4278 = vadd.f32 %v4274, 1e-05
  %v4279 = vadd.f32 %v4275, 1e-05
  %v4280 = vadd.f32 %v4276, 1e-05
  %v4281 = vrsqrt.pop %v4277
  %v4282 = vrsqrt.pop %v4278
  %v4283 = vrsqrt.pop %v4279
  %v4284 = vrsqrt.pop %v4280
  %v4285 = vmul.f32 %v91, %v4281
  %v4286 = vmul.f32 %v92, %v4282
  %v4287 = vmul.f32 %v93, %v4283
  %v4288 = vmul.f32 %v94, %v4284
  %v4289 = vmul.f32 %v4261, %v4285
  %v4290 = vmul.f32 %v4262, %v4286
  %v4291 = vmul.f32 %v4263, %v4287
  %v4292 = vmul.f32 %v4264, %v4288
  %v4293 = vsub.f32 %v95, %v4289
  %v4294 = vsub.f32 %v96, %v4290
  %v4295 = vsub.f32 %v97, %v4291
  %v4296 = vsub.f32 %v98, %v4292
  %4298 = vset.pattern.permute.xlu0 0
  %4299 = vperm.xlu0 %4298, %v4285
  %v4300 = vpop.permute.xlu0 %4299
  %4303 = vset.pattern.permute.xlu0 0
  %4304 = vperm.xlu0 %4303, %v4286
  %v4305 = vpop.permute.xlu0 %4304
  %4308 = vset.pattern.permute.xlu0 0
  %4309 = vperm.xlu0 %4308, %v4287
  %v4310 = vpop.permute.xlu0 %4309
  %4313 = vset.pattern.permute.xlu0 0
  %4314 = vperm.xlu0 %4313, %v4288
  %v4315 = vpop.permute.xlu0 %4314
  %v4317 = vmul.f32 %v4019, %v4300
  %v4318 = vmul.f32 %v4020, %v4300
  %v4319 = vmul.f32 %v4021, %v4300
  %v4320 = vmul.f32 %v4022, %v4300
  %v4321 = vmul.f32 %v4023, %v4305
  %v4322 = vmul.f32 %v4024, %v4305
  %v4323 = vmul.f32 %v4025, %v4305
  %v4324 = vmul.f32 %v4026, %v4305
  %v4325 = vmul.f32 %v4027, %v4310
  %v4326 = vmul.f32 %v4028, %v4310
  %v4327 = vmul.f32 %v4029, %v4310
  %v4328 = vmul.f32 %v4030, %v4310
  %v4329 = vmul.f32 %v4031, %v4315
  %v4330 = vmul.f32 %v4032, %v4315
  %v4331 = vmul.f32 %v4033, %v4315
  %v4332 = vmul.f32 %v4034, %v4315
  %4334 = vset.pattern.permute.xlu0 0
  %4335 = vperm.xlu0 %4334, %v4293
  %v4336 = vpop.permute.xlu0 %4335
  %4339 = vset.pattern.permute.xlu0 0
  %4340 = vperm.xlu0 %4339, %v4294
  %v4341 = vpop.permute.xlu0 %4340
  %4344 = vset.pattern.permute.xlu0 0
  %4345 = vperm.xlu0 %4344, %v4295
  %v4346 = vpop.permute.xlu0 %4345
  %4349 = vset.pattern.permute.xlu0 0
  %4350 = vperm.xlu0 %4349, %v4296
  %v4351 = vpop.permute.xlu0 %4350
  %v4353 = vadd.f32 %v4317, %v4336
  %v4354 = vadd.f32 %v4318, %v4336
  %v4355 = vadd.f32 %v4319, %v4336
  %v4356 = vadd.f32 %v4320, %v4336
  %v4357 = vadd.f32 %v4321, %v4341
  %v4358 = vadd.f32 %v4322, %v4341
  %v4359 = vadd.f32 %v4323, %v4341
  %v4360 = vadd.f32 %v4324, %v4341
  %v4361 = vadd.f32 %v4325, %v4346
  %v4362 = vadd.f32 %v4326, %v4346
  %v4363 = vadd.f32 %v4327, %v4346
  %v4364 = vadd.f32 %v4328, %v4346
  %v4365 = vadd.f32 %v4329, %v4351
  %v4366 = vadd.f32 %v4330, %v4351
  %v4367 = vadd.f32 %v4331, %v4351
  %v4368 = vadd.f32 %v4332, %v4351
  %v4369 = vxor.u32 %v4353, 2147483648
  %v4370 = vxor.u32 %v4354, 2147483648
  %v4371 = vxor.u32 %v4355, 2147483648
  %v4372 = vxor.u32 %v4356, 2147483648
  %v4373 = vmul.f32 %v4369, 1.442695
  %v4374 = vpow.pop %v4373
  %v4375 = vmul.f32 %v4370, 1.442695
  %v4376 = vpow.pop %v4375
  %v4377 = vmul.f32 %v4371, 1.442695
  %v4378 = vpow.pop %v4377
  %v4379 = vmul.f32 %v4372, 1.442695
  %v4380 = vpow.pop %v4379
  %v4381 = vadd.f32 %v4374, 1.0
  %v4382 = vadd.f32 %v4376, 1.0
  %v4383 = vadd.f32 %v4378, 1.0
  %v4384 = vadd.f32 %v4380, 1.0
  %v4385 = vrcp.pop %v4381
  %v4386 = vmul.f32 1.0, %v4385
  %v4387 = vrcp.pop %v4382
  %v4388 = vmul.f32 1.0, %v4387
  %v4389 = vrcp.pop %v4383
  %v4390 = vmul.f32 1.0, %v4389
  %v4391 = vrcp.pop %v4384
  %v4392 = vmul.f32 1.0, %v4391
  %v4393 = vxor.u32 %v4357, 2147483648
  %v4394 = vxor.u32 %v4358, 2147483648
  %v4395 = vxor.u32 %v4359, 2147483648
  %v4396 = vxor.u32 %v4360, 2147483648
  %v4397 = vmul.f32 %v4393, 1.442695
  %v4398 = vpow.pop %v4397
  %v4399 = vmul.f32 %v4394, 1.442695
  %v4400 = vpow.pop %v4399
  %v4401 = vmul.f32 %v4395, 1.442695
  %v4402 = vpow.pop %v4401
  %v4403 = vmul.f32 %v4396, 1.442695
  %v4404 = vpow.pop %v4403
  %v4405 = vadd.f32 %v4398, 1.0
  %v4406 = vadd.f32 %v4400, 1.0
  %v4407 = vadd.f32 %v4402, 1.0
  %v4408 = vadd.f32 %v4404, 1.0
  %v4409 = vrcp.pop %v4405
  %v4410 = vmul.f32 1.0, %v4409
  %v4411 = vrcp.pop %v4406
  %v4412 = vmul.f32 1.0, %v4411
  %v4413 = vrcp.pop %v4407
  %v4414 = vmul.f32 1.0, %v4413
  %v4415 = vrcp.pop %v4408
  %v4416 = vmul.f32 1.0, %v4415
  %v4417 = vxor.u32 %v4365, 2147483648
  %v4418 = vxor.u32 %v4366, 2147483648
  %v4419 = vxor.u32 %v4367, 2147483648
  %v4420 = vxor.u32 %v4368, 2147483648
  %v4421 = vmul.f32 %v4417, 1.442695
  %v4422 = vpow.pop %v4421
  %v4423 = vmul.f32 %v4418, 1.442695
  %v4424 = vpow.pop %v4423
  %v4425 = vmul.f32 %v4419, 1.442695
  %v4426 = vpow.pop %v4425
  %v4427 = vmul.f32 %v4420, 1.442695
  %v4428 = vpow.pop %v4427
  %v4429 = vadd.f32 %v4422, 1.0
  %v4430 = vadd.f32 %v4424, 1.0
  %v4431 = vadd.f32 %v4426, 1.0
  %v4432 = vadd.f32 %v4428, 1.0
  %v4433 = vrcp.pop %v4429
  %v4434 = vmul.f32 1.0, %v4433
  %v4435 = vrcp.pop %v4430
  %v4436 = vmul.f32 1.0, %v4435
  %v4437 = vrcp.pop %v4431
  %v4438 = vmul.f32 1.0, %v4437
  %v4439 = vrcp.pop %v4432
  %v4440 = vmul.f32 1.0, %v4439
  %v4441 = vmul.f32 %v4410, 0.0
  %v4442 = vmul.f32 %v4412, 0.0
  %v4443 = vmul.f32 %v4414, 0.0
  %v4444 = vmul.f32 %v4416, 0.0
  %v4445 = vmul.f32 %v4386, %v4361
  %v4446 = vmul.f32 %v4388, %v4362
  %v4447 = vmul.f32 %v4390, %v4363
  %v4448 = vmul.f32 %v4392, %v4364
  %v4449 = vadd.f32 %v4441, %v4445
  %v4450 = vadd.f32 %v4442, %v4446
  %v4451 = vadd.f32 %v4443, %v4447
  %v4452 = vadd.f32 %v4444, %v4448
  %v4453 = vtanh.pop %v4449
  %v4454 = vtanh.pop %v4450
  %v4455 = vtanh.pop %v4451
  %v4456 = vtanh.pop %v4452
  %v4457 = vmul.f32 %v4434, %v4453
  %v4458 = vmul.f32 %v4436, %v4454
  %v4459 = vmul.f32 %v4438, %v4455
  %v4460 = vmul.f32 %v4440, %v4456
  %4461 = vst [vmem:[%s6] sm:$0xff] %v4457
  %4462 = vst [vmem:[%s6 + $0x8] sm:$0xff] %v4458
  %4463 = vst [vmem:[%s6 + $0x10] sm:$0xff] %v4459
  %4464 = vst [vmem:[%s6 + $0x18] sm:$0xff] %v4460
  %4465 = vrot.lane.b32.xlu0 %v4457, 17
  %v4466 = vpop.permute.xlu0 %4465
  %4467 = vrot.lane.b32.xlu0 %v4458, 17
  %v4468 = vpop.permute.xlu0 %4467
  %4469 = vrot.lane.b32.xlu0 %v4459, 17
  %v4470 = vpop.permute.xlu0 %4469
  %4471 = vrot.lane.b32.xlu0 %v4460, 17
  %v4472 = vpop.permute.xlu0 %4471
  %v4473 = vsel %vm197, %v4470, %v4472
  %v4474 = vsel %vm197, %v4468, %v4470
  %v4475 = vsel %vm197, %v4466, %v4468
  %v4476 = vsel %vm197, %v4472, %v4466
  %v4477 = vmul.f32 %v4476, %v233
  %v4478 = vmul.f32 %v4475, %v237
  %v4479 = vmul.f32 %v4474, %v241
  %v4480 = vmul.f32 %v4473, %v245
  %4481 = vrot.lane.b32.xlu0 %v4457, 16
  %v4482 = vpop.permute.xlu0 %4481
  %4483 = vrot.lane.b32.xlu0 %v4458, 16
  %v4484 = vpop.permute.xlu0 %4483
  %4485 = vrot.lane.b32.xlu0 %v4459, 16
  %v4486 = vpop.permute.xlu0 %4485
  %4487 = vrot.lane.b32.xlu0 %v4460, 16
  %v4488 = vpop.permute.xlu0 %4487
  %v4489 = vsel %vm454, %v4486, %v4488
  %v4490 = vsel %vm454, %v4484, %v4486
  %v4491 = vsel %vm454, %v4482, %v4484
  %v4492 = vsel %vm454, %v4488, %v4482
  %v4493 = vmul.f32 %v4492, %v490
  %v4494 = vmul.f32 %v4491, %v494
  %v4495 = vmul.f32 %v4490, %v498
  %v4496 = vmul.f32 %v4489, %v502
  %4497 = vrot.lane.b32.xlu0 %v4457, 15
  %v4498 = vpop.permute.xlu0 %4497
  %4499 = vrot.lane.b32.xlu0 %v4458, 15
  %v4500 = vpop.permute.xlu0 %4499
  %4501 = vrot.lane.b32.xlu0 %v4459, 15
  %v4502 = vpop.permute.xlu0 %4501
  %4503 = vrot.lane.b32.xlu0 %v4460, 15
  %v4504 = vpop.permute.xlu0 %4503
  %v4505 = vsel %vm711, %v4502, %v4504
  %v4506 = vsel %vm711, %v4500, %v4502
  %v4507 = vsel %vm711, %v4498, %v4500
  %v4508 = vsel %vm711, %v4504, %v4498
  %v4509 = vmul.f32 %v4508, %v747
  %v4510 = vmul.f32 %v4507, %v751
  %v4511 = vmul.f32 %v4506, %v755
  %v4512 = vmul.f32 %v4505, %v759
  %4513 = vrot.lane.b32.xlu0 %v4457, 1
  %v4514 = vpop.permute.xlu0 %4513
  %4515 = vrot.lane.b32.xlu0 %v4458, 1
  %v4516 = vpop.permute.xlu0 %4515
  %4517 = vrot.lane.b32.xlu0 %v4459, 1
  %v4518 = vpop.permute.xlu0 %4517
  %4519 = vrot.lane.b32.xlu0 %v4460, 1
  %v4520 = vpop.permute.xlu0 %4519
  %v4521 = vsel %vm968, %v4518, %v4520
  %v4522 = vsel %vm968, %v4516, %v4518
  %v4523 = vsel %vm968, %v4514, %v4516
  %v4524 = vsel %vm968, %v4520, %v4514
  %v4525 = vmul.f32 %v4524, %v1004
  %v4526 = vmul.f32 %v4523, %v1008
  %v4527 = vmul.f32 %v4522, %v1012
  %v4528 = vmul.f32 %v4521, %v1016
  %4529 = vrot.lane.b32.xlu0 %v4457, 127
  %v4530 = vpop.permute.xlu0 %4529
  %4531 = vrot.lane.b32.xlu0 %v4458, 127
  %v4532 = vpop.permute.xlu0 %4531
  %4533 = vrot.lane.b32.xlu0 %v4459, 127
  %v4534 = vpop.permute.xlu0 %4533
  %4535 = vrot.lane.b32.xlu0 %v4460, 127
  %v4536 = vpop.permute.xlu0 %4535
  %v4537 = vsel %vm1225, %v4534, %v4536
  %v4538 = vsel %vm1225, %v4532, %v4534
  %v4539 = vsel %vm1225, %v4530, %v4532
  %v4540 = vsel %vm1225, %v4536, %v4530
  %v4541 = vmul.f32 %v4539, %v1261
  %v4542 = vmul.f32 %v4538, %v1265
  %v4543 = vmul.f32 %v4537, %v1269
  %v4544 = vmul.f32 %v4540, %v1273
  %4545 = vrot.lane.b32.xlu0 %v4457, 113
  %v4546 = vpop.permute.xlu0 %4545
  %4547 = vrot.lane.b32.xlu0 %v4458, 113
  %v4548 = vpop.permute.xlu0 %4547
  %4549 = vrot.lane.b32.xlu0 %v4459, 113
  %v4550 = vpop.permute.xlu0 %4549
  %4551 = vrot.lane.b32.xlu0 %v4460, 113
  %v4552 = vpop.permute.xlu0 %4551
  %v4553 = vsel %vm1482, %v4550, %v4552
  %v4554 = vsel %vm1482, %v4548, %v4550
  %v4555 = vsel %vm1482, %v4546, %v4548
  %v4556 = vsel %vm1482, %v4552, %v4546
  %v4557 = vmul.f32 %v4555, %v1518
  %v4558 = vmul.f32 %v4554, %v1522
  %v4559 = vmul.f32 %v4553, %v1526
  %v4560 = vmul.f32 %v4556, %v1530
  %4561 = vrot.lane.b32.xlu0 %v4457, 112
  %v4562 = vpop.permute.xlu0 %4561
  %4563 = vrot.lane.b32.xlu0 %v4458, 112
  %v4564 = vpop.permute.xlu0 %4563
  %4565 = vrot.lane.b32.xlu0 %v4459, 112
  %v4566 = vpop.permute.xlu0 %4565
  %4567 = vrot.lane.b32.xlu0 %v4460, 112
  %v4568 = vpop.permute.xlu0 %4567
  %v4569 = vsel %vm1739, %v4566, %v4568
  %v4570 = vsel %vm1739, %v4564, %v4566
  %v4571 = vsel %vm1739, %v4562, %v4564
  %v4572 = vsel %vm1739, %v4568, %v4562
  %v4573 = vmul.f32 %v4571, %v1775
  %v4574 = vmul.f32 %v4570, %v1779
  %v4575 = vmul.f32 %v4569, %v1783
  %v4576 = vmul.f32 %v4572, %v1787
  %4577 = vrot.lane.b32.xlu0 %v4457, 111
  %v4578 = vpop.permute.xlu0 %4577
  %4579 = vrot.lane.b32.xlu0 %v4458, 111
  %v4580 = vpop.permute.xlu0 %4579
  %4581 = vrot.lane.b32.xlu0 %v4459, 111
  %v4582 = vpop.permute.xlu0 %4581
  %4583 = vrot.lane.b32.xlu0 %v4460, 111
  %v4584 = vpop.permute.xlu0 %4583
  %v4585 = vsel %vm1996, %v4582, %v4584
  %v4586 = vsel %vm1996, %v4580, %v4582
  %v4587 = vsel %vm1996, %v4578, %v4580
  %v4588 = vsel %vm1996, %v4584, %v4578
  %v4589 = vmul.f32 %v4587, %v2032
  %v4590 = vmul.f32 %v4586, %v2036
  %v4591 = vmul.f32 %v4585, %v2040
  %v4592 = vmul.f32 %v4588, %v2044
  %v4593 = vld [vmem:[%s3646] sm:$0xff]
  %v4594 = vld [vmem:[%s3646 + $0x8] sm:$0xff]
  %v4595 = vld [vmem:[%s3646 + $0x10] sm:$0xff]
  %v4596 = vld [vmem:[%s3646 + $0x18] sm:$0xff]
  %v4597 = vld [vmem:[%s3646 + $0x20] sm:$0xff]
  %v4598 = vld [vmem:[%s3646 + $0x28] sm:$0xff]
  %v4599 = vld [vmem:[%s3646 + $0x30] sm:$0xff]
  %v4600 = vld [vmem:[%s3646 + $0x38] sm:$0xff]
  %v4601 = vld [vmem:[%s3646 + $0x40] sm:$0xff]
  %v4602 = vld [vmem:[%s3646 + $0x48] sm:$0xff]
  %v4603 = vld [vmem:[%s3646 + $0x50] sm:$0xff]
  %v4604 = vld [vmem:[%s3646 + $0x58] sm:$0xff]
  %v4605 = vld [vmem:[%s3646 + $0x60] sm:$0xff]
  %v4606 = vld [vmem:[%s3646 + $0x68] sm:$0xff]
  %v4607 = vld [vmem:[%s3646 + $0x70] sm:$0xff]
  %v4608 = vld [vmem:[%s3646 + $0x78] sm:$0xff]
  %4609 = vmatprep.subr.mxu0 0.0
  %4610 = vmatpush1.msra.mxu0 0.0
  %4611 = vmatprep.subr.mxu0 0.0
  %4612 = vmatpush1.msra.mxu0 0.0
  %4613 = vmatprep.subr.mxu0 0.0
  %4614 = vmatpush1.msra.mxu0 0.0
  %4615 = vmatprep.subr.mxu0 0.0
  %4616 = vmatpush1.msra.mxu0 0.0
  %4617 = vmatprep.subr.mxu0 0.0
  %4618 = vmatpush1.msra.mxu0 0.0
  %4619 = vmatprep.subr.mxu0 0.0
  %4620 = vmatpush1.msra.mxu0 0.0
  %4621 = vmatprep.subr.mxu0 0.0
  %4622 = vmatpush1.msra.mxu0 0.0
  %4623 = vmatprep.subr.mxu0 %v4590
  %4624 = vmatpush1.msra.mxu0 %v4589
  %4625 = vmatprep.subr.mxu0 %v4574
  %4626 = vmatpush1.msra.mxu0 %v4573
  %4627 = vmatprep.subr.mxu0 %v4558
  %4628 = vmatpush1.msra.mxu0 %v4557
  %4629 = vmatprep.subr.mxu0 %v4542
  %4630 = vmatpush1.msra.mxu0 %v4541
  %4631 = vmatprep.subr.mxu0 %v4458
  %4632 = vmatpush1.msra.mxu0 %v4457
  %4633 = vmatprep.subr.mxu0 %v4526
  %4634 = vmatpush1.msra.mxu0 %v4525
  %4635 = vmatprep.subr.mxu0 %v4510
  %4636 = vmatpush1.msra.mxu0 %v4509
  %4637 = vmatprep.subr.mxu0 %v4494
  %4638 = vmatpush1.msra.mxu0 %v4493
  %4639 = vmatprep.subr.mxu0 %v4478
  %4640 = vmatpush1.msra.mxu0 %v4477
  %4641 = vmatprep.subr.mxu0 0.0
  %4642 = vmatpush2.msra.mxu0 0.0
  %4643 = vmatprep.subr.mxu0 0.0
  %4644 = vmatpush2.msra.mxu0 0.0
  %4645 = vmatprep.subr.mxu0 0.0
  %4646 = vmatpush2.msra.mxu0 0.0
  %4647 = vmatprep.subr.mxu0 0.0
  %4648 = vmatpush2.msra.mxu0 0.0
  %4649 = vmatprep.subr.mxu0 0.0
  %4650 = vmatpush2.msra.mxu0 0.0
  %4651 = vmatprep.subr.mxu0 0.0
  %4652 = vmatpush2.msra.mxu0 0.0
  %4653 = vmatprep.subr.mxu0 0.0
  %4654 = vmatpush2.msra.mxu0 0.0
  %4655 = vmatprep.subr.mxu0 0.0
  %4656 = vmatpush2.msra.mxu0 0.0
  %4657 = vmatprep.subr.mxu0 0.0
  %4658 = vmatpush2.msra.mxu0 0.0
  %4659 = vmatprep.subr.mxu0 0.0
  %4660 = vmatpush2.msra.mxu0 0.0
  %4661 = vmatprep.subr.mxu0 0.0
  %4662 = vmatpush2.msra.mxu0 0.0
  %4663 = vmatprep.subr.mxu0 0.0
  %4664 = vmatpush2.msra.mxu0 0.0
  %4665 = vmatprep.subr.mxu0 0.0
  %4666 = vmatpush2.msra.mxu0 0.0
  %4667 = vmatprep.subr.mxu0 0.0
  %4668 = vmatpush2.msra.mxu0 0.0
  %4669 = vmatprep.subr.mxu0 0.0
  %4670 = vmatpush2.msra.mxu0 0.0
  %4671 = vmatprep.subr.mxu0 0.0
  %4672 = vmatpush2.msra.mxu0 0.0
  %4673 = vmatprep.mubr.f32.mxu0 0.0
  %4674 = vmatmul.mubr.f32.gmra.mxu0 %v3830
  %v4675 = vpop.f32.mrf.mxu0
  %v4676 = vadd.f32 0.0, %v4675
  %v4677 = vpop.f32.mrf.mxu0
  %v4678 = vadd.f32 0.0, %v4677
  %4679 = vmatprep.mubr.f32.mxu0 0.0
  %4680 = vmatmul.mubr.f32.gmra.mxu0 %v3833
  %v4681 = vpop.f32.mrf.mxu0
  %v4682 = vadd.f32 0.0, %v4681
  %v4683 = vpop.f32.mrf.mxu0
  %v4684 = vadd.f32 0.0, %v4683
  %4685 = vmatprep.mubr.f32.mxu0 0.0
  %4686 = vmatmul.mubr.f32.gmra.mxu0 %v3836
  %v4687 = vpop.f32.mrf.mxu0
  %v4688 = vadd.f32 0.0, %v4687
  %v4689 = vpop.f32.mrf.mxu0
  %v4690 = vadd.f32 0.0, %v4689
  %4691 = vmatprep.mubr.f32.mxu0 0.0
  %4692 = vmatmul.mubr.f32.gmra.mxu0 %v3839
  %v4693 = vpop.f32.mrf.mxu0
  %v4694 = vadd.f32 0.0, %v4693
  %v4695 = vpop.f32.mrf.mxu0
  %v4696 = vadd.f32 0.0, %v4695
  %4697 = vdwg.mxu0
  %4698 = vmatprep.subr.mxu0 0.0
  %4699 = vmatpush1.msra.mxu0 0.0
  %4700 = vmatprep.subr.mxu0 0.0
  %4701 = vmatpush1.msra.mxu0 0.0
  %4702 = vmatprep.subr.mxu0 0.0
  %4703 = vmatpush1.msra.mxu0 0.0
  %4704 = vmatprep.subr.mxu0 0.0
  %4705 = vmatpush1.msra.mxu0 0.0
  %4706 = vmatprep.subr.mxu0 0.0
  %4707 = vmatpush1.msra.mxu0 0.0
  %4708 = vmatprep.subr.mxu0 0.0
  %4709 = vmatpush1.msra.mxu0 0.0
  %4710 = vmatprep.subr.mxu0 0.0
  %4711 = vmatpush1.msra.mxu0 0.0
  %4712 = vmatprep.subr.mxu0 %v4592
  %4713 = vmatpush1.msra.mxu0 %v4591
  %4714 = vmatprep.subr.mxu0 %v4576
  %4715 = vmatpush1.msra.mxu0 %v4575
  %4716 = vmatprep.subr.mxu0 %v4560
  %4717 = vmatpush1.msra.mxu0 %v4559
  %4718 = vmatprep.subr.mxu0 %v4544
  %4719 = vmatpush1.msra.mxu0 %v4543
  %4720 = vmatprep.subr.mxu0 %v4460
  %4721 = vmatpush1.msra.mxu0 %v4459
  %4722 = vmatprep.subr.mxu0 %v4528
  %4723 = vmatpush1.msra.mxu0 %v4527
  %4724 = vmatprep.subr.mxu0 %v4512
  %4725 = vmatpush1.msra.mxu0 %v4511
  %4726 = vmatprep.subr.mxu0 %v4496
  %4727 = vmatpush1.msra.mxu0 %v4495
  %4728 = vmatprep.subr.mxu0 %v4480
  %4729 = vmatpush1.msra.mxu0 %v4479
  %4730 = vmatprep.subr.mxu0 0.0
  %4731 = vmatpush2.msra.mxu0 0.0
  %4732 = vmatprep.subr.mxu0 0.0
  %4733 = vmatpush2.msra.mxu0 0.0
  %4734 = vmatprep.subr.mxu0 0.0
  %4735 = vmatpush2.msra.mxu0 0.0
  %4736 = vmatprep.subr.mxu0 0.0
  %4737 = vmatpush2.msra.mxu0 0.0
  %4738 = vmatprep.subr.mxu0 0.0
  %4739 = vmatpush2.msra.mxu0 0.0
  %4740 = vmatprep.subr.mxu0 0.0
  %4741 = vmatpush2.msra.mxu0 0.0
  %4742 = vmatprep.subr.mxu0 0.0
  %4743 = vmatpush2.msra.mxu0 0.0
  %4744 = vmatprep.subr.mxu0 0.0
  %4745 = vmatpush2.msra.mxu0 0.0
  %4746 = vmatprep.subr.mxu0 0.0
  %4747 = vmatpush2.msra.mxu0 0.0
  %4748 = vmatprep.subr.mxu0 0.0
  %4749 = vmatpush2.msra.mxu0 0.0
  %4750 = vmatprep.subr.mxu0 0.0
  %4751 = vmatpush2.msra.mxu0 0.0
  %4752 = vmatprep.subr.mxu0 0.0
  %4753 = vmatpush2.msra.mxu0 0.0
  %4754 = vmatprep.subr.mxu0 0.0
  %4755 = vmatpush2.msra.mxu0 0.0
  %4756 = vmatprep.subr.mxu0 0.0
  %4757 = vmatpush2.msra.mxu0 0.0
  %4758 = vmatprep.subr.mxu0 0.0
  %4759 = vmatpush2.msra.mxu0 0.0
  %4760 = vmatprep.subr.mxu0 0.0
  %4761 = vmatpush2.msra.mxu0 0.0
  %4762 = vmatprep.mubr.f32.mxu0 0.0
  %4763 = vmatmul.mubr.f32.gmra.mxu0 %v3830
  %v4764 = vpop.f32.mrf.mxu0
  %v4765 = vadd.f32 0.0, %v4764
  %v4766 = vpop.f32.mrf.mxu0
  %v4767 = vadd.f32 0.0, %v4766
  %4768 = vmatprep.mubr.f32.mxu0 0.0
  %4769 = vmatmul.mubr.f32.gmra.mxu0 %v3833
  %v4770 = vpop.f32.mrf.mxu0
  %v4771 = vadd.f32 0.0, %v4770
  %v4772 = vpop.f32.mrf.mxu0
  %v4773 = vadd.f32 0.0, %v4772
  %4774 = vmatprep.mubr.f32.mxu0 0.0
  %4775 = vmatmul.mubr.f32.gmra.mxu0 %v3836
  %v4776 = vpop.f32.mrf.mxu0
  %v4777 = vadd.f32 0.0, %v4776
  %v4778 = vpop.f32.mrf.mxu0
  %v4779 = vadd.f32 0.0, %v4778
  %4780 = vmatprep.mubr.f32.mxu0 0.0
  %4781 = vmatmul.mubr.f32.gmra.mxu0 %v3839
  %v4782 = vpop.f32.mrf.mxu0
  %v4783 = vadd.f32 0.0, %v4782
  %v4784 = vpop.f32.mrf.mxu0
  %v4785 = vadd.f32 0.0, %v4784
  %4786 = vdwg.mxu0
  %v4787 = vadd.f32 %v4593, %v4676
  %v4788 = vadd.f32 %v4594, %v4678
  %v4789 = vadd.f32 %v4595, %v4765
  %v4790 = vadd.f32 %v4596, %v4767
  %v4791 = vadd.f32 %v4597, %v4682
  %v4792 = vadd.f32 %v4598, %v4684
  %v4793 = vadd.f32 %v4599, %v4771
  %v4794 = vadd.f32 %v4600, %v4773
  %v4795 = vadd.f32 %v4601, %v4688
  %v4796 = vadd.f32 %v4602, %v4690
  %v4797 = vadd.f32 %v4603, %v4777
  %v4798 = vadd.f32 %v4604, %v4779
  %v4799 = vadd.f32 %v4605, %v4694
  %v4800 = vadd.f32 %v4606, %v4696
  %v4801 = vadd.f32 %v4607, %v4783
  %v4802 = vadd.f32 %v4608, %v4785
  %v4803 = vmul.f32 %v4787, %v4787
  %v4804 = vmul.f32 %v4788, %v4788
  %v4805 = vmul.f32 %v4789, %v4789
  %v4806 = vmul.f32 %v4790, %v4790
  %v4807 = vmul.f32 %v4791, %v4791
  %v4808 = vmul.f32 %v4792, %v4792
  %v4809 = vmul.f32 %v4793, %v4793
  %v4810 = vmul.f32 %v4794, %v4794
  %v4811 = vmul.f32 %v4795, %v4795
  %v4812 = vmul.f32 %v4796, %v4796
  %v4813 = vmul.f32 %v4797, %v4797
  %v4814 = vmul.f32 %v4798, %v4798
  %v4815 = vmul.f32 %v4799, %v4799
  %v4816 = vmul.f32 %v4800, %v4800
  %v4817 = vmul.f32 %v4801, %v4801
  %v4818 = vmul.f32 %v4802, %v4802
  %4819 = vmatprep.subr.mxu0 0.0
  %4820 = vmatpush1.msra.mxu0 1.0
  %4821 = vmatprep.subr.mxu0 0.0
  %4822 = vmatpush1.msra.mxu0 1.0
  %4823 = vmatprep.subr.mxu0 0.0
  %4824 = vmatpush1.msra.mxu0 1.0
  %4825 = vmatprep.subr.mxu0 0.0
  %4826 = vmatpush1.msra.mxu0 1.0
  %4827 = vmatprep.subr.mxu0 0.0
  %4828 = vmatpush1.msra.mxu0 1.0
  %4829 = vmatprep.subr.mxu0 0.0
  %4830 = vmatpush1.msra.mxu0 1.0
  %4831 = vmatprep.subr.mxu0 0.0
  %4832 = vmatpush1.msra.mxu0 1.0
  %4833 = vmatprep.subr.mxu0 0.0
  %4834 = vmatpush1.msra.mxu0 1.0
  %4835 = vmatprep.subr.mxu0 0.0
  %4836 = vmatpush1.msra.mxu0 1.0
  %4837 = vmatprep.subr.mxu0 0.0
  %4838 = vmatpush1.msra.mxu0 1.0
  %4839 = vmatprep.subr.mxu0 0.0
  %4840 = vmatpush1.msra.mxu0 1.0
  %4841 = vmatprep.subr.mxu0 0.0
  %4842 = vmatpush1.msra.mxu0 1.0
  %4843 = vmatprep.subr.mxu0 0.0
  %4844 = vmatpush1.msra.mxu0 1.0
  %4845 = vmatprep.subr.mxu0 0.0
  %4846 = vmatpush1.msra.mxu0 1.0
  %4847 = vmatprep.subr.mxu0 0.0
  %4848 = vmatpush1.msra.mxu0 1.0
  %4849 = vmatprep.subr.mxu0 0.0
  %4850 = vmatpush1.msra.mxu0 1.0
  %4851 = vmatprep.subr.mxu0 0.0
  %4852 = vmatpush2.msra.mxu0 1.0
  %4853 = vmatprep.subr.mxu0 0.0
  %4854 = vmatpush2.msra.mxu0 1.0
  %4855 = vmatprep.subr.mxu0 0.0
  %4856 = vmatpush2.msra.mxu0 1.0
  %4857 = vmatprep.subr.mxu0 0.0
  %4858 = vmatpush2.msra.mxu0 1.0
  %4859 = vmatprep.subr.mxu0 0.0
  %4860 = vmatpush2.msra.mxu0 1.0
  %4861 = vmatprep.subr.mxu0 0.0
  %4862 = vmatpush2.msra.mxu0 1.0
  %4863 = vmatprep.subr.mxu0 0.0
  %4864 = vmatpush2.msra.mxu0 1.0
  %4865 = vmatprep.subr.mxu0 0.0
  %4866 = vmatpush2.msra.mxu0 1.0
  %4867 = vmatprep.subr.mxu0 0.0
  %4868 = vmatpush2.msra.mxu0 1.0
  %4869 = vmatprep.subr.mxu0 0.0
  %4870 = vmatpush2.msra.mxu0 1.0
  %4871 = vmatprep.subr.mxu0 0.0
  %4872 = vmatpush2.msra.mxu0 1.0
  %4873 = vmatprep.subr.mxu0 0.0
  %4874 = vmatpush2.msra.mxu0 1.0
  %4875 = vmatprep.subr.mxu0 0.0
  %4876 = vmatpush2.msra.mxu0 1.0
  %4877 = vmatprep.subr.mxu0 0.0
  %4878 = vmatpush2.msra.mxu0 1.0
  %4879 = vmatprep.subr.mxu0 0.0
  %4880 = vmatpush2.msra.mxu0 1.0
  %4881 = vmatprep.subr.mxu0 0.0
  %4882 = vmatpush2.msra.mxu0 1.0
  %4883 = vmatprep.mubr.f32.mxu0 %v4788
  %4884 = vmatmul.mubr.f32.gmra.mxu0 %v4787
  %v4885 = vpop.f32.mrf.mxu0
  %v4886 = vadd.f32 0.0, %v4885
  %v4887 = vpop.f32.mrf.mxu0
  %4888 = vmatprep.mubr.f32.mxu0 %v4792
  %4889 = vmatmul.mubr.f32.gmra.mxu0 %v4791
  %v4890 = vpop.f32.mrf.mxu0
  %v4891 = vadd.f32 0.0, %v4890
  %v4892 = vpop.f32.mrf.mxu0
  %4893 = vmatprep.mubr.f32.mxu0 %v4796
  %4894 = vmatmul.mubr.f32.gmra.mxu0 %v4795
  %v4895 = vpop.f32.mrf.mxu0
  %v4896 = vadd.f32 0.0, %v4895
  %v4897 = vpop.f32.mrf.mxu0
  %4898 = vmatprep.mubr.f32.mxu0 %v4800
  %4899 = vmatmul.mubr.f32.gmra.mxu0 %v4799
  %v4900 = vpop.f32.mrf.mxu0
  %v4901 = vadd.f32 0.0, %v4900
  %v4902 = vpop.f32.mrf.mxu0
  %4903 = vmatprep.mubr.f32.mxu0 %v4804
  %4904 = vmatmul.mubr.f32.gmra.mxu0 %v4803
  %v4905 = vpop.f32.mrf.mxu0
  %v4906 = vadd.f32 0.0, %v4905
  %v4907 = vpop.f32.mrf.mxu0
  %4908 = vmatprep.mubr.f32.mxu0 %v4808
  %4909 = vmatmul.mubr.f32.gmra.mxu0 %v4807
  %v4910 = vpop.f32.mrf.mxu0
  %v4911 = vadd.f32 0.0, %v4910
  %v4912 = vpop.f32.mrf.mxu0
  %4913 = vmatprep.mubr.f32.mxu0 %v4812
  %4914 = vmatmul.mubr.f32.gmra.mxu0 %v4811
  %v4915 = vpop.f32.mrf.mxu0
  %v4916 = vadd.f32 0.0, %v4915
  %v4917 = vpop.f32.mrf.mxu0
  %4918 = vmatprep.mubr.f32.mxu0 %v4816
  %4919 = vmatmul.mubr.f32.gmra.mxu0 %v4815
  %v4920 = vpop.f32.mrf.mxu0
  %v4921 = vadd.f32 0.0, %v4920
  %v4922 = vpop.f32.mrf.mxu0
  %4923 = vdwg.mxu0
  %4924 = vmatprep.subr.mxu0 0.0
  %4925 = vmatpush1.msra.mxu0 1.0
  %4926 = vmatprep.subr.mxu0 0.0
  %4927 = vmatpush1.msra.mxu0 1.0
  %4928 = vmatprep.subr.mxu0 0.0
  %4929 = vmatpush1.msra.mxu0 1.0
  %4930 = vmatprep.subr.mxu0 0.0
  %4931 = vmatpush1.msra.mxu0 1.0
  %4932 = vmatprep.subr.mxu0 0.0
  %4933 = vmatpush1.msra.mxu0 1.0
  %4934 = vmatprep.subr.mxu0 0.0
  %4935 = vmatpush1.msra.mxu0 1.0
  %4936 = vmatprep.subr.mxu0 0.0
  %4937 = vmatpush1.msra.mxu0 1.0
  %4938 = vmatprep.subr.mxu0 0.0
  %4939 = vmatpush1.msra.mxu0 1.0
  %4940 = vmatprep.subr.mxu0 0.0
  %4941 = vmatpush1.msra.mxu0 1.0
  %4942 = vmatprep.subr.mxu0 0.0
  %4943 = vmatpush1.msra.mxu0 1.0
  %4944 = vmatprep.subr.mxu0 0.0
  %4945 = vmatpush1.msra.mxu0 1.0
  %4946 = vmatprep.subr.mxu0 0.0
  %4947 = vmatpush1.msra.mxu0 1.0
  %4948 = vmatprep.subr.mxu0 0.0
  %4949 = vmatpush1.msra.mxu0 1.0
  %4950 = vmatprep.subr.mxu0 0.0
  %4951 = vmatpush1.msra.mxu0 1.0
  %4952 = vmatprep.subr.mxu0 0.0
  %4953 = vmatpush1.msra.mxu0 1.0
  %4954 = vmatprep.subr.mxu0 0.0
  %4955 = vmatpush1.msra.mxu0 1.0
  %4956 = vmatprep.subr.mxu0 0.0
  %4957 = vmatpush2.msra.mxu0 1.0
  %4958 = vmatprep.subr.mxu0 0.0
  %4959 = vmatpush2.msra.mxu0 1.0
  %4960 = vmatprep.subr.mxu0 0.0
  %4961 = vmatpush2.msra.mxu0 1.0
  %4962 = vmatprep.subr.mxu0 0.0
  %4963 = vmatpush2.msra.mxu0 1.0
  %4964 = vmatprep.subr.mxu0 0.0
  %4965 = vmatpush2.msra.mxu0 1.0
  %4966 = vmatprep.subr.mxu0 0.0
  %4967 = vmatpush2.msra.mxu0 1.0
  %4968 = vmatprep.subr.mxu0 0.0
  %4969 = vmatpush2.msra.mxu0 1.0
  %4970 = vmatprep.subr.mxu0 0.0
  %4971 = vmatpush2.msra.mxu0 1.0
  %4972 = vmatprep.subr.mxu0 0.0
  %4973 = vmatpush2.msra.mxu0 1.0
  %4974 = vmatprep.subr.mxu0 0.0
  %4975 = vmatpush2.msra.mxu0 1.0
  %4976 = vmatprep.subr.mxu0 0.0
  %4977 = vmatpush2.msra.mxu0 1.0
  %4978 = vmatprep.subr.mxu0 0.0
  %4979 = vmatpush2.msra.mxu0 1.0
  %4980 = vmatprep.subr.mxu0 0.0
  %4981 = vmatpush2.msra.mxu0 1.0
  %4982 = vmatprep.subr.mxu0 0.0
  %4983 = vmatpush2.msra.mxu0 1.0
  %4984 = vmatprep.subr.mxu0 0.0
  %4985 = vmatpush2.msra.mxu0 1.0
  %4986 = vmatprep.subr.mxu0 0.0
  %4987 = vmatpush2.msra.mxu0 1.0
  %4988 = vmatprep.mubr.f32.mxu0 %v4790
  %4989 = vmatmul.mubr.f32.gmra.mxu0 %v4789
  %v4990 = vpop.f32.mrf.mxu0
  %v4991 = vadd.f32 %v4886, %v4990
  %v4992 = vpop.f32.mrf.mxu0
  %4993 = vmatprep.mubr.f32.mxu0 %v4794
  %4994 = vmatmul.mubr.f32.gmra.mxu0 %v4793
  %v4995 = vpop.f32.mrf.mxu0
  %v4996 = vadd.f32 %v4891, %v4995
  %v4997 = vpop.f32.mrf.mxu0
  %4998 = vmatprep.mubr.f32.mxu0 %v4798
  %4999 = vmatmul.mubr.f32.gmra.mxu0 %v4797
  %v5000 = vpop.f32.mrf.mxu0
  %v5001 = vadd.f32 %v4896, %v5000
  %v5002 = vpop.f32.mrf.mxu0
  %5003 = vmatprep.mubr.f32.mxu0 %v4802
  %5004 = vmatmul.mubr.f32.gmra.mxu0 %v4801
  %v5005 = vpop.f32.mrf.mxu0
  %v5006 = vadd.f32 %v4901, %v5005
  %v5007 = vpop.f32.mrf.mxu0
  %5008 = vmatprep.mubr.f32.mxu0 %v4806
  %5009 = vmatmul.mubr.f32.gmra.mxu0 %v4805
  %v5010 = vpop.f32.mrf.mxu0
  %v5011 = vadd.f32 %v4906, %v5010
  %v5012 = vpop.f32.mrf.mxu0
  %5013 = vmatprep.mubr.f32.mxu0 %v4810
  %5014 = vmatmul.mubr.f32.gmra.mxu0 %v4809
  %v5015 = vpop.f32.mrf.mxu0
  %v5016 = vadd.f32 %v4911, %v5015
  %v5017 = vpop.f32.mrf.mxu0
  %5018 = vmatprep.mubr.f32.mxu0 %v4814
  %5019 = vmatmul.mubr.f32.gmra.mxu0 %v4813
  %v5020 = vpop.f32.mrf.mxu0
  %v5021 = vadd.f32 %v4916, %v5020
  %v5022 = vpop.f32.mrf.mxu0
  %5023 = vmatprep.mubr.f32.mxu0 %v4818
  %5024 = vmatmul.mubr.f32.gmra.mxu0 %v4817
  %v5025 = vpop.f32.mrf.mxu0
  %v5026 = vadd.f32 %v4921, %v5025
  %v5027 = vpop.f32.mrf.mxu0
  %5028 = vdwg.mxu0
  %v5029 = vmul.f32 %v4991, 0.001953125
  %v5030 = vmul.f32 %v4996, 0.001953125
  %v5031 = vmul.f32 %v5001, 0.001953125
  %v5032 = vmul.f32 %v5006, 0.001953125
  %v5033 = vmul.f32 %v5011, 0.001953125
  %v5034 = vmul.f32 %v5016, 0.001953125
  %v5035 = vmul.f32 %v5021, 0.001953125
  %v5036 = vmul.f32 %v5026, 0.001953125
  %v5037 = vmul.f32 %v5029, %v5029
  %v5038 = vmul.f32 %v5030, %v5030
  %v5039 = vmul.f32 %v5031, %v5031
  %v5040 = vmul.f32 %v5032, %v5032
  %v5041 = vsub.f32 %v5033, %v5037
  %v5042 = vsub.f32 %v5034, %v5038
  %v5043 = vsub.f32 %v5035, %v5039
  %v5044 = vsub.f32 %v5036, %v5040
  %v5045 = vadd.f32 %v5041, 1e-05
  %v5046 = vadd.f32 %v5042, 1e-05
  %v5047 = vadd.f32 %v5043, 1e-05
  %v5048 = vadd.f32 %v5044, 1e-05
  %v5049 = vrsqrt.pop %v5045
  %v5050 = vrsqrt.pop %v5046
  %v5051 = vrsqrt.pop %v5047
  %v5052 = vrsqrt.pop %v5048
  %v5053 = vmul.f32 %v91, %v5049
  %v5054 = vmul.f32 %v92, %v5050
  %v5055 = vmul.f32 %v93, %v5051
  %v5056 = vmul.f32 %v94, %v5052
  %v5057 = vmul.f32 %v5029, %v5053
  %v5058 = vmul.f32 %v5030, %v5054
  %v5059 = vmul.f32 %v5031, %v5055
  %v5060 = vmul.f32 %v5032, %v5056
  %v5061 = vsub.f32 %v95, %v5057
  %v5062 = vsub.f32 %v96, %v5058
  %v5063 = vsub.f32 %v97, %v5059
  %v5064 = vsub.f32 %v98, %v5060
  %5066 = vset.pattern.permute.xlu0 0
  %5067 = vperm.xlu0 %5066, %v5053
  %v5068 = vpop.permute.xlu0 %5067
  %5071 = vset.pattern.permute.xlu0 0
  %5072 = vperm.xlu0 %5071, %v5054
  %v5073 = vpop.permute.xlu0 %5072
  %5076 = vset.pattern.permute.xlu0 0
  %5077 = vperm.xlu0 %5076, %v5055
  %v5078 = vpop.permute.xlu0 %5077
  %5081 = vset.pattern.permute.xlu0 0
  %5082 = vperm.xlu0 %5081, %v5056
  %v5083 = vpop.permute.xlu0 %5082
  %v5085 = vmul.f32 %v4787, %v5068
  %v5086 = vmul.f32 %v4788, %v5068
  %v5087 = vmul.f32 %v4789, %v5068
  %v5088 = vmul.f32 %v4790, %v5068
  %v5089 = vmul.f32 %v4791, %v5073
  %v5090 = vmul.f32 %v4792, %v5073
  %v5091 = vmul.f32 %v4793, %v5073
  %v5092 = vmul.f32 %v4794, %v5073
  %v5093 = vmul.f32 %v4795, %v5078
  %v5094 = vmul.f32 %v4796, %v5078
  %v5095 = vmul.f32 %v4797, %v5078
  %v5096 = vmul.f32 %v4798, %v5078
  %v5097 = vmul.f32 %v4799, %v5083
  %v5098 = vmul.f32 %v4800, %v5083
  %v5099 = vmul.f32 %v4801, %v5083
  %v5100 = vmul.f32 %v4802, %v5083
  %5102 = vset.pattern.permute.xlu0 0
  %5103 = vperm.xlu0 %5102, %v5061
  %v5104 = vpop.permute.xlu0 %5103
  %5107 = vset.pattern.permute.xlu0 0
  %5108 = vperm.xlu0 %5107, %v5062
  %v5109 = vpop.permute.xlu0 %5108
  %5112 = vset.pattern.permute.xlu0 0
  %5113 = vperm.xlu0 %5112, %v5063
  %v5114 = vpop.permute.xlu0 %5113
  %5117 = vset.pattern.permute.xlu0 0
  %5118 = vperm.xlu0 %5117, %v5064
  %v5119 = vpop.permute.xlu0 %5118
  %v5121 = vadd.f32 %v5085, %v5104
  %v5122 = vadd.f32 %v5086, %v5104
  %v5123 = vadd.f32 %v5087, %v5104
  %v5124 = vadd.f32 %v5088, %v5104
  %v5125 = vadd.f32 %v5089, %v5109
  %v5126 = vadd.f32 %v5090, %v5109
  %v5127 = vadd.f32 %v5091, %v5109
  %v5128 = vadd.f32 %v5092, %v5109
  %v5129 = vadd.f32 %v5093, %v5114
  %v5130 = vadd.f32 %v5094, %v5114
  %v5131 = vadd.f32 %v5095, %v5114
  %v5132 = vadd.f32 %v5096, %v5114
  %v5133 = vadd.f32 %v5097, %v5119
  %v5134 = vadd.f32 %v5098, %v5119
  %v5135 = vadd.f32 %v5099, %v5119
  %v5136 = vadd.f32 %v5100, %v5119
  %v5137 = vxor.u32 %v5121, 2147483648
  %v5138 = vxor.u32 %v5122, 2147483648
  %v5139 = vxor.u32 %v5123, 2147483648
  %v5140 = vxor.u32 %v5124, 2147483648
  %v5141 = vmul.f32 %v5137, 1.442695
  %v5142 = vpow.pop %v5141
  %v5143 = vmul.f32 %v5138, 1.442695
  %v5144 = vpow.pop %v5143
  %v5145 = vmul.f32 %v5139, 1.442695
  %v5146 = vpow.pop %v5145
  %v5147 = vmul.f32 %v5140, 1.442695
  %v5148 = vpow.pop %v5147
  %v5149 = vadd.f32 %v5142, 1.0
  %v5150 = vadd.f32 %v5144, 1.0
  %v5151 = vadd.f32 %v5146, 1.0
  %v5152 = vadd.f32 %v5148, 1.0
  %v5153 = vrcp.pop %v5149
  %v5154 = vmul.f32 1.0, %v5153
  %v5155 = vrcp.pop %v5150
  %v5156 = vmul.f32 1.0, %v5155
  %v5157 = vrcp.pop %v5151
  %v5158 = vmul.f32 1.0, %v5157
  %v5159 = vrcp.pop %v5152
  %v5160 = vmul.f32 1.0, %v5159
  %v5161 = vxor.u32 %v5125, 2147483648
  %v5162 = vxor.u32 %v5126, 2147483648
  %v5163 = vxor.u32 %v5127, 2147483648
  %v5164 = vxor.u32 %v5128, 2147483648
  %v5165 = vmul.f32 %v5161, 1.442695
  %v5166 = vpow.pop %v5165
  %v5167 = vmul.f32 %v5162, 1.442695
  %v5168 = vpow.pop %v5167
  %v5169 = vmul.f32 %v5163, 1.442695
  %v5170 = vpow.pop %v5169
  %v5171 = vmul.f32 %v5164, 1.442695
  %v5172 = vpow.pop %v5171
  %v5173 = vadd.f32 %v5166, 1.0
  %v5174 = vadd.f32 %v5168, 1.0
  %v5175 = vadd.f32 %v5170, 1.0
  %v5176 = vadd.f32 %v5172, 1.0
  %v5177 = vrcp.pop %v5173
  %v5178 = vmul.f32 1.0, %v5177
  %v5179 = vrcp.pop %v5174
  %v5180 = vmul.f32 1.0, %v5179
  %v5181 = vrcp.pop %v5175
  %v5182 = vmul.f32 1.0, %v5181
  %v5183 = vrcp.pop %v5176
  %v5184 = vmul.f32 1.0, %v5183
  %v5185 = vxor.u32 %v5133, 2147483648
  %v5186 = vxor.u32 %v5134, 2147483648
  %v5187 = vxor.u32 %v5135, 2147483648
  %v5188 = vxor.u32 %v5136, 2147483648
  %v5189 = vmul.f32 %v5185, 1.442695
  %v5190 = vpow.pop %v5189
  %v5191 = vmul.f32 %v5186, 1.442695
  %v5192 = vpow.pop %v5191
  %v5193 = vmul.f32 %v5187, 1.442695
  %v5194 = vpow.pop %v5193
  %v5195 = vmul.f32 %v5188, 1.442695
  %v5196 = vpow.pop %v5195
  %v5197 = vadd.f32 %v5190, 1.0
  %v5198 = vadd.f32 %v5192, 1.0
  %v5199 = vadd.f32 %v5194, 1.0
  %v5200 = vadd.f32 %v5196, 1.0
  %v5201 = vrcp.pop %v5197
  %v5202 = vmul.f32 1.0, %v5201
  %v5203 = vrcp.pop %v5198
  %v5204 = vmul.f32 1.0, %v5203
  %v5205 = vrcp.pop %v5199
  %v5206 = vmul.f32 1.0, %v5205
  %v5207 = vrcp.pop %v5200
  %v5208 = vmul.f32 1.0, %v5207
  %v5209 = vmul.f32 %v5178, %v4449
  %v5210 = vmul.f32 %v5180, %v4450
  %v5211 = vmul.f32 %v5182, %v4451
  %v5212 = vmul.f32 %v5184, %v4452
  %v5213 = vmul.f32 %v5154, %v5129
  %v5214 = vmul.f32 %v5156, %v5130
  %v5215 = vmul.f32 %v5158, %v5131
  %v5216 = vmul.f32 %v5160, %v5132
  %v5217 = vadd.f32 %v5209, %v5213
  %v5218 = vadd.f32 %v5210, %v5214
  %v5219 = vadd.f32 %v5211, %v5215
  %v5220 = vadd.f32 %v5212, %v5216
  %v5221 = vtanh.pop %v5217
  %v5222 = vtanh.pop %v5218
  %v5223 = vtanh.pop %v5219
  %v5224 = vtanh.pop %v5220
  %v5225 = vmul.f32 %v5202, %v5221
  %v5226 = vmul.f32 %v5204, %v5222
  %v5227 = vmul.f32 %v5206, %v5223
  %v5228 = vmul.f32 %v5208, %v5224
  %s5229 = scalar_lea.vmem %s6, 32
  %5230 = vst [vmem:[%s5229] sm:$0xff] %v5225
  %5231 = vst [vmem:[%s5229 + $0x8] sm:$0xff] %v5226
  %5232 = vst [vmem:[%s5229 + $0x10] sm:$0xff] %v5227
  %5233 = vst [vmem:[%s5229 + $0x18] sm:$0xff] %v5228
  %5234 = vrot.lane.b32.xlu0 %v5225, 17
  %v5235 = vpop.permute.xlu0 %5234
  %5236 = vrot.lane.b32.xlu0 %v5226, 17
  %v5237 = vpop.permute.xlu0 %5236
  %5238 = vrot.lane.b32.xlu0 %v5227, 17
  %v5239 = vpop.permute.xlu0 %5238
  %5240 = vrot.lane.b32.xlu0 %v5228, 17
  %v5241 = vpop.permute.xlu0 %5240
  %v5242 = vsel %vm197, %v5239, %v5241
  %v5243 = vsel %vm197, %v5237, %v5239
  %v5244 = vsel %vm197, %v5235, %v5237
  %v5245 = vsel %vm197, %v5241, %v5235
  %v5246 = vmul.f32 %v5245, %v233
  %v5247 = vmul.f32 %v5244, %v237
  %v5248 = vmul.f32 %v5243, %v241
  %v5249 = vmul.f32 %v5242, %v245
  %5250 = vrot.lane.b32.xlu0 %v5225, 16
  %v5251 = vpop.permute.xlu0 %5250
  %5252 = vrot.lane.b32.xlu0 %v5226, 16
  %v5253 = vpop.permute.xlu0 %5252
  %5254 = vrot.lane.b32.xlu0 %v5227, 16
  %v5255 = vpop.permute.xlu0 %5254
  %5256 = vrot.lane.b32.xlu0 %v5228, 16
  %v5257 = vpop.permute.xlu0 %5256
  %v5258 = vsel %vm454, %v5255, %v5257
  %v5259 = vsel %vm454, %v5253, %v5255
  %v5260 = vsel %vm454, %v5251, %v5253
  %v5261 = vsel %vm454, %v5257, %v5251
  %v5262 = vmul.f32 %v5261, %v490
  %v5263 = vmul.f32 %v5260, %v494
  %v5264 = vmul.f32 %v5259, %v498
  %v5265 = vmul.f32 %v5258, %v502
  %5266 = vrot.lane.b32.xlu0 %v5225, 15
  %v5267 = vpop.permute.xlu0 %5266
  %5268 = vrot.lane.b32.xlu0 %v5226, 15
  %v5269 = vpop.permute.xlu0 %5268
  %5270 = vrot.lane.b32.xlu0 %v5227, 15
  %v5271 = vpop.permute.xlu0 %5270
  %5272 = vrot.lane.b32.xlu0 %v5228, 15
  %v5273 = vpop.permute.xlu0 %5272
  %v5274 = vsel %vm711, %v5271, %v5273
  %v5275 = vsel %vm711, %v5269, %v5271
  %v5276 = vsel %vm711, %v5267, %v5269
  %v5277 = vsel %vm711, %v5273, %v5267
  %v5278 = vmul.f32 %v5277, %v747
  %v5279 = vmul.f32 %v5276, %v751
  %v5280 = vmul.f32 %v5275, %v755
  %v5281 = vmul.f32 %v5274, %v759
  %5282 = vrot.lane.b32.xlu0 %v5225, 1
  %v5283 = vpop.permute.xlu0 %5282
  %5284 = vrot.lane.b32.xlu0 %v5226, 1
  %v5285 = vpop.permute.xlu0 %5284
  %5286 = vrot.lane.b32.xlu0 %v5227, 1
  %v5287 = vpop.permute.xlu0 %5286
  %5288 = vrot.lane.b32.xlu0 %v5228, 1
  %v5289 = vpop.permute.xlu0 %5288
  %v5290 = vsel %vm968, %v5287, %v5289
  %v5291 = vsel %vm968, %v5285, %v5287
  %v5292 = vsel %vm968, %v5283, %v5285
  %v5293 = vsel %vm968, %v5289, %v5283
  %v5294 = vmul.f32 %v5293, %v1004
  %v5295 = vmul.f32 %v5292, %v1008
  %v5296 = vmul.f32 %v5291, %v1012
  %v5297 = vmul.f32 %v5290, %v1016
  %5298 = vrot.lane.b32.xlu0 %v5225, 127
  %v5299 = vpop.permute.xlu0 %5298
  %5300 = vrot.lane.b32.xlu0 %v5226, 127
  %v5301 = vpop.permute.xlu0 %5300
  %5302 = vrot.lane.b32.xlu0 %v5227, 127
  %v5303 = vpop.permute.xlu0 %5302
  %5304 = vrot.lane.b32.xlu0 %v5228, 127
  %v5305 = vpop.permute.xlu0 %5304
  %v5306 = vsel %vm1225, %v5303, %v5305
  %v5307 = vsel %vm1225, %v5301, %v5303
  %v5308 = vsel %vm1225, %v5299, %v5301
  %v5309 = vsel %vm1225, %v5305, %v5299
  %v5310 = vmul.f32 %v5308, %v1261
  %v5311 = vmul.f32 %v5307, %v1265
  %v5312 = vmul.f32 %v5306, %v1269
  %v5313 = vmul.f32 %v5309, %v1273
  %5314 = vrot.lane.b32.xlu0 %v5225, 113
  %v5315 = vpop.permute.xlu0 %5314
  %5316 = vrot.lane.b32.xlu0 %v5226, 113
  %v5317 = vpop.permute.xlu0 %5316
  %5318 = vrot.lane.b32.xlu0 %v5227, 113
  %v5319 = vpop.permute.xlu0 %5318
  %5320 = vrot.lane.b32.xlu0 %v5228, 113
  %v5321 = vpop.permute.xlu0 %5320
  %v5322 = vsel %vm1482, %v5319, %v5321
  %v5323 = vsel %vm1482, %v5317, %v5319
  %v5324 = vsel %vm1482, %v5315, %v5317
  %v5325 = vsel %vm1482, %v5321, %v5315
  %v5326 = vmul.f32 %v5324, %v1518
  %v5327 = vmul.f32 %v5323, %v1522
  %v5328 = vmul.f32 %v5322, %v1526
  %v5329 = vmul.f32 %v5325, %v1530
  %5330 = vrot.lane.b32.xlu0 %v5225, 112
  %v5331 = vpop.permute.xlu0 %5330
  %5332 = vrot.lane.b32.xlu0 %v5226, 112
  %v5333 = vpop.permute.xlu0 %5332
  %5334 = vrot.lane.b32.xlu0 %v5227, 112
  %v5335 = vpop.permute.xlu0 %5334
  %5336 = vrot.lane.b32.xlu0 %v5228, 112
  %v5337 = vpop.permute.xlu0 %5336
  %v5338 = vsel %vm1739, %v5335, %v5337
  %v5339 = vsel %vm1739, %v5333, %v5335
  %v5340 = vsel %vm1739, %v5331, %v5333
  %v5341 = vsel %vm1739, %v5337, %v5331
  %v5342 = vmul.f32 %v5340, %v1775
  %v5343 = vmul.f32 %v5339, %v1779
  %v5344 = vmul.f32 %v5338, %v1783
  %v5345 = vmul.f32 %v5341, %v1787
  %5346 = vrot.lane.b32.xlu0 %v5225, 111
  %v5347 = vpop.permute.xlu0 %5346
  %5348 = vrot.lane.b32.xlu0 %v5226, 111
  %v5349 = vpop.permute.xlu0 %5348
  %5350 = vrot.lane.b32.xlu0 %v5227, 111
  %v5351 = vpop.permute.xlu0 %5350
  %5352 = vrot.lane.b32.xlu0 %v5228, 111
  %v5353 = vpop.permute.xlu0 %5352
  %v5354 = vsel %vm1996, %v5351, %v5353
  %v5355 = vsel %vm1996, %v5349, %v5351
  %v5356 = vsel %vm1996, %v5347, %v5349
  %v5357 = vsel %vm1996, %v5353, %v5347
  %v5358 = vmul.f32 %v5356, %v2032
  %v5359 = vmul.f32 %v5355, %v2036
  %v5360 = vmul.f32 %v5354, %v2040
  %v5361 = vmul.f32 %v5357, %v2044
  %v5362 = vld [vmem:[%s3663] sm:$0xff]
  %v5363 = vld [vmem:[%s3663 + $0x8] sm:$0xff]
  %v5364 = vld [vmem:[%s3663 + $0x10] sm:$0xff]
  %v5365 = vld [vmem:[%s3663 + $0x18] sm:$0xff]
  %v5366 = vld [vmem:[%s3663 + $0x20] sm:$0xff]
  %v5367 = vld [vmem:[%s3663 + $0x28] sm:$0xff]
  %v5368 = vld [vmem:[%s3663 + $0x30] sm:$0xff]
  %v5369 = vld [vmem:[%s3663 + $0x38] sm:$0xff]
  %v5370 = vld [vmem:[%s3663 + $0x40] sm:$0xff]
  %v5371 = vld [vmem:[%s3663 + $0x48] sm:$0xff]
  %v5372 = vld [vmem:[%s3663 + $0x50] sm:$0xff]
  %v5373 = vld [vmem:[%s3663 + $0x58] sm:$0xff]
  %v5374 = vld [vmem:[%s3663 + $0x60] sm:$0xff]
  %v5375 = vld [vmem:[%s3663 + $0x68] sm:$0xff]
  %v5376 = vld [vmem:[%s3663 + $0x70] sm:$0xff]
  %v5377 = vld [vmem:[%s3663 + $0x78] sm:$0xff]
  %5378 = vmatprep.subr.mxu0 0.0
  %5379 = vmatpush1.msra.mxu0 0.0
  %5380 = vmatprep.subr.mxu0 0.0
  %5381 = vmatpush1.msra.mxu0 0.0
  %5382 = vmatprep.subr.mxu0 0.0
  %5383 = vmatpush1.msra.mxu0 0.0
  %5384 = vmatprep.subr.mxu0 0.0
  %5385 = vmatpush1.msra.mxu0 0.0
  %5386 = vmatprep.subr.mxu0 0.0
  %5387 = vmatpush1.msra.mxu0 0.0
  %5388 = vmatprep.subr.mxu0 0.0
  %5389 = vmatpush1.msra.mxu0 0.0
  %5390 = vmatprep.subr.mxu0 0.0
  %5391 = vmatpush1.msra.mxu0 0.0
  %5392 = vmatprep.subr.mxu0 %v5359
  %5393 = vmatpush1.msra.mxu0 %v5358
  %5394 = vmatprep.subr.mxu0 %v5343
  %5395 = vmatpush1.msra.mxu0 %v5342
  %5396 = vmatprep.subr.mxu0 %v5327
  %5397 = vmatpush1.msra.mxu0 %v5326
  %5398 = vmatprep.subr.mxu0 %v5311
  %5399 = vmatpush1.msra.mxu0 %v5310
  %5400 = vmatprep.subr.mxu0 %v5226
  %5401 = vmatpush1.msra.mxu0 %v5225
  %5402 = vmatprep.subr.mxu0 %v5295
  %5403 = vmatpush1.msra.mxu0 %v5294
  %5404 = vmatprep.subr.mxu0 %v5279
  %5405 = vmatpush1.msra.mxu0 %v5278
  %5406 = vmatprep.subr.mxu0 %v5263
  %5407 = vmatpush1.msra.mxu0 %v5262
  %5408 = vmatprep.subr.mxu0 %v5247
  %5409 = vmatpush1.msra.mxu0 %v5246
  %5410 = vmatprep.subr.mxu0 0.0
  %5411 = vmatpush2.msra.mxu0 0.0
  %5412 = vmatprep.subr.mxu0 0.0
  %5413 = vmatpush2.msra.mxu0 0.0
  %5414 = vmatprep.subr.mxu0 0.0
  %5415 = vmatpush2.msra.mxu0 0.0
  %5416 = vmatprep.subr.mxu0 0.0
  %5417 = vmatpush2.msra.mxu0 0.0
  %5418 = vmatprep.subr.mxu0 0.0
  %5419 = vmatpush2.msra.mxu0 0.0
  %5420 = vmatprep.subr.mxu0 0.0
  %5421 = vmatpush2.msra.mxu0 0.0
  %5422 = vmatprep.subr.mxu0 0.0
  %5423 = vmatpush2.msra.mxu0 0.0
  %5424 = vmatprep.subr.mxu0 0.0
  %5425 = vmatpush2.msra.mxu0 0.0
  %5426 = vmatprep.subr.mxu0 0.0
  %5427 = vmatpush2.msra.mxu0 0.0
  %5428 = vmatprep.subr.mxu0 0.0
  %5429 = vmatpush2.msra.mxu0 0.0
  %5430 = vmatprep.subr.mxu0 0.0
  %5431 = vmatpush2.msra.mxu0 0.0
  %5432 = vmatprep.subr.mxu0 0.0
  %5433 = vmatpush2.msra.mxu0 0.0
  %5434 = vmatprep.subr.mxu0 0.0
  %5435 = vmatpush2.msra.mxu0 0.0
  %5436 = vmatprep.subr.mxu0 0.0
  %5437 = vmatpush2.msra.mxu0 0.0
  %5438 = vmatprep.subr.mxu0 0.0
  %5439 = vmatpush2.msra.mxu0 0.0
  %5440 = vmatprep.subr.mxu0 0.0
  %5441 = vmatpush2.msra.mxu0 0.0
  %5442 = vmatprep.mubr.f32.mxu0 0.0
  %5443 = vmatmul.mubr.f32.gmra.mxu0 %v3830
  %v5444 = vpop.f32.mrf.mxu0
  %v5445 = vadd.f32 0.0, %v5444
  %v5446 = vpop.f32.mrf.mxu0
  %v5447 = vadd.f32 0.0, %v5446
  %5448 = vmatprep.mubr.f32.mxu0 0.0
  %5449 = vmatmul.mubr.f32.gmra.mxu0 %v3833
  %v5450 = vpop.f32.mrf.mxu0
  %v5451 = vadd.f32 0.0, %v5450
  %v5452 = vpop.f32.mrf.mxu0
  %v5453 = vadd.f32 0.0, %v5452
  %5454 = vmatprep.mubr.f32.mxu0 0.0
  %5455 = vmatmul.mubr.f32.gmra.mxu0 %v3836
  %v5456 = vpop.f32.mrf.mxu0
  %v5457 = vadd.f32 0.0, %v5456
  %v5458 = vpop.f32.mrf.mxu0
  %v5459 = vadd.f32 0.0, %v5458
  %5460 = vmatprep.mubr.f32.mxu0 0.0
  %5461 = vmatmul.mubr.f32.gmra.mxu0 %v3839
  %v5462 = vpop.f32.mrf.mxu0
  %v5463 = vadd.f32 0.0, %v5462
  %v5464 = vpop.f32.mrf.mxu0
  %v5465 = vadd.f32 0.0, %v5464
  %5466 = vdwg.mxu0
  %5467 = vmatprep.subr.mxu0 0.0
  %5468 = vmatpush1.msra.mxu0 0.0
  %5469 = vmatprep.subr.mxu0 0.0
  %5470 = vmatpush1.msra.mxu0 0.0
  %5471 = vmatprep.subr.mxu0 0.0
  %5472 = vmatpush1.msra.mxu0 0.0
  %5473 = vmatprep.subr.mxu0 0.0
  %5474 = vmatpush1.msra.mxu0 0.0
  %5475 = vmatprep.subr.mxu0 0.0
  %5476 = vmatpush1.msra.mxu0 0.0
  %5477 = vmatprep.subr.mxu0 0.0
  %5478 = vmatpush1.msra.mxu0 0.0
  %5479 = vmatprep.subr.mxu0 0.0
  %5480 = vmatpush1.msra.mxu0 0.0
  %5481 = vmatprep.subr.mxu0 %v5361
  %5482 = vmatpush1.msra.mxu0 %v5360
  %5483 = vmatprep.subr.mxu0 %v5345
  %5484 = vmatpush1.msra.mxu0 %v5344
  %5485 = vmatprep.subr.mxu0 %v5329
  %5486 = vmatpush1.msra.mxu0 %v5328
  %5487 = vmatprep.subr.mxu0 %v5313
  %5488 = vmatpush1.msra.mxu0 %v5312
  %5489 = vmatprep.subr.mxu0 %v5228
  %5490 = vmatpush1.msra.mxu0 %v5227
  %5491 = vmatprep.subr.mxu0 %v5297
  %5492 = vmatpush1.msra.mxu0 %v5296
  %5493 = vmatprep.subr.mxu0 %v5281
  %5494 = vmatpush1.msra.mxu0 %v5280
  %5495 = vmatprep.subr.mxu0 %v5265
  %5496 = vmatpush1.msra.mxu0 %v5264
  %5497 = vmatprep.subr.mxu0 %v5249
  %5498 = vmatpush1.msra.mxu0 %v5248
  %5499 = vmatprep.subr.mxu0 0.0
  %5500 = vmatpush2.msra.mxu0 0.0
  %5501 = vmatprep.subr.mxu0 0.0
  %5502 = vmatpush2.msra.mxu0 0.0
  %5503 = vmatprep.subr.mxu0 0.0
  %5504 = vmatpush2.msra.mxu0 0.0
  %5505 = vmatprep.subr.mxu0 0.0
  %5506 = vmatpush2.msra.mxu0 0.0
  %5507 = vmatprep.subr.mxu0 0.0
  %5508 = vmatpush2.msra.mxu0 0.0
  %5509 = vmatprep.subr.mxu0 0.0
  %5510 = vmatpush2.msra.mxu0 0.0
  %5511 = vmatprep.subr.mxu0 0.0
  %5512 = vmatpush2.msra.mxu0 0.0
  %5513 = vmatprep.subr.mxu0 0.0
  %5514 = vmatpush2.msra.mxu0 0.0
  %5515 = vmatprep.subr.mxu0 0.0
  %5516 = vmatpush2.msra.mxu0 0.0
  %5517 = vmatprep.subr.mxu0 0.0
  %5518 = vmatpush2.msra.mxu0 0.0
  %5519 = vmatprep.subr.mxu0 0.0
  %5520 = vmatpush2.msra.mxu0 0.0
  %5521 = vmatprep.subr.mxu0 0.0
  %5522 = vmatpush2.msra.mxu0 0.0
  %5523 = vmatprep.subr.mxu0 0.0
  %5524 = vmatpush2.msra.mxu0 0.0
  %5525 = vmatprep.subr.mxu0 0.0
  %5526 = vmatpush2.msra.mxu0 0.0
  %5527 = vmatprep.subr.mxu0 0.0
  %5528 = vmatpush2.msra.mxu0 0.0
  %5529 = vmatprep.subr.mxu0 0.0
  %5530 = vmatpush2.msra.mxu0 0.0
  %5531 = vmatprep.mubr.f32.mxu0 0.0
  %5532 = vmatmul.mubr.f32.gmra.mxu0 %v3830
  %v5533 = vpop.f32.mrf.mxu0
  %v5534 = vadd.f32 0.0, %v5533
  %v5535 = vpop.f32.mrf.mxu0
  %v5536 = vadd.f32 0.0, %v5535
  %5537 = vmatprep.mubr.f32.mxu0 0.0
  %5538 = vmatmul.mubr.f32.gmra.mxu0 %v3833
  %v5539 = vpop.f32.mrf.mxu0
  %v5540 = vadd.f32 0.0, %v5539
  %v5541 = vpop.f32.mrf.mxu0
  %v5542 = vadd.f32 0.0, %v5541
  %5543 = vmatprep.mubr.f32.mxu0 0.0
  %5544 = vmatmul.mubr.f32.gmra.mxu0 %v3836
  %v5545 = vpop.f32.mrf.mxu0
  %v5546 = vadd.f32 0.0, %v5545
  %v5547 = vpop.f32.mrf.mxu0
  %v5548 = vadd.f32 0.0, %v5547
  %5549 = vmatprep.mubr.f32.mxu0 0.0
  %5550 = vmatmul.mubr.f32.gmra.mxu0 %v3839
  %v5551 = vpop.f32.mrf.mxu0
  %v5552 = vadd.f32 0.0, %v5551
  %v5553 = vpop.f32.mrf.mxu0
  %v5554 = vadd.f32 0.0, %v5553
  %5555 = vdwg.mxu0
  %v5556 = vadd.f32 %v5362, %v5445
  %v5557 = vadd.f32 %v5363, %v5447
  %v5558 = vadd.f32 %v5364, %v5534
  %v5559 = vadd.f32 %v5365, %v5536
  %v5560 = vadd.f32 %v5366, %v5451
  %v5561 = vadd.f32 %v5367, %v5453
  %v5562 = vadd.f32 %v5368, %v5540
  %v5563 = vadd.f32 %v5369, %v5542
  %v5564 = vadd.f32 %v5370, %v5457
  %v5565 = vadd.f32 %v5371, %v5459
  %v5566 = vadd.f32 %v5372, %v5546
  %v5567 = vadd.f32 %v5373, %v5548
  %v5568 = vadd.f32 %v5374, %v5463
  %v5569 = vadd.f32 %v5375, %v5465
  %v5570 = vadd.f32 %v5376, %v5552
  %v5571 = vadd.f32 %v5377, %v5554
  %v5572 = vmul.f32 %v5556, %v5556
  %v5573 = vmul.f32 %v5557, %v5557
  %v5574 = vmul.f32 %v5558, %v5558
  %v5575 = vmul.f32 %v5559, %v5559
  %v5576 = vmul.f32 %v5560, %v5560
  %v5577 = vmul.f32 %v5561, %v5561
  %v5578 = vmul.f32 %v5562, %v5562
  %v5579 = vmul.f32 %v5563, %v5563
  %v5580 = vmul.f32 %v5564, %v5564
  %v5581 = vmul.f32 %v5565, %v5565
  %v5582 = vmul.f32 %v5566, %v5566
  %v5583 = vmul.f32 %v5567, %v5567
  %v5584 = vmul.f32 %v5568, %v5568
  %v5585 = vmul.f32 %v5569, %v5569
  %v5586 = vmul.f32 %v5570, %v5570
  %v5587 = vmul.f32 %v5571, %v5571
  %5588 = vmatprep.subr.mxu0 0.0
  %5589 = vmatpush1.msra.mxu0 1.0
  %5590 = vmatprep.subr.mxu0 0.0
  %5591 = vmatpush1.msra.mxu0 1.0
  %5592 = vmatprep.subr.mxu0 0.0
  %5593 = vmatpush1.msra.mxu0 1.0
  %5594 = vmatprep.subr.mxu0 0.0
  %5595 = vmatpush1.msra.mxu0 1.0
  %5596 = vmatprep.subr.mxu0 0.0
  %5597 = vmatpush1.msra.mxu0 1.0
  %5598 = vmatprep.subr.mxu0 0.0
  %5599 = vmatpush1.msra.mxu0 1.0
  %5600 = vmatprep.subr.mxu0 0.0
  %5601 = vmatpush1.msra.mxu0 1.0
  %5602 = vmatprep.subr.mxu0 0.0
  %5603 = vmatpush1.msra.mxu0 1.0
  %5604 = vmatprep.subr.mxu0 0.0
  %5605 = vmatpush1.msra.mxu0 1.0
  %5606 = vmatprep.subr.mxu0 0.0
  %5607 = vmatpush1.msra.mxu0 1.0
  %5608 = vmatprep.subr.mxu0 0.0
  %5609 = vmatpush1.msra.mxu0 1.0
  %5610 = vmatprep.subr.mxu0 0.0
  %5611 = vmatpush1.msra.mxu0 1.0
  %5612 = vmatprep.subr.mxu0 0.0
  %5613 = vmatpush1.msra.mxu0 1.0
  %5614 = vmatprep.subr.mxu0 0.0
  %5615 = vmatpush1.msra.mxu0 1.0
  %5616 = vmatprep.subr.mxu0 0.0
  %5617 = vmatpush1.msra.mxu0 1.0
  %5618 = vmatprep.subr.mxu0 0.0
  %5619 = vmatpush1.msra.mxu0 1.0
  %5620 = vmatprep.subr.mxu0 0.0
  %5621 = vmatpush2.msra.mxu0 1.0
  %5622 = vmatprep.subr.mxu0 0.0
  %5623 = vmatpush2.msra.mxu0 1.0
  %5624 = vmatprep.subr.mxu0 0.0
  %5625 = vmatpush2.msra.mxu0 1.0
  %5626 = vmatprep.subr.mxu0 0.0
  %5627 = vmatpush2.msra.mxu0 1.0
  %5628 = vmatprep.subr.mxu0 0.0
  %5629 = vmatpush2.msra.mxu0 1.0
  %5630 = vmatprep.subr.mxu0 0.0
  %5631 = vmatpush2.msra.mxu0 1.0
  %5632 = vmatprep.subr.mxu0 0.0
  %5633 = vmatpush2.msra.mxu0 1.0
  %5634 = vmatprep.subr.mxu0 0.0
  %5635 = vmatpush2.msra.mxu0 1.0
  %5636 = vmatprep.subr.mxu0 0.0
  %5637 = vmatpush2.msra.mxu0 1.0
  %5638 = vmatprep.subr.mxu0 0.0
  %5639 = vmatpush2.msra.mxu0 1.0
  %5640 = vmatprep.subr.mxu0 0.0
  %5641 = vmatpush2.msra.mxu0 1.0
  %5642 = vmatprep.subr.mxu0 0.0
  %5643 = vmatpush2.msra.mxu0 1.0
  %5644 = vmatprep.subr.mxu0 0.0
  %5645 = vmatpush2.msra.mxu0 1.0
  %5646 = vmatprep.subr.mxu0 0.0
  %5647 = vmatpush2.msra.mxu0 1.0
  %5648 = vmatprep.subr.mxu0 0.0
  %5649 = vmatpush2.msra.mxu0 1.0
  %5650 = vmatprep.subr.mxu0 0.0
  %5651 = vmatpush2.msra.mxu0 1.0
  %5652 = vmatprep.mubr.f32.mxu0 %v5557
  %5653 = vmatmul.mubr.f32.gmra.mxu0 %v5556
  %v5654 = vpop.f32.mrf.mxu0
  %v5655 = vadd.f32 0.0, %v5654
  %v5656 = vpop.f32.mrf.mxu0
  %5657 = vmatprep.mubr.f32.mxu0 %v5561
  %5658 = vmatmul.mubr.f32.gmra.mxu0 %v5560
  %v5659 = vpop.f32.mrf.mxu0
  %v5660 = vadd.f32 0.0, %v5659
  %v5661 = vpop.f32.mrf.mxu0
  %5662 = vmatprep.mubr.f32.mxu0 %v5565
  %5663 = vmatmul.mubr.f32.gmra.mxu0 %v5564
  %v5664 = vpop.f32.mrf.mxu0
  %v5665 = vadd.f32 0.0, %v5664
  %v5666 = vpop.f32.mrf.mxu0
  %5667 = vmatprep.mubr.f32.mxu0 %v5569
  %5668 = vmatmul.mubr.f32.gmra.mxu0 %v5568
  %v5669 = vpop.f32.mrf.mxu0
  %v5670 = vadd.f32 0.0, %v5669
  %v5671 = vpop.f32.mrf.mxu0
  %5672 = vmatprep.mubr.f32.mxu0 %v5573
  %5673 = vmatmul.mubr.f32.gmra.mxu0 %v5572
  %v5674 = vpop.f32.mrf.mxu0
  %v5675 = vadd.f32 0.0, %v5674
  %v5676 = vpop.f32.mrf.mxu0
  %5677 = vmatprep.mubr.f32.mxu0 %v5577
  %5678 = vmatmul.mubr.f32.gmra.mxu0 %v5576
  %v5679 = vpop.f32.mrf.mxu0
  %v5680 = vadd.f32 0.0, %v5679
  %v5681 = vpop.f32.mrf.mxu0
  %5682 = vmatprep.mubr.f32.mxu0 %v5581
  %5683 = vmatmul.mubr.f32.gmra.mxu0 %v5580
  %v5684 = vpop.f32.mrf.mxu0
  %v5685 = vadd.f32 0.0, %v5684
  %v5686 = vpop.f32.mrf.mxu0
  %5687 = vmatprep.mubr.f32.mxu0 %v5585
  %5688 = vmatmul.mubr.f32.gmra.mxu0 %v5584
  %v5689 = vpop.f32.mrf.mxu0
  %v5690 = vadd.f32 0.0, %v5689
  %v5691 = vpop.f32.mrf.mxu0
  %5692 = vdwg.mxu0
  %5693 = vmatprep.subr.mxu0 0.0
  %5694 = vmatpush1.msra.mxu0 1.0
  %5695 = vmatprep.subr.mxu0 0.0
  %5696 = vmatpush1.msra.mxu0 1.0
  %5697 = vmatprep.subr.mxu0 0.0
  %5698 = vmatpush1.msra.mxu0 1.0
  %5699 = vmatprep.subr.mxu0 0.0
  %5700 = vmatpush1.msra.mxu0 1.0
  %5701 = vmatprep.subr.mxu0 0.0
  %5702 = vmatpush1.msra.mxu0 1.0
  %5703 = vmatprep.subr.mxu0 0.0
  %5704 = vmatpush1.msra.mxu0 1.0
  %5705 = vmatprep.subr.mxu0 0.0
  %5706 = vmatpush1.msra.mxu0 1.0
  %5707 = vmatprep.subr.mxu0 0.0
  %5708 = vmatpush1.msra.mxu0 1.0
  %5709 = vmatprep.subr.mxu0 0.0
  %5710 = vmatpush1.msra.mxu0 1.0
  %5711 = vmatprep.subr.mxu0 0.0
  %5712 = vmatpush1.msra.mxu0 1.0
  %5713 = vmatprep.subr.mxu0 0.0
  %5714 = vmatpush1.msra.mxu0 1.0
  %5715 = vmatprep.subr.mxu0 0.0
  %5716 = vmatpush1.msra.mxu0 1.0
  %5717 = vmatprep.subr.mxu0 0.0
  %5718 = vmatpush1.msra.mxu0 1.0
  %5719 = vmatprep.subr.mxu0 0.0
  %5720 = vmatpush1.msra.mxu0 1.0
  %5721 = vmatprep.subr.mxu0 0.0
  %5722 = vmatpush1.msra.mxu0 1.0
  %5723 = vmatprep.subr.mxu0 0.0
  %5724 = vmatpush1.msra.mxu0 1.0
  %5725 = vmatprep.subr.mxu0 0.0
  %5726 = vmatpush2.msra.mxu0 1.0
  %5727 = vmatprep.subr.mxu0 0.0
  %5728 = vmatpush2.msra.mxu0 1.0
  %5729 = vmatprep.subr.mxu0 0.0
  %5730 = vmatpush2.msra.mxu0 1.0
  %5731 = vmatprep.subr.mxu0 0.0
  %5732 = vmatpush2.msra.mxu0 1.0
  %5733 = vmatprep.subr.mxu0 0.0
  %5734 = vmatpush2.msra.mxu0 1.0
  %5735 = vmatprep.subr.mxu0 0.0
  %5736 = vmatpush2.msra.mxu0 1.0
  %5737 = vmatprep.subr.mxu0 0.0
  %5738 = vmatpush2.msra.mxu0 1.0
  %5739 = vmatprep.subr.mxu0 0.0
  %5740 = vmatpush2.msra.mxu0 1.0
  %5741 = vmatprep.subr.mxu0 0.0
  %5742 = vmatpush2.msra.mxu0 1.0
  %5743 = vmatprep.subr.mxu0 0.0
  %5744 = vmatpush2.msra.mxu0 1.0
  %5745 = vmatprep.subr.mxu0 0.0
  %5746 = vmatpush2.msra.mxu0 1.0
  %5747 = vmatprep.subr.mxu0 0.0
  %5748 = vmatpush2.msra.mxu0 1.0
  %5749 = vmatprep.subr.mxu0 0.0
  %5750 = vmatpush2.msra.mxu0 1.0
  %5751 = vmatprep.subr.mxu0 0.0
  %5752 = vmatpush2.msra.mxu0 1.0
  %5753 = vmatprep.subr.mxu0 0.0
  %5754 = vmatpush2.msra.mxu0 1.0
  %5755 = vmatprep.subr.mxu0 0.0
  %5756 = vmatpush2.msra.mxu0 1.0
  %5757 = vmatprep.mubr.f32.mxu0 %v5559
  %5758 = vmatmul.mubr.f32.gmra.mxu0 %v5558
  %v5759 = vpop.f32.mrf.mxu0
  %v5760 = vadd.f32 %v5655, %v5759
  %v5761 = vpop.f32.mrf.mxu0
  %5762 = vmatprep.mubr.f32.mxu0 %v5563
  %5763 = vmatmul.mubr.f32.gmra.mxu0 %v5562
  %v5764 = vpop.f32.mrf.mxu0
  %v5765 = vadd.f32 %v5660, %v5764
  %v5766 = vpop.f32.mrf.mxu0
  %5767 = vmatprep.mubr.f32.mxu0 %v5567
  %5768 = vmatmul.mubr.f32.gmra.mxu0 %v5566
  %v5769 = vpop.f32.mrf.mxu0
  %v5770 = vadd.f32 %v5665, %v5769
  %v5771 = vpop.f32.mrf.mxu0
  %5772 = vmatprep.mubr.f32.mxu0 %v5571
  %5773 = vmatmul.mubr.f32.gmra.mxu0 %v5570
  %v5774 = vpop.f32.mrf.mxu0
  %v5775 = vadd.f32 %v5670, %v5774
  %v5776 = vpop.f32.mrf.mxu0
  %5777 = vmatprep.mubr.f32.mxu0 %v5575
  %5778 = vmatmul.mubr.f32.gmra.mxu0 %v5574
  %v5779 = vpop.f32.mrf.mxu0
  %v5780 = vadd.f32 %v5675, %v5779
  %v5781 = vpop.f32.mrf.mxu0
  %5782 = vmatprep.mubr.f32.mxu0 %v5579
  %5783 = vmatmul.mubr.f32.gmra.mxu0 %v5578
  %v5784 = vpop.f32.mrf.mxu0
  %v5785 = vadd.f32 %v5680, %v5784
  %v5786 = vpop.f32.mrf.mxu0
  %5787 = vmatprep.mubr.f32.mxu0 %v5583
  %5788 = vmatmul.mubr.f32.gmra.mxu0 %v5582
  %v5789 = vpop.f32.mrf.mxu0
  %v5790 = vadd.f32 %v5685, %v5789
  %v5791 = vpop.f32.mrf.mxu0
  %5792 = vmatprep.mubr.f32.mxu0 %v5587
  %5793 = vmatmul.mubr.f32.gmra.mxu0 %v5586
  %v5794 = vpop.f32.mrf.mxu0
  %v5795 = vadd.f32 %v5690, %v5794
  %v5796 = vpop.f32.mrf.mxu0
  %5797 = vdwg.mxu0
  %v5798 = vmul.f32 %v5760, 0.001953125
  %v5799 = vmul.f32 %v5765, 0.001953125
  %v5800 = vmul.f32 %v5770, 0.001953125
  %v5801 = vmul.f32 %v5775, 0.001953125
  %v5802 = vmul.f32 %v5780, 0.001953125
  %v5803 = vmul.f32 %v5785, 0.001953125
  %v5804 = vmul.f32 %v5790, 0.001953125
  %v5805 = vmul.f32 %v5795, 0.001953125
  %v5806 = vmul.f32 %v5798, %v5798
  %v5807 = vmul.f32 %v5799, %v5799
  %v5808 = vmul.f32 %v5800, %v5800
  %v5809 = vmul.f32 %v5801, %v5801
  %v5810 = vsub.f32 %v5802, %v5806
  %v5811 = vsub.f32 %v5803, %v5807
  %v5812 = vsub.f32 %v5804, %v5808
  %v5813 = vsub.f32 %v5805, %v5809
  %v5814 = vadd.f32 %v5810, 1e-05
  %v5815 = vadd.f32 %v5811, 1e-05
  %v5816 = vadd.f32 %v5812, 1e-05
  %v5817 = vadd.f32 %v5813, 1e-05
  %v5818 = vrsqrt.pop %v5814
  %v5819 = vrsqrt.pop %v5815
  %v5820 = vrsqrt.pop %v5816
  %v5821 = vrsqrt.pop %v5817
  %v5822 = vmul.f32 %v91, %v5818
  %v5823 = vmul.f32 %v92, %v5819
  %v5824 = vmul.f32 %v93, %v5820
  %v5825 = vmul.f32 %v94, %v5821
  %v5826 = vmul.f32 %v5798, %v5822
  %v5827 = vmul.f32 %v5799, %v5823
  %v5828 = vmul.f32 %v5800, %v5824
  %v5829 = vmul.f32 %v5801, %v5825
  %v5830 = vsub.f32 %v95, %v5826
  %v5831 = vsub.f32 %v96, %v5827
  %v5832 = vsub.f32 %v97, %v5828
  %v5833 = vsub.f32 %v98, %v5829
  %5835 = vset.pattern.permute.xlu0 0
  %5836 = vperm.xlu0 %5835, %v5822
  %v5837 = vpop.permute.xlu0 %5836
  %5840 = vset.pattern.permute.xlu0 0
  %5841 = vperm.xlu0 %5840, %v5823
  %v5842 = vpop.permute.xlu0 %5841
  %5845 = vset.pattern.permute.xlu0 0
  %5846 = vperm.xlu0 %5845, %v5824
  %v5847 = vpop.permute.xlu0 %5846
  %5850 = vset.pattern.permute.xlu0 0
  %5851 = vperm.xlu0 %5850, %v5825
  %v5852 = vpop.permute.xlu0 %5851
  %v5854 = vmul.f32 %v5556, %v5837
  %v5855 = vmul.f32 %v5557, %v5837
  %v5856 = vmul.f32 %v5558, %v5837
  %v5857 = vmul.f32 %v5559, %v5837
  %v5858 = vmul.f32 %v5560, %v5842
  %v5859 = vmul.f32 %v5561, %v5842
  %v5860 = vmul.f32 %v5562, %v5842
  %v5861 = vmul.f32 %v5563, %v5842
  %v5862 = vmul.f32 %v5564, %v5847
  %v5863 = vmul.f32 %v5565, %v5847
  %v5864 = vmul.f32 %v5566, %v5847
  %v5865 = vmul.f32 %v5567, %v5847
  %v5866 = vmul.f32 %v5568, %v5852
  %v5867 = vmul.f32 %v5569, %v5852
  %v5868 = vmul.f32 %v5570, %v5852
  %v5869 = vmul.f32 %v5571, %v5852
  %5871 = vset.pattern.permute.xlu0 0
  %5872 = vperm.xlu0 %5871, %v5830
  %v5873 = vpop.permute.xlu0 %5872
  %5876 = vset.pattern.permute.xlu0 0
  %5877 = vperm.xlu0 %5876, %v5831
  %v5878 = vpop.permute.xlu0 %5877
  %5881 = vset.pattern.permute.xlu0 0
  %5882 = vperm.xlu0 %5881, %v5832
  %v5883 = vpop.permute.xlu0 %5882
  %5886 = vset.pattern.permute.xlu0 0
  %5887 = vperm.xlu0 %5886, %v5833
  %v5888 = vpop.permute.xlu0 %5887
  %v5890 = vadd.f32 %v5854, %v5873
  %v5891 = vadd.f32 %v5855, %v5873
  %v5892 = vadd.f32 %v5856, %v5873
  %v5893 = vadd.f32 %v5857, %v5873
  %v5894 = vadd.f32 %v5858, %v5878
  %v5895 = vadd.f32 %v5859, %v5878
  %v5896 = vadd.f32 %v5860, %v5878
  %v5897 = vadd.f32 %v5861, %v5878
  %v5898 = vadd.f32 %v5862, %v5883
  %v5899 = vadd.f32 %v5863, %v5883
  %v5900 = vadd.f32 %v5864, %v5883
  %v5901 = vadd.f32 %v5865, %v5883
  %v5902 = vadd.f32 %v5866, %v5888
  %v5903 = vadd.f32 %v5867, %v5888
  %v5904 = vadd.f32 %v5868, %v5888
  %v5905 = vadd.f32 %v5869, %v5888
  %v5906 = vxor.u32 %v5890, 2147483648
  %v5907 = vxor.u32 %v5891, 2147483648
  %v5908 = vxor.u32 %v5892, 2147483648
  %v5909 = vxor.u32 %v5893, 2147483648
  %v5910 = vmul.f32 %v5906, 1.442695
  %v5911 = vpow.pop %v5910
  %v5912 = vmul.f32 %v5907, 1.442695
  %v5913 = vpow.pop %v5912
  %v5914 = vmul.f32 %v5908, 1.442695
  %v5915 = vpow.pop %v5914
  %v5916 = vmul.f32 %v5909, 1.442695
  %v5917 = vpow.pop %v5916
  %v5918 = vadd.f32 %v5911, 1.0
  %v5919 = vadd.f32 %v5913, 1.0
  %v5920 = vadd.f32 %v5915, 1.0
  %v5921 = vadd.f32 %v5917, 1.0
  %v5922 = vrcp.pop %v5918
  %v5923 = vmul.f32 1.0, %v5922
  %v5924 = vrcp.pop %v5919
  %v5925 = vmul.f32 1.0, %v5924
  %v5926 = vrcp.pop %v5920
  %v5927 = vmul.f32 1.0, %v5926
  %v5928 = vrcp.pop %v5921
  %v5929 = vmul.f32 1.0, %v5928
  %v5930 = vxor.u32 %v5894, 2147483648
  %v5931 = vxor.u32 %v5895, 2147483648
  %v5932 = vxor.u32 %v5896, 2147483648
  %v5933 = vxor.u32 %v5897, 2147483648
  %v5934 = vmul.f32 %v5930, 1.442695
  %v5935 = vpow.pop %v5934
  %v5936 = vmul.f32 %v5931, 1.442695
  %v5937 = vpow.pop %v5936
  %v5938 = vmul.f32 %v5932, 1.442695
  %v5939 = vpow.pop %v5938
  %v5940 = vmul.f32 %v5933, 1.442695
  %v5941 = vpow.pop %v5940
  %v5942 = vadd.f32 %v5935, 1.0
  %v5943 = vadd.f32 %v5937, 1.0
  %v5944 = vadd.f32 %v5939, 1.0
  %v5945 = vadd.f32 %v5941, 1.0
  %v5946 = vrcp.pop %v5942
  %v5947 = vmul.f32 1.0, %v5946
  %v5948 = vrcp.pop %v5943
  %v5949 = vmul.f32 1.0, %v5948
  %v5950 = vrcp.pop %v5944
  %v5951 = vmul.f32 1.0, %v5950
  %v5952 = vrcp.pop %v5945
  %v5953 = vmul.f32 1.0, %v5952
  %v5954 = vxor.u32 %v5902, 2147483648
  %v5955 = vxor.u32 %v5903, 2147483648
  %v5956 = vxor.u32 %v5904, 2147483648
  %v5957 = vxor.u32 %v5905, 2147483648
  %v5958 = vmul.f32 %v5954, 1.442695
  %v5959 = vpow.pop %v5958
  %v5960 = vmul.f32 %v5955, 1.442695
  %v5961 = vpow.pop %v5960
  %v5962 = vmul.f32 %v5956, 1.442695
  %v5963 = vpow.pop %v5962
  %v5964 = vmul.f32 %v5957, 1.442695
  %v5965 = vpow.pop %v5964
  %v5966 = vadd.f32 %v5959, 1.0
  %v5967 = vadd.f32 %v5961, 1.0
  %v5968 = vadd.f32 %v5963, 1.0
  %v5969 = vadd.f32 %v5965, 1.0
  %v5970 = vrcp.pop %v5966
  %v5971 = vmul.f32 1.0, %v5970
  %v5972 = vrcp.pop %v5967
  %v5973 = vmul.f32 1.0, %v5972
  %v5974 = vrcp.pop %v5968
  %v5975 = vmul.f32 1.0, %v5974
  %v5976 = vrcp.pop %v5969
  %v5977 = vmul.f32 1.0, %v5976
  %v5978 = vmul.f32 %v5947, %v5217
  %v5979 = vmul.f32 %v5949, %v5218
  %v5980 = vmul.f32 %v5951, %v5219
  %v5981 = vmul.f32 %v5953, %v5220
  %v5982 = vmul.f32 %v5923, %v5898
  %v5983 = vmul.f32 %v5925, %v5899
  %v5984 = vmul.f32 %v5927, %v5900
  %v5985 = vmul.f32 %v5929, %v5901
  %v5986 = vadd.f32 %v5978, %v5982
  %v5987 = vadd.f32 %v5979, %v5983
  %v5988 = vadd.f32 %v5980, %v5984
  %v5989 = vadd.f32 %v5981, %v5985
  %v5990 = vtanh.pop %v5986
  %v5991 = vtanh.pop %v5987
  %v5992 = vtanh.pop %v5988
  %v5993 = vtanh.pop %v5989
  %v5994 = vmul.f32 %v5971, %v5990
  %v5995 = vmul.f32 %v5973, %v5991
  %v5996 = vmul.f32 %v5975, %v5992
  %v5997 = vmul.f32 %v5977, %v5993
  %s5998 = scalar_lea.vmem %s6, 64
  %5999 = vst [vmem:[%s5998] sm:$0xff] %v5994
  %6000 = vst [vmem:[%s5998 + $0x8] sm:$0xff] %v5995
  %6001 = vst [vmem:[%s5998 + $0x10] sm:$0xff] %v5996
  %6002 = vst [vmem:[%s5998 + $0x18] sm:$0xff] %v5997
  %6003 = vrot.lane.b32.xlu0 %v5994, 17
  %v6004 = vpop.permute.xlu0 %6003
  %6005 = vrot.lane.b32.xlu0 %v5995, 17
  %v6006 = vpop.permute.xlu0 %6005
  %6007 = vrot.lane.b32.xlu0 %v5996, 17
  %v6008 = vpop.permute.xlu0 %6007
  %6009 = vrot.lane.b32.xlu0 %v5997, 17
  %v6010 = vpop.permute.xlu0 %6009
  %v6011 = vsel %vm197, %v6008, %v6010
  %v6012 = vsel %vm197, %v6006, %v6008
  %v6013 = vsel %vm197, %v6004, %v6006
  %v6014 = vsel %vm197, %v6010, %v6004
  %v6015 = vmul.f32 %v6014, %v233
  %v6016 = vmul.f32 %v6013, %v237
  %v6017 = vmul.f32 %v6012, %v241
  %v6018 = vmul.f32 %v6011, %v245
  %6019 = vrot.lane.b32.xlu0 %v5994, 16
  %v6020 = vpop.permute.xlu0 %6019
  %6021 = vrot.lane.b32.xlu0 %v5995, 16
  %v6022 = vpop.permute.xlu0 %6021
  %6023 = vrot.lane.b32.xlu0 %v5996, 16
  %v6024 = vpop.permute.xlu0 %6023
  %6025 = vrot.lane.b32.xlu0 %v5997, 16
  %v6026 = vpop.permute.xlu0 %6025
  %v6027 = vsel %vm454, %v6024, %v6026
  %v6028 = vsel %vm454, %v6022, %v6024
  %v6029 = vsel %vm454, %v6020, %v6022
  %v6030 = vsel %vm454, %v6026, %v6020
  %v6031 = vmul.f32 %v6030, %v490
  %v6032 = vmul.f32 %v6029, %v494
  %v6033 = vmul.f32 %v6028, %v498
  %v6034 = vmul.f32 %v6027, %v502
  %6035 = vrot.lane.b32.xlu0 %v5994, 15
  %v6036 = vpop.permute.xlu0 %6035
  %6037 = vrot.lane.b32.xlu0 %v5995, 15
  %v6038 = vpop.permute.xlu0 %6037
  %6039 = vrot.lane.b32.xlu0 %v5996, 15
  %v6040 = vpop.permute.xlu0 %6039
  %6041 = vrot.lane.b32.xlu0 %v5997, 15
  %v6042 = vpop.permute.xlu0 %6041
  %v6043 = vsel %vm711, %v6040, %v6042
  %v6044 = vsel %vm711, %v6038, %v6040
  %v6045 = vsel %vm711, %v6036, %v6038
  %v6046 = vsel %vm711, %v6042, %v6036
  %v6047 = vmul.f32 %v6046, %v747
  %v6048 = vmul.f32 %v6045, %v751
  %v6049 = vmul.f32 %v6044, %v755
  %v6050 = vmul.f32 %v6043, %v759
  %6051 = vrot.lane.b32.xlu0 %v5994, 1
  %v6052 = vpop.permute.xlu0 %6051
  %6053 = vrot.lane.b32.xlu0 %v5995, 1
  %v6054 = vpop.permute.xlu0 %6053
  %6055 = vrot.lane.b32.xlu0 %v5996, 1
  %v6056 = vpop.permute.xlu0 %6055
  %6057 = vrot.lane.b32.xlu0 %v5997, 1
  %v6058 = vpop.permute.xlu0 %6057
  %v6059 = vsel %vm968, %v6056, %v6058
  %v6060 = vsel %vm968, %v6054, %v6056
  %v6061 = vsel %vm968, %v6052, %v6054
  %v6062 = vsel %vm968, %v6058, %v6052
  %v6063 = vmul.f32 %v6062, %v1004
  %v6064 = vmul.f32 %v6061, %v1008
  %v6065 = vmul.f32 %v6060, %v1012
  %v6066 = vmul.f32 %v6059, %v1016
  %6067 = vrot.lane.b32.xlu0 %v5994, 127
  %v6068 = vpop.permute.xlu0 %6067
  %6069 = vrot.lane.b32.xlu0 %v5995, 127
  %v6070 = vpop.permute.xlu0 %6069
  %6071 = vrot.lane.b32.xlu0 %v5996, 127
  %v6072 = vpop.permute.xlu0 %6071
  %6073 = vrot.lane.b32.xlu0 %v5997, 127
  %v6074 = vpop.permute.xlu0 %6073
  %v6075 = vsel %vm1225, %v6072, %v6074
  %v6076 = vsel %vm1225, %v6070, %v6072
  %v6077 = vsel %vm1225, %v6068, %v6070
  %v6078 = vsel %vm1225, %v6074, %v6068
  %v6079 = vmul.f32 %v6077, %v1261
  %v6080 = vmul.f32 %v6076, %v1265
  %v6081 = vmul.f32 %v6075, %v1269
  %v6082 = vmul.f32 %v6078, %v1273
  %6083 = vrot.lane.b32.xlu0 %v5994, 113
  %v6084 = vpop.permute.xlu0 %6083
  %6085 = vrot.lane.b32.xlu0 %v5995, 113
  %v6086 = vpop.permute.xlu0 %6085
  %6087 = vrot.lane.b32.xlu0 %v5996, 113
  %v6088 = vpop.permute.xlu0 %6087
  %6089 = vrot.lane.b32.xlu0 %v5997, 113
  %v6090 = vpop.permute.xlu0 %6089
  %v6091 = vsel %vm1482, %v6088, %v6090
  %v6092 = vsel %vm1482, %v6086, %v6088
  %v6093 = vsel %vm1482, %v6084, %v6086
  %v6094 = vsel %vm1482, %v6090, %v6084
  %v6095 = vmul.f32 %v6093, %v1518
  %v6096 = vmul.f32 %v6092, %v1522
  %v6097 = vmul.f32 %v6091, %v1526
  %v6098 = vmul.f32 %v6094, %v1530
  %6099 = vrot.lane.b32.xlu0 %v5994, 112
  %v6100 = vpop.permute.xlu0 %6099
  %6101 = vrot.lane.b32.xlu0 %v5995, 112
  %v6102 = vpop.permute.xlu0 %6101
  %6103 = vrot.lane.b32.xlu0 %v5996, 112
  %v6104 = vpop.permute.xlu0 %6103
  %6105 = vrot.lane.b32.xlu0 %v5997, 112
  %v6106 = vpop.permute.xlu0 %6105
  %v6107 = vsel %vm1739, %v6104, %v6106
  %v6108 = vsel %vm1739, %v6102, %v6104
  %v6109 = vsel %vm1739, %v6100, %v6102
  %v6110 = vsel %vm1739, %v6106, %v6100
  %v6111 = vmul.f32 %v6109, %v1775
  %v6112 = vmul.f32 %v6108, %v1779
  %v6113 = vmul.f32 %v6107, %v1783
  %v6114 = vmul.f32 %v6110, %v1787
  %6115 = vrot.lane.b32.xlu0 %v5994, 111
  %v6116 = vpop.permute.xlu0 %6115
  %6117 = vrot.lane.b32.xlu0 %v5995, 111
  %v6118 = vpop.permute.xlu0 %6117
  %6119 = vrot.lane.b32.xlu0 %v5996, 111
  %v6120 = vpop.permute.xlu0 %6119
  %6121 = vrot.lane.b32.xlu0 %v5997, 111
  %v6122 = vpop.permute.xlu0 %6121
  %v6123 = vsel %vm1996, %v6120, %v6122
  %v6124 = vsel %vm1996, %v6118, %v6120
  %v6125 = vsel %vm1996, %v6116, %v6118
  %v6126 = vsel %vm1996, %v6122, %v6116
  %v6127 = vmul.f32 %v6125, %v2032
  %v6128 = vmul.f32 %v6124, %v2036
  %v6129 = vmul.f32 %v6123, %v2040
  %v6130 = vmul.f32 %v6126, %v2044
  %v6131 = vld [vmem:[%s3680] sm:$0xff]
  %v6132 = vld [vmem:[%s3680 + $0x8] sm:$0xff]
  %v6133 = vld [vmem:[%s3680 + $0x10] sm:$0xff]
  %v6134 = vld [vmem:[%s3680 + $0x18] sm:$0xff]
  %v6135 = vld [vmem:[%s3680 + $0x20] sm:$0xff]
  %v6136 = vld [vmem:[%s3680 + $0x28] sm:$0xff]
  %v6137 = vld [vmem:[%s3680 + $0x30] sm:$0xff]
  %v6138 = vld [vmem:[%s3680 + $0x38] sm:$0xff]
  %v6139 = vld [vmem:[%s3680 + $0x40] sm:$0xff]
  %v6140 = vld [vmem:[%s3680 + $0x48] sm:$0xff]
  %v6141 = vld [vmem:[%s3680 + $0x50] sm:$0xff]
  %v6142 = vld [vmem:[%s3680 + $0x58] sm:$0xff]
  %v6143 = vld [vmem:[%s3680 + $0x60] sm:$0xff]
  %v6144 = vld [vmem:[%s3680 + $0x68] sm:$0xff]
  %v6145 = vld [vmem:[%s3680 + $0x70] sm:$0xff]
  %v6146 = vld [vmem:[%s3680 + $0x78] sm:$0xff]
  %6147 = vmatprep.subr.mxu0 0.0
  %6148 = vmatpush1.msra.mxu0 0.0
  %6149 = vmatprep.subr.mxu0 0.0
  %6150 = vmatpush1.msra.mxu0 0.0
  %6151 = vmatprep.subr.mxu0 0.0
  %6152 = vmatpush1.msra.mxu0 0.0
  %6153 = vmatprep.subr.mxu0 0.0
  %6154 = vmatpush1.msra.mxu0 0.0
  %6155 = vmatprep.subr.mxu0 0.0
  %6156 = vmatpush1.msra.mxu0 0.0
  %6157 = vmatprep.subr.mxu0 0.0
  %6158 = vmatpush1.msra.mxu0 0.0
  %6159 = vmatprep.subr.mxu0 0.0
  %6160 = vmatpush1.msra.mxu0 0.0
  %6161 = vmatprep.subr.mxu0 %v6128
  %6162 = vmatpush1.msra.mxu0 %v6127
  %6163 = vmatprep.subr.mxu0 %v6112
  %6164 = vmatpush1.msra.mxu0 %v6111
  %6165 = vmatprep.subr.mxu0 %v6096
  %6166 = vmatpush1.msra.mxu0 %v6095
  %6167 = vmatprep.subr.mxu0 %v6080
  %6168 = vmatpush1.msra.mxu0 %v6079
  %6169 = vmatprep.subr.mxu0 %v5995
  %6170 = vmatpush1.msra.mxu0 %v5994
  %6171 = vmatprep.subr.mxu0 %v6064
  %6172 = vmatpush1.msra.mxu0 %v6063
  %6173 = vmatprep.subr.mxu0 %v6048
  %6174 = vmatpush1.msra.mxu0 %v6047
  %6175 = vmatprep.subr.mxu0 %v6032
  %6176 = vmatpush1.msra.mxu0 %v6031
  %6177 = vmatprep.subr.mxu0 %v6016
  %6178 = vmatpush1.msra.mxu0 %v6015
  %6179 = vmatprep.subr.mxu0 0.0
  %6180 = vmatpush2.msra.mxu0 0.0
  %6181 = vmatprep.subr.mxu0 0.0
  %6182 = vmatpush2.msra.mxu0 0.0
  %6183 = vmatprep.subr.mxu0 0.0
  %6184 = vmatpush2.msra.mxu0 0.0
  %6185 = vmatprep.subr.mxu0 0.0
  %6186 = vmatpush2.msra.mxu0 0.0
  %6187 = vmatprep.subr.mxu0 0.0
  %6188 = vmatpush2.msra.mxu0 0.0
  %6189 = vmatprep.subr.mxu0 0.0
  %6190 = vmatpush2.msra.mxu0 0.0
  %6191 = vmatprep.subr.mxu0 0.0
  %6192 = vmatpush2.msra.mxu0 0.0
  %6193 = vmatprep.subr.mxu0 0.0
  %6194 = vmatpush2.msra.mxu0 0.0
  %6195 = vmatprep.subr.mxu0 0.0
  %6196 = vmatpush2.msra.mxu0 0.0
  %6197 = vmatprep.subr.mxu0 0.0
  %6198 = vmatpush2.msra.mxu0 0.0
  %6199 = vmatprep.subr.mxu0 0.0
  %6200 = vmatpush2.msra.mxu0 0.0
  %6201 = vmatprep.subr.mxu0 0.0
  %6202 = vmatpush2.msra.mxu0 0.0
  %6203 = vmatprep.subr.mxu0 0.0
  %6204 = vmatpush2.msra.mxu0 0.0
  %6205 = vmatprep.subr.mxu0 0.0
  %6206 = vmatpush2.msra.mxu0 0.0
  %6207 = vmatprep.subr.mxu0 0.0
  %6208 = vmatpush2.msra.mxu0 0.0
  %6209 = vmatprep.subr.mxu0 0.0
  %6210 = vmatpush2.msra.mxu0 0.0
  %6211 = vmatprep.mubr.f32.mxu0 0.0
  %6212 = vmatmul.mubr.f32.gmra.mxu0 %v3830
  %v6213 = vpop.f32.mrf.mxu0
  %v6214 = vadd.f32 0.0, %v6213
  %v6215 = vpop.f32.mrf.mxu0
  %v6216 = vadd.f32 0.0, %v6215
  %6217 = vmatprep.mubr.f32.mxu0 0.0
  %6218 = vmatmul.mubr.f32.gmra.mxu0 %v3833
  %v6219 = vpop.f32.mrf.mxu0
  %v6220 = vadd.f32 0.0, %v6219
  %v6221 = vpop.f32.mrf.mxu0
  %v6222 = vadd.f32 0.0, %v6221
  %6223 = vmatprep.mubr.f32.mxu0 0.0
  %6224 = vmatmul.mubr.f32.gmra.mxu0 %v3836
  %v6225 = vpop.f32.mrf.mxu0
  %v6226 = vadd.f32 0.0, %v6225
  %v6227 = vpop.f32.mrf.mxu0
  %v6228 = vadd.f32 0.0, %v6227
  %6229 = vmatprep.mubr.f32.mxu0 0.0
  %6230 = vmatmul.mubr.f32.gmra.mxu0 %v3839
  %v6231 = vpop.f32.mrf.mxu0
  %v6232 = vadd.f32 0.0, %v6231
  %v6233 = vpop.f32.mrf.mxu0
  %v6234 = vadd.f32 0.0, %v6233
  %6235 = vdwg.mxu0
  %6236 = vmatprep.subr.mxu0 0.0
  %6237 = vmatpush1.msra.mxu0 0.0
  %6238 = vmatprep.subr.mxu0 0.0
  %6239 = vmatpush1.msra.mxu0 0.0
  %6240 = vmatprep.subr.mxu0 0.0
  %6241 = vmatpush1.msra.mxu0 0.0
  %6242 = vmatprep.subr.mxu0 0.0
  %6243 = vmatpush1.msra.mxu0 0.0
  %6244 = vmatprep.subr.mxu0 0.0
  %6245 = vmatpush1.msra.mxu0 0.0
  %6246 = vmatprep.subr.mxu0 0.0
  %6247 = vmatpush1.msra.mxu0 0.0
  %6248 = vmatprep.subr.mxu0 0.0
  %6249 = vmatpush1.msra.mxu0 0.0
  %6250 = vmatprep.subr.mxu0 %v6130
  %6251 = vmatpush1.msra.mxu0 %v6129
  %6252 = vmatprep.subr.mxu0 %v6114
  %6253 = vmatpush1.msra.mxu0 %v6113
  %6254 = vmatprep.subr.mxu0 %v6098
  %6255 = vmatpush1.msra.mxu0 %v6097
  %6256 = vmatprep.subr.mxu0 %v6082
  %6257 = vmatpush1.msra.mxu0 %v6081
  %6258 = vmatprep.subr.mxu0 %v5997
  %6259 = vmatpush1.msra.mxu0 %v5996
  %6260 = vmatprep.subr.mxu0 %v6066
  %6261 = vmatpush1.msra.mxu0 %v6065
  %6262 = vmatprep.subr.mxu0 %v6050
  %6263 = vmatpush1.msra.mxu0 %v6049
  %6264 = vmatprep.subr.mxu0 %v6034
  %6265 = vmatpush1.msra.mxu0 %v6033
  %6266 = vmatprep.subr.mxu0 %v6018
  %6267 = vmatpush1.msra.mxu0 %v6017
  %6268 = vmatprep.subr.mxu0 0.0
  %6269 = vmatpush2.msra.mxu0 0.0
  %6270 = vmatprep.subr.mxu0 0.0
  %6271 = vmatpush2.msra.mxu0 0.0
  %6272 = vmatprep.subr.mxu0 0.0
  %6273 = vmatpush2.msra.mxu0 0.0
  %6274 = vmatprep.subr.mxu0 0.0
  %6275 = vmatpush2.msra.mxu0 0.0
  %6276 = vmatprep.subr.mxu0 0.0
  %6277 = vmatpush2.msra.mxu0 0.0
  %6278 = vmatprep.subr.mxu0 0.0
  %6279 = vmatpush2.msra.mxu0 0.0
  %6280 = vmatprep.subr.mxu0 0.0
  %6281 = vmatpush2.msra.mxu0 0.0
  %6282 = vmatprep.subr.mxu0 0.0
  %6283 = vmatpush2.msra.mxu0 0.0
  %6284 = vmatprep.subr.mxu0 0.0
  %6285 = vmatpush2.msra.mxu0 0.0
  %6286 = vmatprep.subr.mxu0 0.0
  %6287 = vmatpush2.msra.mxu0 0.0
  %6288 = vmatprep.subr.mxu0 0.0
  %6289 = vmatpush2.msra.mxu0 0.0
  %6290 = vmatprep.subr.mxu0 0.0
  %6291 = vmatpush2.msra.mxu0 0.0
  %6292 = vmatprep.subr.mxu0 0.0
  %6293 = vmatpush2.msra.mxu0 0.0
  %6294 = vmatprep.subr.mxu0 0.0
  %6295 = vmatpush2.msra.mxu0 0.0
  %6296 = vmatprep.subr.mxu0 0.0
  %6297 = vmatpush2.msra.mxu0 0.0
  %6298 = vmatprep.subr.mxu0 0.0
  %6299 = vmatpush2.msra.mxu0 0.0
  %6300 = vmatprep.mubr.f32.mxu0 0.0
  %6301 = vmatmul.mubr.f32.gmra.mxu0 %v3830
  %v6302 = vpop.f32.mrf.mxu0
  %v6303 = vadd.f32 0.0, %v6302
  %v6304 = vpop.f32.mrf.mxu0
  %v6305 = vadd.f32 0.0, %v6304
  %6306 = vmatprep.mubr.f32.mxu0 0.0
  %6307 = vmatmul.mubr.f32.gmra.mxu0 %v3833
  %v6308 = vpop.f32.mrf.mxu0
  %v6309 = vadd.f32 0.0, %v6308
  %v6310 = vpop.f32.mrf.mxu0
  %v6311 = vadd.f32 0.0, %v6310
  %6312 = vmatprep.mubr.f32.mxu0 0.0
  %6313 = vmatmul.mubr.f32.gmra.mxu0 %v3836
  %v6314 = vpop.f32.mrf.mxu0
  %v6315 = vadd.f32 0.0, %v6314
  %v6316 = vpop.f32.mrf.mxu0
  %v6317 = vadd.f32 0.0, %v6316
  %6318 = vmatprep.mubr.f32.mxu0 0.0
  %6319 = vmatmul.mubr.f32.gmra.mxu0 %v3839
  %v6320 = vpop.f32.mrf.mxu0
  %v6321 = vadd.f32 0.0, %v6320
  %v6322 = vpop.f32.mrf.mxu0
  %v6323 = vadd.f32 0.0, %v6322
  %6324 = vdwg.mxu0
  %v6325 = vadd.f32 %v6131, %v6214
  %v6326 = vadd.f32 %v6132, %v6216
  %v6327 = vadd.f32 %v6133, %v6303
  %v6328 = vadd.f32 %v6134, %v6305
  %v6329 = vadd.f32 %v6135, %v6220
  %v6330 = vadd.f32 %v6136, %v6222
  %v6331 = vadd.f32 %v6137, %v6309
  %v6332 = vadd.f32 %v6138, %v6311
  %v6333 = vadd.f32 %v6139, %v6226
  %v6334 = vadd.f32 %v6140, %v6228
  %v6335 = vadd.f32 %v6141, %v6315
  %v6336 = vadd.f32 %v6142, %v6317
  %v6337 = vadd.f32 %v6143, %v6232
  %v6338 = vadd.f32 %v6144, %v6234
  %v6339 = vadd.f32 %v6145, %v6321
  %v6340 = vadd.f32 %v6146, %v6323
  %v6341 = vmul.f32 %v6325, %v6325
  %v6342 = vmul.f32 %v6326, %v6326
  %v6343 = vmul.f32 %v6327, %v6327
  %v6344 = vmul.f32 %v6328, %v6328
  %v6345 = vmul.f32 %v6329, %v6329
  %v6346 = vmul.f32 %v6330, %v6330
  %v6347 = vmul.f32 %v6331, %v6331
  %v6348 = vmul.f32 %v6332, %v6332
  %v6349 = vmul.f32 %v6333, %v6333
  %v6350 = vmul.f32 %v6334, %v6334
  %v6351 = vmul.f32 %v6335, %v6335
  %v6352 = vmul.f32 %v6336, %v6336
  %v6353 = vmul.f32 %v6337, %v6337
  %v6354 = vmul.f32 %v6338, %v6338
  %v6355 = vmul.f32 %v6339, %v6339
  %v6356 = vmul.f32 %v6340, %v6340
  %6357 = vmatprep.subr.mxu0 0.0
  %6358 = vmatpush1.msra.mxu0 1.0
  %6359 = vmatprep.subr.mxu0 0.0
  %6360 = vmatpush1.msra.mxu0 1.0
  %6361 = vmatprep.subr.mxu0 0.0
  %6362 = vmatpush1.msra.mxu0 1.0
  %6363 = vmatprep.subr.mxu0 0.0
  %6364 = vmatpush1.msra.mxu0 1.0
  %6365 = vmatprep.subr.mxu0 0.0
  %6366 = vmatpush1.msra.mxu0 1.0
  %6367 = vmatprep.subr.mxu0 0.0
  %6368 = vmatpush1.msra.mxu0 1.0
  %6369 = vmatprep.subr.mxu0 0.0
  %6370 = vmatpush1.msra.mxu0 1.0
  %6371 = vmatprep.subr.mxu0 0.0
  %6372 = vmatpush1.msra.mxu0 1.0
  %6373 = vmatprep.subr.mxu0 0.0
  %6374 = vmatpush1.msra.mxu0 1.0
  %6375 = vmatprep.subr.mxu0 0.0
  %6376 = vmatpush1.msra.mxu0 1.0
  %6377 = vmatprep.subr.mxu0 0.0
  %6378 = vmatpush1.msra.mxu0 1.0
  %6379 = vmatprep.subr.mxu0 0.0
  %6380 = vmatpush1.msra.mxu0 1.0
  %6381 = vmatprep.subr.mxu0 0.0
  %6382 = vmatpush1.msra.mxu0 1.0
  %6383 = vmatprep.subr.mxu0 0.0
  %6384 = vmatpush1.msra.mxu0 1.0
  %6385 = vmatprep.subr.mxu0 0.0
  %6386 = vmatpush1.msra.mxu0 1.0
  %6387 = vmatprep.subr.mxu0 0.0
  %6388 = vmatpush1.msra.mxu0 1.0
  %6389 = vmatprep.subr.mxu0 0.0
  %6390 = vmatpush2.msra.mxu0 1.0
  %6391 = vmatprep.subr.mxu0 0.0
  %6392 = vmatpush2.msra.mxu0 1.0
  %6393 = vmatprep.subr.mxu0 0.0
  %6394 = vmatpush2.msra.mxu0 1.0
  %6395 = vmatprep.subr.mxu0 0.0
  %6396 = vmatpush2.msra.mxu0 1.0
  %6397 = vmatprep.subr.mxu0 0.0
  %6398 = vmatpush2.msra.mxu0 1.0
  %6399 = vmatprep.subr.mxu0 0.0
  %6400 = vmatpush2.msra.mxu0 1.0
  %6401 = vmatprep.subr.mxu0 0.0
  %6402 = vmatpush2.msra.mxu0 1.0
  %6403 = vmatprep.subr.mxu0 0.0
  %6404 = vmatpush2.msra.mxu0 1.0
  %6405 = vmatprep.subr.mxu0 0.0
  %6406 = vmatpush2.msra.mxu0 1.0
  %6407 = vmatprep.subr.mxu0 0.0
  %6408 = vmatpush2.msra.mxu0 1.0
  %6409 = vmatprep.subr.mxu0 0.0
  %6410 = vmatpush2.msra.mxu0 1.0
  %6411 = vmatprep.subr.mxu0 0.0
  %6412 = vmatpush2.msra.mxu0 1.0
  %6413 = vmatprep.subr.mxu0 0.0
  %6414 = vmatpush2.msra.mxu0 1.0
  %6415 = vmatprep.subr.mxu0 0.0
  %6416 = vmatpush2.msra.mxu0 1.0
  %6417 = vmatprep.subr.mxu0 0.0
  %6418 = vmatpush2.msra.mxu0 1.0
  %6419 = vmatprep.subr.mxu0 0.0
  %6420 = vmatpush2.msra.mxu0 1.0
  %6421 = vmatprep.mubr.f32.mxu0 %v6326
  %6422 = vmatmul.mubr.f32.gmra.mxu0 %v6325
  %v6423 = vpop.f32.mrf.mxu0
  %v6424 = vadd.f32 0.0, %v6423
  %v6425 = vpop.f32.mrf.mxu0
  %6426 = vmatprep.mubr.f32.mxu0 %v6330
  %6427 = vmatmul.mubr.f32.gmra.mxu0 %v6329
  %v6428 = vpop.f32.mrf.mxu0
  %v6429 = vadd.f32 0.0, %v6428
  %v6430 = vpop.f32.mrf.mxu0
  %6431 = vmatprep.mubr.f32.mxu0 %v6334
  %6432 = vmatmul.mubr.f32.gmra.mxu0 %v6333
  %v6433 = vpop.f32.mrf.mxu0
  %v6434 = vadd.f32 0.0, %v6433
  %v6435 = vpop.f32.mrf.mxu0
  %6436 = vmatprep.mubr.f32.mxu0 %v6338
  %6437 = vmatmul.mubr.f32.gmra.mxu0 %v6337
  %v6438 = vpop.f32.mrf.mxu0
  %v6439 = vadd.f32 0.0, %v6438
  %v6440 = vpop.f32.mrf.mxu0
  %6441 = vmatprep.mubr.f32.mxu0 %v6342
  %6442 = vmatmul.mubr.f32.gmra.mxu0 %v6341
  %v6443 = vpop.f32.mrf.mxu0
  %v6444 = vadd.f32 0.0, %v6443
  %v6445 = vpop.f32.mrf.mxu0
  %6446 = vmatprep.mubr.f32.mxu0 %v6346
  %6447 = vmatmul.mubr.f32.gmra.mxu0 %v6345
  %v6448 = vpop.f32.mrf.mxu0
  %v6449 = vadd.f32 0.0, %v6448
  %v6450 = vpop.f32.mrf.mxu0
  %6451 = vmatprep.mubr.f32.mxu0 %v6350
  %6452 = vmatmul.mubr.f32.gmra.mxu0 %v6349
  %v6453 = vpop.f32.mrf.mxu0
  %v6454 = vadd.f32 0.0, %v6453
  %v6455 = vpop.f32.mrf.mxu0
  %6456 = vmatprep.mubr.f32.mxu0 %v6354
  %6457 = vmatmul.mubr.f32.gmra.mxu0 %v6353
  %v6458 = vpop.f32.mrf.mxu0
  %v6459 = vadd.f32 0.0, %v6458
  %v6460 = vpop.f32.mrf.mxu0
  %6461 = vdwg.mxu0
  %6462 = vmatprep.subr.mxu0 0.0
  %6463 = vmatpush1.msra.mxu0 1.0
  %6464 = vmatprep.subr.mxu0 0.0
  %6465 = vmatpush1.msra.mxu0 1.0
  %6466 = vmatprep.subr.mxu0 0.0
  %6467 = vmatpush1.msra.mxu0 1.0
  %6468 = vmatprep.subr.mxu0 0.0
  %6469 = vmatpush1.msra.mxu0 1.0
  %6470 = vmatprep.subr.mxu0 0.0
  %6471 = vmatpush1.msra.mxu0 1.0
  %6472 = vmatprep.subr.mxu0 0.0
  %6473 = vmatpush1.msra.mxu0 1.0
  %6474 = vmatprep.subr.mxu0 0.0
  %6475 = vmatpush1.msra.mxu0 1.0
  %6476 = vmatprep.subr.mxu0 0.0
  %6477 = vmatpush1.msra.mxu0 1.0
  %6478 = vmatprep.subr.mxu0 0.0
  %6479 = vmatpush1.msra.mxu0 1.0
  %6480 = vmatprep.subr.mxu0 0.0
  %6481 = vmatpush1.msra.mxu0 1.0
  %6482 = vmatprep.subr.mxu0 0.0
  %6483 = vmatpush1.msra.mxu0 1.0
  %6484 = vmatprep.subr.mxu0 0.0
  %6485 = vmatpush1.msra.mxu0 1.0
  %6486 = vmatprep.subr.mxu0 0.0
  %6487 = vmatpush1.msra.mxu0 1.0
  %6488 = vmatprep.subr.mxu0 0.0
  %6489 = vmatpush1.msra.mxu0 1.0
  %6490 = vmatprep.subr.mxu0 0.0
  %6491 = vmatpush1.msra.mxu0 1.0
  %6492 = vmatprep.subr.mxu0 0.0
  %6493 = vmatpush1.msra.mxu0 1.0
  %6494 = vmatprep.subr.mxu0 0.0
  %6495 = vmatpush2.msra.mxu0 1.0
  %6496 = vmatprep.subr.mxu0 0.0
  %6497 = vmatpush2.msra.mxu0 1.0
  %6498 = vmatprep.subr.mxu0 0.0
  %6499 = vmatpush2.msra.mxu0 1.0
  %6500 = vmatprep.subr.mxu0 0.0
  %6501 = vmatpush2.msra.mxu0 1.0
  %6502 = vmatprep.subr.mxu0 0.0
  %6503 = vmatpush2.msra.mxu0 1.0
  %6504 = vmatprep.subr.mxu0 0.0
  %6505 = vmatpush2.msra.mxu0 1.0
  %6506 = vmatprep.subr.mxu0 0.0
  %6507 = vmatpush2.msra.mxu0 1.0
  %6508 = vmatprep.subr.mxu0 0.0
  %6509 = vmatpush2.msra.mxu0 1.0
  %6510 = vmatprep.subr.mxu0 0.0
  %6511 = vmatpush2.msra.mxu0 1.0
  %6512 = vmatprep.subr.mxu0 0.0
  %6513 = vmatpush2.msra.mxu0 1.0
  %6514 = vmatprep.subr.mxu0 0.0
  %6515 = vmatpush2.msra.mxu0 1.0
  %6516 = vmatprep.subr.mxu0 0.0
  %6517 = vmatpush2.msra.mxu0 1.0
  %6518 = vmatprep.subr.mxu0 0.0
  %6519 = vmatpush2.msra.mxu0 1.0
  %6520 = vmatprep.subr.mxu0 0.0
  %6521 = vmatpush2.msra.mxu0 1.0
  %6522 = vmatprep.subr.mxu0 0.0
  %6523 = vmatpush2.msra.mxu0 1.0
  %6524 = vmatprep.subr.mxu0 0.0
  %6525 = vmatpush2.msra.mxu0 1.0
  %6526 = vmatprep.mubr.f32.mxu0 %v6328
  %6527 = vmatmul.mubr.f32.gmra.mxu0 %v6327
  %v6528 = vpop.f32.mrf.mxu0
  %v6529 = vadd.f32 %v6424, %v6528
  %v6530 = vpop.f32.mrf.mxu0
  %6531 = vmatprep.mubr.f32.mxu0 %v6332
  %6532 = vmatmul.mubr.f32.gmra.mxu0 %v6331
  %v6533 = vpop.f32.mrf.mxu0
  %v6534 = vadd.f32 %v6429, %v6533
  %v6535 = vpop.f32.mrf.mxu0
  %6536 = vmatprep.mubr.f32.mxu0 %v6336
  %6537 = vmatmul.mubr.f32.gmra.mxu0 %v6335
  %v6538 = vpop.f32.mrf.mxu0
  %v6539 = vadd.f32 %v6434, %v6538
  %v6540 = vpop.f32.mrf.mxu0
  %6541 = vmatprep.mubr.f32.mxu0 %v6340
  %6542 = vmatmul.mubr.f32.gmra.mxu0 %v6339
  %v6543 = vpop.f32.mrf.mxu0
  %v6544 = vadd.f32 %v6439, %v6543
  %v6545 = vpop.f32.mrf.mxu0
  %6546 = vmatprep.mubr.f32.mxu0 %v6344
  %6547 = vmatmul.mubr.f32.gmra.mxu0 %v6343
  %v6548 = vpop.f32.mrf.mxu0
  %v6549 = vadd.f32 %v6444, %v6548
  %v6550 = vpop.f32.mrf.mxu0
  %6551 = vmatprep.mubr.f32.mxu0 %v6348
  %6552 = vmatmul.mubr.f32.gmra.mxu0 %v6347
  %v6553 = vpop.f32.mrf.mxu0
  %v6554 = vadd.f32 %v6449, %v6553
  %v6555 = vpop.f32.mrf.mxu0
  %6556 = vmatprep.mubr.f32.mxu0 %v6352
  %6557 = vmatmul.mubr.f32.gmra.mxu0 %v6351
  %v6558 = vpop.f32.mrf.mxu0
  %v6559 = vadd.f32 %v6454, %v6558
  %v6560 = vpop.f32.mrf.mxu0
  %6561 = vmatprep.mubr.f32.mxu0 %v6356
  %6562 = vmatmul.mubr.f32.gmra.mxu0 %v6355
  %v6563 = vpop.f32.mrf.mxu0
  %v6564 = vadd.f32 %v6459, %v6563
  %v6565 = vpop.f32.mrf.mxu0
  %6566 = vdwg.mxu0
  %v6567 = vmul.f32 %v6529, 0.001953125
  %v6568 = vmul.f32 %v6534, 0.001953125
  %v6569 = vmul.f32 %v6539, 0.001953125
  %v6570 = vmul.f32 %v6544, 0.001953125
  %v6571 = vmul.f32 %v6549, 0.001953125
  %v6572 = vmul.f32 %v6554, 0.001953125
  %v6573 = vmul.f32 %v6559, 0.001953125
  %v6574 = vmul.f32 %v6564, 0.001953125
  %v6575 = vmul.f32 %v6567, %v6567
  %v6576 = vmul.f32 %v6568, %v6568
  %v6577 = vmul.f32 %v6569, %v6569
  %v6578 = vmul.f32 %v6570, %v6570
  %v6579 = vsub.f32 %v6571, %v6575
  %v6580 = vsub.f32 %v6572, %v6576
  %v6581 = vsub.f32 %v6573, %v6577
  %v6582 = vsub.f32 %v6574, %v6578
  %v6583 = vadd.f32 %v6579, 1e-05
  %v6584 = vadd.f32 %v6580, 1e-05
  %v6585 = vadd.f32 %v6581, 1e-05
  %v6586 = vadd.f32 %v6582, 1e-05
  %v6587 = vrsqrt.pop %v6583
  %v6588 = vrsqrt.pop %v6584
  %v6589 = vrsqrt.pop %v6585
  %v6590 = vrsqrt.pop %v6586
  %v6591 = vmul.f32 %v91, %v6587
  %v6592 = vmul.f32 %v92, %v6588
  %v6593 = vmul.f32 %v93, %v6589
  %v6594 = vmul.f32 %v94, %v6590
  %v6595 = vmul.f32 %v6567, %v6591
  %v6596 = vmul.f32 %v6568, %v6592
  %v6597 = vmul.f32 %v6569, %v6593
  %v6598 = vmul.f32 %v6570, %v6594
  %v6599 = vsub.f32 %v95, %v6595
  %v6600 = vsub.f32 %v96, %v6596
  %v6601 = vsub.f32 %v97, %v6597
  %v6602 = vsub.f32 %v98, %v6598
  %6604 = vset.pattern.permute.xlu0 0
  %6605 = vperm.xlu0 %6604, %v6591
  %v6606 = vpop.permute.xlu0 %6605
  %6609 = vset.pattern.permute.xlu0 0
  %6610 = vperm.xlu0 %6609, %v6592
  %v6611 = vpop.permute.xlu0 %6610
  %6614 = vset.pattern.permute.xlu0 0
  %6615 = vperm.xlu0 %6614, %v6593
  %v6616 = vpop.permute.xlu0 %6615
  %6619 = vset.pattern.permute.xlu0 0
  %6620 = vperm.xlu0 %6619, %v6594
  %v6621 = vpop.permute.xlu0 %6620
  %v6623 = vmul.f32 %v6325, %v6606
  %v6624 = vmul.f32 %v6326, %v6606
  %v6625 = vmul.f32 %v6327, %v6606
  %v6626 = vmul.f32 %v6328, %v6606
  %v6627 = vmul.f32 %v6329, %v6611
  %v6628 = vmul.f32 %v6330, %v6611
  %v6629 = vmul.f32 %v6331, %v6611
  %v6630 = vmul.f32 %v6332, %v6611
  %v6631 = vmul.f32 %v6333, %v6616
  %v6632 = vmul.f32 %v6334, %v6616
  %v6633 = vmul.f32 %v6335, %v6616
  %v6634 = vmul.f32 %v6336, %v6616
  %v6635 = vmul.f32 %v6337, %v6621
  %v6636 = vmul.f32 %v6338, %v6621
  %v6637 = vmul.f32 %v6339, %v6621
  %v6638 = vmul.f32 %v6340, %v6621
  %6640 = vset.pattern.permute.xlu0 0
  %6641 = vperm.xlu0 %6640, %v6599
  %v6642 = vpop.permute.xlu0 %6641
  %6645 = vset.pattern.permute.xlu0 0
  %6646 = vperm.xlu0 %6645, %v6600
  %v6647 = vpop.permute.xlu0 %6646
  %6650 = vset.pattern.permute.xlu0 0
  %6651 = vperm.xlu0 %6650, %v6601
  %v6652 = vpop.permute.xlu0 %6651
  %6655 = vset.pattern.permute.xlu0 0
  %6656 = vperm.xlu0 %6655, %v6602
  %v6657 = vpop.permute.xlu0 %6656
  %v6659 = vadd.f32 %v6623, %v6642
  %v6660 = vadd.f32 %v6624, %v6642
  %v6661 = vadd.f32 %v6625, %v6642
  %v6662 = vadd.f32 %v6626, %v6642
  %v6663 = vadd.f32 %v6627, %v6647
  %v6664 = vadd.f32 %v6628, %v6647
  %v6665 = vadd.f32 %v6629, %v6647
  %v6666 = vadd.f32 %v6630, %v6647
  %v6667 = vadd.f32 %v6631, %v6652
  %v6668 = vadd.f32 %v6632, %v6652
  %v6669 = vadd.f32 %v6633, %v6652
  %v6670 = vadd.f32 %v6634, %v6652
  %v6671 = vadd.f32 %v6635, %v6657
  %v6672 = vadd.f32 %v6636, %v6657
  %v6673 = vadd.f32 %v6637, %v6657
  %v6674 = vadd.f32 %v6638, %v6657
  %v6675 = vxor.u32 %v6659, 2147483648
  %v6676 = vxor.u32 %v6660, 2147483648
  %v6677 = vxor.u32 %v6661, 2147483648
  %v6678 = vxor.u32 %v6662, 2147483648
  %v6679 = vmul.f32 %v6675, 1.442695
  %v6680 = vpow.pop %v6679
  %v6681 = vmul.f32 %v6676, 1.442695
  %v6682 = vpow.pop %v6681
  %v6683 = vmul.f32 %v6677, 1.442695
  %v6684 = vpow.pop %v6683
  %v6685 = vmul.f32 %v6678, 1.442695
  %v6686 = vpow.pop %v6685
  %v6687 = vadd.f32 %v6680, 1.0
  %v6688 = vadd.f32 %v6682, 1.0
  %v6689 = vadd.f32 %v6684, 1.0
  %v6690 = vadd.f32 %v6686, 1.0
  %v6691 = vrcp.pop %v6687
  %v6692 = vmul.f32 1.0, %v6691
  %v6693 = vrcp.pop %v6688
  %v6694 = vmul.f32 1.0, %v6693
  %v6695 = vrcp.pop %v6689
  %v6696 = vmul.f32 1.0, %v6695
  %v6697 = vrcp.pop %v6690
  %v6698 = vmul.f32 1.0, %v6697
  %v6699 = vxor.u32 %v6663, 2147483648
  %v6700 = vxor.u32 %v6664, 2147483648
  %v6701 = vxor.u32 %v6665, 2147483648
  %v6702 = vxor.u32 %v6666, 2147483648
  %v6703 = vmul.f32 %v6699, 1.442695
  %v6704 = vpow.pop %v6703
  %v6705 = vmul.f32 %v6700, 1.442695
  %v6706 = vpow.pop %v6705
  %v6707 = vmul.f32 %v6701, 1.442695
  %v6708 = vpow.pop %v6707
  %v6709 = vmul.f32 %v6702, 1.442695
  %v6710 = vpow.pop %v6709
  %v6711 = vadd.f32 %v6704, 1.0
  %v6712 = vadd.f32 %v6706, 1.0
  %v6713 = vadd.f32 %v6708, 1.0
  %v6714 = vadd.f32 %v6710, 1.0
  %v6715 = vrcp.pop %v6711
  %v6716 = vmul.f32 1.0, %v6715
  %v6717 = vrcp.pop %v6712
  %v6718 = vmul.f32 1.0, %v6717
  %v6719 = vrcp.pop %v6713
  %v6720 = vmul.f32 1.0, %v6719
  %v6721 = vrcp.pop %v6714
  %v6722 = vmul.f32 1.0, %v6721
  %v6723 = vxor.u32 %v6671, 2147483648
  %v6724 = vxor.u32 %v6672, 2147483648
  %v6725 = vxor.u32 %v6673, 2147483648
  %v6726 = vxor.u32 %v6674, 2147483648
  %v6727 = vmul.f32 %v6723, 1.442695
  %v6728 = vpow.pop %v6727
  %v6729 = vmul.f32 %v6724, 1.442695
  %v6730 = vpow.pop %v6729
  %v6731 = vmul.f32 %v6725, 1.442695
  %v6732 = vpow.pop %v6731
  %v6733 = vmul.f32 %v6726, 1.442695
  %v6734 = vpow.pop %v6733
  %v6735 = vadd.f32 %v6728, 1.0
  %v6736 = vadd.f32 %v6730, 1.0
  %v6737 = vadd.f32 %v6732, 1.0
  %v6738 = vadd.f32 %v6734, 1.0
  %v6739 = vrcp.pop %v6735
  %v6740 = vmul.f32 1.0, %v6739
  %v6741 = vrcp.pop %v6736
  %v6742 = vmul.f32 1.0, %v6741
  %v6743 = vrcp.pop %v6737
  %v6744 = vmul.f32 1.0, %v6743
  %v6745 = vrcp.pop %v6738
  %v6746 = vmul.f32 1.0, %v6745
  %v6747 = vmul.f32 %v6716, %v5986
  %v6748 = vmul.f32 %v6718, %v5987
  %v6749 = vmul.f32 %v6720, %v5988
  %v6750 = vmul.f32 %v6722, %v5989
  %v6751 = vmul.f32 %v6692, %v6667
  %v6752 = vmul.f32 %v6694, %v6668
  %v6753 = vmul.f32 %v6696, %v6669
  %v6754 = vmul.f32 %v6698, %v6670
  %v6755 = vadd.f32 %v6747, %v6751
  %v6756 = vadd.f32 %v6748, %v6752
  %v6757 = vadd.f32 %v6749, %v6753
  %v6758 = vadd.f32 %v6750, %v6754
  %v6759 = vtanh.pop %v6755
  %v6760 = vtanh.pop %v6756
  %v6761 = vtanh.pop %v6757
  %v6762 = vtanh.pop %v6758
  %v6763 = vmul.f32 %v6740, %v6759
  %v6764 = vmul.f32 %v6742, %v6760
  %v6765 = vmul.f32 %v6744, %v6761
  %v6766 = vmul.f32 %v6746, %v6762
  %s6767 = scalar_lea.vmem %s6, 96
  %6768 = vst [vmem:[%s6767] sm:$0xff] %v6763
  %6769 = vst [vmem:[%s6767 + $0x8] sm:$0xff] %v6764
  %6770 = vst [vmem:[%s6767 + $0x10] sm:$0xff] %v6765
  %6771 = vst [vmem:[%s6767 + $0x18] sm:$0xff] %v6766
  %6772 = vrot.lane.b32.xlu0 %v6763, 17
  %v6773 = vpop.permute.xlu0 %6772
  %6774 = vrot.lane.b32.xlu0 %v6764, 17
  %v6775 = vpop.permute.xlu0 %6774
  %6776 = vrot.lane.b32.xlu0 %v6765, 17
  %v6777 = vpop.permute.xlu0 %6776
  %6778 = vrot.lane.b32.xlu0 %v6766, 17
  %v6779 = vpop.permute.xlu0 %6778
  %v6780 = vsel %vm197, %v6777, %v6779
  %v6781 = vsel %vm197, %v6775, %v6777
  %v6782 = vsel %vm197, %v6773, %v6775
  %v6783 = vsel %vm197, %v6779, %v6773
  %v6784 = vmul.f32 %v6783, %v233
  %v6785 = vmul.f32 %v6782, %v237
  %v6786 = vmul.f32 %v6781, %v241
  %v6787 = vmul.f32 %v6780, %v245
  %6788 = vrot.lane.b32.xlu0 %v6763, 16
  %v6789 = vpop.permute.xlu0 %6788
  %6790 = vrot.lane.b32.xlu0 %v6764, 16
  %v6791 = vpop.permute.xlu0 %6790
  %6792 = vrot.lane.b32.xlu0 %v6765, 16
  %v6793 = vpop.permute.xlu0 %6792
  %6794 = vrot.lane.b32.xlu0 %v6766, 16
  %v6795 = vpop.permute.xlu0 %6794
  %v6796 = vsel %vm454, %v6793, %v6795
  %v6797 = vsel %vm454, %v6791, %v6793
  %v6798 = vsel %vm454, %v6789, %v6791
  %v6799 = vsel %vm454, %v6795, %v6789
  %v6800 = vmul.f32 %v6799, %v490
  %v6801 = vmul.f32 %v6798, %v494
  %v6802 = vmul.f32 %v6797, %v498
  %v6803 = vmul.f32 %v6796, %v502
  %6804 = vrot.lane.b32.xlu0 %v6763, 15
  %v6805 = vpop.permute.xlu0 %6804
  %6806 = vrot.lane.b32.xlu0 %v6764, 15
  %v6807 = vpop.permute.xlu0 %6806
  %6808 = vrot.lane.b32.xlu0 %v6765, 15
  %v6809 = vpop.permute.xlu0 %6808
  %6810 = vrot.lane.b32.xlu0 %v6766, 15
  %v6811 = vpop.permute.xlu0 %6810
  %v6812 = vsel %vm711, %v6809, %v6811
  %v6813 = vsel %vm711, %v6807, %v6809
  %v6814 = vsel %vm711, %v6805, %v6807
  %v6815 = vsel %vm711, %v6811, %v6805
  %v6816 = vmul.f32 %v6815, %v747
  %v6817 = vmul.f32 %v6814, %v751
  %v6818 = vmul.f32 %v6813, %v755
  %v6819 = vmul.f32 %v6812, %v759
  %6820 = vrot.lane.b32.xlu0 %v6763, 1
  %v6821 = vpop.permute.xlu0 %6820
  %6822 = vrot.lane.b32.xlu0 %v6764, 1
  %v6823 = vpop.permute.xlu0 %6822
  %6824 = vrot.lane.b32.xlu0 %v6765, 1
  %v6825 = vpop.permute.xlu0 %6824
  %6826 = vrot.lane.b32.xlu0 %v6766, 1
  %v6827 = vpop.permute.xlu0 %6826
  %v6828 = vsel %vm968, %v6825, %v6827
  %v6829 = vsel %vm968, %v6823, %v6825
  %v6830 = vsel %vm968, %v6821, %v6823
  %v6831 = vsel %vm968, %v6827, %v6821
  %v6832 = vmul.f32 %v6831, %v1004
  %v6833 = vmul.f32 %v6830, %v1008
  %v6834 = vmul.f32 %v6829, %v1012
  %v6835 = vmul.f32 %v6828, %v1016
  %6836 = vrot.lane.b32.xlu0 %v6763, 127
  %v6837 = vpop.permute.xlu0 %6836
  %6838 = vrot.lane.b32.xlu0 %v6764, 127
  %v6839 = vpop.permute.xlu0 %6838
  %6840 = vrot.lane.b32.xlu0 %v6765, 127
  %v6841 = vpop.permute.xlu0 %6840
  %6842 = vrot.lane.b32.xlu0 %v6766, 127
  %v6843 = vpop.permute.xlu0 %6842
  %v6844 = vsel %vm1225, %v6841, %v6843
  %v6845 = vsel %vm1225, %v6839, %v6841
  %v6846 = vsel %vm1225, %v6837, %v6839
  %v6847 = vsel %vm1225, %v6843, %v6837
  %v6848 = vmul.f32 %v6846, %v1261
  %v6849 = vmul.f32 %v6845, %v1265
  %v6850 = vmul.f32 %v6844, %v1269
  %v6851 = vmul.f32 %v6847, %v1273
  %6852 = vrot.lane.b32.xlu0 %v6763, 113
  %v6853 = vpop.permute.xlu0 %6852
  %6854 = vrot.lane.b32.xlu0 %v6764, 113
  %v6855 = vpop.permute.xlu0 %6854
  %6856 = vrot.lane.b32.xlu0 %v6765, 113
  %v6857 = vpop.permute.xlu0 %6856
  %6858 = vrot.lane.b32.xlu0 %v6766, 113
  %v6859 = vpop.permute.xlu0 %6858
  %v6860 = vsel %vm1482, %v6857, %v6859
  %v6861 = vsel %vm1482, %v6855, %v6857
  %v6862 = vsel %vm1482, %v6853, %v6855
  %v6863 = vsel %vm1482, %v6859, %v6853
  %v6864 = vmul.f32 %v6862, %v1518
  %v6865 = vmul.f32 %v6861, %v1522
  %v6866 = vmul.f32 %v6860, %v1526
  %v6867 = vmul.f32 %v6863, %v1530
  %6868 = vrot.lane.b32.xlu0 %v6763, 112
  %v6869 = vpop.permute.xlu0 %6868
  %6870 = vrot.lane.b32.xlu0 %v6764, 112
  %v6871 = vpop.permute.xlu0 %6870
  %6872 = vrot.lane.b32.xlu0 %v6765, 112
  %v6873 = vpop.permute.xlu0 %6872
  %6874 = vrot.lane.b32.xlu0 %v6766, 112
  %v6875 = vpop.permute.xlu0 %6874
  %v6876 = vsel %vm1739, %v6873, %v6875
  %v6877 = vsel %vm1739, %v6871, %v6873
  %v6878 = vsel %vm1739, %v6869, %v6871
  %v6879 = vsel %vm1739, %v6875, %v6869
  %v6880 = vmul.f32 %v6878, %v1775
  %v6881 = vmul.f32 %v6877, %v1779
  %v6882 = vmul.f32 %v6876, %v1783
  %v6883 = vmul.f32 %v6879, %v1787
  %6884 = vrot.lane.b32.xlu0 %v6763, 111
  %v6885 = vpop.permute.xlu0 %6884
  %6886 = vrot.lane.b32.xlu0 %v6764, 111
  %v6887 = vpop.permute.xlu0 %6886
  %6888 = vrot.lane.b32.xlu0 %v6765, 111
  %v6889 = vpop.permute.xlu0 %6888
  %6890 = vrot.lane.b32.xlu0 %v6766, 111
  %v6891 = vpop.permute.xlu0 %6890
  %v6892 = vsel %vm1996, %v6889, %v6891
  %v6893 = vsel %vm1996, %v6887, %v6889
  %v6894 = vsel %vm1996, %v6885, %v6887
  %v6895 = vsel %vm1996, %v6891, %v6885
  %v6896 = vmul.f32 %v6894, %v2032
  %v6897 = vmul.f32 %v6893, %v2036
  %v6898 = vmul.f32 %v6892, %v2040
  %v6899 = vmul.f32 %v6895, %v2044
  %v6900 = vld [vmem:[%s3697] sm:$0xff]
  %v6901 = vld [vmem:[%s3697 + $0x8] sm:$0xff]
  %v6902 = vld [vmem:[%s3697 + $0x10] sm:$0xff]
  %v6903 = vld [vmem:[%s3697 + $0x18] sm:$0xff]
  %v6904 = vld [vmem:[%s3697 + $0x20] sm:$0xff]
  %v6905 = vld [vmem:[%s3697 + $0x28] sm:$0xff]
  %v6906 = vld [vmem:[%s3697 + $0x30] sm:$0xff]
  %v6907 = vld [vmem:[%s3697 + $0x38] sm:$0xff]
  %v6908 = vld [vmem:[%s3697 + $0x40] sm:$0xff]
  %v6909 = vld [vmem:[%s3697 + $0x48] sm:$0xff]
  %v6910 = vld [vmem:[%s3697 + $0x50] sm:$0xff]
  %v6911 = vld [vmem:[%s3697 + $0x58] sm:$0xff]
  %v6912 = vld [vmem:[%s3697 + $0x60] sm:$0xff]
  %v6913 = vld [vmem:[%s3697 + $0x68] sm:$0xff]
  %v6914 = vld [vmem:[%s3697 + $0x70] sm:$0xff]
  %v6915 = vld [vmem:[%s3697 + $0x78] sm:$0xff]
  %6916 = vmatprep.subr.mxu0 0.0
  %6917 = vmatpush1.msra.mxu0 0.0
  %6918 = vmatprep.subr.mxu0 0.0
  %6919 = vmatpush1.msra.mxu0 0.0
  %6920 = vmatprep.subr.mxu0 0.0
  %6921 = vmatpush1.msra.mxu0 0.0
  %6922 = vmatprep.subr.mxu0 0.0
  %6923 = vmatpush1.msra.mxu0 0.0
  %6924 = vmatprep.subr.mxu0 0.0
  %6925 = vmatpush1.msra.mxu0 0.0
  %6926 = vmatprep.subr.mxu0 0.0
  %6927 = vmatpush1.msra.mxu0 0.0
  %6928 = vmatprep.subr.mxu0 0.0
  %6929 = vmatpush1.msra.mxu0 0.0
  %6930 = vmatprep.subr.mxu0 %v6897
  %6931 = vmatpush1.msra.mxu0 %v6896
  %6932 = vmatprep.subr.mxu0 %v6881
  %6933 = vmatpush1.msra.mxu0 %v6880
  %6934 = vmatprep.subr.mxu0 %v6865
  %6935 = vmatpush1.msra.mxu0 %v6864
  %6936 = vmatprep.subr.mxu0 %v6849
  %6937 = vmatpush1.msra.mxu0 %v6848
  %6938 = vmatprep.subr.mxu0 %v6764
  %6939 = vmatpush1.msra.mxu0 %v6763
  %6940 = vmatprep.subr.mxu0 %v6833
  %6941 = vmatpush1.msra.mxu0 %v6832
  %6942 = vmatprep.subr.mxu0 %v6817
  %6943 = vmatpush1.msra.mxu0 %v6816
  %6944 = vmatprep.subr.mxu0 %v6801
  %6945 = vmatpush1.msra.mxu0 %v6800
  %6946 = vmatprep.subr.mxu0 %v6785
  %6947 = vmatpush1.msra.mxu0 %v6784
  %6948 = vmatprep.subr.mxu0 0.0
  %6949 = vmatpush2.msra.mxu0 0.0
  %6950 = vmatprep.subr.mxu0 0.0
  %6951 = vmatpush2.msra.mxu0 0.0
  %6952 = vmatprep.subr.mxu0 0.0
  %6953 = vmatpush2.msra.mxu0 0.0
  %6954 = vmatprep.subr.mxu0 0.0
  %6955 = vmatpush2.msra.mxu0 0.0
  %6956 = vmatprep.subr.mxu0 0.0
  %6957 = vmatpush2.msra.mxu0 0.0
  %6958 = vmatprep.subr.mxu0 0.0
  %6959 = vmatpush2.msra.mxu0 0.0
  %6960 = vmatprep.subr.mxu0 0.0
  %6961 = vmatpush2.msra.mxu0 0.0
  %6962 = vmatprep.subr.mxu0 0.0
  %6963 = vmatpush2.msra.mxu0 0.0
  %6964 = vmatprep.subr.mxu0 0.0
  %6965 = vmatpush2.msra.mxu0 0.0
  %6966 = vmatprep.subr.mxu0 0.0
  %6967 = vmatpush2.msra.mxu0 0.0
  %6968 = vmatprep.subr.mxu0 0.0
  %6969 = vmatpush2.msra.mxu0 0.0
  %6970 = vmatprep.subr.mxu0 0.0
  %6971 = vmatpush2.msra.mxu0 0.0
  %6972 = vmatprep.subr.mxu0 0.0
  %6973 = vmatpush2.msra.mxu0 0.0
  %6974 = vmatprep.subr.mxu0 0.0
  %6975 = vmatpush2.msra.mxu0 0.0
  %6976 = vmatprep.subr.mxu0 0.0
  %6977 = vmatpush2.msra.mxu0 0.0
  %6978 = vmatprep.subr.mxu0 0.0
  %6979 = vmatpush2.msra.mxu0 0.0
  %6980 = vmatprep.mubr.f32.mxu0 0.0
  %6981 = vmatmul.mubr.f32.gmra.mxu0 %v3830
  %v6982 = vpop.f32.mrf.mxu0
  %v6983 = vadd.f32 0.0, %v6982
  %v6984 = vpop.f32.mrf.mxu0
  %v6985 = vadd.f32 0.0, %v6984
  %6986 = vmatprep.mubr.f32.mxu0 0.0
  %6987 = vmatmul.mubr.f32.gmra.mxu0 %v3833
  %v6988 = vpop.f32.mrf.mxu0
  %v6989 = vadd.f32 0.0, %v6988
  %v6990 = vpop.f32.mrf.mxu0
  %v6991 = vadd.f32 0.0, %v6990
  %6992 = vmatprep.mubr.f32.mxu0 0.0
  %6993 = vmatmul.mubr.f32.gmra.mxu0 %v3836
  %v6994 = vpop.f32.mrf.mxu0
  %v6995 = vadd.f32 0.0, %v6994
  %v6996 = vpop.f32.mrf.mxu0
  %v6997 = vadd.f32 0.0, %v6996
  %6998 = vmatprep.mubr.f32.mxu0 0.0
  %6999 = vmatmul.mubr.f32.gmra.mxu0 %v3839
  %v7000 = vpop.f32.mrf.mxu0
  %v7001 = vadd.f32 0.0, %v7000
  %v7002 = vpop.f32.mrf.mxu0
  %v7003 = vadd.f32 0.0, %v7002
  %7004 = vdwg.mxu0
  %7005 = vmatprep.subr.mxu0 0.0
  %7006 = vmatpush1.msra.mxu0 0.0
  %7007 = vmatprep.subr.mxu0 0.0
  %7008 = vmatpush1.msra.mxu0 0.0
  %7009 = vmatprep.subr.mxu0 0.0
  %7010 = vmatpush1.msra.mxu0 0.0
  %7011 = vmatprep.subr.mxu0 0.0
  %7012 = vmatpush1.msra.mxu0 0.0
  %7013 = vmatprep.subr.mxu0 0.0
  %7014 = vmatpush1.msra.mxu0 0.0
  %7015 = vmatprep.subr.mxu0 0.0
  %7016 = vmatpush1.msra.mxu0 0.0
  %7017 = vmatprep.subr.mxu0 0.0
  %7018 = vmatpush1.msra.mxu0 0.0
  %7019 = vmatprep.subr.mxu0 %v6899
  %7020 = vmatpush1.msra.mxu0 %v6898
  %7021 = vmatprep.subr.mxu0 %v6883
  %7022 = vmatpush1.msra.mxu0 %v6882
  %7023 = vmatprep.subr.mxu0 %v6867
  %7024 = vmatpush1.msra.mxu0 %v6866
  %7025 = vmatprep.subr.mxu0 %v6851
  %7026 = vmatpush1.msra.mxu0 %v6850
  %7027 = vmatprep.subr.mxu0 %v6766
  %7028 = vmatpush1.msra.mxu0 %v6765
  %7029 = vmatprep.subr.mxu0 %v6835
  %7030 = vmatpush1.msra.mxu0 %v6834
  %7031 = vmatprep.subr.mxu0 %v6819
  %7032 = vmatpush1.msra.mxu0 %v6818
  %7033 = vmatprep.subr.mxu0 %v6803
  %7034 = vmatpush1.msra.mxu0 %v6802
  %7035 = vmatprep.subr.mxu0 %v6787
  %7036 = vmatpush1.msra.mxu0 %v6786
  %7037 = vmatprep.subr.mxu0 0.0
  %7038 = vmatpush2.msra.mxu0 0.0
  %7039 = vmatprep.subr.mxu0 0.0
  %7040 = vmatpush2.msra.mxu0 0.0
  %7041 = vmatprep.subr.mxu0 0.0
  %7042 = vmatpush2.msra.mxu0 0.0
  %7043 = vmatprep.subr.mxu0 0.0
  %7044 = vmatpush2.msra.mxu0 0.0
  %7045 = vmatprep.subr.mxu0 0.0
  %7046 = vmatpush2.msra.mxu0 0.0
  %7047 = vmatprep.subr.mxu0 0.0
  %7048 = vmatpush2.msra.mxu0 0.0
  %7049 = vmatprep.subr.mxu0 0.0
  %7050 = vmatpush2.msra.mxu0 0.0
  %7051 = vmatprep.subr.mxu0 0.0
  %7052 = vmatpush2.msra.mxu0 0.0
  %7053 = vmatprep.subr.mxu0 0.0
  %7054 = vmatpush2.msra.mxu0 0.0
  %7055 = vmatprep.subr.mxu0 0.0
  %7056 = vmatpush2.msra.mxu0 0.0
  %7057 = vmatprep.subr.mxu0 0.0
  %7058 = vmatpush2.msra.mxu0 0.0
  %7059 = vmatprep.subr.mxu0 0.0
  %7060 = vmatpush2.msra.mxu0 0.0
  %7061 = vmatprep.subr.mxu0 0.0
  %7062 = vmatpush2.msra.mxu0 0.0
  %7063 = vmatprep.subr.mxu0 0.0
  %7064 = vmatpush2.msra.mxu0 0.0
  %7065 = vmatprep.subr.mxu0 0.0
  %7066 = vmatpush2.msra.mxu0 0.0
  %7067 = vmatprep.subr.mxu0 0.0
  %7068 = vmatpush2.msra.mxu0 0.0
  %7069 = vmatprep.mubr.f32.mxu0 0.0
  %7070 = vmatmul.mubr.f32.gmra.mxu0 %v3830
  %v7071 = vpop.f32.mrf.mxu0
  %v7072 = vadd.f32 0.0, %v7071
  %v7073 = vpop.f32.mrf.mxu0
  %v7074 = vadd.f32 0.0, %v7073
  %7075 = vmatprep.mubr.f32.mxu0 0.0
  %7076 = vmatmul.mubr.f32.gmra.mxu0 %v3833
  %v7077 = vpop.f32.mrf.mxu0
  %v7078 = vadd.f32 0.0, %v7077
  %v7079 = vpop.f32.mrf.mxu0
  %v7080 = vadd.f32 0.0, %v7079
  %7081 = vmatprep.mubr.f32.mxu0 0.0
  %7082 = vmatmul.mubr.f32.gmra.mxu0 %v3836
  %v7083 = vpop.f32.mrf.mxu0
  %v7084 = vadd.f32 0.0, %v7083
  %v7085 = vpop.f32.mrf.mxu0
  %v7086 = vadd.f32 0.0, %v7085
  %7087 = vmatprep.mubr.f32.mxu0 0.0
  %7088 = vmatmul.mubr.f32.gmra.mxu0 %v3839
  %v7089 = vpop.f32.mrf.mxu0
  %v7090 = vadd.f32 0.0, %v7089
  %v7091 = vpop.f32.mrf.mxu0
  %v7092 = vadd.f32 0.0, %v7091
  %7093 = vdwg.mxu0
  %v7094 = vadd.f32 %v6900, %v6983
  %v7095 = vadd.f32 %v6901, %v6985
  %v7096 = vadd.f32 %v6902, %v7072
  %v7097 = vadd.f32 %v6903, %v7074
  %v7098 = vadd.f32 %v6904, %v6989
  %v7099 = vadd.f32 %v6905, %v6991
  %v7100 = vadd.f32 %v6906, %v7078
  %v7101 = vadd.f32 %v6907, %v7080
  %v7102 = vadd.f32 %v6908, %v6995
  %v7103 = vadd.f32 %v6909, %v6997
  %v7104 = vadd.f32 %v6910, %v7084
  %v7105 = vadd.f32 %v6911, %v7086
  %v7106 = vadd.f32 %v6912, %v7001
  %v7107 = vadd.f32 %v6913, %v7003
  %v7108 = vadd.f32 %v6914, %v7090
  %v7109 = vadd.f32 %v6915, %v7092
  %v7110 = vmul.f32 %v7094, %v7094
  %v7111 = vmul.f32 %v7095, %v7095
  %v7112 = vmul.f32 %v7096, %v7096
  %v7113 = vmul.f32 %v7097, %v7097
  %v7114 = vmul.f32 %v7098, %v7098
  %v7115 = vmul.f32 %v7099, %v7099
  %v7116 = vmul.f32 %v7100, %v7100
  %v7117 = vmul.f32 %v7101, %v7101
  %v7118 = vmul.f32 %v7102, %v7102
  %v7119 = vmul.f32 %v7103, %v7103
  %v7120 = vmul.f32 %v7104, %v7104
  %v7121 = vmul.f32 %v7105, %v7105
  %v7122 = vmul.f32 %v7106, %v7106
  %v7123 = vmul.f32 %v7107, %v7107
  %v7124 = vmul.f32 %v7108, %v7108
  %v7125 = vmul.f32 %v7109, %v7109
  %7126 = vmatprep.subr.mxu0 0.0
  %7127 = vmatpush1.msra.mxu0 1.0
  %7128 = vmatprep.subr.mxu0 0.0
  %7129 = vmatpush1.msra.mxu0 1.0
  %7130 = vmatprep.subr.mxu0 0.0
  %7131 = vmatpush1.msra.mxu0 1.0
  %7132 = vmatprep.subr.mxu0 0.0
  %7133 = vmatpush1.msra.mxu0 1.0
  %7134 = vmatprep.subr.mxu0 0.0
  %7135 = vmatpush1.msra.mxu0 1.0
  %7136 = vmatprep.subr.mxu0 0.0
  %7137 = vmatpush1.msra.mxu0 1.0
  %7138 = vmatprep.subr.mxu0 0.0
  %7139 = vmatpush1.msra.mxu0 1.0
  %7140 = vmatprep.subr.mxu0 0.0
  %7141 = vmatpush1.msra.mxu0 1.0
  %7142 = vmatprep.subr.mxu0 0.0
  %7143 = vmatpush1.msra.mxu0 1.0
  %7144 = vmatprep.subr.mxu0 0.0
  %7145 = vmatpush1.msra.mxu0 1.0
  %7146 = vmatprep.subr.mxu0 0.0
  %7147 = vmatpush1.msra.mxu0 1.0
  %7148 = vmatprep.subr.mxu0 0.0
  %7149 = vmatpush1.msra.mxu0 1.0
  %7150 = vmatprep.subr.mxu0 0.0
  %7151 = vmatpush1.msra.mxu0 1.0
  %7152 = vmatprep.subr.mxu0 0.0
  %7153 = vmatpush1.msra.mxu0 1.0
  %7154 = vmatprep.subr.mxu0 0.0
  %7155 = vmatpush1.msra.mxu0 1.0
  %7156 = vmatprep.subr.mxu0 0.0
  %7157 = vmatpush1.msra.mxu0 1.0
  %7158 = vmatprep.subr.mxu0 0.0
  %7159 = vmatpush2.msra.mxu0 1.0
  %7160 = vmatprep.subr.mxu0 0.0
  %7161 = vmatpush2.msra.mxu0 1.0
  %7162 = vmatprep.subr.mxu0 0.0
  %7163 = vmatpush2.msra.mxu0 1.0
  %7164 = vmatprep.subr.mxu0 0.0
  %7165 = vmatpush2.msra.mxu0 1.0
  %7166 = vmatprep.subr.mxu0 0.0
  %7167 = vmatpush2.msra.mxu0 1.0
  %7168 = vmatprep.subr.mxu0 0.0
  %7169 = vmatpush2.msra.mxu0 1.0
  %7170 = vmatprep.subr.mxu0 0.0
  %7171 = vmatpush2.msra.mxu0 1.0
  %7172 = vmatprep.subr.mxu0 0.0
  %7173 = vmatpush2.msra.mxu0 1.0
  %7174 = vmatprep.subr.mxu0 0.0
  %7175 = vmatpush2.msra.mxu0 1.0
  %7176 = vmatprep.subr.mxu0 0.0
  %7177 = vmatpush2.msra.mxu0 1.0
  %7178 = vmatprep.subr.mxu0 0.0
  %7179 = vmatpush2.msra.mxu0 1.0
  %7180 = vmatprep.subr.mxu0 0.0
  %7181 = vmatpush2.msra.mxu0 1.0
  %7182 = vmatprep.subr.mxu0 0.0
  %7183 = vmatpush2.msra.mxu0 1.0
  %7184 = vmatprep.subr.mxu0 0.0
  %7185 = vmatpush2.msra.mxu0 1.0
  %7186 = vmatprep.subr.mxu0 0.0
  %7187 = vmatpush2.msra.mxu0 1.0
  %7188 = vmatprep.subr.mxu0 0.0
  %7189 = vmatpush2.msra.mxu0 1.0
  %7190 = vmatprep.mubr.f32.mxu0 %v7095
  %7191 = vmatmul.mubr.f32.gmra.mxu0 %v7094
  %v7192 = vpop.f32.mrf.mxu0
  %v7193 = vadd.f32 0.0, %v7192
  %v7194 = vpop.f32.mrf.mxu0
  %7195 = vmatprep.mubr.f32.mxu0 %v7099
  %7196 = vmatmul.mubr.f32.gmra.mxu0 %v7098
  %v7197 = vpop.f32.mrf.mxu0
  %v7198 = vadd.f32 0.0, %v7197
  %v7199 = vpop.f32.mrf.mxu0
  %7200 = vmatprep.mubr.f32.mxu0 %v7103
  %7201 = vmatmul.mubr.f32.gmra.mxu0 %v7102
  %v7202 = vpop.f32.mrf.mxu0
  %v7203 = vadd.f32 0.0, %v7202
  %v7204 = vpop.f32.mrf.mxu0
  %7205 = vmatprep.mubr.f32.mxu0 %v7107
  %7206 = vmatmul.mubr.f32.gmra.mxu0 %v7106
  %v7207 = vpop.f32.mrf.mxu0
  %v7208 = vadd.f32 0.0, %v7207
  %v7209 = vpop.f32.mrf.mxu0
  %7210 = vmatprep.mubr.f32.mxu0 %v7111
  %7211 = vmatmul.mubr.f32.gmra.mxu0 %v7110
  %v7212 = vpop.f32.mrf.mxu0
  %v7213 = vadd.f32 0.0, %v7212
  %v7214 = vpop.f32.mrf.mxu0
  %7215 = vmatprep.mubr.f32.mxu0 %v7115
  %7216 = vmatmul.mubr.f32.gmra.mxu0 %v7114
  %v7217 = vpop.f32.mrf.mxu0
  %v7218 = vadd.f32 0.0, %v7217
  %v7219 = vpop.f32.mrf.mxu0
  %7220 = vmatprep.mubr.f32.mxu0 %v7119
  %7221 = vmatmul.mubr.f32.gmra.mxu0 %v7118
  %v7222 = vpop.f32.mrf.mxu0
  %v7223 = vadd.f32 0.0, %v7222
  %v7224 = vpop.f32.mrf.mxu0
  %7225 = vmatprep.mubr.f32.mxu0 %v7123
  %7226 = vmatmul.mubr.f32.gmra.mxu0 %v7122
  %v7227 = vpop.f32.mrf.mxu0
  %v7228 = vadd.f32 0.0, %v7227
  %v7229 = vpop.f32.mrf.mxu0
  %7230 = vdwg.mxu0
  %7231 = vmatprep.subr.mxu0 0.0
  %7232 = vmatpush1.msra.mxu0 1.0
  %7233 = vmatprep.subr.mxu0 0.0
  %7234 = vmatpush1.msra.mxu0 1.0
  %7235 = vmatprep.subr.mxu0 0.0
  %7236 = vmatpush1.msra.mxu0 1.0
  %7237 = vmatprep.subr.mxu0 0.0
  %7238 = vmatpush1.msra.mxu0 1.0
  %7239 = vmatprep.subr.mxu0 0.0
  %7240 = vmatpush1.msra.mxu0 1.0
  %7241 = vmatprep.subr.mxu0 0.0
  %7242 = vmatpush1.msra.mxu0 1.0
  %7243 = vmatprep.subr.mxu0 0.0
  %7244 = vmatpush1.msra.mxu0 1.0
  %7245 = vmatprep.subr.mxu0 0.0
  %7246 = vmatpush1.msra.mxu0 1.0
  %7247 = vmatprep.subr.mxu0 0.0
  %7248 = vmatpush1.msra.mxu0 1.0
  %7249 = vmatprep.subr.mxu0 0.0
  %7250 = vmatpush1.msra.mxu0 1.0
  %7251 = vmatprep.subr.mxu0 0.0
  %7252 = vmatpush1.msra.mxu0 1.0
  %7253 = vmatprep.subr.mxu0 0.0
  %7254 = vmatpush1.msra.mxu0 1.0
  %7255 = vmatprep.subr.mxu0 0.0
  %7256 = vmatpush1.msra.mxu0 1.0
  %7257 = vmatprep.subr.mxu0 0.0
  %7258 = vmatpush1.msra.mxu0 1.0
  %7259 = vmatprep.subr.mxu0 0.0
  %7260 = vmatpush1.msra.mxu0 1.0
  %7261 = vmatprep.subr.mxu0 0.0
  %7262 = vmatpush1.msra.mxu0 1.0
  %7263 = vmatprep.subr.mxu0 0.0
  %7264 = vmatpush2.msra.mxu0 1.0
  %7265 = vmatprep.subr.mxu0 0.0
  %7266 = vmatpush2.msra.mxu0 1.0
  %7267 = vmatprep.subr.mxu0 0.0
  %7268 = vmatpush2.msra.mxu0 1.0
  %7269 = vmatprep.subr.mxu0 0.0
  %7270 = vmatpush2.msra.mxu0 1.0
  %7271 = vmatprep.subr.mxu0 0.0
  %7272 = vmatpush2.msra.mxu0 1.0
  %7273 = vmatprep.subr.mxu0 0.0
  %7274 = vmatpush2.msra.mxu0 1.0
  %7275 = vmatprep.subr.mxu0 0.0
  %7276 = vmatpush2.msra.mxu0 1.0
  %7277 = vmatprep.subr.mxu0 0.0
  %7278 = vmatpush2.msra.mxu0 1.0
  %7279 = vmatprep.subr.mxu0 0.0
  %7280 = vmatpush2.msra.mxu0 1.0
  %7281 = vmatprep.subr.mxu0 0.0
  %7282 = vmatpush2.msra.mxu0 1.0
  %7283 = vmatprep.subr.mxu0 0.0
  %7284 = vmatpush2.msra.mxu0 1.0
  %7285 = vmatprep.subr.mxu0 0.0
  %7286 = vmatpush2.msra.mxu0 1.0
  %7287 = vmatprep.subr.mxu0 0.0
  %7288 = vmatpush2.msra.mxu0 1.0
  %7289 = vmatprep.subr.mxu0 0.0
  %7290 = vmatpush2.msra.mxu0 1.0
  %7291 = vmatprep.subr.mxu0 0.0
  %7292 = vmatpush2.msra.mxu0 1.0
  %7293 = vmatprep.subr.mxu0 0.0
  %7294 = vmatpush2.msra.mxu0 1.0
  %7295 = vmatprep.mubr.f32.mxu0 %v7097
  %7296 = vmatmul.mubr.f32.gmra.mxu0 %v7096
  %v7297 = vpop.f32.mrf.mxu0
  %v7298 = vadd.f32 %v7193, %v7297
  %v7299 = vpop.f32.mrf.mxu0
  %7300 = vmatprep.mubr.f32.mxu0 %v7101
  %7301 = vmatmul.mubr.f32.gmra.mxu0 %v7100
  %v7302 = vpop.f32.mrf.mxu0
  %v7303 = vadd.f32 %v7198, %v7302
  %v7304 = vpop.f32.mrf.mxu0
  %7305 = vmatprep.mubr.f32.mxu0 %v7105
  %7306 = vmatmul.mubr.f32.gmra.mxu0 %v7104
  %v7307 = vpop.f32.mrf.mxu0
  %v7308 = vadd.f32 %v7203, %v7307
  %v7309 = vpop.f32.mrf.mxu0
  %7310 = vmatprep.mubr.f32.mxu0 %v7109
  %7311 = vmatmul.mubr.f32.gmra.mxu0 %v7108
  %v7312 = vpop.f32.mrf.mxu0
  %v7313 = vadd.f32 %v7208, %v7312
  %v7314 = vpop.f32.mrf.mxu0
  %7315 = vmatprep.mubr.f32.mxu0 %v7113
  %7316 = vmatmul.mubr.f32.gmra.mxu0 %v7112
  %v7317 = vpop.f32.mrf.mxu0
  %v7318 = vadd.f32 %v7213, %v7317
  %v7319 = vpop.f32.mrf.mxu0
  %7320 = vmatprep.mubr.f32.mxu0 %v7117
  %7321 = vmatmul.mubr.f32.gmra.mxu0 %v7116
  %v7322 = vpop.f32.mrf.mxu0
  %v7323 = vadd.f32 %v7218, %v7322
  %v7324 = vpop.f32.mrf.mxu0
  %7325 = vmatprep.mubr.f32.mxu0 %v7121
  %7326 = vmatmul.mubr.f32.gmra.mxu0 %v7120
  %v7327 = vpop.f32.mrf.mxu0
  %v7328 = vadd.f32 %v7223, %v7327
  %v7329 = vpop.f32.mrf.mxu0
  %7330 = vmatprep.mubr.f32.mxu0 %v7125
  %7331 = vmatmul.mubr.f32.gmra.mxu0 %v7124
  %v7332 = vpop.f32.mrf.mxu0
  %v7333 = vadd.f32 %v7228, %v7332
  %v7334 = vpop.f32.mrf.mxu0
  %7335 = vdwg.mxu0
  %v7336 = vmul.f32 %v7298, 0.001953125
  %v7337 = vmul.f32 %v7303, 0.001953125
  %v7338 = vmul.f32 %v7308, 0.001953125
  %v7339 = vmul.f32 %v7313, 0.001953125
  %v7340 = vmul.f32 %v7318, 0.001953125
  %v7341 = vmul.f32 %v7323, 0.001953125
  %v7342 = vmul.f32 %v7328, 0.001953125
  %v7343 = vmul.f32 %v7333, 0.001953125
  %v7344 = vmul.f32 %v7336, %v7336
  %v7345 = vmul.f32 %v7337, %v7337
  %v7346 = vmul.f32 %v7338, %v7338
  %v7347 = vmul.f32 %v7339, %v7339
  %v7348 = vsub.f32 %v7340, %v7344
  %v7349 = vsub.f32 %v7341, %v7345
  %v7350 = vsub.f32 %v7342, %v7346
  %v7351 = vsub.f32 %v7343, %v7347
  %v7352 = vadd.f32 %v7348, 1e-05
  %v7353 = vadd.f32 %v7349, 1e-05
  %v7354 = vadd.f32 %v7350, 1e-05
  %v7355 = vadd.f32 %v7351, 1e-05
  %v7356 = vrsqrt.pop %v7352
  %v7357 = vrsqrt.pop %v7353
  %v7358 = vrsqrt.pop %v7354
  %v7359 = vrsqrt.pop %v7355
  %v7360 = vmul.f32 %v91, %v7356
  %v7361 = vmul.f32 %v92, %v7357
  %v7362 = vmul.f32 %v93, %v7358
  %v7363 = vmul.f32 %v94, %v7359
  %v7364 = vmul.f32 %v7336, %v7360
  %v7365 = vmul.f32 %v7337, %v7361
  %v7366 = vmul.f32 %v7338, %v7362
  %v7367 = vmul.f32 %v7339, %v7363
  %v7368 = vsub.f32 %v95, %v7364
  %v7369 = vsub.f32 %v96, %v7365
  %v7370 = vsub.f32 %v97, %v7366
  %v7371 = vsub.f32 %v98, %v7367
  %7373 = vset.pattern.permute.xlu0 0
  %7374 = vperm.xlu0 %7373, %v7360
  %v7375 = vpop.permute.xlu0 %7374
  %7378 = vset.pattern.permute.xlu0 0
  %7379 = vperm.xlu0 %7378, %v7361
  %v7380 = vpop.permute.xlu0 %7379
  %7383 = vset.pattern.permute.xlu0 0
  %7384 = vperm.xlu0 %7383, %v7362
  %v7385 = vpop.permute.xlu0 %7384
  %7388 = vset.pattern.permute.xlu0 0
  %7389 = vperm.xlu0 %7388, %v7363
  %v7390 = vpop.permute.xlu0 %7389
  %v7392 = vmul.f32 %v7094, %v7375
  %v7393 = vmul.f32 %v7095, %v7375
  %v7394 = vmul.f32 %v7096, %v7375
  %v7395 = vmul.f32 %v7097, %v7375
  %v7396 = vmul.f32 %v7098, %v7380
  %v7397 = vmul.f32 %v7099, %v7380
  %v7398 = vmul.f32 %v7100, %v7380
  %v7399 = vmul.f32 %v7101, %v7380
  %v7400 = vmul.f32 %v7102, %v7385
  %v7401 = vmul.f32 %v7103, %v7385
  %v7402 = vmul.f32 %v7104, %v7385
  %v7403 = vmul.f32 %v7105, %v7385
  %v7404 = vmul.f32 %v7106, %v7390
  %v7405 = vmul.f32 %v7107, %v7390
  %v7406 = vmul.f32 %v7108, %v7390
  %v7407 = vmul.f32 %v7109, %v7390
  %7409 = vset.pattern.permute.xlu0 0
  %7410 = vperm.xlu0 %7409, %v7368
  %v7411 = vpop.permute.xlu0 %7410
  %7414 = vset.pattern.permute.xlu0 0
  %7415 = vperm.xlu0 %7414, %v7369
  %v7416 = vpop.permute.xlu0 %7415
  %7419 = vset.pattern.permute.xlu0 0
  %7420 = vperm.xlu0 %7419, %v7370
  %v7421 = vpop.permute.xlu0 %7420
  %7424 = vset.pattern.permute.xlu0 0
  %7425 = vperm.xlu0 %7424, %v7371
  %v7426 = vpop.permute.xlu0 %7425
  %v7428 = vadd.f32 %v7392, %v7411
  %v7429 = vadd.f32 %v7393, %v7411
  %v7430 = vadd.f32 %v7394, %v7411
  %v7431 = vadd.f32 %v7395, %v7411
  %v7432 = vadd.f32 %v7396, %v7416
  %v7433 = vadd.f32 %v7397, %v7416
  %v7434 = vadd.f32 %v7398, %v7416
  %v7435 = vadd.f32 %v7399, %v7416
  %v7436 = vadd.f32 %v7400, %v7421
  %v7437 = vadd.f32 %v7401, %v7421
  %v7438 = vadd.f32 %v7402, %v7421
  %v7439 = vadd.f32 %v7403, %v7421
  %v7440 = vadd.f32 %v7404, %v7426
  %v7441 = vadd.f32 %v7405, %v7426
  %v7442 = vadd.f32 %v7406, %v7426
  %v7443 = vadd.f32 %v7407, %v7426
  %v7444 = vxor.u32 %v7428, 2147483648
  %v7445 = vxor.u32 %v7429, 2147483648
  %v7446 = vxor.u32 %v7430, 2147483648
  %v7447 = vxor.u32 %v7431, 2147483648
  %v7448 = vmul.f32 %v7444, 1.442695
  %v7449 = vpow.pop %v7448
  %v7450 = vmul.f32 %v7445, 1.442695
  %v7451 = vpow.pop %v7450
  %v7452 = vmul.f32 %v7446, 1.442695
  %v7453 = vpow.pop %v7452
  %v7454 = vmul.f32 %v7447, 1.442695
  %v7455 = vpow.pop %v7454
  %v7456 = vadd.f32 %v7449, 1.0
  %v7457 = vadd.f32 %v7451, 1.0
  %v7458 = vadd.f32 %v7453, 1.0
  %v7459 = vadd.f32 %v7455, 1.0
  %v7460 = vrcp.pop %v7456
  %v7461 = vmul.f32 1.0, %v7460
  %v7462 = vrcp.pop %v7457
  %v7463 = vmul.f32 1.0, %v7462
  %v7464 = vrcp.pop %v7458
  %v7465 = vmul.f32 1.0, %v7464
  %v7466 = vrcp.pop %v7459
  %v7467 = vmul.f32 1.0, %v7466
  %v7468 = vxor.u32 %v7432, 2147483648
  %v7469 = vxor.u32 %v7433, 2147483648
  %v7470 = vxor.u32 %v7434, 2147483648
  %v7471 = vxor.u32 %v7435, 2147483648
  %v7472 = vmul.f32 %v7468, 1.442695
  %v7473 = vpow.pop %v7472
  %v7474 = vmul.f32 %v7469, 1.442695
  %v7475 = vpow.pop %v7474
  %v7476 = vmul.f32 %v7470, 1.442695
  %v7477 = vpow.pop %v7476
  %v7478 = vmul.f32 %v7471, 1.442695
  %v7479 = vpow.pop %v7478
  %v7480 = vadd.f32 %v7473, 1.0
  %v7481 = vadd.f32 %v7475, 1.0
  %v7482 = vadd.f32 %v7477, 1.0
  %v7483 = vadd.f32 %v7479, 1.0
  %v7484 = vrcp.pop %v7480
  %v7485 = vmul.f32 1.0, %v7484
  %v7486 = vrcp.pop %v7481
  %v7487 = vmul.f32 1.0, %v7486
  %v7488 = vrcp.pop %v7482
  %v7489 = vmul.f32 1.0, %v7488
  %v7490 = vrcp.pop %v7483
  %v7491 = vmul.f32 1.0, %v7490
  %v7492 = vxor.u32 %v7440, 2147483648
  %v7493 = vxor.u32 %v7441, 2147483648
  %v7494 = vxor.u32 %v7442, 2147483648
  %v7495 = vxor.u32 %v7443, 2147483648
  %v7496 = vmul.f32 %v7492, 1.442695
  %v7497 = vpow.pop %v7496
  %v7498 = vmul.f32 %v7493, 1.442695
  %v7499 = vpow.pop %v7498
  %v7500 = vmul.f32 %v7494, 1.442695
  %v7501 = vpow.pop %v7500
  %v7502 = vmul.f32 %v7495, 1.442695
  %v7503 = vpow.pop %v7502
  %v7504 = vadd.f32 %v7497, 1.0
  %v7505 = vadd.f32 %v7499, 1.0
  %v7506 = vadd.f32 %v7501, 1.0
  %v7507 = vadd.f32 %v7503, 1.0
  %v7508 = vrcp.pop %v7504
  %v7509 = vmul.f32 1.0, %v7508
  %v7510 = vrcp.pop %v7505
  %v7511 = vmul.f32 1.0, %v7510
  %v7512 = vrcp.pop %v7506
  %v7513 = vmul.f32 1.0, %v7512
  %v7514 = vrcp.pop %v7507
  %v7515 = vmul.f32 1.0, %v7514
  %v7516 = vmul.f32 %v7485, %v6755
  %v7517 = vmul.f32 %v7487, %v6756
  %v7518 = vmul.f32 %v7489, %v6757
  %v7519 = vmul.f32 %v7491, %v6758
  %v7520 = vmul.f32 %v7461, %v7436
  %v7521 = vmul.f32 %v7463, %v7437
  %v7522 = vmul.f32 %v7465, %v7438
  %v7523 = vmul.f32 %v7467, %v7439
  %v7524 = vadd.f32 %v7516, %v7520
  %v7525 = vadd.f32 %v7517, %v7521
  %v7526 = vadd.f32 %v7518, %v7522
  %v7527 = vadd.f32 %v7519, %v7523
  %v7528 = vtanh.pop %v7524
  %v7529 = vtanh.pop %v7525
  %v7530 = vtanh.pop %v7526
  %v7531 = vtanh.pop %v7527
  %v7532 = vmul.f32 %v7509, %v7528
  %v7533 = vmul.f32 %v7511, %v7529
  %v7534 = vmul.f32 %v7513, %v7530
  %v7535 = vmul.f32 %v7515, %v7531
  %s7536 = scalar_lea.vmem %s6, 128
  %7537 = vst [vmem:[%s7536] sm:$0xff] %v7532
  %7538 = vst [vmem:[%s7536 + $0x8] sm:$0xff] %v7533
  %7539 = vst [vmem:[%s7536 + $0x10] sm:$0xff] %v7534
  %7540 = vst [vmem:[%s7536 + $0x18] sm:$0xff] %v7535
  %7541 = vrot.lane.b32.xlu0 %v7532, 17
  %v7542 = vpop.permute.xlu0 %7541
  %7543 = vrot.lane.b32.xlu0 %v7533, 17
  %v7544 = vpop.permute.xlu0 %7543
  %7545 = vrot.lane.b32.xlu0 %v7534, 17
  %v7546 = vpop.permute.xlu0 %7545
  %7547 = vrot.lane.b32.xlu0 %v7535, 17
  %v7548 = vpop.permute.xlu0 %7547
  %v7549 = vsel %vm197, %v7546, %v7548
  %v7550 = vsel %vm197, %v7544, %v7546
  %v7551 = vsel %vm197, %v7542, %v7544
  %v7552 = vsel %vm197, %v7548, %v7542
  %v7553 = vmul.f32 %v7552, %v233
  %v7554 = vmul.f32 %v7551, %v237
  %v7555 = vmul.f32 %v7550, %v241
  %v7556 = vmul.f32 %v7549, %v245
  %7557 = vrot.lane.b32.xlu0 %v7532, 16
  %v7558 = vpop.permute.xlu0 %7557
  %7559 = vrot.lane.b32.xlu0 %v7533, 16
  %v7560 = vpop.permute.xlu0 %7559
  %7561 = vrot.lane.b32.xlu0 %v7534, 16
  %v7562 = vpop.permute.xlu0 %7561
  %7563 = vrot.lane.b32.xlu0 %v7535, 16
  %v7564 = vpop.permute.xlu0 %7563
  %v7565 = vsel %vm454, %v7562, %v7564
  %v7566 = vsel %vm454, %v7560, %v7562
  %v7567 = vsel %vm454, %v7558, %v7560
  %v7568 = vsel %vm454, %v7564, %v7558
  %v7569 = vmul.f32 %v7568, %v490
  %v7570 = vmul.f32 %v7567, %v494
  %v7571 = vmul.f32 %v7566, %v498
  %v7572 = vmul.f32 %v7565, %v502
  %7573 = vrot.lane.b32.xlu0 %v7532, 15
  %v7574 = vpop.permute.xlu0 %7573
  %7575 = vrot.lane.b32.xlu0 %v7533, 15
  %v7576 = vpop.permute.xlu0 %7575
  %7577 = vrot.lane.b32.xlu0 %v7534, 15
  %v7578 = vpop.permute.xlu0 %7577
  %7579 = vrot.lane.b32.xlu0 %v7535, 15
  %v7580 = vpop.permute.xlu0 %7579
  %v7581 = vsel %vm711, %v7578, %v7580
  %v7582 = vsel %vm711, %v7576, %v7578
  %v7583 = vsel %vm711, %v7574, %v7576
  %v7584 = vsel %vm711, %v7580, %v7574
  %v7585 = vmul.f32 %v7584, %v747
  %v7586 = vmul.f32 %v7583, %v751
  %v7587 = vmul.f32 %v7582, %v755
  %v7588 = vmul.f32 %v7581, %v759
  %7589 = vrot.lane.b32.xlu0 %v7532, 1
  %v7590 = vpop.permute.xlu0 %7589
  %7591 = vrot.lane.b32.xlu0 %v7533, 1
  %v7592 = vpop.permute.xlu0 %7591
  %7593 = vrot.lane.b32.xlu0 %v7534, 1
  %v7594 = vpop.permute.xlu0 %7593
  %7595 = vrot.lane.b32.xlu0 %v7535, 1
  %v7596 = vpop.permute.xlu0 %7595
  %v7597 = vsel %vm968, %v7594, %v7596
  %v7598 = vsel %vm968, %v7592, %v7594
  %v7599 = vsel %vm968, %v7590, %v7592
  %v7600 = vsel %vm968, %v7596, %v7590
  %v7601 = vmul.f32 %v7600, %v1004
  %v7602 = vmul.f32 %v7599, %v1008
  %v7603 = vmul.f32 %v7598, %v1012
  %v7604 = vmul.f32 %v7597, %v1016
  %7605 = vrot.lane.b32.xlu0 %v7532, 127
  %v7606 = vpop.permute.xlu0 %7605
  %7607 = vrot.lane.b32.xlu0 %v7533, 127
  %v7608 = vpop.permute.xlu0 %7607
  %7609 = vrot.lane.b32.xlu0 %v7534, 127
  %v7610 = vpop.permute.xlu0 %7609
  %7611 = vrot.lane.b32.xlu0 %v7535, 127
  %v7612 = vpop.permute.xlu0 %7611
  %v7613 = vsel %vm1225, %v7610, %v7612
  %v7614 = vsel %vm1225, %v7608, %v7610
  %v7615 = vsel %vm1225, %v7606, %v7608
  %v7616 = vsel %vm1225, %v7612, %v7606
  %v7617 = vmul.f32 %v7615, %v1261
  %v7618 = vmul.f32 %v7614, %v1265
  %v7619 = vmul.f32 %v7613, %v1269
  %v7620 = vmul.f32 %v7616, %v1273
  %7621 = vrot.lane.b32.xlu0 %v7532, 113
  %v7622 = vpop.permute.xlu0 %7621
  %7623 = vrot.lane.b32.xlu0 %v7533, 113
  %v7624 = vpop.permute.xlu0 %7623
  %7625 = vrot.lane.b32.xlu0 %v7534, 113
  %v7626 = vpop.permute.xlu0 %7625
  %7627 = vrot.lane.b32.xlu0 %v7535, 113
  %v7628 = vpop.permute.xlu0 %7627
  %v7629 = vsel %vm1482, %v7626, %v7628
  %v7630 = vsel %vm1482, %v7624, %v7626
  %v7631 = vsel %vm1482, %v7622, %v7624
  %v7632 = vsel %vm1482, %v7628, %v7622
  %v7633 = vmul.f32 %v7631, %v1518
  %v7634 = vmul.f32 %v7630, %v1522
  %v7635 = vmul.f32 %v7629, %v1526
  %v7636 = vmul.f32 %v7632, %v1530
  %7637 = vrot.lane.b32.xlu0 %v7532, 112
  %v7638 = vpop.permute.xlu0 %7637
  %7639 = vrot.lane.b32.xlu0 %v7533, 112
  %v7640 = vpop.permute.xlu0 %7639
  %7641 = vrot.lane.b32.xlu0 %v7534, 112
  %v7642 = vpop.permute.xlu0 %7641
  %7643 = vrot.lane.b32.xlu0 %v7535, 112
  %v7644 = vpop.permute.xlu0 %7643
  %v7645 = vsel %vm1739, %v7642, %v7644
  %v7646 = vsel %vm1739, %v7640, %v7642
  %v7647 = vsel %vm1739, %v7638, %v7640
  %v7648 = vsel %vm1739, %v7644, %v7638
  %v7649 = vmul.f32 %v7647, %v1775
  %v7650 = vmul.f32 %v7646, %v1779
  %v7651 = vmul.f32 %v7645, %v1783
  %v7652 = vmul.f32 %v7648, %v1787
  %7653 = vrot.lane.b32.xlu0 %v7532, 111
  %v7654 = vpop.permute.xlu0 %7653
  %7655 = vrot.lane.b32.xlu0 %v7533, 111
  %v7656 = vpop.permute.xlu0 %7655
  %7657 = vrot.lane.b32.xlu0 %v7534, 111
  %v7658 = vpop.permute.xlu0 %7657
  %7659 = vrot.lane.b32.xlu0 %v7535, 111
  %v7660 = vpop.permute.xlu0 %7659
  %v7661 = vsel %vm1996, %v7658, %v7660
  %v7662 = vsel %vm1996, %v7656, %v7658
  %v7663 = vsel %vm1996, %v7654, %v7656
  %v7664 = vsel %vm1996, %v7660, %v7654
  %v7665 = vmul.f32 %v7663, %v2032
  %v7666 = vmul.f32 %v7662, %v2036
  %v7667 = vmul.f32 %v7661, %v2040
  %v7668 = vmul.f32 %v7664, %v2044
  %v7669 = vld [vmem:[%s3714] sm:$0xff]
  %v7670 = vld [vmem:[%s3714 + $0x8] sm:$0xff]
  %v7671 = vld [vmem:[%s3714 + $0x10] sm:$0xff]
  %v7672 = vld [vmem:[%s3714 + $0x18] sm:$0xff]
  %v7673 = vld [vmem:[%s3714 + $0x20] sm:$0xff]
  %v7674 = vld [vmem:[%s3714 + $0x28] sm:$0xff]
  %v7675 = vld [vmem:[%s3714 + $0x30] sm:$0xff]
  %v7676 = vld [vmem:[%s3714 + $0x38] sm:$0xff]
  %v7677 = vld [vmem:[%s3714 + $0x40] sm:$0xff]
  %v7678 = vld [vmem:[%s3714 + $0x48] sm:$0xff]
  %v7679 = vld [vmem:[%s3714 + $0x50] sm:$0xff]
  %v7680 = vld [vmem:[%s3714 + $0x58] sm:$0xff]
  %v7681 = vld [vmem:[%s3714 + $0x60] sm:$0xff]
  %v7682 = vld [vmem:[%s3714 + $0x68] sm:$0xff]
  %v7683 = vld [vmem:[%s3714 + $0x70] sm:$0xff]
  %v7684 = vld [vmem:[%s3714 + $0x78] sm:$0xff]
  %7685 = vmatprep.subr.mxu0 0.0
  %7686 = vmatpush1.msra.mxu0 0.0
  %7687 = vmatprep.subr.mxu0 0.0
  %7688 = vmatpush1.msra.mxu0 0.0
  %7689 = vmatprep.subr.mxu0 0.0
  %7690 = vmatpush1.msra.mxu0 0.0
  %7691 = vmatprep.subr.mxu0 0.0
  %7692 = vmatpush1.msra.mxu0 0.0
  %7693 = vmatprep.subr.mxu0 0.0
  %7694 = vmatpush1.msra.mxu0 0.0
  %7695 = vmatprep.subr.mxu0 0.0
  %7696 = vmatpush1.msra.mxu0 0.0
  %7697 = vmatprep.subr.mxu0 0.0
  %7698 = vmatpush1.msra.mxu0 0.0
  %7699 = vmatprep.subr.mxu0 %v7666
  %7700 = vmatpush1.msra.mxu0 %v7665
  %7701 = vmatprep.subr.mxu0 %v7650
  %7702 = vmatpush1.msra.mxu0 %v7649
  %7703 = vmatprep.subr.mxu0 %v7634
  %7704 = vmatpush1.msra.mxu0 %v7633
  %7705 = vmatprep.subr.mxu0 %v7618
  %7706 = vmatpush1.msra.mxu0 %v7617
  %7707 = vmatprep.subr.mxu0 %v7533
  %7708 = vmatpush1.msra.mxu0 %v7532
  %7709 = vmatprep.subr.mxu0 %v7602
  %7710 = vmatpush1.msra.mxu0 %v7601
  %7711 = vmatprep.subr.mxu0 %v7586
  %7712 = vmatpush1.msra.mxu0 %v7585
  %7713 = vmatprep.subr.mxu0 %v7570
  %7714 = vmatpush1.msra.mxu0 %v7569
  %7715 = vmatprep.subr.mxu0 %v7554
  %7716 = vmatpush1.msra.mxu0 %v7553
  %7717 = vmatprep.subr.mxu0 0.0
  %7718 = vmatpush2.msra.mxu0 0.0
  %7719 = vmatprep.subr.mxu0 0.0
  %7720 = vmatpush2.msra.mxu0 0.0
  %7721 = vmatprep.subr.mxu0 0.0
  %7722 = vmatpush2.msra.mxu0 0.0
  %7723 = vmatprep.subr.mxu0 0.0
  %7724 = vmatpush2.msra.mxu0 0.0
  %7725 = vmatprep.subr.mxu0 0.0
  %7726 = vmatpush2.msra.mxu0 0.0
  %7727 = vmatprep.subr.mxu0 0.0
  %7728 = vmatpush2.msra.mxu0 0.0
  %7729 = vmatprep.subr.mxu0 0.0
  %7730 = vmatpush2.msra.mxu0 0.0
  %7731 = vmatprep.subr.mxu0 0.0
  %7732 = vmatpush2.msra.mxu0 0.0
  %7733 = vmatprep.subr.mxu0 0.0
  %7734 = vmatpush2.msra.mxu0 0.0
  %7735 = vmatprep.subr.mxu0 0.0
  %7736 = vmatpush2.msra.mxu0 0.0
  %7737 = vmatprep.subr.mxu0 0.0
  %7738 = vmatpush2.msra.mxu0 0.0
  %7739 = vmatprep.subr.mxu0 0.0
  %7740 = vmatpush2.msra.mxu0 0.0
  %7741 = vmatprep.subr.mxu0 0.0
  %7742 = vmatpush2.msra.mxu0 0.0
  %7743 = vmatprep.subr.mxu0 0.0
  %7744 = vmatpush2.msra.mxu0 0.0
  %7745 = vmatprep.subr.mxu0 0.0
  %7746 = vmatpush2.msra.mxu0 0.0
  %7747 = vmatprep.subr.mxu0 0.0
  %7748 = vmatpush2.msra.mxu0 0.0
  %7749 = vmatprep.mubr.f32.mxu0 0.0
  %7750 = vmatmul.mubr.f32.gmra.mxu0 %v3830
  %v7751 = vpop.f32.mrf.mxu0
  %v7752 = vadd.f32 0.0, %v7751
  %v7753 = vpop.f32.mrf.mxu0
  %v7754 = vadd.f32 0.0, %v7753
  %7755 = vmatprep.mubr.f32.mxu0 0.0
  %7756 = vmatmul.mubr.f32.gmra.mxu0 %v3833
  %v7757 = vpop.f32.mrf.mxu0
  %v7758 = vadd.f32 0.0, %v7757
  %v7759 = vpop.f32.mrf.mxu0
  %v7760 = vadd.f32 0.0, %v7759
  %7761 = vmatprep.mubr.f32.mxu0 0.0
  %7762 = vmatmul.mubr.f32.gmra.mxu0 %v3836
  %v7763 = vpop.f32.mrf.mxu0
  %v7764 = vadd.f32 0.0, %v7763
  %v7765 = vpop.f32.mrf.mxu0
  %v7766 = vadd.f32 0.0, %v7765
  %7767 = vmatprep.mubr.f32.mxu0 0.0
  %7768 = vmatmul.mubr.f32.gmra.mxu0 %v3839
  %v7769 = vpop.f32.mrf.mxu0
  %v7770 = vadd.f32 0.0, %v7769
  %v7771 = vpop.f32.mrf.mxu0
  %v7772 = vadd.f32 0.0, %v7771
  %7773 = vdwg.mxu0
  %7774 = vmatprep.subr.mxu0 0.0
  %7775 = vmatpush1.msra.mxu0 0.0
  %7776 = vmatprep.subr.mxu0 0.0
  %7777 = vmatpush1.msra.mxu0 0.0
  %7778 = vmatprep.subr.mxu0 0.0
  %7779 = vmatpush1.msra.mxu0 0.0
  %7780 = vmatprep.subr.mxu0 0.0
  %7781 = vmatpush1.msra.mxu0 0.0
  %7782 = vmatprep.subr.mxu0 0.0
  %7783 = vmatpush1.msra.mxu0 0.0
  %7784 = vmatprep.subr.mxu0 0.0
  %7785 = vmatpush1.msra.mxu0 0.0
  %7786 = vmatprep.subr.mxu0 0.0
  %7787 = vmatpush1.msra.mxu0 0.0
  %7788 = vmatprep.subr.mxu0 %v7668
  %7789 = vmatpush1.msra.mxu0 %v7667
  %7790 = vmatprep.subr.mxu0 %v7652
  %7791 = vmatpush1.msra.mxu0 %v7651
  %7792 = vmatprep.subr.mxu0 %v7636
  %7793 = vmatpush1.msra.mxu0 %v7635
  %7794 = vmatprep.subr.mxu0 %v7620
  %7795 = vmatpush1.msra.mxu0 %v7619
  %7796 = vmatprep.subr.mxu0 %v7535
  %7797 = vmatpush1.msra.mxu0 %v7534
  %7798 = vmatprep.subr.mxu0 %v7604
  %7799 = vmatpush1.msra.mxu0 %v7603
  %7800 = vmatprep.subr.mxu0 %v7588
  %7801 = vmatpush1.msra.mxu0 %v7587
  %7802 = vmatprep.subr.mxu0 %v7572
  %7803 = vmatpush1.msra.mxu0 %v7571
  %7804 = vmatprep.subr.mxu0 %v7556
  %7805 = vmatpush1.msra.mxu0 %v7555
  %7806 = vmatprep.subr.mxu0 0.0
  %7807 = vmatpush2.msra.mxu0 0.0
  %7808 = vmatprep.subr.mxu0 0.0
  %7809 = vmatpush2.msra.mxu0 0.0
  %7810 = vmatprep.subr.mxu0 0.0
  %7811 = vmatpush2.msra.mxu0 0.0
  %7812 = vmatprep.subr.mxu0 0.0
  %7813 = vmatpush2.msra.mxu0 0.0
  %7814 = vmatprep.subr.mxu0 0.0
  %7815 = vmatpush2.msra.mxu0 0.0
  %7816 = vmatprep.subr.mxu0 0.0
  %7817 = vmatpush2.msra.mxu0 0.0
  %7818 = vmatprep.subr.mxu0 0.0
  %7819 = vmatpush2.msra.mxu0 0.0
  %7820 = vmatprep.subr.mxu0 0.0
  %7821 = vmatpush2.msra.mxu0 0.0
  %7822 = vmatprep.subr.mxu0 0.0
  %7823 = vmatpush2.msra.mxu0 0.0
  %7824 = vmatprep.subr.mxu0 0.0
  %7825 = vmatpush2.msra.mxu0 0.0
  %7826 = vmatprep.subr.mxu0 0.0
  %7827 = vmatpush2.msra.mxu0 0.0
  %7828 = vmatprep.subr.mxu0 0.0
  %7829 = vmatpush2.msra.mxu0 0.0
  %7830 = vmatprep.subr.mxu0 0.0
  %7831 = vmatpush2.msra.mxu0 0.0
  %7832 = vmatprep.subr.mxu0 0.0
  %7833 = vmatpush2.msra.mxu0 0.0
  %7834 = vmatprep.subr.mxu0 0.0
  %7835 = vmatpush2.msra.mxu0 0.0
  %7836 = vmatprep.subr.mxu0 0.0
  %7837 = vmatpush2.msra.mxu0 0.0
  %7838 = vmatprep.mubr.f32.mxu0 0.0
  %7839 = vmatmul.mubr.f32.gmra.mxu0 %v3830
  %v7840 = vpop.f32.mrf.mxu0
  %v7841 = vadd.f32 0.0, %v7840
  %v7842 = vpop.f32.mrf.mxu0
  %v7843 = vadd.f32 0.0, %v7842
  %7844 = vmatprep.mubr.f32.mxu0 0.0
  %7845 = vmatmul.mubr.f32.gmra.mxu0 %v3833
  %v7846 = vpop.f32.mrf.mxu0
  %v7847 = vadd.f32 0.0, %v7846
  %v7848 = vpop.f32.mrf.mxu0
  %v7849 = vadd.f32 0.0, %v7848
  %7850 = vmatprep.mubr.f32.mxu0 0.0
  %7851 = vmatmul.mubr.f32.gmra.mxu0 %v3836
  %v7852 = vpop.f32.mrf.mxu0
  %v7853 = vadd.f32 0.0, %v7852
  %v7854 = vpop.f32.mrf.mxu0
  %v7855 = vadd.f32 0.0, %v7854
  %7856 = vmatprep.mubr.f32.mxu0 0.0
  %7857 = vmatmul.mubr.f32.gmra.mxu0 %v3839
  %v7858 = vpop.f32.mrf.mxu0
  %v7859 = vadd.f32 0.0, %v7858
  %v7860 = vpop.f32.mrf.mxu0
  %v7861 = vadd.f32 0.0, %v7860
  %7862 = vdwg.mxu0
  %v7863 = vadd.f32 %v7669, %v7752
  %v7864 = vadd.f32 %v7670, %v7754
  %v7865 = vadd.f32 %v7671, %v7841
  %v7866 = vadd.f32 %v7672, %v7843
  %v7867 = vadd.f32 %v7673, %v7758
  %v7868 = vadd.f32 %v7674, %v7760
  %v7869 = vadd.f32 %v7675, %v7847
  %v7870 = vadd.f32 %v7676, %v7849
  %v7871 = vadd.f32 %v7677, %v7764
  %v7872 = vadd.f32 %v7678, %v7766
  %v7873 = vadd.f32 %v7679, %v7853
  %v7874 = vadd.f32 %v7680, %v7855
  %v7875 = vadd.f32 %v7681, %v7770
  %v7876 = vadd.f32 %v7682, %v7772
  %v7877 = vadd.f32 %v7683, %v7859
  %v7878 = vadd.f32 %v7684, %v7861
  %v7879 = vmul.f32 %v7863, %v7863
  %v7880 = vmul.f32 %v7864, %v7864
  %v7881 = vmul.f32 %v7865, %v7865
  %v7882 = vmul.f32 %v7866, %v7866
  %v7883 = vmul.f32 %v7867, %v7867
  %v7884 = vmul.f32 %v7868, %v7868
  %v7885 = vmul.f32 %v7869, %v7869
  %v7886 = vmul.f32 %v7870, %v7870
  %v7887 = vmul.f32 %v7871, %v7871
  %v7888 = vmul.f32 %v7872, %v7872
  %v7889 = vmul.f32 %v7873, %v7873
  %v7890 = vmul.f32 %v7874, %v7874
  %v7891 = vmul.f32 %v7875, %v7875
  %v7892 = vmul.f32 %v7876, %v7876
  %v7893 = vmul.f32 %v7877, %v7877
  %v7894 = vmul.f32 %v7878, %v7878
  %7895 = vmatprep.subr.mxu0 0.0
  %7896 = vmatpush1.msra.mxu0 1.0
  %7897 = vmatprep.subr.mxu0 0.0
  %7898 = vmatpush1.msra.mxu0 1.0
  %7899 = vmatprep.subr.mxu0 0.0
  %7900 = vmatpush1.msra.mxu0 1.0
  %7901 = vmatprep.subr.mxu0 0.0
  %7902 = vmatpush1.msra.mxu0 1.0
  %7903 = vmatprep.subr.mxu0 0.0
  %7904 = vmatpush1.msra.mxu0 1.0
  %7905 = vmatprep.subr.mxu0 0.0
  %7906 = vmatpush1.msra.mxu0 1.0
  %7907 = vmatprep.subr.mxu0 0.0
  %7908 = vmatpush1.msra.mxu0 1.0
  %7909 = vmatprep.subr.mxu0 0.0
  %7910 = vmatpush1.msra.mxu0 1.0
  %7911 = vmatprep.subr.mxu0 0.0
  %7912 = vmatpush1.msra.mxu0 1.0
  %7913 = vmatprep.subr.mxu0 0.0
  %7914 = vmatpush1.msra.mxu0 1.0
  %7915 = vmatprep.subr.mxu0 0.0
  %7916 = vmatpush1.msra.mxu0 1.0
  %7917 = vmatprep.subr.mxu0 0.0
  %7918 = vmatpush1.msra.mxu0 1.0
  %7919 = vmatprep.subr.mxu0 0.0
  %7920 = vmatpush1.msra.mxu0 1.0
  %7921 = vmatprep.subr.mxu0 0.0
  %7922 = vmatpush1.msra.mxu0 1.0
  %7923 = vmatprep.subr.mxu0 0.0
  %7924 = vmatpush1.msra.mxu0 1.0
  %7925 = vmatprep.subr.mxu0 0.0
  %7926 = vmatpush1.msra.mxu0 1.0
  %7927 = vmatprep.subr.mxu0 0.0
  %7928 = vmatpush2.msra.mxu0 1.0
  %7929 = vmatprep.subr.mxu0 0.0
  %7930 = vmatpush2.msra.mxu0 1.0
  %7931 = vmatprep.subr.mxu0 0.0
  %7932 = vmatpush2.msra.mxu0 1.0
  %7933 = vmatprep.subr.mxu0 0.0
  %7934 = vmatpush2.msra.mxu0 1.0
  %7935 = vmatprep.subr.mxu0 0.0
  %7936 = vmatpush2.msra.mxu0 1.0
  %7937 = vmatprep.subr.mxu0 0.0
  %7938 = vmatpush2.msra.mxu0 1.0
  %7939 = vmatprep.subr.mxu0 0.0
  %7940 = vmatpush2.msra.mxu0 1.0
  %7941 = vmatprep.subr.mxu0 0.0
  %7942 = vmatpush2.msra.mxu0 1.0
  %7943 = vmatprep.subr.mxu0 0.0
  %7944 = vmatpush2.msra.mxu0 1.0
  %7945 = vmatprep.subr.mxu0 0.0
  %7946 = vmatpush2.msra.mxu0 1.0
  %7947 = vmatprep.subr.mxu0 0.0
  %7948 = vmatpush2.msra.mxu0 1.0
  %7949 = vmatprep.subr.mxu0 0.0
  %7950 = vmatpush2.msra.mxu0 1.0
  %7951 = vmatprep.subr.mxu0 0.0
  %7952 = vmatpush2.msra.mxu0 1.0
  %7953 = vmatprep.subr.mxu0 0.0
  %7954 = vmatpush2.msra.mxu0 1.0
  %7955 = vmatprep.subr.mxu0 0.0
  %7956 = vmatpush2.msra.mxu0 1.0
  %7957 = vmatprep.subr.mxu0 0.0
  %7958 = vmatpush2.msra.mxu0 1.0
  %7959 = vmatprep.mubr.f32.mxu0 %v7864
  %7960 = vmatmul.mubr.f32.gmra.mxu0 %v7863
  %v7961 = vpop.f32.mrf.mxu0
  %v7962 = vadd.f32 0.0, %v7961
  %v7963 = vpop.f32.mrf.mxu0
  %7964 = vmatprep.mubr.f32.mxu0 %v7868
  %7965 = vmatmul.mubr.f32.gmra.mxu0 %v7867
  %v7966 = vpop.f32.mrf.mxu0
  %v7967 = vadd.f32 0.0, %v7966
  %v7968 = vpop.f32.mrf.mxu0
  %7969 = vmatprep.mubr.f32.mxu0 %v7872
  %7970 = vmatmul.mubr.f32.gmra.mxu0 %v7871
  %v7971 = vpop.f32.mrf.mxu0
  %v7972 = vadd.f32 0.0, %v7971
  %v7973 = vpop.f32.mrf.mxu0
  %7974 = vmatprep.mubr.f32.mxu0 %v7876
  %7975 = vmatmul.mubr.f32.gmra.mxu0 %v7875
  %v7976 = vpop.f32.mrf.mxu0
  %v7977 = vadd.f32 0.0, %v7976
  %v7978 = vpop.f32.mrf.mxu0
  %7979 = vmatprep.mubr.f32.mxu0 %v7880
  %7980 = vmatmul.mubr.f32.gmra.mxu0 %v7879
  %v7981 = vpop.f32.mrf.mxu0
  %v7982 = vadd.f32 0.0, %v7981
  %v7983 = vpop.f32.mrf.mxu0
  %7984 = vmatprep.mubr.f32.mxu0 %v7884
  %7985 = vmatmul.mubr.f32.gmra.mxu0 %v7883
  %v7986 = vpop.f32.mrf.mxu0
  %v7987 = vadd.f32 0.0, %v7986
  %v7988 = vpop.f32.mrf.mxu0
  %7989 = vmatprep.mubr.f32.mxu0 %v7888
  %7990 = vmatmul.mubr.f32.gmra.mxu0 %v7887
  %v7991 = vpop.f32.mrf.mxu0
  %v7992 = vadd.f32 0.0, %v7991
  %v7993 = vpop.f32.mrf.mxu0
  %7994 = vmatprep.mubr.f32.mxu0 %v7892
  %7995 = vmatmul.mubr.f32.gmra.mxu0 %v7891
  %v7996 = vpop.f32.mrf.mxu0
  %v7997 = vadd.f32 0.0, %v7996
  %v7998 = vpop.f32.mrf.mxu0
  %7999 = vdwg.mxu0
  %8000 = vmatprep.subr.mxu0 0.0
  %8001 = vmatpush1.msra.mxu0 1.0
  %8002 = vmatprep.subr.mxu0 0.0
  %8003 = vmatpush1.msra.mxu0 1.0
  %8004 = vmatprep.subr.mxu0 0.0
  %8005 = vmatpush1.msra.mxu0 1.0
  %8006 = vmatprep.subr.mxu0 0.0
  %8007 = vmatpush1.msra.mxu0 1.0
  %8008 = vmatprep.subr.mxu0 0.0
  %8009 = vmatpush1.msra.mxu0 1.0
  %8010 = vmatprep.subr.mxu0 0.0
  %8011 = vmatpush1.msra.mxu0 1.0
  %8012 = vmatprep.subr.mxu0 0.0
  %8013 = vmatpush1.msra.mxu0 1.0
  %8014 = vmatprep.subr.mxu0 0.0
  %8015 = vmatpush1.msra.mxu0 1.0
  %8016 = vmatprep.subr.mxu0 0.0
  %8017 = vmatpush1.msra.mxu0 1.0
  %8018 = vmatprep.subr.mxu0 0.0
  %8019 = vmatpush1.msra.mxu0 1.0
  %8020 = vmatprep.subr.mxu0 0.0
  %8021 = vmatpush1.msra.mxu0 1.0
  %8022 = vmatprep.subr.mxu0 0.0
  %8023 = vmatpush1.msra.mxu0 1.0
  %8024 = vmatprep.subr.mxu0 0.0
  %8025 = vmatpush1.msra.mxu0 1.0
  %8026 = vmatprep.subr.mxu0 0.0
  %8027 = vmatpush1.msra.mxu0 1.0
  %8028 = vmatprep.subr.mxu0 0.0
  %8029 = vmatpush1.msra.mxu0 1.0
  %8030 = vmatprep.subr.mxu0 0.0
  %8031 = vmatpush1.msra.mxu0 1.0
  %8032 = vmatprep.subr.mxu0 0.0
  %8033 = vmatpush2.msra.mxu0 1.0
  %8034 = vmatprep.subr.mxu0 0.0
  %8035 = vmatpush2.msra.mxu0 1.0
  %8036 = vmatprep.subr.mxu0 0.0
  %8037 = vmatpush2.msra.mxu0 1.0
  %8038 = vmatprep.subr.mxu0 0.0
  %8039 = vmatpush2.msra.mxu0 1.0
  %8040 = vmatprep.subr.mxu0 0.0
  %8041 = vmatpush2.msra.mxu0 1.0
  %8042 = vmatprep.subr.mxu0 0.0
  %8043 = vmatpush2.msra.mxu0 1.0
  %8044 = vmatprep.subr.mxu0 0.0
  %8045 = vmatpush2.msra.mxu0 1.0
  %8046 = vmatprep.subr.mxu0 0.0
  %8047 = vmatpush2.msra.mxu0 1.0
  %8048 = vmatprep.subr.mxu0 0.0
  %8049 = vmatpush2.msra.mxu0 1.0
  %8050 = vmatprep.subr.mxu0 0.0
  %8051 = vmatpush2.msra.mxu0 1.0
  %8052 = vmatprep.subr.mxu0 0.0
  %8053 = vmatpush2.msra.mxu0 1.0
  %8054 = vmatprep.subr.mxu0 0.0
  %8055 = vmatpush2.msra.mxu0 1.0
  %8056 = vmatprep.subr.mxu0 0.0
  %8057 = vmatpush2.msra.mxu0 1.0
  %8058 = vmatprep.subr.mxu0 0.0
  %8059 = vmatpush2.msra.mxu0 1.0
  %8060 = vmatprep.subr.mxu0 0.0
  %8061 = vmatpush2.msra.mxu0 1.0
  %8062 = vmatprep.subr.mxu0 0.0
  %8063 = vmatpush2.msra.mxu0 1.0
  %8064 = vmatprep.mubr.f32.mxu0 %v7866
  %8065 = vmatmul.mubr.f32.gmra.mxu0 %v7865
  %v8066 = vpop.f32.mrf.mxu0
  %v8067 = vadd.f32 %v7962, %v8066
  %v8068 = vpop.f32.mrf.mxu0
  %8069 = vmatprep.mubr.f32.mxu0 %v7870
  %8070 = vmatmul.mubr.f32.gmra.mxu0 %v7869
  %v8071 = vpop.f32.mrf.mxu0
  %v8072 = vadd.f32 %v7967, %v8071
  %v8073 = vpop.f32.mrf.mxu0
  %8074 = vmatprep.mubr.f32.mxu0 %v7874
  %8075 = vmatmul.mubr.f32.gmra.mxu0 %v7873
  %v8076 = vpop.f32.mrf.mxu0
  %v8077 = vadd.f32 %v7972, %v8076
  %v8078 = vpop.f32.mrf.mxu0
  %8079 = vmatprep.mubr.f32.mxu0 %v7878
  %8080 = vmatmul.mubr.f32.gmra.mxu0 %v7877
  %v8081 = vpop.f32.mrf.mxu0
  %v8082 = vadd.f32 %v7977, %v8081
  %v8083 = vpop.f32.mrf.mxu0
  %8084 = vmatprep.mubr.f32.mxu0 %v7882
  %8085 = vmatmul.mubr.f32.gmra.mxu0 %v7881
  %v8086 = vpop.f32.mrf.mxu0
  %v8087 = vadd.f32 %v7982, %v8086
  %v8088 = vpop.f32.mrf.mxu0
  %8089 = vmatprep.mubr.f32.mxu0 %v7886
  %8090 = vmatmul.mubr.f32.gmra.mxu0 %v7885
  %v8091 = vpop.f32.mrf.mxu0
  %v8092 = vadd.f32 %v7987, %v8091
  %v8093 = vpop.f32.mrf.mxu0
  %8094 = vmatprep.mubr.f32.mxu0 %v7890
  %8095 = vmatmul.mubr.f32.gmra.mxu0 %v7889
  %v8096 = vpop.f32.mrf.mxu0
  %v8097 = vadd.f32 %v7992, %v8096
  %v8098 = vpop.f32.mrf.mxu0
  %8099 = vmatprep.mubr.f32.mxu0 %v7894
  %8100 = vmatmul.mubr.f32.gmra.mxu0 %v7893
  %v8101 = vpop.f32.mrf.mxu0
  %v8102 = vadd.f32 %v7997, %v8101
  %v8103 = vpop.f32.mrf.mxu0
  %8104 = vdwg.mxu0
  %v8105 = vmul.f32 %v8067, 0.001953125
  %v8106 = vmul.f32 %v8072, 0.001953125
  %v8107 = vmul.f32 %v8077, 0.001953125
  %v8108 = vmul.f32 %v8082, 0.001953125
  %v8109 = vmul.f32 %v8087, 0.001953125
  %v8110 = vmul.f32 %v8092, 0.001953125
  %v8111 = vmul.f32 %v8097, 0.001953125
  %v8112 = vmul.f32 %v8102, 0.001953125
  %v8113 = vmul.f32 %v8105, %v8105
  %v8114 = vmul.f32 %v8106, %v8106
  %v8115 = vmul.f32 %v8107, %v8107
  %v8116 = vmul.f32 %v8108, %v8108
  %v8117 = vsub.f32 %v8109, %v8113
  %v8118 = vsub.f32 %v8110, %v8114
  %v8119 = vsub.f32 %v8111, %v8115
  %v8120 = vsub.f32 %v8112, %v8116
  %v8121 = vadd.f32 %v8117, 1e-05
  %v8122 = vadd.f32 %v8118, 1e-05
  %v8123 = vadd.f32 %v8119, 1e-05
  %v8124 = vadd.f32 %v8120, 1e-05
  %v8125 = vrsqrt.pop %v8121
  %v8126 = vrsqrt.pop %v8122
  %v8127 = vrsqrt.pop %v8123
  %v8128 = vrsqrt.pop %v8124
  %v8129 = vmul.f32 %v91, %v8125
  %v8130 = vmul.f32 %v92, %v8126
  %v8131 = vmul.f32 %v93, %v8127
  %v8132 = vmul.f32 %v94, %v8128
  %v8133 = vmul.f32 %v8105, %v8129
  %v8134 = vmul.f32 %v8106, %v8130
  %v8135 = vmul.f32 %v8107, %v8131
  %v8136 = vmul.f32 %v8108, %v8132
  %v8137 = vsub.f32 %v95, %v8133
  %v8138 = vsub.f32 %v96, %v8134
  %v8139 = vsub.f32 %v97, %v8135
  %v8140 = vsub.f32 %v98, %v8136
  %8142 = vset.pattern.permute.xlu0 0
  %8143 = vperm.xlu0 %8142, %v8129
  %v8144 = vpop.permute.xlu0 %8143
  %8147 = vset.pattern.permute.xlu0 0
  %8148 = vperm.xlu0 %8147, %v8130
  %v8149 = vpop.permute.xlu0 %8148
  %8152 = vset.pattern.permute.xlu0 0
  %8153 = vperm.xlu0 %8152, %v8131
  %v8154 = vpop.permute.xlu0 %8153
  %8157 = vset.pattern.permute.xlu0 0
  %8158 = vperm.xlu0 %8157, %v8132
  %v8159 = vpop.permute.xlu0 %8158
  %v8161 = vmul.f32 %v7863, %v8144
  %v8162 = vmul.f32 %v7864, %v8144
  %v8163 = vmul.f32 %v7865, %v8144
  %v8164 = vmul.f32 %v7866, %v8144
  %v8165 = vmul.f32 %v7867, %v8149
  %v8166 = vmul.f32 %v7868, %v8149
  %v8167 = vmul.f32 %v7869, %v8149
  %v8168 = vmul.f32 %v7870, %v8149
  %v8169 = vmul.f32 %v7871, %v8154
  %v8170 = vmul.f32 %v7872, %v8154
  %v8171 = vmul.f32 %v7873, %v8154
  %v8172 = vmul.f32 %v7874, %v8154
  %v8173 = vmul.f32 %v7875, %v8159
  %v8174 = vmul.f32 %v7876, %v8159
  %v8175 = vmul.f32 %v7877, %v8159
  %v8176 = vmul.f32 %v7878, %v8159
  %8178 = vset.pattern.permute.xlu0 0
  %8179 = vperm.xlu0 %8178, %v8137
  %v8180 = vpop.permute.xlu0 %8179
  %8183 = vset.pattern.permute.xlu0 0
  %8184 = vperm.xlu0 %8183, %v8138
  %v8185 = vpop.permute.xlu0 %8184
  %8188 = vset.pattern.permute.xlu0 0
  %8189 = vperm.xlu0 %8188, %v8139
  %v8190 = vpop.permute.xlu0 %8189
  %8193 = vset.pattern.permute.xlu0 0
  %8194 = vperm.xlu0 %8193, %v8140
  %v8195 = vpop.permute.xlu0 %8194
  %v8197 = vadd.f32 %v8161, %v8180
  %v8198 = vadd.f32 %v8162, %v8180
  %v8199 = vadd.f32 %v8163, %v8180
  %v8200 = vadd.f32 %v8164, %v8180
  %v8201 = vadd.f32 %v8165, %v8185
  %v8202 = vadd.f32 %v8166, %v8185
  %v8203 = vadd.f32 %v8167, %v8185
  %v8204 = vadd.f32 %v8168, %v8185
  %v8205 = vadd.f32 %v8169, %v8190
  %v8206 = vadd.f32 %v8170, %v8190
  %v8207 = vadd.f32 %v8171, %v8190
  %v8208 = vadd.f32 %v8172, %v8190
  %v8209 = vadd.f32 %v8173, %v8195
  %v8210 = vadd.f32 %v8174, %v8195
  %v8211 = vadd.f32 %v8175, %v8195
  %v8212 = vadd.f32 %v8176, %v8195
  %v8213 = vxor.u32 %v8197, 2147483648
  %v8214 = vxor.u32 %v8198, 2147483648
  %v8215 = vxor.u32 %v8199, 2147483648
  %v8216 = vxor.u32 %v8200, 2147483648
  %v8217 = vmul.f32 %v8213, 1.442695
  %v8218 = vpow.pop %v8217
  %v8219 = vmul.f32 %v8214, 1.442695
  %v8220 = vpow.pop %v8219
  %v8221 = vmul.f32 %v8215, 1.442695
  %v8222 = vpow.pop %v8221
  %v8223 = vmul.f32 %v8216, 1.442695
  %v8224 = vpow.pop %v8223
  %v8225 = vadd.f32 %v8218, 1.0
  %v8226 = vadd.f32 %v8220, 1.0
  %v8227 = vadd.f32 %v8222, 1.0
  %v8228 = vadd.f32 %v8224, 1.0
  %v8229 = vrcp.pop %v8225
  %v8230 = vmul.f32 1.0, %v8229
  %v8231 = vrcp.pop %v8226
  %v8232 = vmul.f32 1.0, %v8231
  %v8233 = vrcp.pop %v8227
  %v8234 = vmul.f32 1.0, %v8233
  %v8235 = vrcp.pop %v8228
  %v8236 = vmul.f32 1.0, %v8235
  %v8237 = vxor.u32 %v8201, 2147483648
  %v8238 = vxor.u32 %v8202, 2147483648
  %v8239 = vxor.u32 %v8203, 2147483648
  %v8240 = vxor.u32 %v8204, 2147483648
  %v8241 = vmul.f32 %v8237, 1.442695
  %v8242 = vpow.pop %v8241
  %v8243 = vmul.f32 %v8238, 1.442695
  %v8244 = vpow.pop %v8243
  %v8245 = vmul.f32 %v8239, 1.442695
  %v8246 = vpow.pop %v8245
  %v8247 = vmul.f32 %v8240, 1.442695
  %v8248 = vpow.pop %v8247
  %v8249 = vadd.f32 %v8242, 1.0
  %v8250 = vadd.f32 %v8244, 1.0
  %v8251 = vadd.f32 %v8246, 1.0
  %v8252 = vadd.f32 %v8248, 1.0
  %v8253 = vrcp.pop %v8249
  %v8254 = vmul.f32 1.0, %v8253
  %v8255 = vrcp.pop %v8250
  %v8256 = vmul.f32 1.0, %v8255
  %v8257 = vrcp.pop %v8251
  %v8258 = vmul.f32 1.0, %v8257
  %v8259 = vrcp.pop %v8252
  %v8260 = vmul.f32 1.0, %v8259
  %v8261 = vxor.u32 %v8209, 2147483648
  %v8262 = vxor.u32 %v8210, 2147483648
  %v8263 = vxor.u32 %v8211, 2147483648
  %v8264 = vxor.u32 %v8212, 2147483648
  %v8265 = vmul.f32 %v8261, 1.442695
  %v8266 = vpow.pop %v8265
  %v8267 = vmul.f32 %v8262, 1.442695
  %v8268 = vpow.pop %v8267
  %v8269 = vmul.f32 %v8263, 1.442695
  %v8270 = vpow.pop %v8269
  %v8271 = vmul.f32 %v8264, 1.442695
  %v8272 = vpow.pop %v8271
  %v8273 = vadd.f32 %v8266, 1.0
  %v8274 = vadd.f32 %v8268, 1.0
  %v8275 = vadd.f32 %v8270, 1.0
  %v8276 = vadd.f32 %v8272, 1.0
  %v8277 = vrcp.pop %v8273
  %v8278 = vmul.f32 1.0, %v8277
  %v8279 = vrcp.pop %v8274
  %v8280 = vmul.f32 1.0, %v8279
  %v8281 = vrcp.pop %v8275
  %v8282 = vmul.f32 1.0, %v8281
  %v8283 = vrcp.pop %v8276
  %v8284 = vmul.f32 1.0, %v8283
  %v8285 = vmul.f32 %v8254, %v7524
  %v8286 = vmul.f32 %v8256, %v7525
  %v8287 = vmul.f32 %v8258, %v7526
  %v8288 = vmul.f32 %v8260, %v7527
  %v8289 = vmul.f32 %v8230, %v8205
  %v8290 = vmul.f32 %v8232, %v8206
  %v8291 = vmul.f32 %v8234, %v8207
  %v8292 = vmul.f32 %v8236, %v8208
  %v8293 = vadd.f32 %v8285, %v8289
  %v8294 = vadd.f32 %v8286, %v8290
  %v8295 = vadd.f32 %v8287, %v8291
  %v8296 = vadd.f32 %v8288, %v8292
  %v8297 = vtanh.pop %v8293
  %v8298 = vtanh.pop %v8294
  %v8299 = vtanh.pop %v8295
  %v8300 = vtanh.pop %v8296
  %v8301 = vmul.f32 %v8278, %v8297
  %v8302 = vmul.f32 %v8280, %v8298
  %v8303 = vmul.f32 %v8282, %v8299
  %v8304 = vmul.f32 %v8284, %v8300
  %s8305 = scalar_lea.vmem %s6, 160
  %8306 = vst [vmem:[%s8305] sm:$0xff] %v8301
  %8307 = vst [vmem:[%s8305 + $0x8] sm:$0xff] %v8302
  %8308 = vst [vmem:[%s8305 + $0x10] sm:$0xff] %v8303
  %8309 = vst [vmem:[%s8305 + $0x18] sm:$0xff] %v8304
  %8310 = vrot.lane.b32.xlu0 %v8301, 17
  %v8311 = vpop.permute.xlu0 %8310
  %8312 = vrot.lane.b32.xlu0 %v8302, 17
  %v8313 = vpop.permute.xlu0 %8312
  %8314 = vrot.lane.b32.xlu0 %v8303, 17
  %v8315 = vpop.permute.xlu0 %8314
  %8316 = vrot.lane.b32.xlu0 %v8304, 17
  %v8317 = vpop.permute.xlu0 %8316
  %v8318 = vsel %vm197, %v8315, %v8317
  %v8319 = vsel %vm197, %v8313, %v8315
  %v8320 = vsel %vm197, %v8311, %v8313
  %v8321 = vsel %vm197, %v8317, %v8311
  %v8322 = vmul.f32 %v8321, %v233
  %v8323 = vmul.f32 %v8320, %v237
  %v8324 = vmul.f32 %v8319, %v241
  %v8325 = vmul.f32 %v8318, %v245
  %8326 = vrot.lane.b32.xlu0 %v8301, 16
  %v8327 = vpop.permute.xlu0 %8326
  %8328 = vrot.lane.b32.xlu0 %v8302, 16
  %v8329 = vpop.permute.xlu0 %8328
  %8330 = vrot.lane.b32.xlu0 %v8303, 16
  %v8331 = vpop.permute.xlu0 %8330
  %8332 = vrot.lane.b32.xlu0 %v8304, 16
  %v8333 = vpop.permute.xlu0 %8332
  %v8334 = vsel %vm454, %v8331, %v8333
  %v8335 = vsel %vm454, %v8329, %v8331
  %v8336 = vsel %vm454, %v8327, %v8329
  %v8337 = vsel %vm454, %v8333, %v8327
  %v8338 = vmul.f32 %v8337, %v490
  %v8339 = vmul.f32 %v8336, %v494
  %v8340 = vmul.f32 %v8335, %v498
  %v8341 = vmul.f32 %v8334, %v502
  %8342 = vrot.lane.b32.xlu0 %v8301, 15
  %v8343 = vpop.permute.xlu0 %8342
  %8344 = vrot.lane.b32.xlu0 %v8302, 15
  %v8345 = vpop.permute.xlu0 %8344
  %8346 = vrot.lane.b32.xlu0 %v8303, 15
  %v8347 = vpop.permute.xlu0 %8346
  %8348 = vrot.lane.b32.xlu0 %v8304, 15
  %v8349 = vpop.permute.xlu0 %8348
  %v8350 = vsel %vm711, %v8347, %v8349
  %v8351 = vsel %vm711, %v8345, %v8347
  %v8352 = vsel %vm711, %v8343, %v8345
  %v8353 = vsel %vm711, %v8349, %v8343
  %v8354 = vmul.f32 %v8353, %v747
  %v8355 = vmul.f32 %v8352, %v751
  %v8356 = vmul.f32 %v8351, %v755
  %v8357 = vmul.f32 %v8350, %v759
  %8358 = vrot.lane.b32.xlu0 %v8301, 1
  %v8359 = vpop.permute.xlu0 %8358
  %8360 = vrot.lane.b32.xlu0 %v8302, 1
  %v8361 = vpop.permute.xlu0 %8360
  %8362 = vrot.lane.b32.xlu0 %v8303, 1
  %v8363 = vpop.permute.xlu0 %8362
  %8364 = vrot.lane.b32.xlu0 %v8304, 1
  %v8365 = vpop.permute.xlu0 %8364
  %v8366 = vsel %vm968, %v8363, %v8365
  %v8367 = vsel %vm968, %v8361, %v8363
  %v8368 = vsel %vm968, %v8359, %v8361
  %v8369 = vsel %vm968, %v8365, %v8359
  %v8370 = vmul.f32 %v8369, %v1004
  %v8371 = vmul.f32 %v8368, %v1008
  %v8372 = vmul.f32 %v8367, %v1012
  %v8373 = vmul.f32 %v8366, %v1016
  %8374 = vrot.lane.b32.xlu0 %v8301, 127
  %v8375 = vpop.permute.xlu0 %8374
  %8376 = vrot.lane.b32.xlu0 %v8302, 127
  %v8377 = vpop.permute.xlu0 %8376
  %8378 = vrot.lane.b32.xlu0 %v8303, 127
  %v8379 = vpop.permute.xlu0 %8378
  %8380 = vrot.lane.b32.xlu0 %v8304, 127
  %v8381 = vpop.permute.xlu0 %8380
  %v8382 = vsel %vm1225, %v8379, %v8381
  %v8383 = vsel %vm1225, %v8377, %v8379
  %v8384 = vsel %vm1225, %v8375, %v8377
  %v8385 = vsel %vm1225, %v8381, %v8375
  %v8386 = vmul.f32 %v8384, %v1261
  %v8387 = vmul.f32 %v8383, %v1265
  %v8388 = vmul.f32 %v8382, %v1269
  %v8389 = vmul.f32 %v8385, %v1273
  %8390 = vrot.lane.b32.xlu0 %v8301, 113
  %v8391 = vpop.permute.xlu0 %8390
  %8392 = vrot.lane.b32.xlu0 %v8302, 113
  %v8393 = vpop.permute.xlu0 %8392
  %8394 = vrot.lane.b32.xlu0 %v8303, 113
  %v8395 = vpop.permute.xlu0 %8394
  %8396 = vrot.lane.b32.xlu0 %v8304, 113
  %v8397 = vpop.permute.xlu0 %8396
  %v8398 = vsel %vm1482, %v8395, %v8397
  %v8399 = vsel %vm1482, %v8393, %v8395
  %v8400 = vsel %vm1482, %v8391, %v8393
  %v8401 = vsel %vm1482, %v8397, %v8391
  %v8402 = vmul.f32 %v8400, %v1518
  %v8403 = vmul.f32 %v8399, %v1522
  %v8404 = vmul.f32 %v8398, %v1526
  %v8405 = vmul.f32 %v8401, %v1530
  %8406 = vrot.lane.b32.xlu0 %v8301, 112
  %v8407 = vpop.permute.xlu0 %8406
  %8408 = vrot.lane.b32.xlu0 %v8302, 112
  %v8409 = vpop.permute.xlu0 %8408
  %8410 = vrot.lane.b32.xlu0 %v8303, 112
  %v8411 = vpop.permute.xlu0 %8410
  %8412 = vrot.lane.b32.xlu0 %v8304, 112
  %v8413 = vpop.permute.xlu0 %8412
  %v8414 = vsel %vm1739, %v8411, %v8413
  %v8415 = vsel %vm1739, %v8409, %v8411
  %v8416 = vsel %vm1739, %v8407, %v8409
  %v8417 = vsel %vm1739, %v8413, %v8407
  %v8418 = vmul.f32 %v8416, %v1775
  %v8419 = vmul.f32 %v8415, %v1779
  %v8420 = vmul.f32 %v8414, %v1783
  %v8421 = vmul.f32 %v8417, %v1787
  %8422 = vrot.lane.b32.xlu0 %v8301, 111
  %v8423 = vpop.permute.xlu0 %8422
  %8424 = vrot.lane.b32.xlu0 %v8302, 111
  %v8425 = vpop.permute.xlu0 %8424
  %8426 = vrot.lane.b32.xlu0 %v8303, 111
  %v8427 = vpop.permute.xlu0 %8426
  %8428 = vrot.lane.b32.xlu0 %v8304, 111
  %v8429 = vpop.permute.xlu0 %8428
  %v8430 = vsel %vm1996, %v8427, %v8429
  %v8431 = vsel %vm1996, %v8425, %v8427
  %v8432 = vsel %vm1996, %v8423, %v8425
  %v8433 = vsel %vm1996, %v8429, %v8423
  %v8434 = vmul.f32 %v8432, %v2032
  %v8435 = vmul.f32 %v8431, %v2036
  %v8436 = vmul.f32 %v8430, %v2040
  %v8437 = vmul.f32 %v8433, %v2044
  %v8438 = vld [vmem:[%s3731] sm:$0xff]
  %v8439 = vld [vmem:[%s3731 + $0x8] sm:$0xff]
  %v8440 = vld [vmem:[%s3731 + $0x10] sm:$0xff]
  %v8441 = vld [vmem:[%s3731 + $0x18] sm:$0xff]
  %v8442 = vld [vmem:[%s3731 + $0x20] sm:$0xff]
  %v8443 = vld [vmem:[%s3731 + $0x28] sm:$0xff]
  %v8444 = vld [vmem:[%s3731 + $0x30] sm:$0xff]
  %v8445 = vld [vmem:[%s3731 + $0x38] sm:$0xff]
  %v8446 = vld [vmem:[%s3731 + $0x40] sm:$0xff]
  %v8447 = vld [vmem:[%s3731 + $0x48] sm:$0xff]
  %v8448 = vld [vmem:[%s3731 + $0x50] sm:$0xff]
  %v8449 = vld [vmem:[%s3731 + $0x58] sm:$0xff]
  %v8450 = vld [vmem:[%s3731 + $0x60] sm:$0xff]
  %v8451 = vld [vmem:[%s3731 + $0x68] sm:$0xff]
  %v8452 = vld [vmem:[%s3731 + $0x70] sm:$0xff]
  %v8453 = vld [vmem:[%s3731 + $0x78] sm:$0xff]
  %8454 = vmatprep.subr.mxu0 0.0
  %8455 = vmatpush1.msra.mxu0 0.0
  %8456 = vmatprep.subr.mxu0 0.0
  %8457 = vmatpush1.msra.mxu0 0.0
  %8458 = vmatprep.subr.mxu0 0.0
  %8459 = vmatpush1.msra.mxu0 0.0
  %8460 = vmatprep.subr.mxu0 0.0
  %8461 = vmatpush1.msra.mxu0 0.0
  %8462 = vmatprep.subr.mxu0 0.0
  %8463 = vmatpush1.msra.mxu0 0.0
  %8464 = vmatprep.subr.mxu0 0.0
  %8465 = vmatpush1.msra.mxu0 0.0
  %8466 = vmatprep.subr.mxu0 0.0
  %8467 = vmatpush1.msra.mxu0 0.0
  %8468 = vmatprep.subr.mxu0 %v8435
  %8469 = vmatpush1.msra.mxu0 %v8434
  %8470 = vmatprep.subr.mxu0 %v8419
  %8471 = vmatpush1.msra.mxu0 %v8418
  %8472 = vmatprep.subr.mxu0 %v8403
  %8473 = vmatpush1.msra.mxu0 %v8402
  %8474 = vmatprep.subr.mxu0 %v8387
  %8475 = vmatpush1.msra.mxu0 %v8386
  %8476 = vmatprep.subr.mxu0 %v8302
  %8477 = vmatpush1.msra.mxu0 %v8301
  %8478 = vmatprep.subr.mxu0 %v8371
  %8479 = vmatpush1.msra.mxu0 %v8370
  %8480 = vmatprep.subr.mxu0 %v8355
  %8481 = vmatpush1.msra.mxu0 %v8354
  %8482 = vmatprep.subr.mxu0 %v8339
  %8483 = vmatpush1.msra.mxu0 %v8338
  %8484 = vmatprep.subr.mxu0 %v8323
  %8485 = vmatpush1.msra.mxu0 %v8322
  %8486 = vmatprep.subr.mxu0 0.0
  %8487 = vmatpush2.msra.mxu0 0.0
  %8488 = vmatprep.subr.mxu0 0.0
  %8489 = vmatpush2.msra.mxu0 0.0
  %8490 = vmatprep.subr.mxu0 0.0
  %8491 = vmatpush2.msra.mxu0 0.0
  %8492 = vmatprep.subr.mxu0 0.0
  %8493 = vmatpush2.msra.mxu0 0.0
  %8494 = vmatprep.subr.mxu0 0.0
  %8495 = vmatpush2.msra.mxu0 0.0
  %8496 = vmatprep.subr.mxu0 0.0
  %8497 = vmatpush2.msra.mxu0 0.0
  %8498 = vmatprep.subr.mxu0 0.0
  %8499 = vmatpush2.msra.mxu0 0.0
  %8500 = vmatprep.subr.mxu0 0.0
  %8501 = vmatpush2.msra.mxu0 0.0
  %8502 = vmatprep.subr.mxu0 0.0
  %8503 = vmatpush2.msra.mxu0 0.0
  %8504 = vmatprep.subr.mxu0 0.0
  %8505 = vmatpush2.msra.mxu0 0.0
  %8506 = vmatprep.subr.mxu0 0.0
  %8507 = vmatpush2.msra.mxu0 0.0
  %8508 = vmatprep.subr.mxu0 0.0
  %8509 = vmatpush2.msra.mxu0 0.0
  %8510 = vmatprep.subr.mxu0 0.0
  %8511 = vmatpush2.msra.mxu0 0.0
  %8512 = vmatprep.subr.mxu0 0.0
  %8513 = vmatpush2.msra.mxu0 0.0
  %8514 = vmatprep.subr.mxu0 0.0
  %8515 = vmatpush2.msra.mxu0 0.0
  %8516 = vmatprep.subr.mxu0 0.0
  %8517 = vmatpush2.msra.mxu0 0.0
  %8518 = vmatprep.mubr.f32.mxu0 0.0
  %8519 = vmatmul.mubr.f32.gmra.mxu0 %v3830
  %v8520 = vpop.f32.mrf.mxu0
  %v8521 = vadd.f32 0.0, %v8520
  %v8522 = vpop.f32.mrf.mxu0
  %v8523 = vadd.f32 0.0, %v8522
  %8524 = vmatprep.mubr.f32.mxu0 0.0
  %8525 = vmatmul.mubr.f32.gmra.mxu0 %v3833
  %v8526 = vpop.f32.mrf.mxu0
  %v8527 = vadd.f32 0.0, %v8526
  %v8528 = vpop.f32.mrf.mxu0
  %v8529 = vadd.f32 0.0, %v8528
  %8530 = vmatprep.mubr.f32.mxu0 0.0
  %8531 = vmatmul.mubr.f32.gmra.mxu0 %v3836
  %v8532 = vpop.f32.mrf.mxu0
  %v8533 = vadd.f32 0.0, %v8532
  %v8534 = vpop.f32.mrf.mxu0
  %v8535 = vadd.f32 0.0, %v8534
  %8536 = vmatprep.mubr.f32.mxu0 0.0
  %8537 = vmatmul.mubr.f32.gmra.mxu0 %v3839
  %v8538 = vpop.f32.mrf.mxu0
  %v8539 = vadd.f32 0.0, %v8538
  %v8540 = vpop.f32.mrf.mxu0
  %v8541 = vadd.f32 0.0, %v8540
  %8542 = vdwg.mxu0
  %8543 = vmatprep.subr.mxu0 0.0
  %8544 = vmatpush1.msra.mxu0 0.0
  %8545 = vmatprep.subr.mxu0 0.0
  %8546 = vmatpush1.msra.mxu0 0.0
  %8547 = vmatprep.subr.mxu0 0.0
  %8548 = vmatpush1.msra.mxu0 0.0
  %8549 = vmatprep.subr.mxu0 0.0
  %8550 = vmatpush1.msra.mxu0 0.0
  %8551 = vmatprep.subr.mxu0 0.0
  %8552 = vmatpush1.msra.mxu0 0.0
  %8553 = vmatprep.subr.mxu0 0.0
  %8554 = vmatpush1.msra.mxu0 0.0
  %8555 = vmatprep.subr.mxu0 0.0
  %8556 = vmatpush1.msra.mxu0 0.0
  %8557 = vmatprep.subr.mxu0 %v8437
  %8558 = vmatpush1.msra.mxu0 %v8436
  %8559 = vmatprep.subr.mxu0 %v8421
  %8560 = vmatpush1.msra.mxu0 %v8420
  %8561 = vmatprep.subr.mxu0 %v8405
  %8562 = vmatpush1.msra.mxu0 %v8404
  %8563 = vmatprep.subr.mxu0 %v8389
  %8564 = vmatpush1.msra.mxu0 %v8388
  %8565 = vmatprep.subr.mxu0 %v8304
  %8566 = vmatpush1.msra.mxu0 %v8303
  %8567 = vmatprep.subr.mxu0 %v8373
  %8568 = vmatpush1.msra.mxu0 %v8372
  %8569 = vmatprep.subr.mxu0 %v8357
  %8570 = vmatpush1.msra.mxu0 %v8356
  %8571 = vmatprep.subr.mxu0 %v8341
  %8572 = vmatpush1.msra.mxu0 %v8340
  %8573 = vmatprep.subr.mxu0 %v8325
  %8574 = vmatpush1.msra.mxu0 %v8324
  %8575 = vmatprep.subr.mxu0 0.0
  %8576 = vmatpush2.msra.mxu0 0.0
  %8577 = vmatprep.subr.mxu0 0.0
  %8578 = vmatpush2.msra.mxu0 0.0
  %8579 = vmatprep.subr.mxu0 0.0
  %8580 = vmatpush2.msra.mxu0 0.0
  %8581 = vmatprep.subr.mxu0 0.0
  %8582 = vmatpush2.msra.mxu0 0.0
  %8583 = vmatprep.subr.mxu0 0.0
  %8584 = vmatpush2.msra.mxu0 0.0
  %8585 = vmatprep.subr.mxu0 0.0
  %8586 = vmatpush2.msra.mxu0 0.0
  %8587 = vmatprep.subr.mxu0 0.0
  %8588 = vmatpush2.msra.mxu0 0.0
  %8589 = vmatprep.subr.mxu0 0.0
  %8590 = vmatpush2.msra.mxu0 0.0
  %8591 = vmatprep.subr.mxu0 0.0
  %8592 = vmatpush2.msra.mxu0 0.0
  %8593 = vmatprep.subr.mxu0 0.0
  %8594 = vmatpush2.msra.mxu0 0.0
  %8595 = vmatprep.subr.mxu0 0.0
  %8596 = vmatpush2.msra.mxu0 0.0
  %8597 = vmatprep.subr.mxu0 0.0
  %8598 = vmatpush2.msra.mxu0 0.0
  %8599 = vmatprep.subr.mxu0 0.0
  %8600 = vmatpush2.msra.mxu0 0.0
  %8601 = vmatprep.subr.mxu0 0.0
  %8602 = vmatpush2.msra.mxu0 0.0
  %8603 = vmatprep.subr.mxu0 0.0
  %8604 = vmatpush2.msra.mxu0 0.0
  %8605 = vmatprep.subr.mxu0 0.0
  %8606 = vmatpush2.msra.mxu0 0.0
  %8607 = vmatprep.mubr.f32.mxu0 0.0
  %8608 = vmatmul.mubr.f32.gmra.mxu0 %v3830
  %v8609 = vpop.f32.mrf.mxu0
  %v8610 = vadd.f32 0.0, %v8609
  %v8611 = vpop.f32.mrf.mxu0
  %v8612 = vadd.f32 0.0, %v8611
  %8613 = vmatprep.mubr.f32.mxu0 0.0
  %8614 = vmatmul.mubr.f32.gmra.mxu0 %v3833
  %v8615 = vpop.f32.mrf.mxu0
  %v8616 = vadd.f32 0.0, %v8615
  %v8617 = vpop.f32.mrf.mxu0
  %v8618 = vadd.f32 0.0, %v8617
  %8619 = vmatprep.mubr.f32.mxu0 0.0
  %8620 = vmatmul.mubr.f32.gmra.mxu0 %v3836
  %v8621 = vpop.f32.mrf.mxu0
  %v8622 = vadd.f32 0.0, %v8621
  %v8623 = vpop.f32.mrf.mxu0
  %v8624 = vadd.f32 0.0, %v8623
  %8625 = vmatprep.mubr.f32.mxu0 0.0
  %8626 = vmatmul.mubr.f32.gmra.mxu0 %v3839
  %v8627 = vpop.f32.mrf.mxu0
  %v8628 = vadd.f32 0.0, %v8627
  %v8629 = vpop.f32.mrf.mxu0
  %v8630 = vadd.f32 0.0, %v8629
  %8631 = vdwg.mxu0
  %v8632 = vadd.f32 %v8438, %v8521
  %v8633 = vadd.f32 %v8439, %v8523
  %v8634 = vadd.f32 %v8440, %v8610
  %v8635 = vadd.f32 %v8441, %v8612
  %v8636 = vadd.f32 %v8442, %v8527
  %v8637 = vadd.f32 %v8443, %v8529
  %v8638 = vadd.f32 %v8444, %v8616
  %v8639 = vadd.f32 %v8445, %v8618
  %v8640 = vadd.f32 %v8446, %v8533
  %v8641 = vadd.f32 %v8447, %v8535
  %v8642 = vadd.f32 %v8448, %v8622
  %v8643 = vadd.f32 %v8449, %v8624
  %v8644 = vadd.f32 %v8450, %v8539
  %v8645 = vadd.f32 %v8451, %v8541
  %v8646 = vadd.f32 %v8452, %v8628
  %v8647 = vadd.f32 %v8453, %v8630
  %v8648 = vmul.f32 %v8632, %v8632
  %v8649 = vmul.f32 %v8633, %v8633
  %v8650 = vmul.f32 %v8634, %v8634
  %v8651 = vmul.f32 %v8635, %v8635
  %v8652 = vmul.f32 %v8636, %v8636
  %v8653 = vmul.f32 %v8637, %v8637
  %v8654 = vmul.f32 %v8638, %v8638
  %v8655 = vmul.f32 %v8639, %v8639
  %v8656 = vmul.f32 %v8640, %v8640
  %v8657 = vmul.f32 %v8641, %v8641
  %v8658 = vmul.f32 %v8642, %v8642
  %v8659 = vmul.f32 %v8643, %v8643
  %v8660 = vmul.f32 %v8644, %v8644
  %v8661 = vmul.f32 %v8645, %v8645
  %v8662 = vmul.f32 %v8646, %v8646
  %v8663 = vmul.f32 %v8647, %v8647
  %8664 = vmatprep.subr.mxu0 0.0
  %8665 = vmatpush1.msra.mxu0 1.0
  %8666 = vmatprep.subr.mxu0 0.0
  %8667 = vmatpush1.msra.mxu0 1.0
  %8668 = vmatprep.subr.mxu0 0.0
  %8669 = vmatpush1.msra.mxu0 1.0
  %8670 = vmatprep.subr.mxu0 0.0
  %8671 = vmatpush1.msra.mxu0 1.0
  %8672 = vmatprep.subr.mxu0 0.0
  %8673 = vmatpush1.msra.mxu0 1.0
  %8674 = vmatprep.subr.mxu0 0.0
  %8675 = vmatpush1.msra.mxu0 1.0
  %8676 = vmatprep.subr.mxu0 0.0
  %8677 = vmatpush1.msra.mxu0 1.0
  %8678 = vmatprep.subr.mxu0 0.0
  %8679 = vmatpush1.msra.mxu0 1.0
  %8680 = vmatprep.subr.mxu0 0.0
  %8681 = vmatpush1.msra.mxu0 1.0
  %8682 = vmatprep.subr.mxu0 0.0
  %8683 = vmatpush1.msra.mxu0 1.0
  %8684 = vmatprep.subr.mxu0 0.0
  %8685 = vmatpush1.msra.mxu0 1.0
  %8686 = vmatprep.subr.mxu0 0.0
  %8687 = vmatpush1.msra.mxu0 1.0
  %8688 = vmatprep.subr.mxu0 0.0
  %8689 = vmatpush1.msra.mxu0 1.0
  %8690 = vmatprep.subr.mxu0 0.0
  %8691 = vmatpush1.msra.mxu0 1.0
  %8692 = vmatprep.subr.mxu0 0.0
  %8693 = vmatpush1.msra.mxu0 1.0
  %8694 = vmatprep.subr.mxu0 0.0
  %8695 = vmatpush1.msra.mxu0 1.0
  %8696 = vmatprep.subr.mxu0 0.0
  %8697 = vmatpush2.msra.mxu0 1.0
  %8698 = vmatprep.subr.mxu0 0.0
  %8699 = vmatpush2.msra.mxu0 1.0
  %8700 = vmatprep.subr.mxu0 0.0
  %8701 = vmatpush2.msra.mxu0 1.0
  %8702 = vmatprep.subr.mxu0 0.0
  %8703 = vmatpush2.msra.mxu0 1.0
  %8704 = vmatprep.subr.mxu0 0.0
  %8705 = vmatpush2.msra.mxu0 1.0
  %8706 = vmatprep.subr.mxu0 0.0
  %8707 = vmatpush2.msra.mxu0 1.0
  %8708 = vmatprep.subr.mxu0 0.0
  %8709 = vmatpush2.msra.mxu0 1.0
  %8710 = vmatprep.subr.mxu0 0.0
  %8711 = vmatpush2.msra.mxu0 1.0
  %8712 = vmatprep.subr.mxu0 0.0
  %8713 = vmatpush2.msra.mxu0 1.0
  %8714 = vmatprep.subr.mxu0 0.0
  %8715 = vmatpush2.msra.mxu0 1.0
  %8716 = vmatprep.subr.mxu0 0.0
  %8717 = vmatpush2.msra.mxu0 1.0
  %8718 = vmatprep.subr.mxu0 0.0
  %8719 = vmatpush2.msra.mxu0 1.0
  %8720 = vmatprep.subr.mxu0 0.0
  %8721 = vmatpush2.msra.mxu0 1.0
  %8722 = vmatprep.subr.mxu0 0.0
  %8723 = vmatpush2.msra.mxu0 1.0
  %8724 = vmatprep.subr.mxu0 0.0
  %8725 = vmatpush2.msra.mxu0 1.0
  %8726 = vmatprep.subr.mxu0 0.0
  %8727 = vmatpush2.msra.mxu0 1.0
  %8728 = vmatprep.mubr.f32.mxu0 %v8633
  %8729 = vmatmul.mubr.f32.gmra.mxu0 %v8632
  %v8730 = vpop.f32.mrf.mxu0
  %v8731 = vadd.f32 0.0, %v8730
  %v8732 = vpop.f32.mrf.mxu0
  %8733 = vmatprep.mubr.f32.mxu0 %v8637
  %8734 = vmatmul.mubr.f32.gmra.mxu0 %v8636
  %v8735 = vpop.f32.mrf.mxu0
  %v8736 = vadd.f32 0.0, %v8735
  %v8737 = vpop.f32.mrf.mxu0
  %8738 = vmatprep.mubr.f32.mxu0 %v8641
  %8739 = vmatmul.mubr.f32.gmra.mxu0 %v8640
  %v8740 = vpop.f32.mrf.mxu0
  %v8741 = vadd.f32 0.0, %v8740
  %v8742 = vpop.f32.mrf.mxu0
  %8743 = vmatprep.mubr.f32.mxu0 %v8645
  %8744 = vmatmul.mubr.f32.gmra.mxu0 %v8644
  %v8745 = vpop.f32.mrf.mxu0
  %v8746 = vadd.f32 0.0, %v8745
  %v8747 = vpop.f32.mrf.mxu0
  %8748 = vmatprep.mubr.f32.mxu0 %v8649
  %8749 = vmatmul.mubr.f32.gmra.mxu0 %v8648
  %v8750 = vpop.f32.mrf.mxu0
  %v8751 = vadd.f32 0.0, %v8750
  %v8752 = vpop.f32.mrf.mxu0
  %8753 = vmatprep.mubr.f32.mxu0 %v8653
  %8754 = vmatmul.mubr.f32.gmra.mxu0 %v8652
  %v8755 = vpop.f32.mrf.mxu0
  %v8756 = vadd.f32 0.0, %v8755
  %v8757 = vpop.f32.mrf.mxu0
  %8758 = vmatprep.mubr.f32.mxu0 %v8657
  %8759 = vmatmul.mubr.f32.gmra.mxu0 %v8656
  %v8760 = vpop.f32.mrf.mxu0
  %v8761 = vadd.f32 0.0, %v8760
  %v8762 = vpop.f32.mrf.mxu0
  %8763 = vmatprep.mubr.f32.mxu0 %v8661
  %8764 = vmatmul.mubr.f32.gmra.mxu0 %v8660
  %v8765 = vpop.f32.mrf.mxu0
  %v8766 = vadd.f32 0.0, %v8765
  %v8767 = vpop.f32.mrf.mxu0
  %8768 = vdwg.mxu0
  %8769 = vmatprep.subr.mxu0 0.0
  %8770 = vmatpush1.msra.mxu0 1.0
  %8771 = vmatprep.subr.mxu0 0.0
  %8772 = vmatpush1.msra.mxu0 1.0
  %8773 = vmatprep.subr.mxu0 0.0
  %8774 = vmatpush1.msra.mxu0 1.0
  %8775 = vmatprep.subr.mxu0 0.0
  %8776 = vmatpush1.msra.mxu0 1.0
  %8777 = vmatprep.subr.mxu0 0.0
  %8778 = vmatpush1.msra.mxu0 1.0
  %8779 = vmatprep.subr.mxu0 0.0
  %8780 = vmatpush1.msra.mxu0 1.0
  %8781 = vmatprep.subr.mxu0 0.0
  %8782 = vmatpush1.msra.mxu0 1.0
  %8783 = vmatprep.subr.mxu0 0.0
  %8784 = vmatpush1.msra.mxu0 1.0
  %8785 = vmatprep.subr.mxu0 0.0
  %8786 = vmatpush1.msra.mxu0 1.0
  %8787 = vmatprep.subr.mxu0 0.0
  %8788 = vmatpush1.msra.mxu0 1.0
  %8789 = vmatprep.subr.mxu0 0.0
  %8790 = vmatpush1.msra.mxu0 1.0
  %8791 = vmatprep.subr.mxu0 0.0
  %8792 = vmatpush1.msra.mxu0 1.0
  %8793 = vmatprep.subr.mxu0 0.0
  %8794 = vmatpush1.msra.mxu0 1.0
  %8795 = vmatprep.subr.mxu0 0.0
  %8796 = vmatpush1.msra.mxu0 1.0
  %8797 = vmatprep.subr.mxu0 0.0
  %8798 = vmatpush1.msra.mxu0 1.0
  %8799 = vmatprep.subr.mxu0 0.0
  %8800 = vmatpush1.msra.mxu0 1.0
  %8801 = vmatprep.subr.mxu0 0.0
  %8802 = vmatpush2.msra.mxu0 1.0
  %8803 = vmatprep.subr.mxu0 0.0
  %8804 = vmatpush2.msra.mxu0 1.0
  %8805 = vmatprep.subr.mxu0 0.0
  %8806 = vmatpush2.msra.mxu0 1.0
  %8807 = vmatprep.subr.mxu0 0.0
  %8808 = vmatpush2.msra.mxu0 1.0
  %8809 = vmatprep.subr.mxu0 0.0
  %8810 = vmatpush2.msra.mxu0 1.0
  %8811 = vmatprep.subr.mxu0 0.0
  %8812 = vmatpush2.msra.mxu0 1.0
  %8813 = vmatprep.subr.mxu0 0.0
  %8814 = vmatpush2.msra.mxu0 1.0
  %8815 = vmatprep.subr.mxu0 0.0
  %8816 = vmatpush2.msra.mxu0 1.0
  %8817 = vmatprep.subr.mxu0 0.0
  %8818 = vmatpush2.msra.mxu0 1.0
  %8819 = vmatprep.subr.mxu0 0.0
  %8820 = vmatpush2.msra.mxu0 1.0
  %8821 = vmatprep.subr.mxu0 0.0
  %8822 = vmatpush2.msra.mxu0 1.0
  %8823 = vmatprep.subr.mxu0 0.0
  %8824 = vmatpush2.msra.mxu0 1.0
  %8825 = vmatprep.subr.mxu0 0.0
  %8826 = vmatpush2.msra.mxu0 1.0
  %8827 = vmatprep.subr.mxu0 0.0
  %8828 = vmatpush2.msra.mxu0 1.0
  %8829 = vmatprep.subr.mxu0 0.0
  %8830 = vmatpush2.msra.mxu0 1.0
  %8831 = vmatprep.subr.mxu0 0.0
  %8832 = vmatpush2.msra.mxu0 1.0
  %8833 = vmatprep.mubr.f32.mxu0 %v8635
  %8834 = vmatmul.mubr.f32.gmra.mxu0 %v8634
  %v8835 = vpop.f32.mrf.mxu0
  %v8836 = vadd.f32 %v8731, %v8835
  %v8837 = vpop.f32.mrf.mxu0
  %8838 = vmatprep.mubr.f32.mxu0 %v8639
  %8839 = vmatmul.mubr.f32.gmra.mxu0 %v8638
  %v8840 = vpop.f32.mrf.mxu0
  %v8841 = vadd.f32 %v8736, %v8840
  %v8842 = vpop.f32.mrf.mxu0
  %8843 = vmatprep.mubr.f32.mxu0 %v8643
  %8844 = vmatmul.mubr.f32.gmra.mxu0 %v8642
  %v8845 = vpop.f32.mrf.mxu0
  %v8846 = vadd.f32 %v8741, %v8845
  %v8847 = vpop.f32.mrf.mxu0
  %8848 = vmatprep.mubr.f32.mxu0 %v8647
  %8849 = vmatmul.mubr.f32.gmra.mxu0 %v8646
  %v8850 = vpop.f32.mrf.mxu0
  %v8851 = vadd.f32 %v8746, %v8850
  %v8852 = vpop.f32.mrf.mxu0
  %8853 = vmatprep.mubr.f32.mxu0 %v8651
  %8854 = vmatmul.mubr.f32.gmra.mxu0 %v8650
  %v8855 = vpop.f32.mrf.mxu0
  %v8856 = vadd.f32 %v8751, %v8855
  %v8857 = vpop.f32.mrf.mxu0
  %8858 = vmatprep.mubr.f32.mxu0 %v8655
  %8859 = vmatmul.mubr.f32.gmra.mxu0 %v8654
  %v8860 = vpop.f32.mrf.mxu0
  %v8861 = vadd.f32 %v8756, %v8860
  %v8862 = vpop.f32.mrf.mxu0
  %8863 = vmatprep.mubr.f32.mxu0 %v8659
  %8864 = vmatmul.mubr.f32.gmra.mxu0 %v8658
  %v8865 = vpop.f32.mrf.mxu0
  %v8866 = vadd.f32 %v8761, %v8865
  %v8867 = vpop.f32.mrf.mxu0
  %8868 = vmatprep.mubr.f32.mxu0 %v8663
  %8869 = vmatmul.mubr.f32.gmra.mxu0 %v8662
  %v8870 = vpop.f32.mrf.mxu0
  %v8871 = vadd.f32 %v8766, %v8870
  %v8872 = vpop.f32.mrf.mxu0
  %8873 = vdwg.mxu0
  %v8874 = vmul.f32 %v8836, 0.001953125
  %v8875 = vmul.f32 %v8841, 0.001953125
  %v8876 = vmul.f32 %v8846, 0.001953125
  %v8877 = vmul.f32 %v8851, 0.001953125
  %v8878 = vmul.f32 %v8856, 0.001953125
  %v8879 = vmul.f32 %v8861, 0.001953125
  %v8880 = vmul.f32 %v8866, 0.001953125
  %v8881 = vmul.f32 %v8871, 0.001953125
  %v8882 = vmul.f32 %v8874, %v8874
  %v8883 = vmul.f32 %v8875, %v8875
  %v8884 = vmul.f32 %v8876, %v8876
  %v8885 = vmul.f32 %v8877, %v8877
  %v8886 = vsub.f32 %v8878, %v8882
  %v8887 = vsub.f32 %v8879, %v8883
  %v8888 = vsub.f32 %v8880, %v8884
  %v8889 = vsub.f32 %v8881, %v8885
  %v8890 = vadd.f32 %v8886, 1e-05
  %v8891 = vadd.f32 %v8887, 1e-05
  %v8892 = vadd.f32 %v8888, 1e-05
  %v8893 = vadd.f32 %v8889, 1e-05
  %v8894 = vrsqrt.pop %v8890
  %v8895 = vrsqrt.pop %v8891
  %v8896 = vrsqrt.pop %v8892
  %v8897 = vrsqrt.pop %v8893
  %v8898 = vmul.f32 %v91, %v8894
  %v8899 = vmul.f32 %v92, %v8895
  %v8900 = vmul.f32 %v93, %v8896
  %v8901 = vmul.f32 %v94, %v8897
  %v8902 = vmul.f32 %v8874, %v8898
  %v8903 = vmul.f32 %v8875, %v8899
  %v8904 = vmul.f32 %v8876, %v8900
  %v8905 = vmul.f32 %v8877, %v8901
  %v8906 = vsub.f32 %v95, %v8902
  %v8907 = vsub.f32 %v96, %v8903
  %v8908 = vsub.f32 %v97, %v8904
  %v8909 = vsub.f32 %v98, %v8905
  %8911 = vset.pattern.permute.xlu0 0
  %8912 = vperm.xlu0 %8911, %v8898
  %v8913 = vpop.permute.xlu0 %8912
  %8916 = vset.pattern.permute.xlu0 0
  %8917 = vperm.xlu0 %8916, %v8899
  %v8918 = vpop.permute.xlu0 %8917
  %8921 = vset.pattern.permute.xlu0 0
  %8922 = vperm.xlu0 %8921, %v8900
  %v8923 = vpop.permute.xlu0 %8922
  %8926 = vset.pattern.permute.xlu0 0
  %8927 = vperm.xlu0 %8926, %v8901
  %v8928 = vpop.permute.xlu0 %8927
  %v8930 = vmul.f32 %v8632, %v8913
  %v8931 = vmul.f32 %v8633, %v8913
  %v8932 = vmul.f32 %v8634, %v8913
  %v8933 = vmul.f32 %v8635, %v8913
  %v8934 = vmul.f32 %v8636, %v8918
  %v8935 = vmul.f32 %v8637, %v8918
  %v8936 = vmul.f32 %v8638, %v8918
  %v8937 = vmul.f32 %v8639, %v8918
  %v8938 = vmul.f32 %v8640, %v8923
  %v8939 = vmul.f32 %v8641, %v8923
  %v8940 = vmul.f32 %v8642, %v8923
  %v8941 = vmul.f32 %v8643, %v8923
  %v8942 = vmul.f32 %v8644, %v8928
  %v8943 = vmul.f32 %v8645, %v8928
  %v8944 = vmul.f32 %v8646, %v8928
  %v8945 = vmul.f32 %v8647, %v8928
  %8947 = vset.pattern.permute.xlu0 0
  %8948 = vperm.xlu0 %8947, %v8906
  %v8949 = vpop.permute.xlu0 %8948
  %8952 = vset.pattern.permute.xlu0 0
  %8953 = vperm.xlu0 %8952, %v8907
  %v8954 = vpop.permute.xlu0 %8953
  %8957 = vset.pattern.permute.xlu0 0
  %8958 = vperm.xlu0 %8957, %v8908
  %v8959 = vpop.permute.xlu0 %8958
  %8962 = vset.pattern.permute.xlu0 0
  %8963 = vperm.xlu0 %8962, %v8909
  %v8964 = vpop.permute.xlu0 %8963
  %v8966 = vadd.f32 %v8930, %v8949
  %v8967 = vadd.f32 %v8931, %v8949
  %v8968 = vadd.f32 %v8932, %v8949
  %v8969 = vadd.f32 %v8933, %v8949
  %v8970 = vadd.f32 %v8934, %v8954
  %v8971 = vadd.f32 %v8935, %v8954
  %v8972 = vadd.f32 %v8936, %v8954
  %v8973 = vadd.f32 %v8937, %v8954
  %v8974 = vadd.f32 %v8938, %v8959
  %v8975 = vadd.f32 %v8939, %v8959
  %v8976 = vadd.f32 %v8940, %v8959
  %v8977 = vadd.f32 %v8941, %v8959
  %v8978 = vadd.f32 %v8942, %v8964
  %v8979 = vadd.f32 %v8943, %v8964
  %v8980 = vadd.f32 %v8944, %v8964
  %v8981 = vadd.f32 %v8945, %v8964
  %v8982 = vxor.u32 %v8966, 2147483648
  %v8983 = vxor.u32 %v8967, 2147483648
  %v8984 = vxor.u32 %v8968, 2147483648
  %v8985 = vxor.u32 %v8969, 2147483648
  %v8986 = vmul.f32 %v8982, 1.442695
  %v8987 = vpow.pop %v8986
  %v8988 = vmul.f32 %v8983, 1.442695
  %v8989 = vpow.pop %v8988
  %v8990 = vmul.f32 %v8984, 1.442695
  %v8991 = vpow.pop %v8990
  %v8992 = vmul.f32 %v8985, 1.442695
  %v8993 = vpow.pop %v8992
  %v8994 = vadd.f32 %v8987, 1.0
  %v8995 = vadd.f32 %v8989, 1.0
  %v8996 = vadd.f32 %v8991, 1.0
  %v8997 = vadd.f32 %v8993, 1.0
  %v8998 = vrcp.pop %v8994
  %v8999 = vmul.f32 1.0, %v8998
  %v9000 = vrcp.pop %v8995
  %v9001 = vmul.f32 1.0, %v9000
  %v9002 = vrcp.pop %v8996
  %v9003 = vmul.f32 1.0, %v9002
  %v9004 = vrcp.pop %v8997
  %v9005 = vmul.f32 1.0, %v9004
  %v9006 = vxor.u32 %v8970, 2147483648
  %v9007 = vxor.u32 %v8971, 2147483648
  %v9008 = vxor.u32 %v8972, 2147483648
  %v9009 = vxor.u32 %v8973, 2147483648
  %v9010 = vmul.f32 %v9006, 1.442695
  %v9011 = vpow.pop %v9010
  %v9012 = vmul.f32 %v9007, 1.442695
  %v9013 = vpow.pop %v9012
  %v9014 = vmul.f32 %v9008, 1.442695
  %v9015 = vpow.pop %v9014
  %v9016 = vmul.f32 %v9009, 1.442695
  %v9017 = vpow.pop %v9016
  %v9018 = vadd.f32 %v9011, 1.0
  %v9019 = vadd.f32 %v9013, 1.0
  %v9020 = vadd.f32 %v9015, 1.0
  %v9021 = vadd.f32 %v9017, 1.0
  %v9022 = vrcp.pop %v9018
  %v9023 = vmul.f32 1.0, %v9022
  %v9024 = vrcp.pop %v9019
  %v9025 = vmul.f32 1.0, %v9024
  %v9026 = vrcp.pop %v9020
  %v9027 = vmul.f32 1.0, %v9026
  %v9028 = vrcp.pop %v9021
  %v9029 = vmul.f32 1.0, %v9028
  %v9030 = vxor.u32 %v8978, 2147483648
  %v9031 = vxor.u32 %v8979, 2147483648
  %v9032 = vxor.u32 %v8980, 2147483648
  %v9033 = vxor.u32 %v8981, 2147483648
  %v9034 = vmul.f32 %v9030, 1.442695
  %v9035 = vpow.pop %v9034
  %v9036 = vmul.f32 %v9031, 1.442695
  %v9037 = vpow.pop %v9036
  %v9038 = vmul.f32 %v9032, 1.442695
  %v9039 = vpow.pop %v9038
  %v9040 = vmul.f32 %v9033, 1.442695
  %v9041 = vpow.pop %v9040
  %v9042 = vadd.f32 %v9035, 1.0
  %v9043 = vadd.f32 %v9037, 1.0
  %v9044 = vadd.f32 %v9039, 1.0
  %v9045 = vadd.f32 %v9041, 1.0
  %v9046 = vrcp.pop %v9042
  %v9047 = vmul.f32 1.0, %v9046
  %v9048 = vrcp.pop %v9043
  %v9049 = vmul.f32 1.0, %v9048
  %v9050 = vrcp.pop %v9044
  %v9051 = vmul.f32 1.0, %v9050
  %v9052 = vrcp.pop %v9045
  %v9053 = vmul.f32 1.0, %v9052
  %v9054 = vmul.f32 %v9023, %v8293
  %v9055 = vmul.f32 %v9025, %v8294
  %v9056 = vmul.f32 %v9027, %v8295
  %v9057 = vmul.f32 %v9029, %v8296
  %v9058 = vmul.f32 %v8999, %v8974
  %v9059 = vmul.f32 %v9001, %v8975
  %v9060 = vmul.f32 %v9003, %v8976
  %v9061 = vmul.f32 %v9005, %v8977
  %v9062 = vadd.f32 %v9054, %v9058
  %v9063 = vadd.f32 %v9055, %v9059
  %v9064 = vadd.f32 %v9056, %v9060
  %v9065 = vadd.f32 %v9057, %v9061
  %v9066 = vtanh.pop %v9062
  %v9067 = vtanh.pop %v9063
  %v9068 = vtanh.pop %v9064
  %v9069 = vtanh.pop %v9065
  %v9070 = vmul.f32 %v9047, %v9066
  %v9071 = vmul.f32 %v9049, %v9067
  %v9072 = vmul.f32 %v9051, %v9068
  %v9073 = vmul.f32 %v9053, %v9069
  %s9074 = scalar_lea.vmem %s6, 192
  %9075 = vst [vmem:[%s9074] sm:$0xff] %v9070
  %9076 = vst [vmem:[%s9074 + $0x8] sm:$0xff] %v9071
  %9077 = vst [vmem:[%s9074 + $0x10] sm:$0xff] %v9072
  %9078 = vst [vmem:[%s9074 + $0x18] sm:$0xff] %v9073
  %9079 = vrot.lane.b32.xlu0 %v9070, 17
  %v9080 = vpop.permute.xlu0 %9079
  %9081 = vrot.lane.b32.xlu0 %v9071, 17
  %v9082 = vpop.permute.xlu0 %9081
  %9083 = vrot.lane.b32.xlu0 %v9072, 17
  %v9084 = vpop.permute.xlu0 %9083
  %9085 = vrot.lane.b32.xlu0 %v9073, 17
  %v9086 = vpop.permute.xlu0 %9085
  %v9087 = vsel %vm197, %v9084, %v9086
  %v9088 = vsel %vm197, %v9082, %v9084
  %v9089 = vsel %vm197, %v9080, %v9082
  %v9090 = vsel %vm197, %v9086, %v9080
  %v9091 = vmul.f32 %v9090, %v233
  %v9092 = vmul.f32 %v9089, %v237
  %v9093 = vmul.f32 %v9088, %v241
  %v9094 = vmul.f32 %v9087, %v245
  %9095 = vrot.lane.b32.xlu0 %v9070, 16
  %v9096 = vpop.permute.xlu0 %9095
  %9097 = vrot.lane.b32.xlu0 %v9071, 16
  %v9098 = vpop.permute.xlu0 %9097
  %9099 = vrot.lane.b32.xlu0 %v9072, 16
  %v9100 = vpop.permute.xlu0 %9099
  %9101 = vrot.lane.b32.xlu0 %v9073, 16
  %v9102 = vpop.permute.xlu0 %9101
  %v9103 = vsel %vm454, %v9100, %v9102
  %v9104 = vsel %vm454, %v9098, %v9100
  %v9105 = vsel %vm454, %v9096, %v9098
  %v9106 = vsel %vm454, %v9102, %v9096
  %v9107 = vmul.f32 %v9106, %v490
  %v9108 = vmul.f32 %v9105, %v494
  %v9109 = vmul.f32 %v9104, %v498
  %v9110 = vmul.f32 %v9103, %v502
  %9111 = vrot.lane.b32.xlu0 %v9070, 15
  %v9112 = vpop.permute.xlu0 %9111
  %9113 = vrot.lane.b32.xlu0 %v9071, 15
  %v9114 = vpop.permute.xlu0 %9113
  %9115 = vrot.lane.b32.xlu0 %v9072, 15
  %v9116 = vpop.permute.xlu0 %9115
  %9117 = vrot.lane.b32.xlu0 %v9073, 15
  %v9118 = vpop.permute.xlu0 %9117
  %v9119 = vsel %vm711, %v9116, %v9118
  %v9120 = vsel %vm711, %v9114, %v9116
  %v9121 = vsel %vm711, %v9112, %v9114
  %v9122 = vsel %vm711, %v9118, %v9112
  %v9123 = vmul.f32 %v9122, %v747
  %v9124 = vmul.f32 %v9121, %v751
  %v9125 = vmul.f32 %v9120, %v755
  %v9126 = vmul.f32 %v9119, %v759
  %9127 = vrot.lane.b32.xlu0 %v9070, 1
  %v9128 = vpop.permute.xlu0 %9127
  %9129 = vrot.lane.b32.xlu0 %v9071, 1
  %v9130 = vpop.permute.xlu0 %9129
  %9131 = vrot.lane.b32.xlu0 %v9072, 1
  %v9132 = vpop.permute.xlu0 %9131
  %9133 = vrot.lane.b32.xlu0 %v9073, 1
  %v9134 = vpop.permute.xlu0 %9133
  %v9135 = vsel %vm968, %v9132, %v9134
  %v9136 = vsel %vm968, %v9130, %v9132
  %v9137 = vsel %vm968, %v9128, %v9130
  %v9138 = vsel %vm968, %v9134, %v9128
  %v9139 = vmul.f32 %v9138, %v1004
  %v9140 = vmul.f32 %v9137, %v1008
  %v9141 = vmul.f32 %v9136, %v1012
  %v9142 = vmul.f32 %v9135, %v1016
  %9143 = vrot.lane.b32.xlu0 %v9070, 127
  %v9144 = vpop.permute.xlu0 %9143
  %9145 = vrot.lane.b32.xlu0 %v9071, 127
  %v9146 = vpop.permute.xlu0 %9145
  %9147 = vrot.lane.b32.xlu0 %v9072, 127
  %v9148 = vpop.permute.xlu0 %9147
  %9149 = vrot.lane.b32.xlu0 %v9073, 127
  %v9150 = vpop.permute.xlu0 %9149
  %v9151 = vsel %vm1225, %v9148, %v9150
  %v9152 = vsel %vm1225, %v9146, %v9148
  %v9153 = vsel %vm1225, %v9144, %v9146
  %v9154 = vsel %vm1225, %v9150, %v9144
  %v9155 = vmul.f32 %v9153, %v1261
  %v9156 = vmul.f32 %v9152, %v1265
  %v9157 = vmul.f32 %v9151, %v1269
  %v9158 = vmul.f32 %v9154, %v1273
  %9159 = vrot.lane.b32.xlu0 %v9070, 113
  %v9160 = vpop.permute.xlu0 %9159
  %9161 = vrot.lane.b32.xlu0 %v9071, 113
  %v9162 = vpop.permute.xlu0 %9161
  %9163 = vrot.lane.b32.xlu0 %v9072, 113
  %v9164 = vpop.permute.xlu0 %9163
  %9165 = vrot.lane.b32.xlu0 %v9073, 113
  %v9166 = vpop.permute.xlu0 %9165
  %v9167 = vsel %vm1482, %v9164, %v9166
  %v9168 = vsel %vm1482, %v9162, %v9164
  %v9169 = vsel %vm1482, %v9160, %v9162
  %v9170 = vsel %vm1482, %v9166, %v9160
  %v9171 = vmul.f32 %v9169, %v1518
  %v9172 = vmul.f32 %v9168, %v1522
  %v9173 = vmul.f32 %v9167, %v1526
  %v9174 = vmul.f32 %v9170, %v1530
  %9175 = vrot.lane.b32.xlu0 %v9070, 112
  %v9176 = vpop.permute.xlu0 %9175
  %9177 = vrot.lane.b32.xlu0 %v9071, 112
  %v9178 = vpop.permute.xlu0 %9177
  %9179 = vrot.lane.b32.xlu0 %v9072, 112
  %v9180 = vpop.permute.xlu0 %9179
  %9181 = vrot.lane.b32.xlu0 %v9073, 112
  %v9182 = vpop.permute.xlu0 %9181
  %v9183 = vsel %vm1739, %v9180, %v9182
  %v9184 = vsel %vm1739, %v9178, %v9180
  %v9185 = vsel %vm1739, %v9176, %v9178
  %v9186 = vsel %vm1739, %v9182, %v9176
  %v9187 = vmul.f32 %v9185, %v1775
  %v9188 = vmul.f32 %v9184, %v1779
  %v9189 = vmul.f32 %v9183, %v1783
  %v9190 = vmul.f32 %v9186, %v1787
  %9191 = vrot.lane.b32.xlu0 %v9070, 111
  %v9192 = vpop.permute.xlu0 %9191
  %9193 = vrot.lane.b32.xlu0 %v9071, 111
  %v9194 = vpop.permute.xlu0 %9193
  %9195 = vrot.lane.b32.xlu0 %v9072, 111
  %v9196 = vpop.permute.xlu0 %9195
  %9197 = vrot.lane.b32.xlu0 %v9073, 111
  %v9198 = vpop.permute.xlu0 %9197
  %v9199 = vsel %vm1996, %v9196, %v9198
  %v9200 = vsel %vm1996, %v9194, %v9196
  %v9201 = vsel %vm1996, %v9192, %v9194
  %v9202 = vsel %vm1996, %v9198, %v9192
  %v9203 = vmul.f32 %v9201, %v2032
  %v9204 = vmul.f32 %v9200, %v2036
  %v9205 = vmul.f32 %v9199, %v2040
  %v9206 = vmul.f32 %v9202, %v2044
  %v9207 = vld [vmem:[%s3748] sm:$0xff]
  %v9208 = vld [vmem:[%s3748 + $0x8] sm:$0xff]
  %v9209 = vld [vmem:[%s3748 + $0x10] sm:$0xff]
  %v9210 = vld [vmem:[%s3748 + $0x18] sm:$0xff]
  %v9211 = vld [vmem:[%s3748 + $0x20] sm:$0xff]
  %v9212 = vld [vmem:[%s3748 + $0x28] sm:$0xff]
  %v9213 = vld [vmem:[%s3748 + $0x30] sm:$0xff]
  %v9214 = vld [vmem:[%s3748 + $0x38] sm:$0xff]
  %v9215 = vld [vmem:[%s3748 + $0x40] sm:$0xff]
  %v9216 = vld [vmem:[%s3748 + $0x48] sm:$0xff]
  %v9217 = vld [vmem:[%s3748 + $0x50] sm:$0xff]
  %v9218 = vld [vmem:[%s3748 + $0x58] sm:$0xff]
  %v9219 = vld [vmem:[%s3748 + $0x60] sm:$0xff]
  %v9220 = vld [vmem:[%s3748 + $0x68] sm:$0xff]
  %v9221 = vld [vmem:[%s3748 + $0x70] sm:$0xff]
  %v9222 = vld [vmem:[%s3748 + $0x78] sm:$0xff]
  %9223 = vmatprep.subr.mxu0 0.0
  %9224 = vmatpush1.msra.mxu0 0.0
  %9225 = vmatprep.subr.mxu0 0.0
  %9226 = vmatpush1.msra.mxu0 0.0
  %9227 = vmatprep.subr.mxu0 0.0
  %9228 = vmatpush1.msra.mxu0 0.0
  %9229 = vmatprep.subr.mxu0 0.0
  %9230 = vmatpush1.msra.mxu0 0.0
  %9231 = vmatprep.subr.mxu0 0.0
  %9232 = vmatpush1.msra.mxu0 0.0
  %9233 = vmatprep.subr.mxu0 0.0
  %9234 = vmatpush1.msra.mxu0 0.0
  %9235 = vmatprep.subr.mxu0 0.0
  %9236 = vmatpush1.msra.mxu0 0.0
  %9237 = vmatprep.subr.mxu0 %v9204
  %9238 = vmatpush1.msra.mxu0 %v9203
  %9239 = vmatprep.subr.mxu0 %v9188
  %9240 = vmatpush1.msra.mxu0 %v9187
  %9241 = vmatprep.subr.mxu0 %v9172
  %9242 = vmatpush1.msra.mxu0 %v9171
  %9243 = vmatprep.subr.mxu0 %v9156
  %9244 = vmatpush1.msra.mxu0 %v9155
  %9245 = vmatprep.subr.mxu0 %v9071
  %9246 = vmatpush1.msra.mxu0 %v9070
  %9247 = vmatprep.subr.mxu0 %v9140
  %9248 = vmatpush1.msra.mxu0 %v9139
  %9249 = vmatprep.subr.mxu0 %v9124
  %9250 = vmatpush1.msra.mxu0 %v9123
  %9251 = vmatprep.subr.mxu0 %v9108
  %9252 = vmatpush1.msra.mxu0 %v9107
  %9253 = vmatprep.subr.mxu0 %v9092
  %9254 = vmatpush1.msra.mxu0 %v9091
  %9255 = vmatprep.subr.mxu0 0.0
  %9256 = vmatpush2.msra.mxu0 0.0
  %9257 = vmatprep.subr.mxu0 0.0
  %9258 = vmatpush2.msra.mxu0 0.0
  %9259 = vmatprep.subr.mxu0 0.0
  %9260 = vmatpush2.msra.mxu0 0.0
  %9261 = vmatprep.subr.mxu0 0.0
  %9262 = vmatpush2.msra.mxu0 0.0
  %9263 = vmatprep.subr.mxu0 0.0
  %9264 = vmatpush2.msra.mxu0 0.0
  %9265 = vmatprep.subr.mxu0 0.0
  %9266 = vmatpush2.msra.mxu0 0.0
  %9267 = vmatprep.subr.mxu0 0.0
  %9268 = vmatpush2.msra.mxu0 0.0
  %9269 = vmatprep.subr.mxu0 0.0
  %9270 = vmatpush2.msra.mxu0 0.0
  %9271 = vmatprep.subr.mxu0 0.0
  %9272 = vmatpush2.msra.mxu0 0.0
  %9273 = vmatprep.subr.mxu0 0.0
  %9274 = vmatpush2.msra.mxu0 0.0
  %9275 = vmatprep.subr.mxu0 0.0
  %9276 = vmatpush2.msra.mxu0 0.0
  %9277 = vmatprep.subr.mxu0 0.0
  %9278 = vmatpush2.msra.mxu0 0.0
  %9279 = vmatprep.subr.mxu0 0.0
  %9280 = vmatpush2.msra.mxu0 0.0
  %9281 = vmatprep.subr.mxu0 0.0
  %9282 = vmatpush2.msra.mxu0 0.0
  %9283 = vmatprep.subr.mxu0 0.0
  %9284 = vmatpush2.msra.mxu0 0.0
  %9285 = vmatprep.subr.mxu0 0.0
  %9286 = vmatpush2.msra.mxu0 0.0
  %9287 = vmatprep.mubr.f32.mxu0 0.0
  %9288 = vmatmul.mubr.f32.gmra.mxu0 %v3830
  %v9289 = vpop.f32.mrf.mxu0
  %v9290 = vadd.f32 0.0, %v9289
  %v9291 = vpop.f32.mrf.mxu0
  %v9292 = vadd.f32 0.0, %v9291
  %9293 = vmatprep.mubr.f32.mxu0 0.0
  %9294 = vmatmul.mubr.f32.gmra.mxu0 %v3833
  %v9295 = vpop.f32.mrf.mxu0
  %v9296 = vadd.f32 0.0, %v9295
  %v9297 = vpop.f32.mrf.mxu0
  %v9298 = vadd.f32 0.0, %v9297
  %9299 = vmatprep.mubr.f32.mxu0 0.0
  %9300 = vmatmul.mubr.f32.gmra.mxu0 %v3836
  %v9301 = vpop.f32.mrf.mxu0
  %v9302 = vadd.f32 0.0, %v9301
  %v9303 = vpop.f32.mrf.mxu0
  %v9304 = vadd.f32 0.0, %v9303
  %9305 = vmatprep.mubr.f32.mxu0 0.0
  %9306 = vmatmul.mubr.f32.gmra.mxu0 %v3839
  %v9307 = vpop.f32.mrf.mxu0
  %v9308 = vadd.f32 0.0, %v9307
  %v9309 = vpop.f32.mrf.mxu0
  %v9310 = vadd.f32 0.0, %v9309
  %9311 = vdwg.mxu0
  %9312 = vmatprep.subr.mxu0 0.0
  %9313 = vmatpush1.msra.mxu0 0.0
  %9314 = vmatprep.subr.mxu0 0.0
  %9315 = vmatpush1.msra.mxu0 0.0
  %9316 = vmatprep.subr.mxu0 0.0
  %9317 = vmatpush1.msra.mxu0 0.0
  %9318 = vmatprep.subr.mxu0 0.0
  %9319 = vmatpush1.msra.mxu0 0.0
  %9320 = vmatprep.subr.mxu0 0.0
  %9321 = vmatpush1.msra.mxu0 0.0
  %9322 = vmatprep.subr.mxu0 0.0
  %9323 = vmatpush1.msra.mxu0 0.0
  %9324 = vmatprep.subr.mxu0 0.0
  %9325 = vmatpush1.msra.mxu0 0.0
  %9326 = vmatprep.subr.mxu0 %v9206
  %9327 = vmatpush1.msra.mxu0 %v9205
  %9328 = vmatprep.subr.mxu0 %v9190
  %9329 = vmatpush1.msra.mxu0 %v9189
  %9330 = vmatprep.subr.mxu0 %v9174
  %9331 = vmatpush1.msra.mxu0 %v9173
  %9332 = vmatprep.subr.mxu0 %v9158
  %9333 = vmatpush1.msra.mxu0 %v9157
  %9334 = vmatprep.subr.mxu0 %v9073
  %9335 = vmatpush1.msra.mxu0 %v9072
  %9336 = vmatprep.subr.mxu0 %v9142
  %9337 = vmatpush1.msra.mxu0 %v9141
  %9338 = vmatprep.subr.mxu0 %v9126
  %9339 = vmatpush1.msra.mxu0 %v9125
  %9340 = vmatprep.subr.mxu0 %v9110
  %9341 = vmatpush1.msra.mxu0 %v9109
  %9342 = vmatprep.subr.mxu0 %v9094
  %9343 = vmatpush1.msra.mxu0 %v9093
  %9344 = vmatprep.subr.mxu0 0.0
  %9345 = vmatpush2.msra.mxu0 0.0
  %9346 = vmatprep.subr.mxu0 0.0
  %9347 = vmatpush2.msra.mxu0 0.0
  %9348 = vmatprep.subr.mxu0 0.0
  %9349 = vmatpush2.msra.mxu0 0.0
  %9350 = vmatprep.subr.mxu0 0.0
  %9351 = vmatpush2.msra.mxu0 0.0
  %9352 = vmatprep.subr.mxu0 0.0
  %9353 = vmatpush2.msra.mxu0 0.0
  %9354 = vmatprep.subr.mxu0 0.0
  %9355 = vmatpush2.msra.mxu0 0.0
  %9356 = vmatprep.subr.mxu0 0.0
  %9357 = vmatpush2.msra.mxu0 0.0
  %9358 = vmatprep.subr.mxu0 0.0
  %9359 = vmatpush2.msra.mxu0 0.0
  %9360 = vmatprep.subr.mxu0 0.0
  %9361 = vmatpush2.msra.mxu0 0.0
  %9362 = vmatprep.subr.mxu0 0.0
  %9363 = vmatpush2.msra.mxu0 0.0
  %9364 = vmatprep.subr.mxu0 0.0
  %9365 = vmatpush2.msra.mxu0 0.0
  %9366 = vmatprep.subr.mxu0 0.0
  %9367 = vmatpush2.msra.mxu0 0.0
  %9368 = vmatprep.subr.mxu0 0.0
  %9369 = vmatpush2.msra.mxu0 0.0
  %9370 = vmatprep.subr.mxu0 0.0
  %9371 = vmatpush2.msra.mxu0 0.0
  %9372 = vmatprep.subr.mxu0 0.0
  %9373 = vmatpush2.msra.mxu0 0.0
  %9374 = vmatprep.subr.mxu0 0.0
  %9375 = vmatpush2.msra.mxu0 0.0
  %9376 = vmatprep.mubr.f32.mxu0 0.0
  %9377 = vmatmul.mubr.f32.gmra.mxu0 %v3830
  %v9378 = vpop.f32.mrf.mxu0
  %v9379 = vadd.f32 0.0, %v9378
  %v9380 = vpop.f32.mrf.mxu0
  %v9381 = vadd.f32 0.0, %v9380
  %9382 = vmatprep.mubr.f32.mxu0 0.0
  %9383 = vmatmul.mubr.f32.gmra.mxu0 %v3833
  %v9384 = vpop.f32.mrf.mxu0
  %v9385 = vadd.f32 0.0, %v9384
  %v9386 = vpop.f32.mrf.mxu0
  %v9387 = vadd.f32 0.0, %v9386
  %9388 = vmatprep.mubr.f32.mxu0 0.0
  %9389 = vmatmul.mubr.f32.gmra.mxu0 %v3836
  %v9390 = vpop.f32.mrf.mxu0
  %v9391 = vadd.f32 0.0, %v9390
  %v9392 = vpop.f32.mrf.mxu0
  %v9393 = vadd.f32 0.0, %v9392
  %9394 = vmatprep.mubr.f32.mxu0 0.0
  %9395 = vmatmul.mubr.f32.gmra.mxu0 %v3839
  %v9396 = vpop.f32.mrf.mxu0
  %v9397 = vadd.f32 0.0, %v9396
  %v9398 = vpop.f32.mrf.mxu0
  %v9399 = vadd.f32 0.0, %v9398
  %9400 = vdwg.mxu0
  %v9401 = vadd.f32 %v9207, %v9290
  %v9402 = vadd.f32 %v9208, %v9292
  %v9403 = vadd.f32 %v9209, %v9379
  %v9404 = vadd.f32 %v9210, %v9381
  %v9405 = vadd.f32 %v9211, %v9296
  %v9406 = vadd.f32 %v9212, %v9298
  %v9407 = vadd.f32 %v9213, %v9385
  %v9408 = vadd.f32 %v9214, %v9387
  %v9409 = vadd.f32 %v9215, %v9302
  %v9410 = vadd.f32 %v9216, %v9304
  %v9411 = vadd.f32 %v9217, %v9391
  %v9412 = vadd.f32 %v9218, %v9393
  %v9413 = vadd.f32 %v9219, %v9308
  %v9414 = vadd.f32 %v9220, %v9310
  %v9415 = vadd.f32 %v9221, %v9397
  %v9416 = vadd.f32 %v9222, %v9399
  %v9417 = vmul.f32 %v9401, %v9401
  %v9418 = vmul.f32 %v9402, %v9402
  %v9419 = vmul.f32 %v9403, %v9403
  %v9420 = vmul.f32 %v9404, %v9404
  %v9421 = vmul.f32 %v9405, %v9405
  %v9422 = vmul.f32 %v9406, %v9406
  %v9423 = vmul.f32 %v9407, %v9407
  %v9424 = vmul.f32 %v9408, %v9408
  %v9425 = vmul.f32 %v9409, %v9409
  %v9426 = vmul.f32 %v9410, %v9410
  %v9427 = vmul.f32 %v9411, %v9411
  %v9428 = vmul.f32 %v9412, %v9412
  %v9429 = vmul.f32 %v9413, %v9413
  %v9430 = vmul.f32 %v9414, %v9414
  %v9431 = vmul.f32 %v9415, %v9415
  %v9432 = vmul.f32 %v9416, %v9416
  %9433 = vmatprep.subr.mxu0 0.0
  %9434 = vmatpush1.msra.mxu0 1.0
  %9435 = vmatprep.subr.mxu0 0.0
  %9436 = vmatpush1.msra.mxu0 1.0
  %9437 = vmatprep.subr.mxu0 0.0
  %9438 = vmatpush1.msra.mxu0 1.0
  %9439 = vmatprep.subr.mxu0 0.0
  %9440 = vmatpush1.msra.mxu0 1.0
  %9441 = vmatprep.subr.mxu0 0.0
  %9442 = vmatpush1.msra.mxu0 1.0
  %9443 = vmatprep.subr.mxu0 0.0
  %9444 = vmatpush1.msra.mxu0 1.0
  %9445 = vmatprep.subr.mxu0 0.0
  %9446 = vmatpush1.msra.mxu0 1.0
  %9447 = vmatprep.subr.mxu0 0.0
  %9448 = vmatpush1.msra.mxu0 1.0
  %9449 = vmatprep.subr.mxu0 0.0
  %9450 = vmatpush1.msra.mxu0 1.0
  %9451 = vmatprep.subr.mxu0 0.0
  %9452 = vmatpush1.msra.mxu0 1.0
  %9453 = vmatprep.subr.mxu0 0.0
  %9454 = vmatpush1.msra.mxu0 1.0
  %9455 = vmatprep.subr.mxu0 0.0
  %9456 = vmatpush1.msra.mxu0 1.0
  %9457 = vmatprep.subr.mxu0 0.0
  %9458 = vmatpush1.msra.mxu0 1.0
  %9459 = vmatprep.subr.mxu0 0.0
  %9460 = vmatpush1.msra.mxu0 1.0
  %9461 = vmatprep.subr.mxu0 0.0
  %9462 = vmatpush1.msra.mxu0 1.0
  %9463 = vmatprep.subr.mxu0 0.0
  %9464 = vmatpush1.msra.mxu0 1.0
  %9465 = vmatprep.subr.mxu0 0.0
  %9466 = vmatpush2.msra.mxu0 1.0
  %9467 = vmatprep.subr.mxu0 0.0
  %9468 = vmatpush2.msra.mxu0 1.0
  %9469 = vmatprep.subr.mxu0 0.0
  %9470 = vmatpush2.msra.mxu0 1.0
  %9471 = vmatprep.subr.mxu0 0.0
  %9472 = vmatpush2.msra.mxu0 1.0
  %9473 = vmatprep.subr.mxu0 0.0
  %9474 = vmatpush2.msra.mxu0 1.0
  %9475 = vmatprep.subr.mxu0 0.0
  %9476 = vmatpush2.msra.mxu0 1.0
  %9477 = vmatprep.subr.mxu0 0.0
  %9478 = vmatpush2.msra.mxu0 1.0
  %9479 = vmatprep.subr.mxu0 0.0
  %9480 = vmatpush2.msra.mxu0 1.0
  %9481 = vmatprep.subr.mxu0 0.0
  %9482 = vmatpush2.msra.mxu0 1.0
  %9483 = vmatprep.subr.mxu0 0.0
  %9484 = vmatpush2.msra.mxu0 1.0
  %9485 = vmatprep.subr.mxu0 0.0
  %9486 = vmatpush2.msra.mxu0 1.0
  %9487 = vmatprep.subr.mxu0 0.0
  %9488 = vmatpush2.msra.mxu0 1.0
  %9489 = vmatprep.subr.mxu0 0.0
  %9490 = vmatpush2.msra.mxu0 1.0
  %9491 = vmatprep.subr.mxu0 0.0
  %9492 = vmatpush2.msra.mxu0 1.0
  %9493 = vmatprep.subr.mxu0 0.0
  %9494 = vmatpush2.msra.mxu0 1.0
  %9495 = vmatprep.subr.mxu0 0.0
  %9496 = vmatpush2.msra.mxu0 1.0
  %9497 = vmatprep.mubr.f32.mxu0 %v9402
  %9498 = vmatmul.mubr.f32.gmra.mxu0 %v9401
  %v9499 = vpop.f32.mrf.mxu0
  %v9500 = vadd.f32 0.0, %v9499
  %v9501 = vpop.f32.mrf.mxu0
  %9502 = vmatprep.mubr.f32.mxu0 %v9406
  %9503 = vmatmul.mubr.f32.gmra.mxu0 %v9405
  %v9504 = vpop.f32.mrf.mxu0
  %v9505 = vadd.f32 0.0, %v9504
  %v9506 = vpop.f32.mrf.mxu0
  %9507 = vmatprep.mubr.f32.mxu0 %v9410
  %9508 = vmatmul.mubr.f32.gmra.mxu0 %v9409
  %v9509 = vpop.f32.mrf.mxu0
  %v9510 = vadd.f32 0.0, %v9509
  %v9511 = vpop.f32.mrf.mxu0
  %9512 = vmatprep.mubr.f32.mxu0 %v9414
  %9513 = vmatmul.mubr.f32.gmra.mxu0 %v9413
  %v9514 = vpop.f32.mrf.mxu0
  %v9515 = vadd.f32 0.0, %v9514
  %v9516 = vpop.f32.mrf.mxu0
  %9517 = vmatprep.mubr.f32.mxu0 %v9418
  %9518 = vmatmul.mubr.f32.gmra.mxu0 %v9417
  %v9519 = vpop.f32.mrf.mxu0
  %v9520 = vadd.f32 0.0, %v9519
  %v9521 = vpop.f32.mrf.mxu0
  %9522 = vmatprep.mubr.f32.mxu0 %v9422
  %9523 = vmatmul.mubr.f32.gmra.mxu0 %v9421
  %v9524 = vpop.f32.mrf.mxu0
  %v9525 = vadd.f32 0.0, %v9524
  %v9526 = vpop.f32.mrf.mxu0
  %9527 = vmatprep.mubr.f32.mxu0 %v9426
  %9528 = vmatmul.mubr.f32.gmra.mxu0 %v9425
  %v9529 = vpop.f32.mrf.mxu0
  %v9530 = vadd.f32 0.0, %v9529
  %v9531 = vpop.f32.mrf.mxu0
  %9532 = vmatprep.mubr.f32.mxu0 %v9430
  %9533 = vmatmul.mubr.f32.gmra.mxu0 %v9429
  %v9534 = vpop.f32.mrf.mxu0
  %v9535 = vadd.f32 0.0, %v9534
  %v9536 = vpop.f32.mrf.mxu0
  %9537 = vdwg.mxu0
  %9538 = vmatprep.subr.mxu0 0.0
  %9539 = vmatpush1.msra.mxu0 1.0
  %9540 = vmatprep.subr.mxu0 0.0
  %9541 = vmatpush1.msra.mxu0 1.0
  %9542 = vmatprep.subr.mxu0 0.0
  %9543 = vmatpush1.msra.mxu0 1.0
  %9544 = vmatprep.subr.mxu0 0.0
  %9545 = vmatpush1.msra.mxu0 1.0
  %9546 = vmatprep.subr.mxu0 0.0
  %9547 = vmatpush1.msra.mxu0 1.0
  %9548 = vmatprep.subr.mxu0 0.0
  %9549 = vmatpush1.msra.mxu0 1.0
  %9550 = vmatprep.subr.mxu0 0.0
  %9551 = vmatpush1.msra.mxu0 1.0
  %9552 = vmatprep.subr.mxu0 0.0
  %9553 = vmatpush1.msra.mxu0 1.0
  %9554 = vmatprep.subr.mxu0 0.0
  %9555 = vmatpush1.msra.mxu0 1.0
  %9556 = vmatprep.subr.mxu0 0.0
  %9557 = vmatpush1.msra.mxu0 1.0
  %9558 = vmatprep.subr.mxu0 0.0
  %9559 = vmatpush1.msra.mxu0 1.0
  %9560 = vmatprep.subr.mxu0 0.0
  %9561 = vmatpush1.msra.mxu0 1.0
  %9562 = vmatprep.subr.mxu0 0.0
  %9563 = vmatpush1.msra.mxu0 1.0
  %9564 = vmatprep.subr.mxu0 0.0
  %9565 = vmatpush1.msra.mxu0 1.0
  %9566 = vmatprep.subr.mxu0 0.0
  %9567 = vmatpush1.msra.mxu0 1.0
  %9568 = vmatprep.subr.mxu0 0.0
  %9569 = vmatpush1.msra.mxu0 1.0
  %9570 = vmatprep.subr.mxu0 0.0
  %9571 = vmatpush2.msra.mxu0 1.0
  %9572 = vmatprep.subr.mxu0 0.0
  %9573 = vmatpush2.msra.mxu0 1.0
  %9574 = vmatprep.subr.mxu0 0.0
  %9575 = vmatpush2.msra.mxu0 1.0
  %9576 = vmatprep.subr.mxu0 0.0
  %9577 = vmatpush2.msra.mxu0 1.0
  %9578 = vmatprep.subr.mxu0 0.0
  %9579 = vmatpush2.msra.mxu0 1.0
  %9580 = vmatprep.subr.mxu0 0.0
  %9581 = vmatpush2.msra.mxu0 1.0
  %9582 = vmatprep.subr.mxu0 0.0
  %9583 = vmatpush2.msra.mxu0 1.0
  %9584 = vmatprep.subr.mxu0 0.0
  %9585 = vmatpush2.msra.mxu0 1.0
  %9586 = vmatprep.subr.mxu0 0.0
  %9587 = vmatpush2.msra.mxu0 1.0
  %9588 = vmatprep.subr.mxu0 0.0
  %9589 = vmatpush2.msra.mxu0 1.0
  %9590 = vmatprep.subr.mxu0 0.0
  %9591 = vmatpush2.msra.mxu0 1.0
  %9592 = vmatprep.subr.mxu0 0.0
  %9593 = vmatpush2.msra.mxu0 1.0
  %9594 = vmatprep.subr.mxu0 0.0
  %9595 = vmatpush2.msra.mxu0 1.0
  %9596 = vmatprep.subr.mxu0 0.0
  %9597 = vmatpush2.msra.mxu0 1.0
  %9598 = vmatprep.subr.mxu0 0.0
  %9599 = vmatpush2.msra.mxu0 1.0
  %9600 = vmatprep.subr.mxu0 0.0
  %9601 = vmatpush2.msra.mxu0 1.0
  %9602 = vmatprep.mubr.f32.mxu0 %v9404
  %9603 = vmatmul.mubr.f32.gmra.mxu0 %v9403
  %v9604 = vpop.f32.mrf.mxu0
  %v9605 = vadd.f32 %v9500, %v9604
  %v9606 = vpop.f32.mrf.mxu0
  %9607 = vmatprep.mubr.f32.mxu0 %v9408
  %9608 = vmatmul.mubr.f32.gmra.mxu0 %v9407
  %v9609 = vpop.f32.mrf.mxu0
  %v9610 = vadd.f32 %v9505, %v9609
  %v9611 = vpop.f32.mrf.mxu0
  %9612 = vmatprep.mubr.f32.mxu0 %v9412
  %9613 = vmatmul.mubr.f32.gmra.mxu0 %v9411
  %v9614 = vpop.f32.mrf.mxu0
  %v9615 = vadd.f32 %v9510, %v9614
  %v9616 = vpop.f32.mrf.mxu0
  %9617 = vmatprep.mubr.f32.mxu0 %v9416
  %9618 = vmatmul.mubr.f32.gmra.mxu0 %v9415
  %v9619 = vpop.f32.mrf.mxu0
  %v9620 = vadd.f32 %v9515, %v9619
  %v9621 = vpop.f32.mrf.mxu0
  %9622 = vmatprep.mubr.f32.mxu0 %v9420
  %9623 = vmatmul.mubr.f32.gmra.mxu0 %v9419
  %v9624 = vpop.f32.mrf.mxu0
  %v9625 = vadd.f32 %v9520, %v9624
  %v9626 = vpop.f32.mrf.mxu0
  %9627 = vmatprep.mubr.f32.mxu0 %v9424
  %9628 = vmatmul.mubr.f32.gmra.mxu0 %v9423
  %v9629 = vpop.f32.mrf.mxu0
  %v9630 = vadd.f32 %v9525, %v9629
  %v9631 = vpop.f32.mrf.mxu0
  %9632 = vmatprep.mubr.f32.mxu0 %v9428
  %9633 = vmatmul.mubr.f32.gmra.mxu0 %v9427
  %v9634 = vpop.f32.mrf.mxu0
  %v9635 = vadd.f32 %v9530, %v9634
  %v9636 = vpop.f32.mrf.mxu0
  %9637 = vmatprep.mubr.f32.mxu0 %v9432
  %9638 = vmatmul.mubr.f32.gmra.mxu0 %v9431
  %v9639 = vpop.f32.mrf.mxu0
  %v9640 = vadd.f32 %v9535, %v9639
  %v9641 = vpop.f32.mrf.mxu0
  %9642 = vdwg.mxu0
  %v9643 = vmul.f32 %v9605, 0.001953125
  %v9644 = vmul.f32 %v9610, 0.001953125
  %v9645 = vmul.f32 %v9615, 0.001953125
  %v9646 = vmul.f32 %v9620, 0.001953125
  %v9647 = vmul.f32 %v9625, 0.001953125
  %v9648 = vmul.f32 %v9630, 0.001953125
  %v9649 = vmul.f32 %v9635, 0.001953125
  %v9650 = vmul.f32 %v9640, 0.001953125
  %v9651 = vmul.f32 %v9643, %v9643
  %v9652 = vmul.f32 %v9644, %v9644
  %v9653 = vmul.f32 %v9645, %v9645
  %v9654 = vmul.f32 %v9646, %v9646
  %v9655 = vsub.f32 %v9647, %v9651
  %v9656 = vsub.f32 %v9648, %v9652
  %v9657 = vsub.f32 %v9649, %v9653
  %v9658 = vsub.f32 %v9650, %v9654
  %v9659 = vadd.f32 %v9655, 1e-05
  %v9660 = vadd.f32 %v9656, 1e-05
  %v9661 = vadd.f32 %v9657, 1e-05
  %v9662 = vadd.f32 %v9658, 1e-05
  %v9663 = vrsqrt.pop %v9659
  %v9664 = vrsqrt.pop %v9660
  %v9665 = vrsqrt.pop %v9661
  %v9666 = vrsqrt.pop %v9662
  %v9667 = vmul.f32 %v91, %v9663
  %v9668 = vmul.f32 %v92, %v9664
  %v9669 = vmul.f32 %v93, %v9665
  %v9670 = vmul.f32 %v94, %v9666
  %v9671 = vmul.f32 %v9643, %v9667
  %v9672 = vmul.f32 %v9644, %v9668
  %v9673 = vmul.f32 %v9645, %v9669
  %v9674 = vmul.f32 %v9646, %v9670
  %v9675 = vsub.f32 %v95, %v9671
  %v9676 = vsub.f32 %v96, %v9672
  %v9677 = vsub.f32 %v97, %v9673
  %v9678 = vsub.f32 %v98, %v9674
  %9680 = vset.pattern.permute.xlu0 0
  %9681 = vperm.xlu0 %9680, %v9667
  %v9682 = vpop.permute.xlu0 %9681
  %9685 = vset.pattern.permute.xlu0 0
  %9686 = vperm.xlu0 %9685, %v9668
  %v9687 = vpop.permute.xlu0 %9686
  %9690 = vset.pattern.permute.xlu0 0
  %9691 = vperm.xlu0 %9690, %v9669
  %v9692 = vpop.permute.xlu0 %9691
  %9695 = vset.pattern.permute.xlu0 0
  %9696 = vperm.xlu0 %9695, %v9670
  %v9697 = vpop.permute.xlu0 %9696
  %v9699 = vmul.f32 %v9401, %v9682
  %v9700 = vmul.f32 %v9402, %v9682
  %v9701 = vmul.f32 %v9403, %v9682
  %v9702 = vmul.f32 %v9404, %v9682
  %v9703 = vmul.f32 %v9405, %v9687
  %v9704 = vmul.f32 %v9406, %v9687
  %v9705 = vmul.f32 %v9407, %v9687
  %v9706 = vmul.f32 %v9408, %v9687
  %v9707 = vmul.f32 %v9409, %v9692
  %v9708 = vmul.f32 %v9410, %v9692
  %v9709 = vmul.f32 %v9411, %v9692
  %v9710 = vmul.f32 %v9412, %v9692
  %v9711 = vmul.f32 %v9413, %v9697
  %v9712 = vmul.f32 %v9414, %v9697
  %v9713 = vmul.f32 %v9415, %v9697
  %v9714 = vmul.f32 %v9416, %v9697
  %9716 = vset.pattern.permute.xlu0 0
  %9717 = vperm.xlu0 %9716, %v9675
  %v9718 = vpop.permute.xlu0 %9717
  %9721 = vset.pattern.permute.xlu0 0
  %9722 = vperm.xlu0 %9721, %v9676
  %v9723 = vpop.permute.xlu0 %9722
  %9726 = vset.pattern.permute.xlu0 0
  %9727 = vperm.xlu0 %9726, %v9677
  %v9728 = vpop.permute.xlu0 %9727
  %9731 = vset.pattern.permute.xlu0 0
  %9732 = vperm.xlu0 %9731, %v9678
  %v9733 = vpop.permute.xlu0 %9732
  %v9735 = vadd.f32 %v9699, %v9718
  %v9736 = vadd.f32 %v9700, %v9718
  %v9737 = vadd.f32 %v9701, %v9718
  %v9738 = vadd.f32 %v9702, %v9718
  %v9739 = vadd.f32 %v9703, %v9723
  %v9740 = vadd.f32 %v9704, %v9723
  %v9741 = vadd.f32 %v9705, %v9723
  %v9742 = vadd.f32 %v9706, %v9723
  %v9743 = vadd.f32 %v9707, %v9728
  %v9744 = vadd.f32 %v9708, %v9728
  %v9745 = vadd.f32 %v9709, %v9728
  %v9746 = vadd.f32 %v9710, %v9728
  %v9747 = vadd.f32 %v9711, %v9733
  %v9748 = vadd.f32 %v9712, %v9733
  %v9749 = vadd.f32 %v9713, %v9733
  %v9750 = vadd.f32 %v9714, %v9733
  %v9751 = vxor.u32 %v9735, 2147483648
  %v9752 = vxor.u32 %v9736, 2147483648
  %v9753 = vxor.u32 %v9737, 2147483648
  %v9754 = vxor.u32 %v9738, 2147483648
  %v9755 = vmul.f32 %v9751, 1.442695
  %v9756 = vpow.pop %v9755
  %v9757 = vmul.f32 %v9752, 1.442695
  %v9758 = vpow.pop %v9757
  %v9759 = vmul.f32 %v9753, 1.442695
  %v9760 = vpow.pop %v9759
  %v9761 = vmul.f32 %v9754, 1.442695
  %v9762 = vpow.pop %v9761
  %v9763 = vadd.f32 %v9756, 1.0
  %v9764 = vadd.f32 %v9758, 1.0
  %v9765 = vadd.f32 %v9760, 1.0
  %v9766 = vadd.f32 %v9762, 1.0
  %v9767 = vrcp.pop %v9763
  %v9768 = vmul.f32 1.0, %v9767
  %v9769 = vrcp.pop %v9764
  %v9770 = vmul.f32 1.0, %v9769
  %v9771 = vrcp.pop %v9765
  %v9772 = vmul.f32 1.0, %v9771
  %v9773 = vrcp.pop %v9766
  %v9774 = vmul.f32 1.0, %v9773
  %v9775 = vxor.u32 %v9739, 2147483648
  %v9776 = vxor.u32 %v9740, 2147483648
  %v9777 = vxor.u32 %v9741, 2147483648
  %v9778 = vxor.u32 %v9742, 2147483648
  %v9779 = vmul.f32 %v9775, 1.442695
  %v9780 = vpow.pop %v9779
  %v9781 = vmul.f32 %v9776, 1.442695
  %v9782 = vpow.pop %v9781
  %v9783 = vmul.f32 %v9777, 1.442695
  %v9784 = vpow.pop %v9783
  %v9785 = vmul.f32 %v9778, 1.442695
  %v9786 = vpow.pop %v9785
  %v9787 = vadd.f32 %v9780, 1.0
  %v9788 = vadd.f32 %v9782, 1.0
  %v9789 = vadd.f32 %v9784, 1.0
  %v9790 = vadd.f32 %v9786, 1.0
  %v9791 = vrcp.pop %v9787
  %v9792 = vmul.f32 1.0, %v9791
  %v9793 = vrcp.pop %v9788
  %v9794 = vmul.f32 1.0, %v9793
  %v9795 = vrcp.pop %v9789
  %v9796 = vmul.f32 1.0, %v9795
  %v9797 = vrcp.pop %v9790
  %v9798 = vmul.f32 1.0, %v9797
  %v9799 = vxor.u32 %v9747, 2147483648
  %v9800 = vxor.u32 %v9748, 2147483648
  %v9801 = vxor.u32 %v9749, 2147483648
  %v9802 = vxor.u32 %v9750, 2147483648
  %v9803 = vmul.f32 %v9799, 1.442695
  %v9804 = vpow.pop %v9803
  %v9805 = vmul.f32 %v9800, 1.442695
  %v9806 = vpow.pop %v9805
  %v9807 = vmul.f32 %v9801, 1.442695
  %v9808 = vpow.pop %v9807
  %v9809 = vmul.f32 %v9802, 1.442695
  %v9810 = vpow.pop %v9809
  %v9811 = vadd.f32 %v9804, 1.0
  %v9812 = vadd.f32 %v9806, 1.0
  %v9813 = vadd.f32 %v9808, 1.0
  %v9814 = vadd.f32 %v9810, 1.0
  %v9815 = vrcp.pop %v9811
  %v9816 = vmul.f32 1.0, %v9815
  %v9817 = vrcp.pop %v9812
  %v9818 = vmul.f32 1.0, %v9817
  %v9819 = vrcp.pop %v9813
  %v9820 = vmul.f32 1.0, %v9819
  %v9821 = vrcp.pop %v9814
  %v9822 = vmul.f32 1.0, %v9821
  %v9823 = vmul.f32 %v9792, %v9062
  %v9824 = vmul.f32 %v9794, %v9063
  %v9825 = vmul.f32 %v9796, %v9064
  %v9826 = vmul.f32 %v9798, %v9065
  %v9827 = vmul.f32 %v9768, %v9743
  %v9828 = vmul.f32 %v9770, %v9744
  %v9829 = vmul.f32 %v9772, %v9745
  %v9830 = vmul.f32 %v9774, %v9746
  %v9831 = vadd.f32 %v9823, %v9827
  %v9832 = vadd.f32 %v9824, %v9828
  %v9833 = vadd.f32 %v9825, %v9829
  %v9834 = vadd.f32 %v9826, %v9830
  %v9835 = vtanh.pop %v9831
  %v9836 = vtanh.pop %v9832
  %v9837 = vtanh.pop %v9833
  %v9838 = vtanh.pop %v9834
  %v9839 = vmul.f32 %v9816, %v9835
  %v9840 = vmul.f32 %v9818, %v9836
  %v9841 = vmul.f32 %v9820, %v9837
  %v9842 = vmul.f32 %v9822, %v9838
  %s9843 = scalar_lea.vmem %s6, 224
  %9844 = vst [vmem:[%s9843] sm:$0xff] %v9839
  %9845 = vst [vmem:[%s9843 + $0x8] sm:$0xff] %v9840
  %9846 = vst [vmem:[%s9843 + $0x10] sm:$0xff] %v9841
  %9847 = vst [vmem:[%s9843 + $0x18] sm:$0xff] %v9842
  // Predicated region
  $region26: #{conv_lstm_layer.1} parent=0 // pred_check
    _
  $region27: #{conv_lstm_layer.1} parent=0 // pred_check_branch
    %9849 = sbr.rel (0) target = $region29
  $region28: #{conv_lstm_layer.1} parent=0 // pred_region
    _
  $region29: #{conv_lstm_layer.1} parent=0 // pred_fallthru
    _
  // Predicated region
  $region30: #{conv_lstm_layer.1} parent=0 // pred_check
    _
  $region31: #{conv_lstm_layer.1} parent=0 // pred_check_branch
    %9851 = sbr.rel (0) target = $region33
  $region32: #{conv_lstm_layer.1} parent=0 // pred_region
    _
  $region33: #{conv_lstm_layer.1} parent=0 // pred_fallthru
    _

</llo_original>
